<compile_context>
chip_gen: v7x
topology: tpu7x:2x2x1
jax: 0.10.0
libtpu: 0.0.40
codegen_flags: <defaults>
</compile_context>

<pallas_src>
import jax
import jax.numpy as jnp
from jax.experimental import pallas as pl
from jax.experimental.pallas import tpu as pltpu


# --------------------------------------------------------------------------
# Module configuration (matches the PyTorch constructor arguments)
# --------------------------------------------------------------------------
IN_CHANNELS = 4
INCEPTION_OUTPUT_CHANNELS = 8
N_CLASSES = 10
OUTPUT_CHANNELS = [4, 8]            # per-block input channel counts
ARCHITECTURE = {
    "block1": {
        "conv_1": {"in_channels": 4, "out_channels": 6, "kernel_size": 3},
        "maxpool_1": {"kernel_size": 3},
        "identity_1": {},
    },
    "block2": {
        "conv_1": {"in_channels": 8, "out_channels": 6, "kernel_size": 3},
        "avgpool_1": {"kernel_size": 3},
        "identity_1": {},
    },
}


# --------------------------------------------------------------------------
# Parameter construction (mirrors the PyTorch constructor), f32 everywhere.
# Conv weights are pre-arranged as (9*Cin, Cout, 1) so w[t*Cin + ci] is the
# (Cout, 1) column for spatial tap t = 3*(dh+1)+(dw+1) and input channel ci.
# --------------------------------------------------------------------------
def init_params(key):
    keys = iter(jax.random.split(key, 64))

    def conv_p(cin, cout, k=3):
        assert k == 3, "only 3x3 convs supported by the fused kernel"
        w = 0.1 * jax.random.normal(next(keys), (3, 3, cin, cout), jnp.float32)
        b = 0.01 * jax.random.normal(next(keys), (cout,), jnp.float32)
        return {"w": w.reshape(9 * cin, cout)[:, :, None],   # (9*cin, cout, 1)
                "b": b.reshape(1, cout, 1)}

    params = {"first_layer": conv_p(1, IN_CHANNELS), "blocks": []}
    for block_name, cin in zip(ARCHITECTURE, OUTPUT_CHANNELS):
        branches = []
        for sub_name, sub_cfg in ARCHITECTURE[block_name].items():
            kind = sub_name.split("_")[0]
            if kind == "conv":
                k = sub_cfg.get("kernel_size", 3)
                branches.append({"kind": "conv",
                                 "params": conv_p(sub_cfg["in_channels"],
                                                  sub_cfg["out_channels"], k),
                                 "channels": sub_cfg["out_channels"]})
            elif kind in ("maxpool", "avgpool"):
                assert sub_cfg.get("kernel_size", 3) == 3
                branches.append({"kind": kind, "params": None, "channels": cin})
            else:  # identity
                branches.append({"kind": "identity", "params": None, "channels": cin})

        concat_c = sum(br["channels"] for br in branches)
        proj_w = 0.1 * jax.random.normal(
            next(keys), (concat_c, INCEPTION_OUTPUT_CHANNELS), jnp.float32)
        proj_b = 0.01 * jax.random.normal(
            next(keys), (INCEPTION_OUTPUT_CHANNELS,), jnp.float32)
        # Pre-split the 1x1 projection weight row-wise per branch: the kernel
        # never materializes the channel concat (concat@W == sum of branch @W_i).
        splits, off = [], 0
        for br in branches:
            c = br["channels"]
            splits.append(proj_w[off:off + c, :][:, :, None])   # (c, 8, 1)
            off += c
        params["blocks"].append({"in_channels": cin, "branches": branches,
                                 "proj_w": splits,
                                 "proj_b": proj_b.reshape(1, -1, 1)})

    w_lin = 0.1 * jax.random.normal(
        next(keys), (INCEPTION_OUTPUT_CHANNELS, N_CLASSES), jnp.float32)
    b_lin = 0.01 * jax.random.normal(next(keys), (N_CLASSES,), jnp.float32)
    params["head"] = {"w": w_lin[:, None, :],                 # (C, 1, n_classes)
                      "b": b_lin.reshape(1, N_CLASSES)}
    return params


# --------------------------------------------------------------------------
# Fused forward builder: ONE pallas_call, batch-parallel grid.
# --------------------------------------------------------------------------
def make_encoder_forward(params, image_hw=(16, 16)):
    H, W = image_hw
    assert H == W, "square inputs assumed"
    S0 = H + 2                                  # canvas side: 1 zero ring
    S2 = S0 * S0                                # 324
    S2P = ((S2 + 127) // 128) * 128             # lane-padded flat length (384)
    n_classes = params["head"]["b"].shape[-1]

    # ---- flatten parameters into the operand order the kernel consumes -----
    operands = [params["first_layer"]["w"], params["first_layer"]["b"]]
    blocks_meta = []
    for blk in params["blocks"]:
        kinds = []
        for br in blk["branches"]:
            kinds.append((br["kind"], br["channels"]))
            if br["kind"] == "conv":
                operands += [br["params"]["w"], br["params"]["b"]]
        operands += list(blk["proj_w"])
        operands.append(blk["proj_b"])
        blocks_meta.append({"cin": blk["in_channels"], "branches": tuple(kinds)})
    operands += [params["head"]["w"], params["head"]["b"]]

    # ---- the fused kernel (one batch tile per grid step) -------------------
    def kernel(*refs):
        x_ref, out_ref = refs[0], refs[-1]
        it = iter(refs[1:-1])

        # Interior mask built in-kernel from iota compares (no HBM operand):
        # keep canvas rows/cols 1..H (the real 16x16 image), zero the 1-wide
        # ring and the lane-padding tail.  Avoids int div/mod entirely.
        p = jax.lax.broadcasted_iota(jnp.int32, (1, 1, S2P), 2)
        inside = None
        for r in range(1, H + 1):
            start = r * S0 + 1
            hit = (p >= start) & (p < start + W)
            inside = hit if inside is None else (inside | hit)
        mask = inside.astype(jnp.float32)                     # (1, 1, S2P)

        def taps(x):
            # 9 shifted copies of the flattened canvas (XLU lane rolls, shared
            # by every branch of a block).  Interior positions never wrap; the
            # wrap garbage only lands on the ring/tail, which the mask re-zeroes.
            out = []
            for dh in (-1, 0, 1):
                for dw in (-1, 0, 1):
                    off = dh * S0 + dw
                    out.append(x if off == 0
                               else pltpu.roll(x, shift=(-off) % S2P, axis=2))
            return out

        def conv3x3(xs, w_ref, b_ref, cin):
            # 'same'-size 3x3 conv as 9*cin f32 VPU broadcast MACs (no MXU).
            acc = None
            for t in range(9):
                xt = xs[t]
                for ci in range(cin):
                    term = xt[:, ci:ci + 1, :] * w_ref[t * cin + ci][None, :, :]
                    acc = term if acc is None else acc + term
            return jnp.maximum(acc + b_ref[...], 0.0)

        def pool3x3(xs, op):
            # zero border == pad=1 pooling here (inputs are post-ReLU >= 0;
            # avgpool assumes count_include_pad=True -> /9).
            acc = xs[0]
            for xt in xs[1:]:
                acc = jnp.maximum(acc, xt) if op == "max" else acc + xt
            return acc * (1.0 / 9.0) if op == "avg" else acc

        # first_layer: conv_nxn_subblock(1 -> in_channels)
        w0, b0 = next(it), next(it)
        act = conv3x3(taps(x_ref[...]), w0, b0, 1) * mask

        # inception blocks: shared taps, per-branch outputs, fused 1x1 projection
        for meta in blocks_meta:
            cin = meta["cin"]
            xs = taps(act)
            branch_outs = []
            for kind, _cb in meta["branches"]:
                if kind == "conv":
                    w, b = next(it), next(it)
                    branch_outs.append(conv3x3(xs, w, b, cin))
                elif kind == "maxpool":
                    branch_outs.append(pool3x3(xs, "max"))
                elif kind == "avgpool":
                    branch_outs.append(pool3x3(xs, "avg"))
                else:  # identity
                    branch_outs.append(act)

            proj = None
            for (_kind, cb), bo in zip(meta["branches"], branch_outs):
                pw = next(it)
                for ci in range(cb):
                    term = bo[:, ci:ci + 1, :] * pw[ci][None, :, :]
                    proj = term if proj is None else proj + term
            pb = next(it)
            act = jnp.maximum(proj + pb[...], 0.0) * mask

        # AdaptiveAvgPool2d((1,1)) + flatten + Linear, all on VPU/XLU.
        hw, hb = next(it), next(it)
        pooled = jnp.sum(act, axis=2) * (1.0 / (H * W))        # (NB, C)
        logits = None
        for c in range(pooled.shape[1]):
            term = pooled[:, c:c + 1] * hw[c]                  # (NB,1)*(1,n_classes)
            logits = term if logits is None else logits + term
        out_ref[...] = logits + hb[...]

    def full_spec(arr):
        nd = arr.ndim
        return pl.BlockSpec(arr.shape, lambda b, _nd=nd: (0,) * _nd)

    @jax.jit
    def forward(x_nchw):
        n, c_img, h, w = x_nchw.shape
        assert (h, w) == (H, W) and c_img == 1
        # Batch tile: whole batch if small, else the largest of {64,32,16,8}
        # that divides it (keeps the (8,128) out-block rule satisfied).
        nb = n if n < 8 else next((c for c in (64, 32, 16, 8) if n % c == 0), n)

        # NCHW -> zero-ring canvas -> lane-dense flattened layout (N, 1, S2P).
        x = jnp.pad(x_nchw.astype(jnp.float32), ((0, 0), (0, 0), (1, 1), (1, 1)))
        x = x.reshape(n, 1, S2)
        x = jnp.pad(x, ((0, 0), (0, 0), (0, S2P - S2)))

        return pl.pallas_call(
            kernel,
            out_shape=jax.ShapeDtypeStruct((n, n_classes), jnp.float32),
            grid=(n // nb,),
            in_specs=[pl.BlockSpec((nb, 1, S2P), lambda b: (b, 0, 0))]
                     + [full_spec(op) for op in operands],
            out_specs=pl.BlockSpec((nb, n_classes), lambda b: (b, 0)),
            compiler_params=pltpu.CompilerParams(
                dimension_semantics=("parallel",)),
        )(x, *operands)

    return forward


if __name__ == "__main__":
    key = jax.random.PRNGKey(0)
    pkey, xkey = jax.random.split(key)
    params = init_params(pkey)
    forward = make_encoder_forward(params, image_hw=(16, 16))

    # first_layer is conv_nxn_subblock(1, in_channels): the module consumes
    # 1-channel NCHW images.
    x = jax.random.normal(xkey, (2, 1, 16, 16), jnp.float32)

    out = jax.block_until_ready(forward(x))
    assert out.shape == (2, N_CLASSES), out.shape
    assert bool(jnp.all(jnp.isfinite(out)))
    print("KERNEL_OK")
</pallas_src>

<mosaic_0001>
module attributes {stable_mosaic.version = 11 : i64} {
  func.func @kernel(%arg0: i32, %arg1: memref<2x1x384xf32, #tpu.memory_space<vmem>>, %arg2: memref<9x4x1xf32, #tpu.memory_space<vmem>>, %arg3: memref<1x4x1xf32, #tpu.memory_space<vmem>>, %arg4: memref<36x6x1xf32, #tpu.memory_space<vmem>>, %arg5: memref<1x6x1xf32, #tpu.memory_space<vmem>>, %arg6: memref<6x8x1xf32, #tpu.memory_space<vmem>>, %arg7: memref<4x8x1xf32, #tpu.memory_space<vmem>>, %arg8: memref<4x8x1xf32, #tpu.memory_space<vmem>>, %arg9: memref<1x8x1xf32, #tpu.memory_space<vmem>>, %arg10: memref<72x6x1xf32, #tpu.memory_space<vmem>>, %arg11: memref<1x6x1xf32, #tpu.memory_space<vmem>>, %arg12: memref<6x8x1xf32, #tpu.memory_space<vmem>>, %arg13: memref<8x8x1xf32, #tpu.memory_space<vmem>>, %arg14: memref<8x8x1xf32, #tpu.memory_space<vmem>>, %arg15: memref<1x8x1xf32, #tpu.memory_space<vmem>>, %arg16: memref<8x1x10xf32, #tpu.memory_space<vmem>>, %arg17: memref<1x10xf32, #tpu.memory_space<vmem>>, %arg18: memref<2x10xf32, #tpu.memory_space<vmem>>) attributes {dimension_semantics = [#tpu.dimension_semantics<parallel>], iteration_bounds = array<i64: 1>, scalar_prefetch = 0 : i64, scratch_operands = 0 : i64, tpu.core_type = #tpu.core_type<tc>, window_params = [{transform_indices = @transform_0, window_bounds = array<i64: 2, 1, 384>}, {pipeline_mode = #tpu.pipeline_mode<synchronous>, transform_indices = @transform_1, window_bounds = array<i64: 9, 4, 1>}, {pipeline_mode = #tpu.pipeline_mode<synchronous>, transform_indices = @transform_2, window_bounds = array<i64: 1, 4, 1>}, {pipeline_mode = #tpu.pipeline_mode<synchronous>, transform_indices = @transform_3, window_bounds = array<i64: 36, 6, 1>}, {pipeline_mode = #tpu.pipeline_mode<synchronous>, transform_indices = @transform_4, window_bounds = array<i64: 1, 6, 1>}, {pipeline_mode = #tpu.pipeline_mode<synchronous>, transform_indices = @transform_5, window_bounds = array<i64: 6, 8, 1>}, {pipeline_mode = #tpu.pipeline_mode<synchronous>, transform_indices = @transform_6, window_bounds = array<i64: 4, 8, 1>}, {pipeline_mode = #tpu.pipeline_mode<synchronous>, transform_indices = @transform_7, window_bounds = array<i64: 4, 8, 1>}, {pipeline_mode = #tpu.pipeline_mode<synchronous>, transform_indices = @transform_8, window_bounds = array<i64: 1, 8, 1>}, {pipeline_mode = #tpu.pipeline_mode<synchronous>, transform_indices = @transform_9, window_bounds = array<i64: 72, 6, 1>}, {pipeline_mode = #tpu.pipeline_mode<synchronous>, transform_indices = @transform_10, window_bounds = array<i64: 1, 6, 1>}, {pipeline_mode = #tpu.pipeline_mode<synchronous>, transform_indices = @transform_11, window_bounds = array<i64: 6, 8, 1>}, {pipeline_mode = #tpu.pipeline_mode<synchronous>, transform_indices = @transform_12, window_bounds = array<i64: 8, 8, 1>}, {pipeline_mode = #tpu.pipeline_mode<synchronous>, transform_indices = @transform_13, window_bounds = array<i64: 8, 8, 1>}, {pipeline_mode = #tpu.pipeline_mode<synchronous>, transform_indices = @transform_14, window_bounds = array<i64: 1, 8, 1>}, {pipeline_mode = #tpu.pipeline_mode<synchronous>, transform_indices = @transform_15, window_bounds = array<i64: 8, 1, 10>}, {pipeline_mode = #tpu.pipeline_mode<synchronous>, transform_indices = @transform_16, window_bounds = array<i64: 1, 10>}, {transform_indices = @transform_17, window_bounds = array<i64: 2, 10>}]} {
    %0 = tpu.iota {dimensions = array<i32: 2>} : vector<1x1x384xi32>
    %c19_i32 = arith.constant 19 : i32
    %1 = vector.broadcast %c19_i32 : i32 to vector<1x1x384xi32>
    %2 = arith.cmpi sge, %0, %1 : vector<1x1x384xi32>
    %c35_i32 = arith.constant 35 : i32
    %3 = vector.broadcast %c35_i32 : i32 to vector<1x1x384xi32>
    %4 = arith.cmpi slt, %0, %3 : vector<1x1x384xi32>
    %5 = arith.andi %2, %4 : vector<1x1x384xi1>
    %c37_i32 = arith.constant 37 : i32
    %6 = vector.broadcast %c37_i32 : i32 to vector<1x1x384xi32>
    %7 = arith.cmpi sge, %0, %6 : vector<1x1x384xi32>
    %c53_i32 = arith.constant 53 : i32
    %8 = vector.broadcast %c53_i32 : i32 to vector<1x1x384xi32>
    %9 = arith.cmpi slt, %0, %8 : vector<1x1x384xi32>
    %10 = arith.andi %7, %9 : vector<1x1x384xi1>
    %11 = arith.ori %5, %10 : vector<1x1x384xi1>
    %c55_i32 = arith.constant 55 : i32
    %12 = vector.broadcast %c55_i32 : i32 to vector<1x1x384xi32>
    %13 = arith.cmpi sge, %0, %12 : vector<1x1x384xi32>
    %c71_i32 = arith.constant 71 : i32
    %14 = vector.broadcast %c71_i32 : i32 to vector<1x1x384xi32>
    %15 = arith.cmpi slt, %0, %14 : vector<1x1x384xi32>
    %16 = arith.andi %13, %15 : vector<1x1x384xi1>
    %17 = arith.ori %11, %16 : vector<1x1x384xi1>
    %c73_i32 = arith.constant 73 : i32
    %18 = vector.broadcast %c73_i32 : i32 to vector<1x1x384xi32>
    %19 = arith.cmpi sge, %0, %18 : vector<1x1x384xi32>
    %c89_i32 = arith.constant 89 : i32
    %20 = vector.broadcast %c89_i32 : i32 to vector<1x1x384xi32>
    %21 = arith.cmpi slt, %0, %20 : vector<1x1x384xi32>
    %22 = arith.andi %19, %21 : vector<1x1x384xi1>
    %23 = arith.ori %17, %22 : vector<1x1x384xi1>
    %c91_i32 = arith.constant 91 : i32
    %24 = vector.broadcast %c91_i32 : i32 to vector<1x1x384xi32>
    %25 = arith.cmpi sge, %0, %24 : vector<1x1x384xi32>
    %c107_i32 = arith.constant 107 : i32
    %26 = vector.broadcast %c107_i32 : i32 to vector<1x1x384xi32>
    %27 = arith.cmpi slt, %0, %26 : vector<1x1x384xi32>
    %28 = arith.andi %25, %27 : vector<1x1x384xi1>
    %29 = arith.ori %23, %28 : vector<1x1x384xi1>
    %c109_i32 = arith.constant 109 : i32
    %30 = vector.broadcast %c109_i32 : i32 to vector<1x1x384xi32>
    %31 = arith.cmpi sge, %0, %30 : vector<1x1x384xi32>
    %c125_i32 = arith.constant 125 : i32
    %32 = vector.broadcast %c125_i32 : i32 to vector<1x1x384xi32>
    %33 = arith.cmpi slt, %0, %32 : vector<1x1x384xi32>
    %34 = arith.andi %31, %33 : vector<1x1x384xi1>
    %35 = arith.ori %29, %34 : vector<1x1x384xi1>
    %c127_i32 = arith.constant 127 : i32
    %36 = vector.broadcast %c127_i32 : i32 to vector<1x1x384xi32>
    %37 = arith.cmpi sge, %0, %36 : vector<1x1x384xi32>
    %c143_i32 = arith.constant 143 : i32
    %38 = vector.broadcast %c143_i32 : i32 to vector<1x1x384xi32>
    %39 = arith.cmpi slt, %0, %38 : vector<1x1x384xi32>
    %40 = arith.andi %37, %39 : vector<1x1x384xi1>
    %41 = arith.ori %35, %40 : vector<1x1x384xi1>
    %c145_i32 = arith.constant 145 : i32
    %42 = vector.broadcast %c145_i32 : i32 to vector<1x1x384xi32>
    %43 = arith.cmpi sge, %0, %42 : vector<1x1x384xi32>
    %c161_i32 = arith.constant 161 : i32
    %44 = vector.broadcast %c161_i32 : i32 to vector<1x1x384xi32>
    %45 = arith.cmpi slt, %0, %44 : vector<1x1x384xi32>
    %46 = arith.andi %43, %45 : vector<1x1x384xi1>
    %47 = arith.ori %41, %46 : vector<1x1x384xi1>
    %c163_i32 = arith.constant 163 : i32
    %48 = vector.broadcast %c163_i32 : i32 to vector<1x1x384xi32>
    %49 = arith.cmpi sge, %0, %48 : vector<1x1x384xi32>
    %c179_i32 = arith.constant 179 : i32
    %50 = vector.broadcast %c179_i32 : i32 to vector<1x1x384xi32>
    %51 = arith.cmpi slt, %0, %50 : vector<1x1x384xi32>
    %52 = arith.andi %49, %51 : vector<1x1x384xi1>
    %53 = arith.ori %47, %52 : vector<1x1x384xi1>
    %c181_i32 = arith.constant 181 : i32
    %54 = vector.broadcast %c181_i32 : i32 to vector<1x1x384xi32>
    %55 = arith.cmpi sge, %0, %54 : vector<1x1x384xi32>
    %c197_i32 = arith.constant 197 : i32
    %56 = vector.broadcast %c197_i32 : i32 to vector<1x1x384xi32>
    %57 = arith.cmpi slt, %0, %56 : vector<1x1x384xi32>
    %58 = arith.andi %55, %57 : vector<1x1x384xi1>
    %59 = arith.ori %53, %58 : vector<1x1x384xi1>
    %c199_i32 = arith.constant 199 : i32
    %60 = vector.broadcast %c199_i32 : i32 to vector<1x1x384xi32>
    %61 = arith.cmpi sge, %0, %60 : vector<1x1x384xi32>
    %c215_i32 = arith.constant 215 : i32
    %62 = vector.broadcast %c215_i32 : i32 to vector<1x1x384xi32>
    %63 = arith.cmpi slt, %0, %62 : vector<1x1x384xi32>
    %64 = arith.andi %61, %63 : vector<1x1x384xi1>
    %65 = arith.ori %59, %64 : vector<1x1x384xi1>
    %c217_i32 = arith.constant 217 : i32
    %66 = vector.broadcast %c217_i32 : i32 to vector<1x1x384xi32>
    %67 = arith.cmpi sge, %0, %66 : vector<1x1x384xi32>
    %c233_i32 = arith.constant 233 : i32
    %68 = vector.broadcast %c233_i32 : i32 to vector<1x1x384xi32>
    %69 = arith.cmpi slt, %0, %68 : vector<1x1x384xi32>
    %70 = arith.andi %67, %69 : vector<1x1x384xi1>
    %71 = arith.ori %65, %70 : vector<1x1x384xi1>
    %c235_i32 = arith.constant 235 : i32
    %72 = vector.broadcast %c235_i32 : i32 to vector<1x1x384xi32>
    %73 = arith.cmpi sge, %0, %72 : vector<1x1x384xi32>
    %c251_i32 = arith.constant 251 : i32
    %74 = vector.broadcast %c251_i32 : i32 to vector<1x1x384xi32>
    %75 = arith.cmpi slt, %0, %74 : vector<1x1x384xi32>
    %76 = arith.andi %73, %75 : vector<1x1x384xi1>
    %77 = arith.ori %71, %76 : vector<1x1x384xi1>
    %c253_i32 = arith.constant 253 : i32
    %78 = vector.broadcast %c253_i32 : i32 to vector<1x1x384xi32>
    %79 = arith.cmpi sge, %0, %78 : vector<1x1x384xi32>
    %c269_i32 = arith.constant 269 : i32
    %80 = vector.broadcast %c269_i32 : i32 to vector<1x1x384xi32>
    %81 = arith.cmpi slt, %0, %80 : vector<1x1x384xi32>
    %82 = arith.andi %79, %81 : vector<1x1x384xi1>
    %83 = arith.ori %77, %82 : vector<1x1x384xi1>
    %c271_i32 = arith.constant 271 : i32
    %84 = vector.broadcast %c271_i32 : i32 to vector<1x1x384xi32>
    %85 = arith.cmpi sge, %0, %84 : vector<1x1x384xi32>
    %c287_i32 = arith.constant 287 : i32
    %86 = vector.broadcast %c287_i32 : i32 to vector<1x1x384xi32>
    %87 = arith.cmpi slt, %0, %86 : vector<1x1x384xi32>
    %88 = arith.andi %85, %87 : vector<1x1x384xi1>
    %89 = arith.ori %83, %88 : vector<1x1x384xi1>
    %c289_i32 = arith.constant 289 : i32
    %90 = vector.broadcast %c289_i32 : i32 to vector<1x1x384xi32>
    %91 = arith.cmpi sge, %0, %90 : vector<1x1x384xi32>
    %c305_i32 = arith.constant 305 : i32
    %92 = vector.broadcast %c305_i32 : i32 to vector<1x1x384xi32>
    %93 = arith.cmpi slt, %0, %92 : vector<1x1x384xi32>
    %94 = arith.andi %91, %93 : vector<1x1x384xi1>
    %95 = arith.ori %89, %94 : vector<1x1x384xi1>
    %96 = arith.extui %95 : vector<1x1x384xi1> to vector<1x1x384xi32>
    %97 = arith.sitofp %96 : vector<1x1x384xi32> to vector<1x1x384xf32>
    %c0 = arith.constant 0 : index
    %c0_0 = arith.constant 0 : index
    %c0_1 = arith.constant 0 : index
    %98 = vector.load %arg1[%c0, %c0_0, %c0_1] : memref<2x1x384xf32, #tpu.memory_space<vmem>>, vector<2x1x384xf32>
    %c19_i32_2 = arith.constant 19 : i32
    %99 = tpu.dynamic_rotate %98 by %c19_i32_2 dim 2 : vector<2x1x384xf32>, i32 -> vector<2x1x384xf32>
    %c18_i32 = arith.constant 18 : i32
    %100 = tpu.dynamic_rotate %98 by %c18_i32 dim 2 : vector<2x1x384xf32>, i32 -> vector<2x1x384xf32>
    %c17_i32 = arith.constant 17 : i32
    %101 = tpu.dynamic_rotate %98 by %c17_i32 dim 2 : vector<2x1x384xf32>, i32 -> vector<2x1x384xf32>
    %c1_i32 = arith.constant 1 : i32
    %102 = tpu.dynamic_rotate %98 by %c1_i32 dim 2 : vector<2x1x384xf32>, i32 -> vector<2x1x384xf32>
    %c383_i32 = arith.constant 383 : i32
    %103 = tpu.dynamic_rotate %98 by %c383_i32 dim 2 : vector<2x1x384xf32>, i32 -> vector<2x1x384xf32>
    %c367_i32 = arith.constant 367 : i32
    %104 = tpu.dynamic_rotate %98 by %c367_i32 dim 2 : vector<2x1x384xf32>, i32 -> vector<2x1x384xf32>
    %c366_i32 = arith.constant 366 : i32
    %105 = tpu.dynamic_rotate %98 by %c366_i32 dim 2 : vector<2x1x384xf32>, i32 -> vector<2x1x384xf32>
    %c365_i32 = arith.constant 365 : i32
    %106 = tpu.dynamic_rotate %98 by %c365_i32 dim 2 : vector<2x1x384xf32>, i32 -> vector<2x1x384xf32>
    %c0_3 = arith.constant 0 : index
    %c0_4 = arith.constant 0 : index
    %c0_5 = arith.constant 0 : index
    %107 = vector.load %arg2[%c0_3, %c0_4, %c0_5] : memref<9x4x1xf32, #tpu.memory_space<vmem>>, vector<1x4x1xf32>
    %108 = vector.shape_cast %107 : vector<1x4x1xf32> to vector<4x1xf32>
    %109 = vector.shape_cast %108 : vector<4x1xf32> to vector<1x4x1xf32>
    %110 = vector.broadcast %99 : vector<2x1x384xf32> to vector<2x4x384xf32>
    %111 = vector.broadcast %109 : vector<1x4x1xf32> to vector<2x4x384xf32>
    %112 = arith.mulf %110, %111 : vector<2x4x384xf32>
    %c1 = arith.constant 1 : index
    %c0_6 = arith.constant 0 : index
    %c0_7 = arith.constant 0 : index
    %113 = vector.load %arg2[%c1, %c0_6, %c0_7] : memref<9x4x1xf32, #tpu.memory_space<vmem>>, vector<1x4x1xf32>
    %114 = vector.shape_cast %113 : vector<1x4x1xf32> to vector<4x1xf32>
    %115 = vector.shape_cast %114 : vector<4x1xf32> to vector<1x4x1xf32>
    %116 = vector.broadcast %100 : vector<2x1x384xf32> to vector<2x4x384xf32>
    %117 = vector.broadcast %115 : vector<1x4x1xf32> to vector<2x4x384xf32>
    %118 = arith.mulf %116, %117 : vector<2x4x384xf32>
    %119 = arith.addf %112, %118 : vector<2x4x384xf32>
    %c2 = arith.constant 2 : index
    %c0_8 = arith.constant 0 : index
    %c0_9 = arith.constant 0 : index
    %120 = vector.load %arg2[%c2, %c0_8, %c0_9] : memref<9x4x1xf32, #tpu.memory_space<vmem>>, vector<1x4x1xf32>
    %121 = vector.shape_cast %120 : vector<1x4x1xf32> to vector<4x1xf32>
    %122 = vector.shape_cast %121 : vector<4x1xf32> to vector<1x4x1xf32>
    %123 = vector.broadcast %101 : vector<2x1x384xf32> to vector<2x4x384xf32>
    %124 = vector.broadcast %122 : vector<1x4x1xf32> to vector<2x4x384xf32>
    %125 = arith.mulf %123, %124 : vector<2x4x384xf32>
    %126 = arith.addf %119, %125 : vector<2x4x384xf32>
    %c3 = arith.constant 3 : index
    %c0_10 = arith.constant 0 : index
    %c0_11 = arith.constant 0 : index
    %127 = vector.load %arg2[%c3, %c0_10, %c0_11] : memref<9x4x1xf32, #tpu.memory_space<vmem>>, vector<1x4x1xf32>
    %128 = vector.shape_cast %127 : vector<1x4x1xf32> to vector<4x1xf32>
    %129 = vector.shape_cast %128 : vector<4x1xf32> to vector<1x4x1xf32>
    %130 = vector.broadcast %102 : vector<2x1x384xf32> to vector<2x4x384xf32>
    %131 = vector.broadcast %129 : vector<1x4x1xf32> to vector<2x4x384xf32>
    %132 = arith.mulf %130, %131 : vector<2x4x384xf32>
    %133 = arith.addf %126, %132 : vector<2x4x384xf32>
    %c4 = arith.constant 4 : index
    %c0_12 = arith.constant 0 : index
    %c0_13 = arith.constant 0 : index
    %134 = vector.load %arg2[%c4, %c0_12, %c0_13] : memref<9x4x1xf32, #tpu.memory_space<vmem>>, vector<1x4x1xf32>
    %135 = vector.shape_cast %134 : vector<1x4x1xf32> to vector<4x1xf32>
    %136 = vector.shape_cast %135 : vector<4x1xf32> to vector<1x4x1xf32>
    %137 = vector.broadcast %98 : vector<2x1x384xf32> to vector<2x4x384xf32>
    %138 = vector.broadcast %136 : vector<1x4x1xf32> to vector<2x4x384xf32>
    %139 = arith.mulf %137, %138 : vector<2x4x384xf32>
    %140 = arith.addf %133, %139 : vector<2x4x384xf32>
    %c5 = arith.constant 5 : index
    %c0_14 = arith.constant 0 : index
    %c0_15 = arith.constant 0 : index
    %141 = vector.load %arg2[%c5, %c0_14, %c0_15] : memref<9x4x1xf32, #tpu.memory_space<vmem>>, vector<1x4x1xf32>
    %142 = vector.shape_cast %141 : vector<1x4x1xf32> to vector<4x1xf32>
    %143 = vector.shape_cast %142 : vector<4x1xf32> to vector<1x4x1xf32>
    %144 = vector.broadcast %103 : vector<2x1x384xf32> to vector<2x4x384xf32>
    %145 = vector.broadcast %143 : vector<1x4x1xf32> to vector<2x4x384xf32>
    %146 = arith.mulf %144, %145 : vector<2x4x384xf32>
    %147 = arith.addf %140, %146 : vector<2x4x384xf32>
    %c6 = arith.constant 6 : index
    %c0_16 = arith.constant 0 : index
    %c0_17 = arith.constant 0 : index
    %148 = vector.load %arg2[%c6, %c0_16, %c0_17] : memref<9x4x1xf32, #tpu.memory_space<vmem>>, vector<1x4x1xf32>
    %149 = vector.shape_cast %148 : vector<1x4x1xf32> to vector<4x1xf32>
    %150 = vector.shape_cast %149 : vector<4x1xf32> to vector<1x4x1xf32>
    %151 = vector.broadcast %104 : vector<2x1x384xf32> to vector<2x4x384xf32>
    %152 = vector.broadcast %150 : vector<1x4x1xf32> to vector<2x4x384xf32>
    %153 = arith.mulf %151, %152 : vector<2x4x384xf32>
    %154 = arith.addf %147, %153 : vector<2x4x384xf32>
    %c7 = arith.constant 7 : index
    %c0_18 = arith.constant 0 : index
    %c0_19 = arith.constant 0 : index
    %155 = vector.load %arg2[%c7, %c0_18, %c0_19] : memref<9x4x1xf32, #tpu.memory_space<vmem>>, vector<1x4x1xf32>
    %156 = vector.shape_cast %155 : vector<1x4x1xf32> to vector<4x1xf32>
    %157 = vector.shape_cast %156 : vector<4x1xf32> to vector<1x4x1xf32>
    %158 = vector.broadcast %105 : vector<2x1x384xf32> to vector<2x4x384xf32>
    %159 = vector.broadcast %157 : vector<1x4x1xf32> to vector<2x4x384xf32>
    %160 = arith.mulf %158, %159 : vector<2x4x384xf32>
    %161 = arith.addf %154, %160 : vector<2x4x384xf32>
    %c8 = arith.constant 8 : index
    %c0_20 = arith.constant 0 : index
    %c0_21 = arith.constant 0 : index
    %162 = vector.load %arg2[%c8, %c0_20, %c0_21] : memref<9x4x1xf32, #tpu.memory_space<vmem>>, vector<1x4x1xf32>
    %163 = vector.shape_cast %162 : vector<1x4x1xf32> to vector<4x1xf32>
    %164 = vector.shape_cast %163 : vector<4x1xf32> to vector<1x4x1xf32>
    %165 = vector.broadcast %106 : vector<2x1x384xf32> to vector<2x4x384xf32>
    %166 = vector.broadcast %164 : vector<1x4x1xf32> to vector<2x4x384xf32>
    %167 = arith.mulf %165, %166 : vector<2x4x384xf32>
    %168 = arith.addf %161, %167 : vector<2x4x384xf32>
    %c0_22 = arith.constant 0 : index
    %c0_23 = arith.constant 0 : index
    %c0_24 = arith.constant 0 : index
    %169 = vector.load %arg3[%c0_22, %c0_23, %c0_24] : memref<1x4x1xf32, #tpu.memory_space<vmem>>, vector<1x4x1xf32>
    %170 = vector.broadcast %169 : vector<1x4x1xf32> to vector<2x4x384xf32>
    %171 = arith.addf %168, %170 : vector<2x4x384xf32>
    %cst = arith.constant 0.000000e+00 : f32
    %172 = vector.broadcast %cst : f32 to vector<2x4x384xf32>
    %173 = arith.maximumf %171, %172 : vector<2x4x384xf32>
    %174 = vector.broadcast %97 : vector<1x1x384xf32> to vector<2x4x384xf32>
    %175 = arith.mulf %173, %174 : vector<2x4x384xf32>
    %c19_i32_25 = arith.constant 19 : i32
    %176 = tpu.dynamic_rotate %175 by %c19_i32_25 dim 2 : vector<2x4x384xf32>, i32 -> vector<2x4x384xf32>
    %c18_i32_26 = arith.constant 18 : i32
    %177 = tpu.dynamic_rotate %175 by %c18_i32_26 dim 2 : vector<2x4x384xf32>, i32 -> vector<2x4x384xf32>
    %c17_i32_27 = arith.constant 17 : i32
    %178 = tpu.dynamic_rotate %175 by %c17_i32_27 dim 2 : vector<2x4x384xf32>, i32 -> vector<2x4x384xf32>
    %c1_i32_28 = arith.constant 1 : i32
    %179 = tpu.dynamic_rotate %175 by %c1_i32_28 dim 2 : vector<2x4x384xf32>, i32 -> vector<2x4x384xf32>
    %c383_i32_29 = arith.constant 383 : i32
    %180 = tpu.dynamic_rotate %175 by %c383_i32_29 dim 2 : vector<2x4x384xf32>, i32 -> vector<2x4x384xf32>
    %c367_i32_30 = arith.constant 367 : i32
    %181 = tpu.dynamic_rotate %175 by %c367_i32_30 dim 2 : vector<2x4x384xf32>, i32 -> vector<2x4x384xf32>
    %c366_i32_31 = arith.constant 366 : i32
    %182 = tpu.dynamic_rotate %175 by %c366_i32_31 dim 2 : vector<2x4x384xf32>, i32 -> vector<2x4x384xf32>
    %c365_i32_32 = arith.constant 365 : i32
    %183 = tpu.dynamic_rotate %175 by %c365_i32_32 dim 2 : vector<2x4x384xf32>, i32 -> vector<2x4x384xf32>
    %184 = vector.extract_strided_slice %176 {offsets = [0, 0, 0], sizes = [2, 1, 384], strides = [1, 1, 1]} : vector<2x4x384xf32> to vector<2x1x384xf32>
    %c0_33 = arith.constant 0 : index
    %c0_34 = arith.constant 0 : index
    %c0_35 = arith.constant 0 : index
    %185 = vector.load %arg4[%c0_33, %c0_34, %c0_35] : memref<36x6x1xf32, #tpu.memory_space<vmem>>, vector<1x6x1xf32>
    %186 = vector.shape_cast %185 : vector<1x6x1xf32> to vector<6x1xf32>
    %187 = vector.shape_cast %186 : vector<6x1xf32> to vector<1x6x1xf32>
    %188 = vector.broadcast %184 : vector<2x1x384xf32> to vector<2x6x384xf32>
    %189 = vector.broadcast %187 : vector<1x6x1xf32> to vector<2x6x384xf32>
    %190 = arith.mulf %188, %189 : vector<2x6x384xf32>
    %191 = vector.extract_strided_slice %176 {offsets = [0, 1, 0], sizes = [2, 1, 384], strides = [1, 1, 1]} : vector<2x4x384xf32> to vector<2x1x384xf32>
    %c1_36 = arith.constant 1 : index
    %c0_37 = arith.constant 0 : index
    %c0_38 = arith.constant 0 : index
    %192 = vector.load %arg4[%c1_36, %c0_37, %c0_38] : memref<36x6x1xf32, #tpu.memory_space<vmem>>, vector<1x6x1xf32>
    %193 = vector.shape_cast %192 : vector<1x6x1xf32> to vector<6x1xf32>
    %194 = vector.shape_cast %193 : vector<6x1xf32> to vector<1x6x1xf32>
    %195 = vector.broadcast %191 : vector<2x1x384xf32> to vector<2x6x384xf32>
    %196 = vector.broadcast %194 : vector<1x6x1xf32> to vector<2x6x384xf32>
    %197 = arith.mulf %195, %196 : vector<2x6x384xf32>
    %198 = arith.addf %190, %197 : vector<2x6x384xf32>
    %199 = vector.extract_strided_slice %176 {offsets = [0, 2, 0], sizes = [2, 1, 384], strides = [1, 1, 1]} : vector<2x4x384xf32> to vector<2x1x384xf32>
    %c2_39 = arith.constant 2 : index
    %c0_40 = arith.constant 0 : index
    %c0_41 = arith.constant 0 : index
    %200 = vector.load %arg4[%c2_39, %c0_40, %c0_41] : memref<36x6x1xf32, #tpu.memory_space<vmem>>, vector<1x6x1xf32>
    %201 = vector.shape_cast %200 : vector<1x6x1xf32> to vector<6x1xf32>
    %202 = vector.shape_cast %201 : vector<6x1xf32> to vector<1x6x1xf32>
    %203 = vector.broadcast %199 : vector<2x1x384xf32> to vector<2x6x384xf32>
    %204 = vector.broadcast %202 : vector<1x6x1xf32> to vector<2x6x384xf32>
    %205 = arith.mulf %203, %204 : vector<2x6x384xf32>
    %206 = arith.addf %198, %205 : vector<2x6x384xf32>
    %207 = vector.extract_strided_slice %176 {offsets = [0, 3, 0], sizes = [2, 1, 384], strides = [1, 1, 1]} : vector<2x4x384xf32> to vector<2x1x384xf32>
    %c3_42 = arith.constant 3 : index
    %c0_43 = arith.constant 0 : index
    %c0_44 = arith.constant 0 : index
    %208 = vector.load %arg4[%c3_42, %c0_43, %c0_44] : memref<36x6x1xf32, #tpu.memory_space<vmem>>, vector<1x6x1xf32>
    %209 = vector.shape_cast %208 : vector<1x6x1xf32> to vector<6x1xf32>
    %210 = vector.shape_cast %209 : vector<6x1xf32> to vector<1x6x1xf32>
    %211 = vector.broadcast %207 : vector<2x1x384xf32> to vector<2x6x384xf32>
    %212 = vector.broadcast %210 : vector<1x6x1xf32> to vector<2x6x384xf32>
    %213 = arith.mulf %211, %212 : vector<2x6x384xf32>
    %214 = arith.addf %206, %213 : vector<2x6x384xf32>
    %215 = vector.extract_strided_slice %177 {offsets = [0, 0, 0], sizes = [2, 1, 384], strides = [1, 1, 1]} : vector<2x4x384xf32> to vector<2x1x384xf32>
    %c4_45 = arith.constant 4 : index
    %c0_46 = arith.constant 0 : index
    %c0_47 = arith.constant 0 : index
    %216 = vector.load %arg4[%c4_45, %c0_46, %c0_47] : memref<36x6x1xf32, #tpu.memory_space<vmem>>, vector<1x6x1xf32>
    %217 = vector.shape_cast %216 : vector<1x6x1xf32> to vector<6x1xf32>
    %218 = vector.shape_cast %217 : vector<6x1xf32> to vector<1x6x1xf32>
    %219 = vector.broadcast %215 : vector<2x1x384xf32> to vector<2x6x384xf32>
    %220 = vector.broadcast %218 : vector<1x6x1xf32> to vector<2x6x384xf32>
    %221 = arith.mulf %219, %220 : vector<2x6x384xf32>
    %222 = arith.addf %214, %221 : vector<2x6x384xf32>
    %223 = vector.extract_strided_slice %177 {offsets = [0, 1, 0], sizes = [2, 1, 384], strides = [1, 1, 1]} : vector<2x4x384xf32> to vector<2x1x384xf32>
    %c5_48 = arith.constant 5 : index
    %c0_49 = arith.constant 0 : index
    %c0_50 = arith.constant 0 : index
    %224 = vector.load %arg4[%c5_48, %c0_49, %c0_50] : memref<36x6x1xf32, #tpu.memory_space<vmem>>, vector<1x6x1xf32>
    %225 = vector.shape_cast %224 : vector<1x6x1xf32> to vector<6x1xf32>
    %226 = vector.shape_cast %225 : vector<6x1xf32> to vector<1x6x1xf32>
    %227 = vector.broadcast %223 : vector<2x1x384xf32> to vector<2x6x384xf32>
    %228 = vector.broadcast %226 : vector<1x6x1xf32> to vector<2x6x384xf32>
    %229 = arith.mulf %227, %228 : vector<2x6x384xf32>
    %230 = arith.addf %222, %229 : vector<2x6x384xf32>
    %231 = vector.extract_strided_slice %177 {offsets = [0, 2, 0], sizes = [2, 1, 384], strides = [1, 1, 1]} : vector<2x4x384xf32> to vector<2x1x384xf32>
    %c6_51 = arith.constant 6 : index
    %c0_52 = arith.constant 0 : index
    %c0_53 = arith.constant 0 : index
    %232 = vector.load %arg4[%c6_51, %c0_52, %c0_53] : memref<36x6x1xf32, #tpu.memory_space<vmem>>, vector<1x6x1xf32>
    %233 = vector.shape_cast %232 : vector<1x6x1xf32> to vector<6x1xf32>
    %234 = vector.shape_cast %233 : vector<6x1xf32> to vector<1x6x1xf32>
    %235 = vector.broadcast %231 : vector<2x1x384xf32> to vector<2x6x384xf32>
    %236 = vector.broadcast %234 : vector<1x6x1xf32> to vector<2x6x384xf32>
    %237 = arith.mulf %235, %236 : vector<2x6x384xf32>
    %238 = arith.addf %230, %237 : vector<2x6x384xf32>
    %239 = vector.extract_strided_slice %177 {offsets = [0, 3, 0], sizes = [2, 1, 384], strides = [1, 1, 1]} : vector<2x4x384xf32> to vector<2x1x384xf32>
    %c7_54 = arith.constant 7 : index
    %c0_55 = arith.constant 0 : index
    %c0_56 = arith.constant 0 : index
    %240 = vector.load %arg4[%c7_54, %c0_55, %c0_56] : memref<36x6x1xf32, #tpu.memory_space<vmem>>, vector<1x6x1xf32>
    %241 = vector.shape_cast %240 : vector<1x6x1xf32> to vector<6x1xf32>
    %242 = vector.shape_cast %241 : vector<6x1xf32> to vector<1x6x1xf32>
    %243 = vector.broadcast %239 : vector<2x1x384xf32> to vector<2x6x384xf32>
    %244 = vector.broadcast %242 : vector<1x6x1xf32> to vector<2x6x384xf32>
    %245 = arith.mulf %243, %244 : vector<2x6x384xf32>
    %246 = arith.addf %238, %245 : vector<2x6x384xf32>
    %247 = vector.extract_strided_slice %178 {offsets = [0, 0, 0], sizes = [2, 1, 384], strides = [1, 1, 1]} : vector<2x4x384xf32> to vector<2x1x384xf32>
    %c8_57 = arith.constant 8 : index
    %c0_58 = arith.constant 0 : index
    %c0_59 = arith.constant 0 : index
    %248 = vector.load %arg4[%c8_57, %c0_58, %c0_59] : memref<36x6x1xf32, #tpu.memory_space<vmem>>, vector<1x6x1xf32>
    %249 = vector.shape_cast %248 : vector<1x6x1xf32> to vector<6x1xf32>
    %250 = vector.shape_cast %249 : vector<6x1xf32> to vector<1x6x1xf32>
    %251 = vector.broadcast %247 : vector<2x1x384xf32> to vector<2x6x384xf32>
    %252 = vector.broadcast %250 : vector<1x6x1xf32> to vector<2x6x384xf32>
    %253 = arith.mulf %251, %252 : vector<2x6x384xf32>
    %254 = arith.addf %246, %253 : vector<2x6x384xf32>
    %255 = vector.extract_strided_slice %178 {offsets = [0, 1, 0], sizes = [2, 1, 384], strides = [1, 1, 1]} : vector<2x4x384xf32> to vector<2x1x384xf32>
    %c9 = arith.constant 9 : index
    %c0_60 = arith.constant 0 : index
    %c0_61 = arith.constant 0 : index
    %256 = vector.load %arg4[%c9, %c0_60, %c0_61] : memref<36x6x1xf32, #tpu.memory_space<vmem>>, vector<1x6x1xf32>
    %257 = vector.shape_cast %256 : vector<1x6x1xf32> to vector<6x1xf32>
    %258 = vector.shape_cast %257 : vector<6x1xf32> to vector<1x6x1xf32>
    %259 = vector.broadcast %255 : vector<2x1x384xf32> to vector<2x6x384xf32>
    %260 = vector.broadcast %258 : vector<1x6x1xf32> to vector<2x6x384xf32>
    %261 = arith.mulf %259, %260 : vector<2x6x384xf32>
    %262 = arith.addf %254, %261 : vector<2x6x384xf32>
    %263 = vector.extract_strided_slice %178 {offsets = [0, 2, 0], sizes = [2, 1, 384], strides = [1, 1, 1]} : vector<2x4x384xf32> to vector<2x1x384xf32>
    %c10 = arith.constant 10 : index
    %c0_62 = arith.constant 0 : index
    %c0_63 = arith.constant 0 : index
    %264 = vector.load %arg4[%c10, %c0_62, %c0_63] : memref<36x6x1xf32, #tpu.memory_space<vmem>>, vector<1x6x1xf32>
    %265 = vector.shape_cast %264 : vector<1x6x1xf32> to vector<6x1xf32>
    %266 = vector.shape_cast %265 : vector<6x1xf32> to vector<1x6x1xf32>
    %267 = vector.broadcast %263 : vector<2x1x384xf32> to vector<2x6x384xf32>
    %268 = vector.broadcast %266 : vector<1x6x1xf32> to vector<2x6x384xf32>
    %269 = arith.mulf %267, %268 : vector<2x6x384xf32>
    %270 = arith.addf %262, %269 : vector<2x6x384xf32>
    %271 = vector.extract_strided_slice %178 {offsets = [0, 3, 0], sizes = [2, 1, 384], strides = [1, 1, 1]} : vector<2x4x384xf32> to vector<2x1x384xf32>
    %c11 = arith.constant 11 : index
    %c0_64 = arith.constant 0 : index
    %c0_65 = arith.constant 0 : index
    %272 = vector.load %arg4[%c11, %c0_64, %c0_65] : memref<36x6x1xf32, #tpu.memory_space<vmem>>, vector<1x6x1xf32>
    %273 = vector.shape_cast %272 : vector<1x6x1xf32> to vector<6x1xf32>
    %274 = vector.shape_cast %273 : vector<6x1xf32> to vector<1x6x1xf32>
    %275 = vector.broadcast %271 : vector<2x1x384xf32> to vector<2x6x384xf32>
    %276 = vector.broadcast %274 : vector<1x6x1xf32> to vector<2x6x384xf32>
    %277 = arith.mulf %275, %276 : vector<2x6x384xf32>
    %278 = arith.addf %270, %277 : vector<2x6x384xf32>
    %279 = vector.extract_strided_slice %179 {offsets = [0, 0, 0], sizes = [2, 1, 384], strides = [1, 1, 1]} : vector<2x4x384xf32> to vector<2x1x384xf32>
    %c12 = arith.constant 12 : index
    %c0_66 = arith.constant 0 : index
    %c0_67 = arith.constant 0 : index
    %280 = vector.load %arg4[%c12, %c0_66, %c0_67] : memref<36x6x1xf32, #tpu.memory_space<vmem>>, vector<1x6x1xf32>
    %281 = vector.shape_cast %280 : vector<1x6x1xf32> to vector<6x1xf32>
    %282 = vector.shape_cast %281 : vector<6x1xf32> to vector<1x6x1xf32>
    %283 = vector.broadcast %279 : vector<2x1x384xf32> to vector<2x6x384xf32>
    %284 = vector.broadcast %282 : vector<1x6x1xf32> to vector<2x6x384xf32>
    %285 = arith.mulf %283, %284 : vector<2x6x384xf32>
    %286 = arith.addf %278, %285 : vector<2x6x384xf32>
    %287 = vector.extract_strided_slice %179 {offsets = [0, 1, 0], sizes = [2, 1, 384], strides = [1, 1, 1]} : vector<2x4x384xf32> to vector<2x1x384xf32>
    %c13 = arith.constant 13 : index
    %c0_68 = arith.constant 0 : index
    %c0_69 = arith.constant 0 : index
    %288 = vector.load %arg4[%c13, %c0_68, %c0_69] : memref<36x6x1xf32, #tpu.memory_space<vmem>>, vector<1x6x1xf32>
    %289 = vector.shape_cast %288 : vector<1x6x1xf32> to vector<6x1xf32>
    %290 = vector.shape_cast %289 : vector<6x1xf32> to vector<1x6x1xf32>
    %291 = vector.broadcast %287 : vector<2x1x384xf32> to vector<2x6x384xf32>
    %292 = vector.broadcast %290 : vector<1x6x1xf32> to vector<2x6x384xf32>
    %293 = arith.mulf %291, %292 : vector<2x6x384xf32>
    %294 = arith.addf %286, %293 : vector<2x6x384xf32>
    %295 = vector.extract_strided_slice %179 {offsets = [0, 2, 0], sizes = [2, 1, 384], strides = [1, 1, 1]} : vector<2x4x384xf32> to vector<2x1x384xf32>
    %c14 = arith.constant 14 : index
    %c0_70 = arith.constant 0 : index
    %c0_71 = arith.constant 0 : index
    %296 = vector.load %arg4[%c14, %c0_70, %c0_71] : memref<36x6x1xf32, #tpu.memory_space<vmem>>, vector<1x6x1xf32>
    %297 = vector.shape_cast %296 : vector<1x6x1xf32> to vector<6x1xf32>
    %298 = vector.shape_cast %297 : vector<6x1xf32> to vector<1x6x1xf32>
    %299 = vector.broadcast %295 : vector<2x1x384xf32> to vector<2x6x384xf32>
    %300 = vector.broadcast %298 : vector<1x6x1xf32> to vector<2x6x384xf32>
    %301 = arith.mulf %299, %300 : vector<2x6x384xf32>
    %302 = arith.addf %294, %301 : vector<2x6x384xf32>
    %303 = vector.extract_strided_slice %179 {offsets = [0, 3, 0], sizes = [2, 1, 384], strides = [1, 1, 1]} : vector<2x4x384xf32> to vector<2x1x384xf32>
    %c15 = arith.constant 15 : index
    %c0_72 = arith.constant 0 : index
    %c0_73 = arith.constant 0 : index
    %304 = vector.load %arg4[%c15, %c0_72, %c0_73] : memref<36x6x1xf32, #tpu.memory_space<vmem>>, vector<1x6x1xf32>
    %305 = vector.shape_cast %304 : vector<1x6x1xf32> to vector<6x1xf32>
    %306 = vector.shape_cast %305 : vector<6x1xf32> to vector<1x6x1xf32>
    %307 = vector.broadcast %303 : vector<2x1x384xf32> to vector<2x6x384xf32>
    %308 = vector.broadcast %306 : vector<1x6x1xf32> to vector<2x6x384xf32>
    %309 = arith.mulf %307, %308 : vector<2x6x384xf32>
    %310 = arith.addf %302, %309 : vector<2x6x384xf32>
    %311 = vector.extract_strided_slice %175 {offsets = [0, 0, 0], sizes = [2, 1, 384], strides = [1, 1, 1]} : vector<2x4x384xf32> to vector<2x1x384xf32>
    %c16 = arith.constant 16 : index
    %c0_74 = arith.constant 0 : index
    %c0_75 = arith.constant 0 : index
    %312 = vector.load %arg4[%c16, %c0_74, %c0_75] : memref<36x6x1xf32, #tpu.memory_space<vmem>>, vector<1x6x1xf32>
    %313 = vector.shape_cast %312 : vector<1x6x1xf32> to vector<6x1xf32>
    %314 = vector.shape_cast %313 : vector<6x1xf32> to vector<1x6x1xf32>
    %315 = vector.broadcast %311 : vector<2x1x384xf32> to vector<2x6x384xf32>
    %316 = vector.broadcast %314 : vector<1x6x1xf32> to vector<2x6x384xf32>
    %317 = arith.mulf %315, %316 : vector<2x6x384xf32>
    %318 = arith.addf %310, %317 : vector<2x6x384xf32>
    %319 = vector.extract_strided_slice %175 {offsets = [0, 1, 0], sizes = [2, 1, 384], strides = [1, 1, 1]} : vector<2x4x384xf32> to vector<2x1x384xf32>
    %c17 = arith.constant 17 : index
    %c0_76 = arith.constant 0 : index
    %c0_77 = arith.constant 0 : index
    %320 = vector.load %arg4[%c17, %c0_76, %c0_77] : memref<36x6x1xf32, #tpu.memory_space<vmem>>, vector<1x6x1xf32>
    %321 = vector.shape_cast %320 : vector<1x6x1xf32> to vector<6x1xf32>
    %322 = vector.shape_cast %321 : vector<6x1xf32> to vector<1x6x1xf32>
    %323 = vector.broadcast %319 : vector<2x1x384xf32> to vector<2x6x384xf32>
    %324 = vector.broadcast %322 : vector<1x6x1xf32> to vector<2x6x384xf32>
    %325 = arith.mulf %323, %324 : vector<2x6x384xf32>
    %326 = arith.addf %318, %325 : vector<2x6x384xf32>
    %327 = vector.extract_strided_slice %175 {offsets = [0, 2, 0], sizes = [2, 1, 384], strides = [1, 1, 1]} : vector<2x4x384xf32> to vector<2x1x384xf32>
    %c18 = arith.constant 18 : index
    %c0_78 = arith.constant 0 : index
    %c0_79 = arith.constant 0 : index
    %328 = vector.load %arg4[%c18, %c0_78, %c0_79] : memref<36x6x1xf32, #tpu.memory_space<vmem>>, vector<1x6x1xf32>
    %329 = vector.shape_cast %328 : vector<1x6x1xf32> to vector<6x1xf32>
    %330 = vector.shape_cast %329 : vector<6x1xf32> to vector<1x6x1xf32>
    %331 = vector.broadcast %327 : vector<2x1x384xf32> to vector<2x6x384xf32>
    %332 = vector.broadcast %330 : vector<1x6x1xf32> to vector<2x6x384xf32>
    %333 = arith.mulf %331, %332 : vector<2x6x384xf32>
    %334 = arith.addf %326, %333 : vector<2x6x384xf32>
    %335 = vector.extract_strided_slice %175 {offsets = [0, 3, 0], sizes = [2, 1, 384], strides = [1, 1, 1]} : vector<2x4x384xf32> to vector<2x1x384xf32>
    %c19 = arith.constant 19 : index
    %c0_80 = arith.constant 0 : index
    %c0_81 = arith.constant 0 : index
    %336 = vector.load %arg4[%c19, %c0_80, %c0_81] : memref<36x6x1xf32, #tpu.memory_space<vmem>>, vector<1x6x1xf32>
    %337 = vector.shape_cast %336 : vector<1x6x1xf32> to vector<6x1xf32>
    %338 = vector.shape_cast %337 : vector<6x1xf32> to vector<1x6x1xf32>
    %339 = vector.broadcast %335 : vector<2x1x384xf32> to vector<2x6x384xf32>
    %340 = vector.broadcast %338 : vector<1x6x1xf32> to vector<2x6x384xf32>
    %341 = arith.mulf %339, %340 : vector<2x6x384xf32>
    %342 = arith.addf %334, %341 : vector<2x6x384xf32>
    %343 = vector.extract_strided_slice %180 {offsets = [0, 0, 0], sizes = [2, 1, 384], strides = [1, 1, 1]} : vector<2x4x384xf32> to vector<2x1x384xf32>
    %c20 = arith.constant 20 : index
    %c0_82 = arith.constant 0 : index
    %c0_83 = arith.constant 0 : index
    %344 = vector.load %arg4[%c20, %c0_82, %c0_83] : memref<36x6x1xf32, #tpu.memory_space<vmem>>, vector<1x6x1xf32>
    %345 = vector.shape_cast %344 : vector<1x6x1xf32> to vector<6x1xf32>
    %346 = vector.shape_cast %345 : vector<6x1xf32> to vector<1x6x1xf32>
    %347 = vector.broadcast %343 : vector<2x1x384xf32> to vector<2x6x384xf32>
    %348 = vector.broadcast %346 : vector<1x6x1xf32> to vector<2x6x384xf32>
    %349 = arith.mulf %347, %348 : vector<2x6x384xf32>
    %350 = arith.addf %342, %349 : vector<2x6x384xf32>
    %351 = vector.extract_strided_slice %180 {offsets = [0, 1, 0], sizes = [2, 1, 384], strides = [1, 1, 1]} : vector<2x4x384xf32> to vector<2x1x384xf32>
    %c21 = arith.constant 21 : index
    %c0_84 = arith.constant 0 : index
    %c0_85 = arith.constant 0 : index
    %352 = vector.load %arg4[%c21, %c0_84, %c0_85] : memref<36x6x1xf32, #tpu.memory_space<vmem>>, vector<1x6x1xf32>
    %353 = vector.shape_cast %352 : vector<1x6x1xf32> to vector<6x1xf32>
    %354 = vector.shape_cast %353 : vector<6x1xf32> to vector<1x6x1xf32>
    %355 = vector.broadcast %351 : vector<2x1x384xf32> to vector<2x6x384xf32>
    %356 = vector.broadcast %354 : vector<1x6x1xf32> to vector<2x6x384xf32>
    %357 = arith.mulf %355, %356 : vector<2x6x384xf32>
    %358 = arith.addf %350, %357 : vector<2x6x384xf32>
    %359 = vector.extract_strided_slice %180 {offsets = [0, 2, 0], sizes = [2, 1, 384], strides = [1, 1, 1]} : vector<2x4x384xf32> to vector<2x1x384xf32>
    %c22 = arith.constant 22 : index
    %c0_86 = arith.constant 0 : index
    %c0_87 = arith.constant 0 : index
    %360 = vector.load %arg4[%c22, %c0_86, %c0_87] : memref<36x6x1xf32, #tpu.memory_space<vmem>>, vector<1x6x1xf32>
    %361 = vector.shape_cast %360 : vector<1x6x1xf32> to vector<6x1xf32>
    %362 = vector.shape_cast %361 : vector<6x1xf32> to vector<1x6x1xf32>
    %363 = vector.broadcast %359 : vector<2x1x384xf32> to vector<2x6x384xf32>
    %364 = vector.broadcast %362 : vector<1x6x1xf32> to vector<2x6x384xf32>
    %365 = arith.mulf %363, %364 : vector<2x6x384xf32>
    %366 = arith.addf %358, %365 : vector<2x6x384xf32>
    %367 = vector.extract_strided_slice %180 {offsets = [0, 3, 0], sizes = [2, 1, 384], strides = [1, 1, 1]} : vector<2x4x384xf32> to vector<2x1x384xf32>
    %c23 = arith.constant 23 : index
    %c0_88 = arith.constant 0 : index
    %c0_89 = arith.constant 0 : index
    %368 = vector.load %arg4[%c23, %c0_88, %c0_89] : memref<36x6x1xf32, #tpu.memory_space<vmem>>, vector<1x6x1xf32>
    %369 = vector.shape_cast %368 : vector<1x6x1xf32> to vector<6x1xf32>
    %370 = vector.shape_cast %369 : vector<6x1xf32> to vector<1x6x1xf32>
    %371 = vector.broadcast %367 : vector<2x1x384xf32> to vector<2x6x384xf32>
    %372 = vector.broadcast %370 : vector<1x6x1xf32> to vector<2x6x384xf32>
    %373 = arith.mulf %371, %372 : vector<2x6x384xf32>
    %374 = arith.addf %366, %373 : vector<2x6x384xf32>
    %375 = vector.extract_strided_slice %181 {offsets = [0, 0, 0], sizes = [2, 1, 384], strides = [1, 1, 1]} : vector<2x4x384xf32> to vector<2x1x384xf32>
    %c24 = arith.constant 24 : index
    %c0_90 = arith.constant 0 : index
    %c0_91 = arith.constant 0 : index
    %376 = vector.load %arg4[%c24, %c0_90, %c0_91] : memref<36x6x1xf32, #tpu.memory_space<vmem>>, vector<1x6x1xf32>
    %377 = vector.shape_cast %376 : vector<1x6x1xf32> to vector<6x1xf32>
    %378 = vector.shape_cast %377 : vector<6x1xf32> to vector<1x6x1xf32>
    %379 = vector.broadcast %375 : vector<2x1x384xf32> to vector<2x6x384xf32>
    %380 = vector.broadcast %378 : vector<1x6x1xf32> to vector<2x6x384xf32>
    %381 = arith.mulf %379, %380 : vector<2x6x384xf32>
    %382 = arith.addf %374, %381 : vector<2x6x384xf32>
    %383 = vector.extract_strided_slice %181 {offsets = [0, 1, 0], sizes = [2, 1, 384], strides = [1, 1, 1]} : vector<2x4x384xf32> to vector<2x1x384xf32>
    %c25 = arith.constant 25 : index
    %c0_92 = arith.constant 0 : index
    %c0_93 = arith.constant 0 : index
    %384 = vector.load %arg4[%c25, %c0_92, %c0_93] : memref<36x6x1xf32, #tpu.memory_space<vmem>>, vector<1x6x1xf32>
    %385 = vector.shape_cast %384 : vector<1x6x1xf32> to vector<6x1xf32>
    %386 = vector.shape_cast %385 : vector<6x1xf32> to vector<1x6x1xf32>
    %387 = vector.broadcast %383 : vector<2x1x384xf32> to vector<2x6x384xf32>
    %388 = vector.broadcast %386 : vector<1x6x1xf32> to vector<2x6x384xf32>
    %389 = arith.mulf %387, %388 : vector<2x6x384xf32>
    %390 = arith.addf %382, %389 : vector<2x6x384xf32>
    %391 = vector.extract_strided_slice %181 {offsets = [0, 2, 0], sizes = [2, 1, 384], strides = [1, 1, 1]} : vector<2x4x384xf32> to vector<2x1x384xf32>
    %c26 = arith.constant 26 : index
    %c0_94 = arith.constant 0 : index
    %c0_95 = arith.constant 0 : index
    %392 = vector.load %arg4[%c26, %c0_94, %c0_95] : memref<36x6x1xf32, #tpu.memory_space<vmem>>, vector<1x6x1xf32>
    %393 = vector.shape_cast %392 : vector<1x6x1xf32> to vector<6x1xf32>
    %394 = vector.shape_cast %393 : vector<6x1xf32> to vector<1x6x1xf32>
    %395 = vector.broadcast %391 : vector<2x1x384xf32> to vector<2x6x384xf32>
    %396 = vector.broadcast %394 : vector<1x6x1xf32> to vector<2x6x384xf32>
    %397 = arith.mulf %395, %396 : vector<2x6x384xf32>
    %398 = arith.addf %390, %397 : vector<2x6x384xf32>
    %399 = vector.extract_strided_slice %181 {offsets = [0, 3, 0], sizes = [2, 1, 384], strides = [1, 1, 1]} : vector<2x4x384xf32> to vector<2x1x384xf32>
    %c27 = arith.constant 27 : index
    %c0_96 = arith.constant 0 : index
    %c0_97 = arith.constant 0 : index
    %400 = vector.load %arg4[%c27, %c0_96, %c0_97] : memref<36x6x1xf32, #tpu.memory_space<vmem>>, vector<1x6x1xf32>
    %401 = vector.shape_cast %400 : vector<1x6x1xf32> to vector<6x1xf32>
    %402 = vector.shape_cast %401 : vector<6x1xf32> to vector<1x6x1xf32>
    %403 = vector.broadcast %399 : vector<2x1x384xf32> to vector<2x6x384xf32>
    %404 = vector.broadcast %402 : vector<1x6x1xf32> to vector<2x6x384xf32>
    %405 = arith.mulf %403, %404 : vector<2x6x384xf32>
    %406 = arith.addf %398, %405 : vector<2x6x384xf32>
    %407 = vector.extract_strided_slice %182 {offsets = [0, 0, 0], sizes = [2, 1, 384], strides = [1, 1, 1]} : vector<2x4x384xf32> to vector<2x1x384xf32>
    %c28 = arith.constant 28 : index
    %c0_98 = arith.constant 0 : index
    %c0_99 = arith.constant 0 : index
    %408 = vector.load %arg4[%c28, %c0_98, %c0_99] : memref<36x6x1xf32, #tpu.memory_space<vmem>>, vector<1x6x1xf32>
    %409 = vector.shape_cast %408 : vector<1x6x1xf32> to vector<6x1xf32>
    %410 = vector.shape_cast %409 : vector<6x1xf32> to vector<1x6x1xf32>
    %411 = vector.broadcast %407 : vector<2x1x384xf32> to vector<2x6x384xf32>
    %412 = vector.broadcast %410 : vector<1x6x1xf32> to vector<2x6x384xf32>
    %413 = arith.mulf %411, %412 : vector<2x6x384xf32>
    %414 = arith.addf %406, %413 : vector<2x6x384xf32>
    %415 = vector.extract_strided_slice %182 {offsets = [0, 1, 0], sizes = [2, 1, 384], strides = [1, 1, 1]} : vector<2x4x384xf32> to vector<2x1x384xf32>
    %c29 = arith.constant 29 : index
    %c0_100 = arith.constant 0 : index
    %c0_101 = arith.constant 0 : index
    %416 = vector.load %arg4[%c29, %c0_100, %c0_101] : memref<36x6x1xf32, #tpu.memory_space<vmem>>, vector<1x6x1xf32>
    %417 = vector.shape_cast %416 : vector<1x6x1xf32> to vector<6x1xf32>
    %418 = vector.shape_cast %417 : vector<6x1xf32> to vector<1x6x1xf32>
    %419 = vector.broadcast %415 : vector<2x1x384xf32> to vector<2x6x384xf32>
    %420 = vector.broadcast %418 : vector<1x6x1xf32> to vector<2x6x384xf32>
    %421 = arith.mulf %419, %420 : vector<2x6x384xf32>
    %422 = arith.addf %414, %421 : vector<2x6x384xf32>
    %423 = vector.extract_strided_slice %182 {offsets = [0, 2, 0], sizes = [2, 1, 384], strides = [1, 1, 1]} : vector<2x4x384xf32> to vector<2x1x384xf32>
    %c30 = arith.constant 30 : index
    %c0_102 = arith.constant 0 : index
    %c0_103 = arith.constant 0 : index
    %424 = vector.load %arg4[%c30, %c0_102, %c0_103] : memref<36x6x1xf32, #tpu.memory_space<vmem>>, vector<1x6x1xf32>
    %425 = vector.shape_cast %424 : vector<1x6x1xf32> to vector<6x1xf32>
    %426 = vector.shape_cast %425 : vector<6x1xf32> to vector<1x6x1xf32>
    %427 = vector.broadcast %423 : vector<2x1x384xf32> to vector<2x6x384xf32>
    %428 = vector.broadcast %426 : vector<1x6x1xf32> to vector<2x6x384xf32>
    %429 = arith.mulf %427, %428 : vector<2x6x384xf32>
    %430 = arith.addf %422, %429 : vector<2x6x384xf32>
    %431 = vector.extract_strided_slice %182 {offsets = [0, 3, 0], sizes = [2, 1, 384], strides = [1, 1, 1]} : vector<2x4x384xf32> to vector<2x1x384xf32>
    %c31 = arith.constant 31 : index
    %c0_104 = arith.constant 0 : index
    %c0_105 = arith.constant 0 : index
    %432 = vector.load %arg4[%c31, %c0_104, %c0_105] : memref<36x6x1xf32, #tpu.memory_space<vmem>>, vector<1x6x1xf32>
    %433 = vector.shape_cast %432 : vector<1x6x1xf32> to vector<6x1xf32>
    %434 = vector.shape_cast %433 : vector<6x1xf32> to vector<1x6x1xf32>
    %435 = vector.broadcast %431 : vector<2x1x384xf32> to vector<2x6x384xf32>
    %436 = vector.broadcast %434 : vector<1x6x1xf32> to vector<2x6x384xf32>
    %437 = arith.mulf %435, %436 : vector<2x6x384xf32>
    %438 = arith.addf %430, %437 : vector<2x6x384xf32>
    %439 = vector.extract_strided_slice %183 {offsets = [0, 0, 0], sizes = [2, 1, 384], strides = [1, 1, 1]} : vector<2x4x384xf32> to vector<2x1x384xf32>
    %c32 = arith.constant 32 : index
    %c0_106 = arith.constant 0 : index
    %c0_107 = arith.constant 0 : index
    %440 = vector.load %arg4[%c32, %c0_106, %c0_107] : memref<36x6x1xf32, #tpu.memory_space<vmem>>, vector<1x6x1xf32>
    %441 = vector.shape_cast %440 : vector<1x6x1xf32> to vector<6x1xf32>
    %442 = vector.shape_cast %441 : vector<6x1xf32> to vector<1x6x1xf32>
    %443 = vector.broadcast %439 : vector<2x1x384xf32> to vector<2x6x384xf32>
    %444 = vector.broadcast %442 : vector<1x6x1xf32> to vector<2x6x384xf32>
    %445 = arith.mulf %443, %444 : vector<2x6x384xf32>
    %446 = arith.addf %438, %445 : vector<2x6x384xf32>
    %447 = vector.extract_strided_slice %183 {offsets = [0, 1, 0], sizes = [2, 1, 384], strides = [1, 1, 1]} : vector<2x4x384xf32> to vector<2x1x384xf32>
    %c33 = arith.constant 33 : index
    %c0_108 = arith.constant 0 : index
    %c0_109 = arith.constant 0 : index
    %448 = vector.load %arg4[%c33, %c0_108, %c0_109] : memref<36x6x1xf32, #tpu.memory_space<vmem>>, vector<1x6x1xf32>
    %449 = vector.shape_cast %448 : vector<1x6x1xf32> to vector<6x1xf32>
    %450 = vector.shape_cast %449 : vector<6x1xf32> to vector<1x6x1xf32>
    %451 = vector.broadcast %447 : vector<2x1x384xf32> to vector<2x6x384xf32>
    %452 = vector.broadcast %450 : vector<1x6x1xf32> to vector<2x6x384xf32>
    %453 = arith.mulf %451, %452 : vector<2x6x384xf32>
    %454 = arith.addf %446, %453 : vector<2x6x384xf32>
    %455 = vector.extract_strided_slice %183 {offsets = [0, 2, 0], sizes = [2, 1, 384], strides = [1, 1, 1]} : vector<2x4x384xf32> to vector<2x1x384xf32>
    %c34 = arith.constant 34 : index
    %c0_110 = arith.constant 0 : index
    %c0_111 = arith.constant 0 : index
    %456 = vector.load %arg4[%c34, %c0_110, %c0_111] : memref<36x6x1xf32, #tpu.memory_space<vmem>>, vector<1x6x1xf32>
    %457 = vector.shape_cast %456 : vector<1x6x1xf32> to vector<6x1xf32>
    %458 = vector.shape_cast %457 : vector<6x1xf32> to vector<1x6x1xf32>
    %459 = vector.broadcast %455 : vector<2x1x384xf32> to vector<2x6x384xf32>
    %460 = vector.broadcast %458 : vector<1x6x1xf32> to vector<2x6x384xf32>
    %461 = arith.mulf %459, %460 : vector<2x6x384xf32>
    %462 = arith.addf %454, %461 : vector<2x6x384xf32>
    %463 = vector.extract_strided_slice %183 {offsets = [0, 3, 0], sizes = [2, 1, 384], strides = [1, 1, 1]} : vector<2x4x384xf32> to vector<2x1x384xf32>
    %c35 = arith.constant 35 : index
    %c0_112 = arith.constant 0 : index
    %c0_113 = arith.constant 0 : index
    %464 = vector.load %arg4[%c35, %c0_112, %c0_113] : memref<36x6x1xf32, #tpu.memory_space<vmem>>, vector<1x6x1xf32>
    %465 = vector.shape_cast %464 : vector<1x6x1xf32> to vector<6x1xf32>
    %466 = vector.shape_cast %465 : vector<6x1xf32> to vector<1x6x1xf32>
    %467 = vector.broadcast %463 : vector<2x1x384xf32> to vector<2x6x384xf32>
    %468 = vector.broadcast %466 : vector<1x6x1xf32> to vector<2x6x384xf32>
    %469 = arith.mulf %467, %468 : vector<2x6x384xf32>
    %470 = arith.addf %462, %469 : vector<2x6x384xf32>
    %c0_114 = arith.constant 0 : index
    %c0_115 = arith.constant 0 : index
    %c0_116 = arith.constant 0 : index
    %471 = vector.load %arg5[%c0_114, %c0_115, %c0_116] : memref<1x6x1xf32, #tpu.memory_space<vmem>>, vector<1x6x1xf32>
    %472 = vector.broadcast %471 : vector<1x6x1xf32> to vector<2x6x384xf32>
    %473 = arith.addf %470, %472 : vector<2x6x384xf32>
    %cst_117 = arith.constant 0.000000e+00 : f32
    %474 = vector.broadcast %cst_117 : f32 to vector<2x6x384xf32>
    %475 = arith.maximumf %473, %474 : vector<2x6x384xf32>
    %476 = arith.maximumf %176, %177 : vector<2x4x384xf32>
    %477 = arith.maximumf %476, %178 : vector<2x4x384xf32>
    %478 = arith.maximumf %477, %179 : vector<2x4x384xf32>
    %479 = arith.maximumf %478, %175 : vector<2x4x384xf32>
    %480 = arith.maximumf %479, %180 : vector<2x4x384xf32>
    %481 = arith.maximumf %480, %181 : vector<2x4x384xf32>
    %482 = arith.maximumf %481, %182 : vector<2x4x384xf32>
    %483 = arith.maximumf %482, %183 : vector<2x4x384xf32>
    %484 = vector.extract_strided_slice %475 {offsets = [0, 0, 0], sizes = [2, 1, 384], strides = [1, 1, 1]} : vector<2x6x384xf32> to vector<2x1x384xf32>
    %c0_118 = arith.constant 0 : index
    %c0_119 = arith.constant 0 : index
    %c0_120 = arith.constant 0 : index
    %485 = vector.load %arg6[%c0_118, %c0_119, %c0_120] : memref<6x8x1xf32, #tpu.memory_space<vmem>>, vector<1x8x1xf32>
    %486 = vector.shape_cast %485 : vector<1x8x1xf32> to vector<8x1xf32>
    %487 = vector.shape_cast %486 : vector<8x1xf32> to vector<1x8x1xf32>
    %488 = vector.broadcast %484 : vector<2x1x384xf32> to vector<2x8x384xf32>
    %489 = vector.broadcast %487 : vector<1x8x1xf32> to vector<2x8x384xf32>
    %490 = arith.mulf %488, %489 : vector<2x8x384xf32>
    %491 = vector.extract_strided_slice %475 {offsets = [0, 1, 0], sizes = [2, 1, 384], strides = [1, 1, 1]} : vector<2x6x384xf32> to vector<2x1x384xf32>
    %c1_121 = arith.constant 1 : index
    %c0_122 = arith.constant 0 : index
    %c0_123 = arith.constant 0 : index
    %492 = vector.load %arg6[%c1_121, %c0_122, %c0_123] : memref<6x8x1xf32, #tpu.memory_space<vmem>>, vector<1x8x1xf32>
    %493 = vector.shape_cast %492 : vector<1x8x1xf32> to vector<8x1xf32>
    %494 = vector.shape_cast %493 : vector<8x1xf32> to vector<1x8x1xf32>
    %495 = vector.broadcast %491 : vector<2x1x384xf32> to vector<2x8x384xf32>
    %496 = vector.broadcast %494 : vector<1x8x1xf32> to vector<2x8x384xf32>
    %497 = arith.mulf %495, %496 : vector<2x8x384xf32>
    %498 = arith.addf %490, %497 : vector<2x8x384xf32>
    %499 = vector.extract_strided_slice %475 {offsets = [0, 2, 0], sizes = [2, 1, 384], strides = [1, 1, 1]} : vector<2x6x384xf32> to vector<2x1x384xf32>
    %c2_124 = arith.constant 2 : index
    %c0_125 = arith.constant 0 : index
    %c0_126 = arith.constant 0 : index
    %500 = vector.load %arg6[%c2_124, %c0_125, %c0_126] : memref<6x8x1xf32, #tpu.memory_space<vmem>>, vector<1x8x1xf32>
    %501 = vector.shape_cast %500 : vector<1x8x1xf32> to vector<8x1xf32>
    %502 = vector.shape_cast %501 : vector<8x1xf32> to vector<1x8x1xf32>
    %503 = vector.broadcast %499 : vector<2x1x384xf32> to vector<2x8x384xf32>
    %504 = vector.broadcast %502 : vector<1x8x1xf32> to vector<2x8x384xf32>
    %505 = arith.mulf %503, %504 : vector<2x8x384xf32>
    %506 = arith.addf %498, %505 : vector<2x8x384xf32>
    %507 = vector.extract_strided_slice %475 {offsets = [0, 3, 0], sizes = [2, 1, 384], strides = [1, 1, 1]} : vector<2x6x384xf32> to vector<2x1x384xf32>
    %c3_127 = arith.constant 3 : index
    %c0_128 = arith.constant 0 : index
    %c0_129 = arith.constant 0 : index
    %508 = vector.load %arg6[%c3_127, %c0_128, %c0_129] : memref<6x8x1xf32, #tpu.memory_space<vmem>>, vector<1x8x1xf32>
    %509 = vector.shape_cast %508 : vector<1x8x1xf32> to vector<8x1xf32>
    %510 = vector.shape_cast %509 : vector<8x1xf32> to vector<1x8x1xf32>
    %511 = vector.broadcast %507 : vector<2x1x384xf32> to vector<2x8x384xf32>
    %512 = vector.broadcast %510 : vector<1x8x1xf32> to vector<2x8x384xf32>
    %513 = arith.mulf %511, %512 : vector<2x8x384xf32>
    %514 = arith.addf %506, %513 : vector<2x8x384xf32>
    %515 = vector.extract_strided_slice %475 {offsets = [0, 4, 0], sizes = [2, 1, 384], strides = [1, 1, 1]} : vector<2x6x384xf32> to vector<2x1x384xf32>
    %c4_130 = arith.constant 4 : index
    %c0_131 = arith.constant 0 : index
    %c0_132 = arith.constant 0 : index
    %516 = vector.load %arg6[%c4_130, %c0_131, %c0_132] : memref<6x8x1xf32, #tpu.memory_space<vmem>>, vector<1x8x1xf32>
    %517 = vector.shape_cast %516 : vector<1x8x1xf32> to vector<8x1xf32>
    %518 = vector.shape_cast %517 : vector<8x1xf32> to vector<1x8x1xf32>
    %519 = vector.broadcast %515 : vector<2x1x384xf32> to vector<2x8x384xf32>
    %520 = vector.broadcast %518 : vector<1x8x1xf32> to vector<2x8x384xf32>
    %521 = arith.mulf %519, %520 : vector<2x8x384xf32>
    %522 = arith.addf %514, %521 : vector<2x8x384xf32>
    %523 = vector.extract_strided_slice %475 {offsets = [0, 5, 0], sizes = [2, 1, 384], strides = [1, 1, 1]} : vector<2x6x384xf32> to vector<2x1x384xf32>
    %c5_133 = arith.constant 5 : index
    %c0_134 = arith.constant 0 : index
    %c0_135 = arith.constant 0 : index
    %524 = vector.load %arg6[%c5_133, %c0_134, %c0_135] : memref<6x8x1xf32, #tpu.memory_space<vmem>>, vector<1x8x1xf32>
    %525 = vector.shape_cast %524 : vector<1x8x1xf32> to vector<8x1xf32>
    %526 = vector.shape_cast %525 : vector<8x1xf32> to vector<1x8x1xf32>
    %527 = vector.broadcast %523 : vector<2x1x384xf32> to vector<2x8x384xf32>
    %528 = vector.broadcast %526 : vector<1x8x1xf32> to vector<2x8x384xf32>
    %529 = arith.mulf %527, %528 : vector<2x8x384xf32>
    %530 = arith.addf %522, %529 : vector<2x8x384xf32>
    %531 = vector.extract_strided_slice %483 {offsets = [0, 0, 0], sizes = [2, 1, 384], strides = [1, 1, 1]} : vector<2x4x384xf32> to vector<2x1x384xf32>
    %c0_136 = arith.constant 0 : index
    %c0_137 = arith.constant 0 : index
    %c0_138 = arith.constant 0 : index
    %532 = vector.load %arg7[%c0_136, %c0_137, %c0_138] : memref<4x8x1xf32, #tpu.memory_space<vmem>>, vector<1x8x1xf32>
    %533 = vector.shape_cast %532 : vector<1x8x1xf32> to vector<8x1xf32>
    %534 = vector.shape_cast %533 : vector<8x1xf32> to vector<1x8x1xf32>
    %535 = vector.broadcast %531 : vector<2x1x384xf32> to vector<2x8x384xf32>
    %536 = vector.broadcast %534 : vector<1x8x1xf32> to vector<2x8x384xf32>
    %537 = arith.mulf %535, %536 : vector<2x8x384xf32>
    %538 = arith.addf %530, %537 : vector<2x8x384xf32>
    %539 = vector.extract_strided_slice %483 {offsets = [0, 1, 0], sizes = [2, 1, 384], strides = [1, 1, 1]} : vector<2x4x384xf32> to vector<2x1x384xf32>
    %c1_139 = arith.constant 1 : index
    %c0_140 = arith.constant 0 : index
    %c0_141 = arith.constant 0 : index
    %540 = vector.load %arg7[%c1_139, %c0_140, %c0_141] : memref<4x8x1xf32, #tpu.memory_space<vmem>>, vector<1x8x1xf32>
    %541 = vector.shape_cast %540 : vector<1x8x1xf32> to vector<8x1xf32>
    %542 = vector.shape_cast %541 : vector<8x1xf32> to vector<1x8x1xf32>
    %543 = vector.broadcast %539 : vector<2x1x384xf32> to vector<2x8x384xf32>
    %544 = vector.broadcast %542 : vector<1x8x1xf32> to vector<2x8x384xf32>
    %545 = arith.mulf %543, %544 : vector<2x8x384xf32>
    %546 = arith.addf %538, %545 : vector<2x8x384xf32>
    %547 = vector.extract_strided_slice %483 {offsets = [0, 2, 0], sizes = [2, 1, 384], strides = [1, 1, 1]} : vector<2x4x384xf32> to vector<2x1x384xf32>
    %c2_142 = arith.constant 2 : index
    %c0_143 = arith.constant 0 : index
    %c0_144 = arith.constant 0 : index
    %548 = vector.load %arg7[%c2_142, %c0_143, %c0_144] : memref<4x8x1xf32, #tpu.memory_space<vmem>>, vector<1x8x1xf32>
    %549 = vector.shape_cast %548 : vector<1x8x1xf32> to vector<8x1xf32>
    %550 = vector.shape_cast %549 : vector<8x1xf32> to vector<1x8x1xf32>
    %551 = vector.broadcast %547 : vector<2x1x384xf32> to vector<2x8x384xf32>
    %552 = vector.broadcast %550 : vector<1x8x1xf32> to vector<2x8x384xf32>
    %553 = arith.mulf %551, %552 : vector<2x8x384xf32>
    %554 = arith.addf %546, %553 : vector<2x8x384xf32>
    %555 = vector.extract_strided_slice %483 {offsets = [0, 3, 0], sizes = [2, 1, 384], strides = [1, 1, 1]} : vector<2x4x384xf32> to vector<2x1x384xf32>
    %c3_145 = arith.constant 3 : index
    %c0_146 = arith.constant 0 : index
    %c0_147 = arith.constant 0 : index
    %556 = vector.load %arg7[%c3_145, %c0_146, %c0_147] : memref<4x8x1xf32, #tpu.memory_space<vmem>>, vector<1x8x1xf32>
    %557 = vector.shape_cast %556 : vector<1x8x1xf32> to vector<8x1xf32>
    %558 = vector.shape_cast %557 : vector<8x1xf32> to vector<1x8x1xf32>
    %559 = vector.broadcast %555 : vector<2x1x384xf32> to vector<2x8x384xf32>
    %560 = vector.broadcast %558 : vector<1x8x1xf32> to vector<2x8x384xf32>
    %561 = arith.mulf %559, %560 : vector<2x8x384xf32>
    %562 = arith.addf %554, %561 : vector<2x8x384xf32>
    %563 = vector.extract_strided_slice %175 {offsets = [0, 0, 0], sizes = [2, 1, 384], strides = [1, 1, 1]} : vector<2x4x384xf32> to vector<2x1x384xf32>
    %c0_148 = arith.constant 0 : index
    %c0_149 = arith.constant 0 : index
    %c0_150 = arith.constant 0 : index
    %564 = vector.load %arg8[%c0_148, %c0_149, %c0_150] : memref<4x8x1xf32, #tpu.memory_space<vmem>>, vector<1x8x1xf32>
    %565 = vector.shape_cast %564 : vector<1x8x1xf32> to vector<8x1xf32>
    %566 = vector.shape_cast %565 : vector<8x1xf32> to vector<1x8x1xf32>
    %567 = vector.broadcast %563 : vector<2x1x384xf32> to vector<2x8x384xf32>
    %568 = vector.broadcast %566 : vector<1x8x1xf32> to vector<2x8x384xf32>
    %569 = arith.mulf %567, %568 : vector<2x8x384xf32>
    %570 = arith.addf %562, %569 : vector<2x8x384xf32>
    %571 = vector.extract_strided_slice %175 {offsets = [0, 1, 0], sizes = [2, 1, 384], strides = [1, 1, 1]} : vector<2x4x384xf32> to vector<2x1x384xf32>
    %c1_151 = arith.constant 1 : index
    %c0_152 = arith.constant 0 : index
    %c0_153 = arith.constant 0 : index
    %572 = vector.load %arg8[%c1_151, %c0_152, %c0_153] : memref<4x8x1xf32, #tpu.memory_space<vmem>>, vector<1x8x1xf32>
    %573 = vector.shape_cast %572 : vector<1x8x1xf32> to vector<8x1xf32>
    %574 = vector.shape_cast %573 : vector<8x1xf32> to vector<1x8x1xf32>
    %575 = vector.broadcast %571 : vector<2x1x384xf32> to vector<2x8x384xf32>
    %576 = vector.broadcast %574 : vector<1x8x1xf32> to vector<2x8x384xf32>
    %577 = arith.mulf %575, %576 : vector<2x8x384xf32>
    %578 = arith.addf %570, %577 : vector<2x8x384xf32>
    %579 = vector.extract_strided_slice %175 {offsets = [0, 2, 0], sizes = [2, 1, 384], strides = [1, 1, 1]} : vector<2x4x384xf32> to vector<2x1x384xf32>
    %c2_154 = arith.constant 2 : index
    %c0_155 = arith.constant 0 : index
    %c0_156 = arith.constant 0 : index
    %580 = vector.load %arg8[%c2_154, %c0_155, %c0_156] : memref<4x8x1xf32, #tpu.memory_space<vmem>>, vector<1x8x1xf32>
    %581 = vector.shape_cast %580 : vector<1x8x1xf32> to vector<8x1xf32>
    %582 = vector.shape_cast %581 : vector<8x1xf32> to vector<1x8x1xf32>
    %583 = vector.broadcast %579 : vector<2x1x384xf32> to vector<2x8x384xf32>
    %584 = vector.broadcast %582 : vector<1x8x1xf32> to vector<2x8x384xf32>
    %585 = arith.mulf %583, %584 : vector<2x8x384xf32>
    %586 = arith.addf %578, %585 : vector<2x8x384xf32>
    %587 = vector.extract_strided_slice %175 {offsets = [0, 3, 0], sizes = [2, 1, 384], strides = [1, 1, 1]} : vector<2x4x384xf32> to vector<2x1x384xf32>
    %c3_157 = arith.constant 3 : index
    %c0_158 = arith.constant 0 : index
    %c0_159 = arith.constant 0 : index
    %588 = vector.load %arg8[%c3_157, %c0_158, %c0_159] : memref<4x8x1xf32, #tpu.memory_space<vmem>>, vector<1x8x1xf32>
    %589 = vector.shape_cast %588 : vector<1x8x1xf32> to vector<8x1xf32>
    %590 = vector.shape_cast %589 : vector<8x1xf32> to vector<1x8x1xf32>
    %591 = vector.broadcast %587 : vector<2x1x384xf32> to vector<2x8x384xf32>
    %592 = vector.broadcast %590 : vector<1x8x1xf32> to vector<2x8x384xf32>
    %593 = arith.mulf %591, %592 : vector<2x8x384xf32>
    %594 = arith.addf %586, %593 : vector<2x8x384xf32>
    %c0_160 = arith.constant 0 : index
    %c0_161 = arith.constant 0 : index
    %c0_162 = arith.constant 0 : index
    %595 = vector.load %arg9[%c0_160, %c0_161, %c0_162] : memref<1x8x1xf32, #tpu.memory_space<vmem>>, vector<1x8x1xf32>
    %596 = vector.broadcast %595 : vector<1x8x1xf32> to vector<2x8x384xf32>
    %597 = arith.addf %594, %596 : vector<2x8x384xf32>
    %cst_163 = arith.constant 0.000000e+00 : f32
    %598 = vector.broadcast %cst_163 : f32 to vector<2x8x384xf32>
    %599 = arith.maximumf %597, %598 : vector<2x8x384xf32>
    %600 = vector.broadcast %97 : vector<1x1x384xf32> to vector<2x8x384xf32>
    %601 = arith.mulf %599, %600 : vector<2x8x384xf32>
    %c19_i32_164 = arith.constant 19 : i32
    %602 = tpu.dynamic_rotate %601 by %c19_i32_164 dim 2 : vector<2x8x384xf32>, i32 -> vector<2x8x384xf32>
    %c18_i32_165 = arith.constant 18 : i32
    %603 = tpu.dynamic_rotate %601 by %c18_i32_165 dim 2 : vector<2x8x384xf32>, i32 -> vector<2x8x384xf32>
    %c17_i32_166 = arith.constant 17 : i32
    %604 = tpu.dynamic_rotate %601 by %c17_i32_166 dim 2 : vector<2x8x384xf32>, i32 -> vector<2x8x384xf32>
    %c1_i32_167 = arith.constant 1 : i32
    %605 = tpu.dynamic_rotate %601 by %c1_i32_167 dim 2 : vector<2x8x384xf32>, i32 -> vector<2x8x384xf32>
    %c383_i32_168 = arith.constant 383 : i32
    %606 = tpu.dynamic_rotate %601 by %c383_i32_168 dim 2 : vector<2x8x384xf32>, i32 -> vector<2x8x384xf32>
    %c367_i32_169 = arith.constant 367 : i32
    %607 = tpu.dynamic_rotate %601 by %c367_i32_169 dim 2 : vector<2x8x384xf32>, i32 -> vector<2x8x384xf32>
    %c366_i32_170 = arith.constant 366 : i32
    %608 = tpu.dynamic_rotate %601 by %c366_i32_170 dim 2 : vector<2x8x384xf32>, i32 -> vector<2x8x384xf32>
    %c365_i32_171 = arith.constant 365 : i32
    %609 = tpu.dynamic_rotate %601 by %c365_i32_171 dim 2 : vector<2x8x384xf32>, i32 -> vector<2x8x384xf32>
    %610 = vector.extract_strided_slice %602 {offsets = [0, 0, 0], sizes = [2, 1, 384], strides = [1, 1, 1]} : vector<2x8x384xf32> to vector<2x1x384xf32>
    %c0_172 = arith.constant 0 : index
    %c0_173 = arith.constant 0 : index
    %c0_174 = arith.constant 0 : index
    %611 = vector.load %arg10[%c0_172, %c0_173, %c0_174] : memref<72x6x1xf32, #tpu.memory_space<vmem>>, vector<1x6x1xf32>
    %612 = vector.shape_cast %611 : vector<1x6x1xf32> to vector<6x1xf32>
    %613 = vector.shape_cast %612 : vector<6x1xf32> to vector<1x6x1xf32>
    %614 = vector.broadcast %610 : vector<2x1x384xf32> to vector<2x6x384xf32>
    %615 = vector.broadcast %613 : vector<1x6x1xf32> to vector<2x6x384xf32>
    %616 = arith.mulf %614, %615 : vector<2x6x384xf32>
    %617 = vector.extract_strided_slice %602 {offsets = [0, 1, 0], sizes = [2, 1, 384], strides = [1, 1, 1]} : vector<2x8x384xf32> to vector<2x1x384xf32>
    %c1_175 = arith.constant 1 : index
    %c0_176 = arith.constant 0 : index
    %c0_177 = arith.constant 0 : index
    %618 = vector.load %arg10[%c1_175, %c0_176, %c0_177] : memref<72x6x1xf32, #tpu.memory_space<vmem>>, vector<1x6x1xf32>
    %619 = vector.shape_cast %618 : vector<1x6x1xf32> to vector<6x1xf32>
    %620 = vector.shape_cast %619 : vector<6x1xf32> to vector<1x6x1xf32>
    %621 = vector.broadcast %617 : vector<2x1x384xf32> to vector<2x6x384xf32>
    %622 = vector.broadcast %620 : vector<1x6x1xf32> to vector<2x6x384xf32>
    %623 = arith.mulf %621, %622 : vector<2x6x384xf32>
    %624 = arith.addf %616, %623 : vector<2x6x384xf32>
    %625 = vector.extract_strided_slice %602 {offsets = [0, 2, 0], sizes = [2, 1, 384], strides = [1, 1, 1]} : vector<2x8x384xf32> to vector<2x1x384xf32>
    %c2_178 = arith.constant 2 : index
    %c0_179 = arith.constant 0 : index
    %c0_180 = arith.constant 0 : index
    %626 = vector.load %arg10[%c2_178, %c0_179, %c0_180] : memref<72x6x1xf32, #tpu.memory_space<vmem>>, vector<1x6x1xf32>
    %627 = vector.shape_cast %626 : vector<1x6x1xf32> to vector<6x1xf32>
    %628 = vector.shape_cast %627 : vector<6x1xf32> to vector<1x6x1xf32>
    %629 = vector.broadcast %625 : vector<2x1x384xf32> to vector<2x6x384xf32>
    %630 = vector.broadcast %628 : vector<1x6x1xf32> to vector<2x6x384xf32>
    %631 = arith.mulf %629, %630 : vector<2x6x384xf32>
    %632 = arith.addf %624, %631 : vector<2x6x384xf32>
    %633 = vector.extract_strided_slice %602 {offsets = [0, 3, 0], sizes = [2, 1, 384], strides = [1, 1, 1]} : vector<2x8x384xf32> to vector<2x1x384xf32>
    %c3_181 = arith.constant 3 : index
    %c0_182 = arith.constant 0 : index
    %c0_183 = arith.constant 0 : index
    %634 = vector.load %arg10[%c3_181, %c0_182, %c0_183] : memref<72x6x1xf32, #tpu.memory_space<vmem>>, vector<1x6x1xf32>
    %635 = vector.shape_cast %634 : vector<1x6x1xf32> to vector<6x1xf32>
    %636 = vector.shape_cast %635 : vector<6x1xf32> to vector<1x6x1xf32>
    %637 = vector.broadcast %633 : vector<2x1x384xf32> to vector<2x6x384xf32>
    %638 = vector.broadcast %636 : vector<1x6x1xf32> to vector<2x6x384xf32>
    %639 = arith.mulf %637, %638 : vector<2x6x384xf32>
    %640 = arith.addf %632, %639 : vector<2x6x384xf32>
    %641 = vector.extract_strided_slice %602 {offsets = [0, 4, 0], sizes = [2, 1, 384], strides = [1, 1, 1]} : vector<2x8x384xf32> to vector<2x1x384xf32>
    %c4_184 = arith.constant 4 : index
    %c0_185 = arith.constant 0 : index
    %c0_186 = arith.constant 0 : index
    %642 = vector.load %arg10[%c4_184, %c0_185, %c0_186] : memref<72x6x1xf32, #tpu.memory_space<vmem>>, vector<1x6x1xf32>
    %643 = vector.shape_cast %642 : vector<1x6x1xf32> to vector<6x1xf32>
    %644 = vector.shape_cast %643 : vector<6x1xf32> to vector<1x6x1xf32>
    %645 = vector.broadcast %641 : vector<2x1x384xf32> to vector<2x6x384xf32>
    %646 = vector.broadcast %644 : vector<1x6x1xf32> to vector<2x6x384xf32>
    %647 = arith.mulf %645, %646 : vector<2x6x384xf32>
    %648 = arith.addf %640, %647 : vector<2x6x384xf32>
    %649 = vector.extract_strided_slice %602 {offsets = [0, 5, 0], sizes = [2, 1, 384], strides = [1, 1, 1]} : vector<2x8x384xf32> to vector<2x1x384xf32>
    %c5_187 = arith.constant 5 : index
    %c0_188 = arith.constant 0 : index
    %c0_189 = arith.constant 0 : index
    %650 = vector.load %arg10[%c5_187, %c0_188, %c0_189] : memref<72x6x1xf32, #tpu.memory_space<vmem>>, vector<1x6x1xf32>
    %651 = vector.shape_cast %650 : vector<1x6x1xf32> to vector<6x1xf32>
    %652 = vector.shape_cast %651 : vector<6x1xf32> to vector<1x6x1xf32>
    %653 = vector.broadcast %649 : vector<2x1x384xf32> to vector<2x6x384xf32>
    %654 = vector.broadcast %652 : vector<1x6x1xf32> to vector<2x6x384xf32>
    %655 = arith.mulf %653, %654 : vector<2x6x384xf32>
    %656 = arith.addf %648, %655 : vector<2x6x384xf32>
    %657 = vector.extract_strided_slice %602 {offsets = [0, 6, 0], sizes = [2, 1, 384], strides = [1, 1, 1]} : vector<2x8x384xf32> to vector<2x1x384xf32>
    %c6_190 = arith.constant 6 : index
    %c0_191 = arith.constant 0 : index
    %c0_192 = arith.constant 0 : index
    %658 = vector.load %arg10[%c6_190, %c0_191, %c0_192] : memref<72x6x1xf32, #tpu.memory_space<vmem>>, vector<1x6x1xf32>
    %659 = vector.shape_cast %658 : vector<1x6x1xf32> to vector<6x1xf32>
    %660 = vector.shape_cast %659 : vector<6x1xf32> to vector<1x6x1xf32>
    %661 = vector.broadcast %657 : vector<2x1x384xf32> to vector<2x6x384xf32>
    %662 = vector.broadcast %660 : vector<1x6x1xf32> to vector<2x6x384xf32>
    %663 = arith.mulf %661, %662 : vector<2x6x384xf32>
    %664 = arith.addf %656, %663 : vector<2x6x384xf32>
    %665 = vector.extract_strided_slice %602 {offsets = [0, 7, 0], sizes = [2, 1, 384], strides = [1, 1, 1]} : vector<2x8x384xf32> to vector<2x1x384xf32>
    %c7_193 = arith.constant 7 : index
    %c0_194 = arith.constant 0 : index
    %c0_195 = arith.constant 0 : index
    %666 = vector.load %arg10[%c7_193, %c0_194, %c0_195] : memref<72x6x1xf32, #tpu.memory_space<vmem>>, vector<1x6x1xf32>
    %667 = vector.shape_cast %666 : vector<1x6x1xf32> to vector<6x1xf32>
    %668 = vector.shape_cast %667 : vector<6x1xf32> to vector<1x6x1xf32>
    %669 = vector.broadcast %665 : vector<2x1x384xf32> to vector<2x6x384xf32>
    %670 = vector.broadcast %668 : vector<1x6x1xf32> to vector<2x6x384xf32>
    %671 = arith.mulf %669, %670 : vector<2x6x384xf32>
    %672 = arith.addf %664, %671 : vector<2x6x384xf32>
    %673 = vector.extract_strided_slice %603 {offsets = [0, 0, 0], sizes = [2, 1, 384], strides = [1, 1, 1]} : vector<2x8x384xf32> to vector<2x1x384xf32>
    %c8_196 = arith.constant 8 : index
    %c0_197 = arith.constant 0 : index
    %c0_198 = arith.constant 0 : index
    %674 = vector.load %arg10[%c8_196, %c0_197, %c0_198] : memref<72x6x1xf32, #tpu.memory_space<vmem>>, vector<1x6x1xf32>
    %675 = vector.shape_cast %674 : vector<1x6x1xf32> to vector<6x1xf32>
    %676 = vector.shape_cast %675 : vector<6x1xf32> to vector<1x6x1xf32>
    %677 = vector.broadcast %673 : vector<2x1x384xf32> to vector<2x6x384xf32>
    %678 = vector.broadcast %676 : vector<1x6x1xf32> to vector<2x6x384xf32>
    %679 = arith.mulf %677, %678 : vector<2x6x384xf32>
    %680 = arith.addf %672, %679 : vector<2x6x384xf32>
    %681 = vector.extract_strided_slice %603 {offsets = [0, 1, 0], sizes = [2, 1, 384], strides = [1, 1, 1]} : vector<2x8x384xf32> to vector<2x1x384xf32>
    %c9_199 = arith.constant 9 : index
    %c0_200 = arith.constant 0 : index
    %c0_201 = arith.constant 0 : index
    %682 = vector.load %arg10[%c9_199, %c0_200, %c0_201] : memref<72x6x1xf32, #tpu.memory_space<vmem>>, vector<1x6x1xf32>
    %683 = vector.shape_cast %682 : vector<1x6x1xf32> to vector<6x1xf32>
    %684 = vector.shape_cast %683 : vector<6x1xf32> to vector<1x6x1xf32>
    %685 = vector.broadcast %681 : vector<2x1x384xf32> to vector<2x6x384xf32>
    %686 = vector.broadcast %684 : vector<1x6x1xf32> to vector<2x6x384xf32>
    %687 = arith.mulf %685, %686 : vector<2x6x384xf32>
    %688 = arith.addf %680, %687 : vector<2x6x384xf32>
    %689 = vector.extract_strided_slice %603 {offsets = [0, 2, 0], sizes = [2, 1, 384], strides = [1, 1, 1]} : vector<2x8x384xf32> to vector<2x1x384xf32>
    %c10_202 = arith.constant 10 : index
    %c0_203 = arith.constant 0 : index
    %c0_204 = arith.constant 0 : index
    %690 = vector.load %arg10[%c10_202, %c0_203, %c0_204] : memref<72x6x1xf32, #tpu.memory_space<vmem>>, vector<1x6x1xf32>
    %691 = vector.shape_cast %690 : vector<1x6x1xf32> to vector<6x1xf32>
    %692 = vector.shape_cast %691 : vector<6x1xf32> to vector<1x6x1xf32>
    %693 = vector.broadcast %689 : vector<2x1x384xf32> to vector<2x6x384xf32>
    %694 = vector.broadcast %692 : vector<1x6x1xf32> to vector<2x6x384xf32>
    %695 = arith.mulf %693, %694 : vector<2x6x384xf32>
    %696 = arith.addf %688, %695 : vector<2x6x384xf32>
    %697 = vector.extract_strided_slice %603 {offsets = [0, 3, 0], sizes = [2, 1, 384], strides = [1, 1, 1]} : vector<2x8x384xf32> to vector<2x1x384xf32>
    %c11_205 = arith.constant 11 : index
    %c0_206 = arith.constant 0 : index
    %c0_207 = arith.constant 0 : index
    %698 = vector.load %arg10[%c11_205, %c0_206, %c0_207] : memref<72x6x1xf32, #tpu.memory_space<vmem>>, vector<1x6x1xf32>
    %699 = vector.shape_cast %698 : vector<1x6x1xf32> to vector<6x1xf32>
    %700 = vector.shape_cast %699 : vector<6x1xf32> to vector<1x6x1xf32>
    %701 = vector.broadcast %697 : vector<2x1x384xf32> to vector<2x6x384xf32>
    %702 = vector.broadcast %700 : vector<1x6x1xf32> to vector<2x6x384xf32>
    %703 = arith.mulf %701, %702 : vector<2x6x384xf32>
    %704 = arith.addf %696, %703 : vector<2x6x384xf32>
    %705 = vector.extract_strided_slice %603 {offsets = [0, 4, 0], sizes = [2, 1, 384], strides = [1, 1, 1]} : vector<2x8x384xf32> to vector<2x1x384xf32>
    %c12_208 = arith.constant 12 : index
    %c0_209 = arith.constant 0 : index
    %c0_210 = arith.constant 0 : index
    %706 = vector.load %arg10[%c12_208, %c0_209, %c0_210] : memref<72x6x1xf32, #tpu.memory_space<vmem>>, vector<1x6x1xf32>
    %707 = vector.shape_cast %706 : vector<1x6x1xf32> to vector<6x1xf32>
    %708 = vector.shape_cast %707 : vector<6x1xf32> to vector<1x6x1xf32>
    %709 = vector.broadcast %705 : vector<2x1x384xf32> to vector<2x6x384xf32>
    %710 = vector.broadcast %708 : vector<1x6x1xf32> to vector<2x6x384xf32>
    %711 = arith.mulf %709, %710 : vector<2x6x384xf32>
    %712 = arith.addf %704, %711 : vector<2x6x384xf32>
    %713 = vector.extract_strided_slice %603 {offsets = [0, 5, 0], sizes = [2, 1, 384], strides = [1, 1, 1]} : vector<2x8x384xf32> to vector<2x1x384xf32>
    %c13_211 = arith.constant 13 : index
    %c0_212 = arith.constant 0 : index
    %c0_213 = arith.constant 0 : index
    %714 = vector.load %arg10[%c13_211, %c0_212, %c0_213] : memref<72x6x1xf32, #tpu.memory_space<vmem>>, vector<1x6x1xf32>
    %715 = vector.shape_cast %714 : vector<1x6x1xf32> to vector<6x1xf32>
    %716 = vector.shape_cast %715 : vector<6x1xf32> to vector<1x6x1xf32>
    %717 = vector.broadcast %713 : vector<2x1x384xf32> to vector<2x6x384xf32>
    %718 = vector.broadcast %716 : vector<1x6x1xf32> to vector<2x6x384xf32>
    %719 = arith.mulf %717, %718 : vector<2x6x384xf32>
    %720 = arith.addf %712, %719 : vector<2x6x384xf32>
    %721 = vector.extract_strided_slice %603 {offsets = [0, 6, 0], sizes = [2, 1, 384], strides = [1, 1, 1]} : vector<2x8x384xf32> to vector<2x1x384xf32>
    %c14_214 = arith.constant 14 : index
    %c0_215 = arith.constant 0 : index
    %c0_216 = arith.constant 0 : index
    %722 = vector.load %arg10[%c14_214, %c0_215, %c0_216] : memref<72x6x1xf32, #tpu.memory_space<vmem>>, vector<1x6x1xf32>
    %723 = vector.shape_cast %722 : vector<1x6x1xf32> to vector<6x1xf32>
    %724 = vector.shape_cast %723 : vector<6x1xf32> to vector<1x6x1xf32>
    %725 = vector.broadcast %721 : vector<2x1x384xf32> to vector<2x6x384xf32>
    %726 = vector.broadcast %724 : vector<1x6x1xf32> to vector<2x6x384xf32>
    %727 = arith.mulf %725, %726 : vector<2x6x384xf32>
    %728 = arith.addf %720, %727 : vector<2x6x384xf32>
    %729 = vector.extract_strided_slice %603 {offsets = [0, 7, 0], sizes = [2, 1, 384], strides = [1, 1, 1]} : vector<2x8x384xf32> to vector<2x1x384xf32>
    %c15_217 = arith.constant 15 : index
    %c0_218 = arith.constant 0 : index
    %c0_219 = arith.constant 0 : index
    %730 = vector.load %arg10[%c15_217, %c0_218, %c0_219] : memref<72x6x1xf32, #tpu.memory_space<vmem>>, vector<1x6x1xf32>
    %731 = vector.shape_cast %730 : vector<1x6x1xf32> to vector<6x1xf32>
    %732 = vector.shape_cast %731 : vector<6x1xf32> to vector<1x6x1xf32>
    %733 = vector.broadcast %729 : vector<2x1x384xf32> to vector<2x6x384xf32>
    %734 = vector.broadcast %732 : vector<1x6x1xf32> to vector<2x6x384xf32>
    %735 = arith.mulf %733, %734 : vector<2x6x384xf32>
    %736 = arith.addf %728, %735 : vector<2x6x384xf32>
    %737 = vector.extract_strided_slice %604 {offsets = [0, 0, 0], sizes = [2, 1, 384], strides = [1, 1, 1]} : vector<2x8x384xf32> to vector<2x1x384xf32>
    %c16_220 = arith.constant 16 : index
    %c0_221 = arith.constant 0 : index
    %c0_222 = arith.constant 0 : index
    %738 = vector.load %arg10[%c16_220, %c0_221, %c0_222] : memref<72x6x1xf32, #tpu.memory_space<vmem>>, vector<1x6x1xf32>
    %739 = vector.shape_cast %738 : vector<1x6x1xf32> to vector<6x1xf32>
    %740 = vector.shape_cast %739 : vector<6x1xf32> to vector<1x6x1xf32>
    %741 = vector.broadcast %737 : vector<2x1x384xf32> to vector<2x6x384xf32>
    %742 = vector.broadcast %740 : vector<1x6x1xf32> to vector<2x6x384xf32>
    %743 = arith.mulf %741, %742 : vector<2x6x384xf32>
    %744 = arith.addf %736, %743 : vector<2x6x384xf32>
    %745 = vector.extract_strided_slice %604 {offsets = [0, 1, 0], sizes = [2, 1, 384], strides = [1, 1, 1]} : vector<2x8x384xf32> to vector<2x1x384xf32>
    %c17_223 = arith.constant 17 : index
    %c0_224 = arith.constant 0 : index
    %c0_225 = arith.constant 0 : index
    %746 = vector.load %arg10[%c17_223, %c0_224, %c0_225] : memref<72x6x1xf32, #tpu.memory_space<vmem>>, vector<1x6x1xf32>
    %747 = vector.shape_cast %746 : vector<1x6x1xf32> to vector<6x1xf32>
    %748 = vector.shape_cast %747 : vector<6x1xf32> to vector<1x6x1xf32>
    %749 = vector.broadcast %745 : vector<2x1x384xf32> to vector<2x6x384xf32>
    %750 = vector.broadcast %748 : vector<1x6x1xf32> to vector<2x6x384xf32>
    %751 = arith.mulf %749, %750 : vector<2x6x384xf32>
    %752 = arith.addf %744, %751 : vector<2x6x384xf32>
    %753 = vector.extract_strided_slice %604 {offsets = [0, 2, 0], sizes = [2, 1, 384], strides = [1, 1, 1]} : vector<2x8x384xf32> to vector<2x1x384xf32>
    %c18_226 = arith.constant 18 : index
    %c0_227 = arith.constant 0 : index
    %c0_228 = arith.constant 0 : index
    %754 = vector.load %arg10[%c18_226, %c0_227, %c0_228] : memref<72x6x1xf32, #tpu.memory_space<vmem>>, vector<1x6x1xf32>
    %755 = vector.shape_cast %754 : vector<1x6x1xf32> to vector<6x1xf32>
    %756 = vector.shape_cast %755 : vector<6x1xf32> to vector<1x6x1xf32>
    %757 = vector.broadcast %753 : vector<2x1x384xf32> to vector<2x6x384xf32>
    %758 = vector.broadcast %756 : vector<1x6x1xf32> to vector<2x6x384xf32>
    %759 = arith.mulf %757, %758 : vector<2x6x384xf32>
    %760 = arith.addf %752, %759 : vector<2x6x384xf32>
    %761 = vector.extract_strided_slice %604 {offsets = [0, 3, 0], sizes = [2, 1, 384], strides = [1, 1, 1]} : vector<2x8x384xf32> to vector<2x1x384xf32>
    %c19_229 = arith.constant 19 : index
    %c0_230 = arith.constant 0 : index
    %c0_231 = arith.constant 0 : index
    %762 = vector.load %arg10[%c19_229, %c0_230, %c0_231] : memref<72x6x1xf32, #tpu.memory_space<vmem>>, vector<1x6x1xf32>
    %763 = vector.shape_cast %762 : vector<1x6x1xf32> to vector<6x1xf32>
    %764 = vector.shape_cast %763 : vector<6x1xf32> to vector<1x6x1xf32>
    %765 = vector.broadcast %761 : vector<2x1x384xf32> to vector<2x6x384xf32>
    %766 = vector.broadcast %764 : vector<1x6x1xf32> to vector<2x6x384xf32>
    %767 = arith.mulf %765, %766 : vector<2x6x384xf32>
    %768 = arith.addf %760, %767 : vector<2x6x384xf32>
    %769 = vector.extract_strided_slice %604 {offsets = [0, 4, 0], sizes = [2, 1, 384], strides = [1, 1, 1]} : vector<2x8x384xf32> to vector<2x1x384xf32>
    %c20_232 = arith.constant 20 : index
    %c0_233 = arith.constant 0 : index
    %c0_234 = arith.constant 0 : index
    %770 = vector.load %arg10[%c20_232, %c0_233, %c0_234] : memref<72x6x1xf32, #tpu.memory_space<vmem>>, vector<1x6x1xf32>
    %771 = vector.shape_cast %770 : vector<1x6x1xf32> to vector<6x1xf32>
    %772 = vector.shape_cast %771 : vector<6x1xf32> to vector<1x6x1xf32>
    %773 = vector.broadcast %769 : vector<2x1x384xf32> to vector<2x6x384xf32>
    %774 = vector.broadcast %772 : vector<1x6x1xf32> to vector<2x6x384xf32>
    %775 = arith.mulf %773, %774 : vector<2x6x384xf32>
    %776 = arith.addf %768, %775 : vector<2x6x384xf32>
    %777 = vector.extract_strided_slice %604 {offsets = [0, 5, 0], sizes = [2, 1, 384], strides = [1, 1, 1]} : vector<2x8x384xf32> to vector<2x1x384xf32>
    %c21_235 = arith.constant 21 : index
    %c0_236 = arith.constant 0 : index
    %c0_237 = arith.constant 0 : index
    %778 = vector.load %arg10[%c21_235, %c0_236, %c0_237] : memref<72x6x1xf32, #tpu.memory_space<vmem>>, vector<1x6x1xf32>
    %779 = vector.shape_cast %778 : vector<1x6x1xf32> to vector<6x1xf32>
    %780 = vector.shape_cast %779 : vector<6x1xf32> to vector<1x6x1xf32>
    %781 = vector.broadcast %777 : vector<2x1x384xf32> to vector<2x6x384xf32>
    %782 = vector.broadcast %780 : vector<1x6x1xf32> to vector<2x6x384xf32>
    %783 = arith.mulf %781, %782 : vector<2x6x384xf32>
    %784 = arith.addf %776, %783 : vector<2x6x384xf32>
    %785 = vector.extract_strided_slice %604 {offsets = [0, 6, 0], sizes = [2, 1, 384], strides = [1, 1, 1]} : vector<2x8x384xf32> to vector<2x1x384xf32>
    %c22_238 = arith.constant 22 : index
    %c0_239 = arith.constant 0 : index
    %c0_240 = arith.constant 0 : index
    %786 = vector.load %arg10[%c22_238, %c0_239, %c0_240] : memref<72x6x1xf32, #tpu.memory_space<vmem>>, vector<1x6x1xf32>
    %787 = vector.shape_cast %786 : vector<1x6x1xf32> to vector<6x1xf32>
    %788 = vector.shape_cast %787 : vector<6x1xf32> to vector<1x6x1xf32>
    %789 = vector.broadcast %785 : vector<2x1x384xf32> to vector<2x6x384xf32>
    %790 = vector.broadcast %788 : vector<1x6x1xf32> to vector<2x6x384xf32>
    %791 = arith.mulf %789, %790 : vector<2x6x384xf32>
    %792 = arith.addf %784, %791 : vector<2x6x384xf32>
    %793 = vector.extract_strided_slice %604 {offsets = [0, 7, 0], sizes = [2, 1, 384], strides = [1, 1, 1]} : vector<2x8x384xf32> to vector<2x1x384xf32>
    %c23_241 = arith.constant 23 : index
    %c0_242 = arith.constant 0 : index
    %c0_243 = arith.constant 0 : index
    %794 = vector.load %arg10[%c23_241, %c0_242, %c0_243] : memref<72x6x1xf32, #tpu.memory_space<vmem>>, vector<1x6x1xf32>
    %795 = vector.shape_cast %794 : vector<1x6x1xf32> to vector<6x1xf32>
    %796 = vector.shape_cast %795 : vector<6x1xf32> to vector<1x6x1xf32>
    %797 = vector.broadcast %793 : vector<2x1x384xf32> to vector<2x6x384xf32>
    %798 = vector.broadcast %796 : vector<1x6x1xf32> to vector<2x6x384xf32>
    %799 = arith.mulf %797, %798 : vector<2x6x384xf32>
    %800 = arith.addf %792, %799 : vector<2x6x384xf32>
    %801 = vector.extract_strided_slice %605 {offsets = [0, 0, 0], sizes = [2, 1, 384], strides = [1, 1, 1]} : vector<2x8x384xf32> to vector<2x1x384xf32>
    %c24_244 = arith.constant 24 : index
    %c0_245 = arith.constant 0 : index
    %c0_246 = arith.constant 0 : index
    %802 = vector.load %arg10[%c24_244, %c0_245, %c0_246] : memref<72x6x1xf32, #tpu.memory_space<vmem>>, vector<1x6x1xf32>
    %803 = vector.shape_cast %802 : vector<1x6x1xf32> to vector<6x1xf32>
    %804 = vector.shape_cast %803 : vector<6x1xf32> to vector<1x6x1xf32>
    %805 = vector.broadcast %801 : vector<2x1x384xf32> to vector<2x6x384xf32>
    %806 = vector.broadcast %804 : vector<1x6x1xf32> to vector<2x6x384xf32>
    %807 = arith.mulf %805, %806 : vector<2x6x384xf32>
    %808 = arith.addf %800, %807 : vector<2x6x384xf32>
    %809 = vector.extract_strided_slice %605 {offsets = [0, 1, 0], sizes = [2, 1, 384], strides = [1, 1, 1]} : vector<2x8x384xf32> to vector<2x1x384xf32>
    %c25_247 = arith.constant 25 : index
    %c0_248 = arith.constant 0 : index
    %c0_249 = arith.constant 0 : index
    %810 = vector.load %arg10[%c25_247, %c0_248, %c0_249] : memref<72x6x1xf32, #tpu.memory_space<vmem>>, vector<1x6x1xf32>
    %811 = vector.shape_cast %810 : vector<1x6x1xf32> to vector<6x1xf32>
    %812 = vector.shape_cast %811 : vector<6x1xf32> to vector<1x6x1xf32>
    %813 = vector.broadcast %809 : vector<2x1x384xf32> to vector<2x6x384xf32>
    %814 = vector.broadcast %812 : vector<1x6x1xf32> to vector<2x6x384xf32>
    %815 = arith.mulf %813, %814 : vector<2x6x384xf32>
    %816 = arith.addf %808, %815 : vector<2x6x384xf32>
    %817 = vector.extract_strided_slice %605 {offsets = [0, 2, 0], sizes = [2, 1, 384], strides = [1, 1, 1]} : vector<2x8x384xf32> to vector<2x1x384xf32>
    %c26_250 = arith.constant 26 : index
    %c0_251 = arith.constant 0 : index
    %c0_252 = arith.constant 0 : index
    %818 = vector.load %arg10[%c26_250, %c0_251, %c0_252] : memref<72x6x1xf32, #tpu.memory_space<vmem>>, vector<1x6x1xf32>
    %819 = vector.shape_cast %818 : vector<1x6x1xf32> to vector<6x1xf32>
    %820 = vector.shape_cast %819 : vector<6x1xf32> to vector<1x6x1xf32>
    %821 = vector.broadcast %817 : vector<2x1x384xf32> to vector<2x6x384xf32>
    %822 = vector.broadcast %820 : vector<1x6x1xf32> to vector<2x6x384xf32>
    %823 = arith.mulf %821, %822 : vector<2x6x384xf32>
    %824 = arith.addf %816, %823 : vector<2x6x384xf32>
    %825 = vector.extract_strided_slice %605 {offsets = [0, 3, 0], sizes = [2, 1, 384], strides = [1, 1, 1]} : vector<2x8x384xf32> to vector<2x1x384xf32>
    %c27_253 = arith.constant 27 : index
    %c0_254 = arith.constant 0 : index
    %c0_255 = arith.constant 0 : index
    %826 = vector.load %arg10[%c27_253, %c0_254, %c0_255] : memref<72x6x1xf32, #tpu.memory_space<vmem>>, vector<1x6x1xf32>
    %827 = vector.shape_cast %826 : vector<1x6x1xf32> to vector<6x1xf32>
    %828 = vector.shape_cast %827 : vector<6x1xf32> to vector<1x6x1xf32>
    %829 = vector.broadcast %825 : vector<2x1x384xf32> to vector<2x6x384xf32>
    %830 = vector.broadcast %828 : vector<1x6x1xf32> to vector<2x6x384xf32>
    %831 = arith.mulf %829, %830 : vector<2x6x384xf32>
    %832 = arith.addf %824, %831 : vector<2x6x384xf32>
    %833 = vector.extract_strided_slice %605 {offsets = [0, 4, 0], sizes = [2, 1, 384], strides = [1, 1, 1]} : vector<2x8x384xf32> to vector<2x1x384xf32>
    %c28_256 = arith.constant 28 : index
    %c0_257 = arith.constant 0 : index
    %c0_258 = arith.constant 0 : index
    %834 = vector.load %arg10[%c28_256, %c0_257, %c0_258] : memref<72x6x1xf32, #tpu.memory_space<vmem>>, vector<1x6x1xf32>
    %835 = vector.shape_cast %834 : vector<1x6x1xf32> to vector<6x1xf32>
    %836 = vector.shape_cast %835 : vector<6x1xf32> to vector<1x6x1xf32>
    %837 = vector.broadcast %833 : vector<2x1x384xf32> to vector<2x6x384xf32>
    %838 = vector.broadcast %836 : vector<1x6x1xf32> to vector<2x6x384xf32>
    %839 = arith.mulf %837, %838 : vector<2x6x384xf32>
    %840 = arith.addf %832, %839 : vector<2x6x384xf32>
    %841 = vector.extract_strided_slice %605 {offsets = [0, 5, 0], sizes = [2, 1, 384], strides = [1, 1, 1]} : vector<2x8x384xf32> to vector<2x1x384xf32>
    %c29_259 = arith.constant 29 : index
    %c0_260 = arith.constant 0 : index
    %c0_261 = arith.constant 0 : index
    %842 = vector.load %arg10[%c29_259, %c0_260, %c0_261] : memref<72x6x1xf32, #tpu.memory_space<vmem>>, vector<1x6x1xf32>
    %843 = vector.shape_cast %842 : vector<1x6x1xf32> to vector<6x1xf32>
    %844 = vector.shape_cast %843 : vector<6x1xf32> to vector<1x6x1xf32>
    %845 = vector.broadcast %841 : vector<2x1x384xf32> to vector<2x6x384xf32>
    %846 = vector.broadcast %844 : vector<1x6x1xf32> to vector<2x6x384xf32>
    %847 = arith.mulf %845, %846 : vector<2x6x384xf32>
    %848 = arith.addf %840, %847 : vector<2x6x384xf32>
    %849 = vector.extract_strided_slice %605 {offsets = [0, 6, 0], sizes = [2, 1, 384], strides = [1, 1, 1]} : vector<2x8x384xf32> to vector<2x1x384xf32>
    %c30_262 = arith.constant 30 : index
    %c0_263 = arith.constant 0 : index
    %c0_264 = arith.constant 0 : index
    %850 = vector.load %arg10[%c30_262, %c0_263, %c0_264] : memref<72x6x1xf32, #tpu.memory_space<vmem>>, vector<1x6x1xf32>
    %851 = vector.shape_cast %850 : vector<1x6x1xf32> to vector<6x1xf32>
    %852 = vector.shape_cast %851 : vector<6x1xf32> to vector<1x6x1xf32>
    %853 = vector.broadcast %849 : vector<2x1x384xf32> to vector<2x6x384xf32>
    %854 = vector.broadcast %852 : vector<1x6x1xf32> to vector<2x6x384xf32>
    %855 = arith.mulf %853, %854 : vector<2x6x384xf32>
    %856 = arith.addf %848, %855 : vector<2x6x384xf32>
    %857 = vector.extract_strided_slice %605 {offsets = [0, 7, 0], sizes = [2, 1, 384], strides = [1, 1, 1]} : vector<2x8x384xf32> to vector<2x1x384xf32>
    %c31_265 = arith.constant 31 : index
    %c0_266 = arith.constant 0 : index
    %c0_267 = arith.constant 0 : index
    %858 = vector.load %arg10[%c31_265, %c0_266, %c0_267] : memref<72x6x1xf32, #tpu.memory_space<vmem>>, vector<1x6x1xf32>
    %859 = vector.shape_cast %858 : vector<1x6x1xf32> to vector<6x1xf32>
    %860 = vector.shape_cast %859 : vector<6x1xf32> to vector<1x6x1xf32>
    %861 = vector.broadcast %857 : vector<2x1x384xf32> to vector<2x6x384xf32>
    %862 = vector.broadcast %860 : vector<1x6x1xf32> to vector<2x6x384xf32>
    %863 = arith.mulf %861, %862 : vector<2x6x384xf32>
    %864 = arith.addf %856, %863 : vector<2x6x384xf32>
    %865 = vector.extract_strided_slice %601 {offsets = [0, 0, 0], sizes = [2, 1, 384], strides = [1, 1, 1]} : vector<2x8x384xf32> to vector<2x1x384xf32>
    %c32_268 = arith.constant 32 : index
    %c0_269 = arith.constant 0 : index
    %c0_270 = arith.constant 0 : index
    %866 = vector.load %arg10[%c32_268, %c0_269, %c0_270] : memref<72x6x1xf32, #tpu.memory_space<vmem>>, vector<1x6x1xf32>
    %867 = vector.shape_cast %866 : vector<1x6x1xf32> to vector<6x1xf32>
    %868 = vector.shape_cast %867 : vector<6x1xf32> to vector<1x6x1xf32>
    %869 = vector.broadcast %865 : vector<2x1x384xf32> to vector<2x6x384xf32>
    %870 = vector.broadcast %868 : vector<1x6x1xf32> to vector<2x6x384xf32>
    %871 = arith.mulf %869, %870 : vector<2x6x384xf32>
    %872 = arith.addf %864, %871 : vector<2x6x384xf32>
    %873 = vector.extract_strided_slice %601 {offsets = [0, 1, 0], sizes = [2, 1, 384], strides = [1, 1, 1]} : vector<2x8x384xf32> to vector<2x1x384xf32>
    %c33_271 = arith.constant 33 : index
    %c0_272 = arith.constant 0 : index
    %c0_273 = arith.constant 0 : index
    %874 = vector.load %arg10[%c33_271, %c0_272, %c0_273] : memref<72x6x1xf32, #tpu.memory_space<vmem>>, vector<1x6x1xf32>
    %875 = vector.shape_cast %874 : vector<1x6x1xf32> to vector<6x1xf32>
    %876 = vector.shape_cast %875 : vector<6x1xf32> to vector<1x6x1xf32>
    %877 = vector.broadcast %873 : vector<2x1x384xf32> to vector<2x6x384xf32>
    %878 = vector.broadcast %876 : vector<1x6x1xf32> to vector<2x6x384xf32>
    %879 = arith.mulf %877, %878 : vector<2x6x384xf32>
    %880 = arith.addf %872, %879 : vector<2x6x384xf32>
    %881 = vector.extract_strided_slice %601 {offsets = [0, 2, 0], sizes = [2, 1, 384], strides = [1, 1, 1]} : vector<2x8x384xf32> to vector<2x1x384xf32>
    %c34_274 = arith.constant 34 : index
    %c0_275 = arith.constant 0 : index
    %c0_276 = arith.constant 0 : index
    %882 = vector.load %arg10[%c34_274, %c0_275, %c0_276] : memref<72x6x1xf32, #tpu.memory_space<vmem>>, vector<1x6x1xf32>
    %883 = vector.shape_cast %882 : vector<1x6x1xf32> to vector<6x1xf32>
    %884 = vector.shape_cast %883 : vector<6x1xf32> to vector<1x6x1xf32>
    %885 = vector.broadcast %881 : vector<2x1x384xf32> to vector<2x6x384xf32>
    %886 = vector.broadcast %884 : vector<1x6x1xf32> to vector<2x6x384xf32>
    %887 = arith.mulf %885, %886 : vector<2x6x384xf32>
    %888 = arith.addf %880, %887 : vector<2x6x384xf32>
    %889 = vector.extract_strided_slice %601 {offsets = [0, 3, 0], sizes = [2, 1, 384], strides = [1, 1, 1]} : vector<2x8x384xf32> to vector<2x1x384xf32>
    %c35_277 = arith.constant 35 : index
    %c0_278 = arith.constant 0 : index
    %c0_279 = arith.constant 0 : index
    %890 = vector.load %arg10[%c35_277, %c0_278, %c0_279] : memref<72x6x1xf32, #tpu.memory_space<vmem>>, vector<1x6x1xf32>
    %891 = vector.shape_cast %890 : vector<1x6x1xf32> to vector<6x1xf32>
    %892 = vector.shape_cast %891 : vector<6x1xf32> to vector<1x6x1xf32>
    %893 = vector.broadcast %889 : vector<2x1x384xf32> to vector<2x6x384xf32>
    %894 = vector.broadcast %892 : vector<1x6x1xf32> to vector<2x6x384xf32>
    %895 = arith.mulf %893, %894 : vector<2x6x384xf32>
    %896 = arith.addf %888, %895 : vector<2x6x384xf32>
    %897 = vector.extract_strided_slice %601 {offsets = [0, 4, 0], sizes = [2, 1, 384], strides = [1, 1, 1]} : vector<2x8x384xf32> to vector<2x1x384xf32>
    %c36 = arith.constant 36 : index
    %c0_280 = arith.constant 0 : index
    %c0_281 = arith.constant 0 : index
    %898 = vector.load %arg10[%c36, %c0_280, %c0_281] : memref<72x6x1xf32, #tpu.memory_space<vmem>>, vector<1x6x1xf32>
    %899 = vector.shape_cast %898 : vector<1x6x1xf32> to vector<6x1xf32>
    %900 = vector.shape_cast %899 : vector<6x1xf32> to vector<1x6x1xf32>
    %901 = vector.broadcast %897 : vector<2x1x384xf32> to vector<2x6x384xf32>
    %902 = vector.broadcast %900 : vector<1x6x1xf32> to vector<2x6x384xf32>
    %903 = arith.mulf %901, %902 : vector<2x6x384xf32>
    %904 = arith.addf %896, %903 : vector<2x6x384xf32>
    %905 = vector.extract_strided_slice %601 {offsets = [0, 5, 0], sizes = [2, 1, 384], strides = [1, 1, 1]} : vector<2x8x384xf32> to vector<2x1x384xf32>
    %c37 = arith.constant 37 : index
    %c0_282 = arith.constant 0 : index
    %c0_283 = arith.constant 0 : index
    %906 = vector.load %arg10[%c37, %c0_282, %c0_283] : memref<72x6x1xf32, #tpu.memory_space<vmem>>, vector<1x6x1xf32>
    %907 = vector.shape_cast %906 : vector<1x6x1xf32> to vector<6x1xf32>
    %908 = vector.shape_cast %907 : vector<6x1xf32> to vector<1x6x1xf32>
    %909 = vector.broadcast %905 : vector<2x1x384xf32> to vector<2x6x384xf32>
    %910 = vector.broadcast %908 : vector<1x6x1xf32> to vector<2x6x384xf32>
    %911 = arith.mulf %909, %910 : vector<2x6x384xf32>
    %912 = arith.addf %904, %911 : vector<2x6x384xf32>
    %913 = vector.extract_strided_slice %601 {offsets = [0, 6, 0], sizes = [2, 1, 384], strides = [1, 1, 1]} : vector<2x8x384xf32> to vector<2x1x384xf32>
    %c38 = arith.constant 38 : index
    %c0_284 = arith.constant 0 : index
    %c0_285 = arith.constant 0 : index
    %914 = vector.load %arg10[%c38, %c0_284, %c0_285] : memref<72x6x1xf32, #tpu.memory_space<vmem>>, vector<1x6x1xf32>
    %915 = vector.shape_cast %914 : vector<1x6x1xf32> to vector<6x1xf32>
    %916 = vector.shape_cast %915 : vector<6x1xf32> to vector<1x6x1xf32>
    %917 = vector.broadcast %913 : vector<2x1x384xf32> to vector<2x6x384xf32>
    %918 = vector.broadcast %916 : vector<1x6x1xf32> to vector<2x6x384xf32>
    %919 = arith.mulf %917, %918 : vector<2x6x384xf32>
    %920 = arith.addf %912, %919 : vector<2x6x384xf32>
    %921 = vector.extract_strided_slice %601 {offsets = [0, 7, 0], sizes = [2, 1, 384], strides = [1, 1, 1]} : vector<2x8x384xf32> to vector<2x1x384xf32>
    %c39 = arith.constant 39 : index
    %c0_286 = arith.constant 0 : index
    %c0_287 = arith.constant 0 : index
    %922 = vector.load %arg10[%c39, %c0_286, %c0_287] : memref<72x6x1xf32, #tpu.memory_space<vmem>>, vector<1x6x1xf32>
    %923 = vector.shape_cast %922 : vector<1x6x1xf32> to vector<6x1xf32>
    %924 = vector.shape_cast %923 : vector<6x1xf32> to vector<1x6x1xf32>
    %925 = vector.broadcast %921 : vector<2x1x384xf32> to vector<2x6x384xf32>
    %926 = vector.broadcast %924 : vector<1x6x1xf32> to vector<2x6x384xf32>
    %927 = arith.mulf %925, %926 : vector<2x6x384xf32>
    %928 = arith.addf %920, %927 : vector<2x6x384xf32>
    %929 = vector.extract_strided_slice %606 {offsets = [0, 0, 0], sizes = [2, 1, 384], strides = [1, 1, 1]} : vector<2x8x384xf32> to vector<2x1x384xf32>
    %c40 = arith.constant 40 : index
    %c0_288 = arith.constant 0 : index
    %c0_289 = arith.constant 0 : index
    %930 = vector.load %arg10[%c40, %c0_288, %c0_289] : memref<72x6x1xf32, #tpu.memory_space<vmem>>, vector<1x6x1xf32>
    %931 = vector.shape_cast %930 : vector<1x6x1xf32> to vector<6x1xf32>
    %932 = vector.shape_cast %931 : vector<6x1xf32> to vector<1x6x1xf32>
    %933 = vector.broadcast %929 : vector<2x1x384xf32> to vector<2x6x384xf32>
    %934 = vector.broadcast %932 : vector<1x6x1xf32> to vector<2x6x384xf32>
    %935 = arith.mulf %933, %934 : vector<2x6x384xf32>
    %936 = arith.addf %928, %935 : vector<2x6x384xf32>
    %937 = vector.extract_strided_slice %606 {offsets = [0, 1, 0], sizes = [2, 1, 384], strides = [1, 1, 1]} : vector<2x8x384xf32> to vector<2x1x384xf32>
    %c41 = arith.constant 41 : index
    %c0_290 = arith.constant 0 : index
    %c0_291 = arith.constant 0 : index
    %938 = vector.load %arg10[%c41, %c0_290, %c0_291] : memref<72x6x1xf32, #tpu.memory_space<vmem>>, vector<1x6x1xf32>
    %939 = vector.shape_cast %938 : vector<1x6x1xf32> to vector<6x1xf32>
    %940 = vector.shape_cast %939 : vector<6x1xf32> to vector<1x6x1xf32>
    %941 = vector.broadcast %937 : vector<2x1x384xf32> to vector<2x6x384xf32>
    %942 = vector.broadcast %940 : vector<1x6x1xf32> to vector<2x6x384xf32>
    %943 = arith.mulf %941, %942 : vector<2x6x384xf32>
    %944 = arith.addf %936, %943 : vector<2x6x384xf32>
    %945 = vector.extract_strided_slice %606 {offsets = [0, 2, 0], sizes = [2, 1, 384], strides = [1, 1, 1]} : vector<2x8x384xf32> to vector<2x1x384xf32>
    %c42 = arith.constant 42 : index
    %c0_292 = arith.constant 0 : index
    %c0_293 = arith.constant 0 : index
    %946 = vector.load %arg10[%c42, %c0_292, %c0_293] : memref<72x6x1xf32, #tpu.memory_space<vmem>>, vector<1x6x1xf32>
    %947 = vector.shape_cast %946 : vector<1x6x1xf32> to vector<6x1xf32>
    %948 = vector.shape_cast %947 : vector<6x1xf32> to vector<1x6x1xf32>
    %949 = vector.broadcast %945 : vector<2x1x384xf32> to vector<2x6x384xf32>
    %950 = vector.broadcast %948 : vector<1x6x1xf32> to vector<2x6x384xf32>
    %951 = arith.mulf %949, %950 : vector<2x6x384xf32>
    %952 = arith.addf %944, %951 : vector<2x6x384xf32>
    %953 = vector.extract_strided_slice %606 {offsets = [0, 3, 0], sizes = [2, 1, 384], strides = [1, 1, 1]} : vector<2x8x384xf32> to vector<2x1x384xf32>
    %c43 = arith.constant 43 : index
    %c0_294 = arith.constant 0 : index
    %c0_295 = arith.constant 0 : index
    %954 = vector.load %arg10[%c43, %c0_294, %c0_295] : memref<72x6x1xf32, #tpu.memory_space<vmem>>, vector<1x6x1xf32>
    %955 = vector.shape_cast %954 : vector<1x6x1xf32> to vector<6x1xf32>
    %956 = vector.shape_cast %955 : vector<6x1xf32> to vector<1x6x1xf32>
    %957 = vector.broadcast %953 : vector<2x1x384xf32> to vector<2x6x384xf32>
    %958 = vector.broadcast %956 : vector<1x6x1xf32> to vector<2x6x384xf32>
    %959 = arith.mulf %957, %958 : vector<2x6x384xf32>
    %960 = arith.addf %952, %959 : vector<2x6x384xf32>
    %961 = vector.extract_strided_slice %606 {offsets = [0, 4, 0], sizes = [2, 1, 384], strides = [1, 1, 1]} : vector<2x8x384xf32> to vector<2x1x384xf32>
    %c44 = arith.constant 44 : index
    %c0_296 = arith.constant 0 : index
    %c0_297 = arith.constant 0 : index
    %962 = vector.load %arg10[%c44, %c0_296, %c0_297] : memref<72x6x1xf32, #tpu.memory_space<vmem>>, vector<1x6x1xf32>
    %963 = vector.shape_cast %962 : vector<1x6x1xf32> to vector<6x1xf32>
    %964 = vector.shape_cast %963 : vector<6x1xf32> to vector<1x6x1xf32>
    %965 = vector.broadcast %961 : vector<2x1x384xf32> to vector<2x6x384xf32>
    %966 = vector.broadcast %964 : vector<1x6x1xf32> to vector<2x6x384xf32>
    %967 = arith.mulf %965, %966 : vector<2x6x384xf32>
    %968 = arith.addf %960, %967 : vector<2x6x384xf32>
    %969 = vector.extract_strided_slice %606 {offsets = [0, 5, 0], sizes = [2, 1, 384], strides = [1, 1, 1]} : vector<2x8x384xf32> to vector<2x1x384xf32>
    %c45 = arith.constant 45 : index
    %c0_298 = arith.constant 0 : index
    %c0_299 = arith.constant 0 : index
    %970 = vector.load %arg10[%c45, %c0_298, %c0_299] : memref<72x6x1xf32, #tpu.memory_space<vmem>>, vector<1x6x1xf32>
    %971 = vector.shape_cast %970 : vector<1x6x1xf32> to vector<6x1xf32>
    %972 = vector.shape_cast %971 : vector<6x1xf32> to vector<1x6x1xf32>
    %973 = vector.broadcast %969 : vector<2x1x384xf32> to vector<2x6x384xf32>
    %974 = vector.broadcast %972 : vector<1x6x1xf32> to vector<2x6x384xf32>
    %975 = arith.mulf %973, %974 : vector<2x6x384xf32>
    %976 = arith.addf %968, %975 : vector<2x6x384xf32>
    %977 = vector.extract_strided_slice %606 {offsets = [0, 6, 0], sizes = [2, 1, 384], strides = [1, 1, 1]} : vector<2x8x384xf32> to vector<2x1x384xf32>
    %c46 = arith.constant 46 : index
    %c0_300 = arith.constant 0 : index
    %c0_301 = arith.constant 0 : index
    %978 = vector.load %arg10[%c46, %c0_300, %c0_301] : memref<72x6x1xf32, #tpu.memory_space<vmem>>, vector<1x6x1xf32>
    %979 = vector.shape_cast %978 : vector<1x6x1xf32> to vector<6x1xf32>
    %980 = vector.shape_cast %979 : vector<6x1xf32> to vector<1x6x1xf32>
    %981 = vector.broadcast %977 : vector<2x1x384xf32> to vector<2x6x384xf32>
    %982 = vector.broadcast %980 : vector<1x6x1xf32> to vector<2x6x384xf32>
    %983 = arith.mulf %981, %982 : vector<2x6x384xf32>
    %984 = arith.addf %976, %983 : vector<2x6x384xf32>
    %985 = vector.extract_strided_slice %606 {offsets = [0, 7, 0], sizes = [2, 1, 384], strides = [1, 1, 1]} : vector<2x8x384xf32> to vector<2x1x384xf32>
    %c47 = arith.constant 47 : index
    %c0_302 = arith.constant 0 : index
    %c0_303 = arith.constant 0 : index
    %986 = vector.load %arg10[%c47, %c0_302, %c0_303] : memref<72x6x1xf32, #tpu.memory_space<vmem>>, vector<1x6x1xf32>
    %987 = vector.shape_cast %986 : vector<1x6x1xf32> to vector<6x1xf32>
    %988 = vector.shape_cast %987 : vector<6x1xf32> to vector<1x6x1xf32>
    %989 = vector.broadcast %985 : vector<2x1x384xf32> to vector<2x6x384xf32>
    %990 = vector.broadcast %988 : vector<1x6x1xf32> to vector<2x6x384xf32>
    %991 = arith.mulf %989, %990 : vector<2x6x384xf32>
    %992 = arith.addf %984, %991 : vector<2x6x384xf32>
    %993 = vector.extract_strided_slice %607 {offsets = [0, 0, 0], sizes = [2, 1, 384], strides = [1, 1, 1]} : vector<2x8x384xf32> to vector<2x1x384xf32>
    %c48 = arith.constant 48 : index
    %c0_304 = arith.constant 0 : index
    %c0_305 = arith.constant 0 : index
    %994 = vector.load %arg10[%c48, %c0_304, %c0_305] : memref<72x6x1xf32, #tpu.memory_space<vmem>>, vector<1x6x1xf32>
    %995 = vector.shape_cast %994 : vector<1x6x1xf32> to vector<6x1xf32>
    %996 = vector.shape_cast %995 : vector<6x1xf32> to vector<1x6x1xf32>
    %997 = vector.broadcast %993 : vector<2x1x384xf32> to vector<2x6x384xf32>
    %998 = vector.broadcast %996 : vector<1x6x1xf32> to vector<2x6x384xf32>
    %999 = arith.mulf %997, %998 : vector<2x6x384xf32>
    %1000 = arith.addf %992, %999 : vector<2x6x384xf32>
    %1001 = vector.extract_strided_slice %607 {offsets = [0, 1, 0], sizes = [2, 1, 384], strides = [1, 1, 1]} : vector<2x8x384xf32> to vector<2x1x384xf32>
    %c49 = arith.constant 49 : index
    %c0_306 = arith.constant 0 : index
    %c0_307 = arith.constant 0 : index
    %1002 = vector.load %arg10[%c49, %c0_306, %c0_307] : memref<72x6x1xf32, #tpu.memory_space<vmem>>, vector<1x6x1xf32>
    %1003 = vector.shape_cast %1002 : vector<1x6x1xf32> to vector<6x1xf32>
    %1004 = vector.shape_cast %1003 : vector<6x1xf32> to vector<1x6x1xf32>
    %1005 = vector.broadcast %1001 : vector<2x1x384xf32> to vector<2x6x384xf32>
    %1006 = vector.broadcast %1004 : vector<1x6x1xf32> to vector<2x6x384xf32>
    %1007 = arith.mulf %1005, %1006 : vector<2x6x384xf32>
    %1008 = arith.addf %1000, %1007 : vector<2x6x384xf32>
    %1009 = vector.extract_strided_slice %607 {offsets = [0, 2, 0], sizes = [2, 1, 384], strides = [1, 1, 1]} : vector<2x8x384xf32> to vector<2x1x384xf32>
    %c50 = arith.constant 50 : index
    %c0_308 = arith.constant 0 : index
    %c0_309 = arith.constant 0 : index
    %1010 = vector.load %arg10[%c50, %c0_308, %c0_309] : memref<72x6x1xf32, #tpu.memory_space<vmem>>, vector<1x6x1xf32>
    %1011 = vector.shape_cast %1010 : vector<1x6x1xf32> to vector<6x1xf32>
    %1012 = vector.shape_cast %1011 : vector<6x1xf32> to vector<1x6x1xf32>
    %1013 = vector.broadcast %1009 : vector<2x1x384xf32> to vector<2x6x384xf32>
    %1014 = vector.broadcast %1012 : vector<1x6x1xf32> to vector<2x6x384xf32>
    %1015 = arith.mulf %1013, %1014 : vector<2x6x384xf32>
    %1016 = arith.addf %1008, %1015 : vector<2x6x384xf32>
    %1017 = vector.extract_strided_slice %607 {offsets = [0, 3, 0], sizes = [2, 1, 384], strides = [1, 1, 1]} : vector<2x8x384xf32> to vector<2x1x384xf32>
    %c51 = arith.constant 51 : index
    %c0_310 = arith.constant 0 : index
    %c0_311 = arith.constant 0 : index
    %1018 = vector.load %arg10[%c51, %c0_310, %c0_311] : memref<72x6x1xf32, #tpu.memory_space<vmem>>, vector<1x6x1xf32>
    %1019 = vector.shape_cast %1018 : vector<1x6x1xf32> to vector<6x1xf32>
    %1020 = vector.shape_cast %1019 : vector<6x1xf32> to vector<1x6x1xf32>
    %1021 = vector.broadcast %1017 : vector<2x1x384xf32> to vector<2x6x384xf32>
    %1022 = vector.broadcast %1020 : vector<1x6x1xf32> to vector<2x6x384xf32>
    %1023 = arith.mulf %1021, %1022 : vector<2x6x384xf32>
    %1024 = arith.addf %1016, %1023 : vector<2x6x384xf32>
    %1025 = vector.extract_strided_slice %607 {offsets = [0, 4, 0], sizes = [2, 1, 384], strides = [1, 1, 1]} : vector<2x8x384xf32> to vector<2x1x384xf32>
    %c52 = arith.constant 52 : index
    %c0_312 = arith.constant 0 : index
    %c0_313 = arith.constant 0 : index
    %1026 = vector.load %arg10[%c52, %c0_312, %c0_313] : memref<72x6x1xf32, #tpu.memory_space<vmem>>, vector<1x6x1xf32>
    %1027 = vector.shape_cast %1026 : vector<1x6x1xf32> to vector<6x1xf32>
    %1028 = vector.shape_cast %1027 : vector<6x1xf32> to vector<1x6x1xf32>
    %1029 = vector.broadcast %1025 : vector<2x1x384xf32> to vector<2x6x384xf32>
    %1030 = vector.broadcast %1028 : vector<1x6x1xf32> to vector<2x6x384xf32>
    %1031 = arith.mulf %1029, %1030 : vector<2x6x384xf32>
    %1032 = arith.addf %1024, %1031 : vector<2x6x384xf32>
    %1033 = vector.extract_strided_slice %607 {offsets = [0, 5, 0], sizes = [2, 1, 384], strides = [1, 1, 1]} : vector<2x8x384xf32> to vector<2x1x384xf32>
    %c53 = arith.constant 53 : index
    %c0_314 = arith.constant 0 : index
    %c0_315 = arith.constant 0 : index
    %1034 = vector.load %arg10[%c53, %c0_314, %c0_315] : memref<72x6x1xf32, #tpu.memory_space<vmem>>, vector<1x6x1xf32>
    %1035 = vector.shape_cast %1034 : vector<1x6x1xf32> to vector<6x1xf32>
    %1036 = vector.shape_cast %1035 : vector<6x1xf32> to vector<1x6x1xf32>
    %1037 = vector.broadcast %1033 : vector<2x1x384xf32> to vector<2x6x384xf32>
    %1038 = vector.broadcast %1036 : vector<1x6x1xf32> to vector<2x6x384xf32>
    %1039 = arith.mulf %1037, %1038 : vector<2x6x384xf32>
    %1040 = arith.addf %1032, %1039 : vector<2x6x384xf32>
    %1041 = vector.extract_strided_slice %607 {offsets = [0, 6, 0], sizes = [2, 1, 384], strides = [1, 1, 1]} : vector<2x8x384xf32> to vector<2x1x384xf32>
    %c54 = arith.constant 54 : index
    %c0_316 = arith.constant 0 : index
    %c0_317 = arith.constant 0 : index
    %1042 = vector.load %arg10[%c54, %c0_316, %c0_317] : memref<72x6x1xf32, #tpu.memory_space<vmem>>, vector<1x6x1xf32>
    %1043 = vector.shape_cast %1042 : vector<1x6x1xf32> to vector<6x1xf32>
    %1044 = vector.shape_cast %1043 : vector<6x1xf32> to vector<1x6x1xf32>
    %1045 = vector.broadcast %1041 : vector<2x1x384xf32> to vector<2x6x384xf32>
    %1046 = vector.broadcast %1044 : vector<1x6x1xf32> to vector<2x6x384xf32>
    %1047 = arith.mulf %1045, %1046 : vector<2x6x384xf32>
    %1048 = arith.addf %1040, %1047 : vector<2x6x384xf32>
    %1049 = vector.extract_strided_slice %607 {offsets = [0, 7, 0], sizes = [2, 1, 384], strides = [1, 1, 1]} : vector<2x8x384xf32> to vector<2x1x384xf32>
    %c55 = arith.constant 55 : index
    %c0_318 = arith.constant 0 : index
    %c0_319 = arith.constant 0 : index
    %1050 = vector.load %arg10[%c55, %c0_318, %c0_319] : memref<72x6x1xf32, #tpu.memory_space<vmem>>, vector<1x6x1xf32>
    %1051 = vector.shape_cast %1050 : vector<1x6x1xf32> to vector<6x1xf32>
    %1052 = vector.shape_cast %1051 : vector<6x1xf32> to vector<1x6x1xf32>
    %1053 = vector.broadcast %1049 : vector<2x1x384xf32> to vector<2x6x384xf32>
    %1054 = vector.broadcast %1052 : vector<1x6x1xf32> to vector<2x6x384xf32>
    %1055 = arith.mulf %1053, %1054 : vector<2x6x384xf32>
    %1056 = arith.addf %1048, %1055 : vector<2x6x384xf32>
    %1057 = vector.extract_strided_slice %608 {offsets = [0, 0, 0], sizes = [2, 1, 384], strides = [1, 1, 1]} : vector<2x8x384xf32> to vector<2x1x384xf32>
    %c56 = arith.constant 56 : index
    %c0_320 = arith.constant 0 : index
    %c0_321 = arith.constant 0 : index
    %1058 = vector.load %arg10[%c56, %c0_320, %c0_321] : memref<72x6x1xf32, #tpu.memory_space<vmem>>, vector<1x6x1xf32>
    %1059 = vector.shape_cast %1058 : vector<1x6x1xf32> to vector<6x1xf32>
    %1060 = vector.shape_cast %1059 : vector<6x1xf32> to vector<1x6x1xf32>
    %1061 = vector.broadcast %1057 : vector<2x1x384xf32> to vector<2x6x384xf32>
    %1062 = vector.broadcast %1060 : vector<1x6x1xf32> to vector<2x6x384xf32>
    %1063 = arith.mulf %1061, %1062 : vector<2x6x384xf32>
    %1064 = arith.addf %1056, %1063 : vector<2x6x384xf32>
    %1065 = vector.extract_strided_slice %608 {offsets = [0, 1, 0], sizes = [2, 1, 384], strides = [1, 1, 1]} : vector<2x8x384xf32> to vector<2x1x384xf32>
    %c57 = arith.constant 57 : index
    %c0_322 = arith.constant 0 : index
    %c0_323 = arith.constant 0 : index
    %1066 = vector.load %arg10[%c57, %c0_322, %c0_323] : memref<72x6x1xf32, #tpu.memory_space<vmem>>, vector<1x6x1xf32>
    %1067 = vector.shape_cast %1066 : vector<1x6x1xf32> to vector<6x1xf32>
    %1068 = vector.shape_cast %1067 : vector<6x1xf32> to vector<1x6x1xf32>
    %1069 = vector.broadcast %1065 : vector<2x1x384xf32> to vector<2x6x384xf32>
    %1070 = vector.broadcast %1068 : vector<1x6x1xf32> to vector<2x6x384xf32>
    %1071 = arith.mulf %1069, %1070 : vector<2x6x384xf32>
    %1072 = arith.addf %1064, %1071 : vector<2x6x384xf32>
    %1073 = vector.extract_strided_slice %608 {offsets = [0, 2, 0], sizes = [2, 1, 384], strides = [1, 1, 1]} : vector<2x8x384xf32> to vector<2x1x384xf32>
    %c58 = arith.constant 58 : index
    %c0_324 = arith.constant 0 : index
    %c0_325 = arith.constant 0 : index
    %1074 = vector.load %arg10[%c58, %c0_324, %c0_325] : memref<72x6x1xf32, #tpu.memory_space<vmem>>, vector<1x6x1xf32>
    %1075 = vector.shape_cast %1074 : vector<1x6x1xf32> to vector<6x1xf32>
    %1076 = vector.shape_cast %1075 : vector<6x1xf32> to vector<1x6x1xf32>
    %1077 = vector.broadcast %1073 : vector<2x1x384xf32> to vector<2x6x384xf32>
    %1078 = vector.broadcast %1076 : vector<1x6x1xf32> to vector<2x6x384xf32>
    %1079 = arith.mulf %1077, %1078 : vector<2x6x384xf32>
    %1080 = arith.addf %1072, %1079 : vector<2x6x384xf32>
    %1081 = vector.extract_strided_slice %608 {offsets = [0, 3, 0], sizes = [2, 1, 384], strides = [1, 1, 1]} : vector<2x8x384xf32> to vector<2x1x384xf32>
    %c59 = arith.constant 59 : index
    %c0_326 = arith.constant 0 : index
    %c0_327 = arith.constant 0 : index
    %1082 = vector.load %arg10[%c59, %c0_326, %c0_327] : memref<72x6x1xf32, #tpu.memory_space<vmem>>, vector<1x6x1xf32>
    %1083 = vector.shape_cast %1082 : vector<1x6x1xf32> to vector<6x1xf32>
    %1084 = vector.shape_cast %1083 : vector<6x1xf32> to vector<1x6x1xf32>
    %1085 = vector.broadcast %1081 : vector<2x1x384xf32> to vector<2x6x384xf32>
    %1086 = vector.broadcast %1084 : vector<1x6x1xf32> to vector<2x6x384xf32>
    %1087 = arith.mulf %1085, %1086 : vector<2x6x384xf32>
    %1088 = arith.addf %1080, %1087 : vector<2x6x384xf32>
    %1089 = vector.extract_strided_slice %608 {offsets = [0, 4, 0], sizes = [2, 1, 384], strides = [1, 1, 1]} : vector<2x8x384xf32> to vector<2x1x384xf32>
    %c60 = arith.constant 60 : index
    %c0_328 = arith.constant 0 : index
    %c0_329 = arith.constant 0 : index
    %1090 = vector.load %arg10[%c60, %c0_328, %c0_329] : memref<72x6x1xf32, #tpu.memory_space<vmem>>, vector<1x6x1xf32>
    %1091 = vector.shape_cast %1090 : vector<1x6x1xf32> to vector<6x1xf32>
    %1092 = vector.shape_cast %1091 : vector<6x1xf32> to vector<1x6x1xf32>
    %1093 = vector.broadcast %1089 : vector<2x1x384xf32> to vector<2x6x384xf32>
    %1094 = vector.broadcast %1092 : vector<1x6x1xf32> to vector<2x6x384xf32>
    %1095 = arith.mulf %1093, %1094 : vector<2x6x384xf32>
    %1096 = arith.addf %1088, %1095 : vector<2x6x384xf32>
    %1097 = vector.extract_strided_slice %608 {offsets = [0, 5, 0], sizes = [2, 1, 384], strides = [1, 1, 1]} : vector<2x8x384xf32> to vector<2x1x384xf32>
    %c61 = arith.constant 61 : index
    %c0_330 = arith.constant 0 : index
    %c0_331 = arith.constant 0 : index
    %1098 = vector.load %arg10[%c61, %c0_330, %c0_331] : memref<72x6x1xf32, #tpu.memory_space<vmem>>, vector<1x6x1xf32>
    %1099 = vector.shape_cast %1098 : vector<1x6x1xf32> to vector<6x1xf32>
    %1100 = vector.shape_cast %1099 : vector<6x1xf32> to vector<1x6x1xf32>
    %1101 = vector.broadcast %1097 : vector<2x1x384xf32> to vector<2x6x384xf32>
    %1102 = vector.broadcast %1100 : vector<1x6x1xf32> to vector<2x6x384xf32>
    %1103 = arith.mulf %1101, %1102 : vector<2x6x384xf32>
    %1104 = arith.addf %1096, %1103 : vector<2x6x384xf32>
    %1105 = vector.extract_strided_slice %608 {offsets = [0, 6, 0], sizes = [2, 1, 384], strides = [1, 1, 1]} : vector<2x8x384xf32> to vector<2x1x384xf32>
    %c62 = arith.constant 62 : index
    %c0_332 = arith.constant 0 : index
    %c0_333 = arith.constant 0 : index
    %1106 = vector.load %arg10[%c62, %c0_332, %c0_333] : memref<72x6x1xf32, #tpu.memory_space<vmem>>, vector<1x6x1xf32>
    %1107 = vector.shape_cast %1106 : vector<1x6x1xf32> to vector<6x1xf32>
    %1108 = vector.shape_cast %1107 : vector<6x1xf32> to vector<1x6x1xf32>
    %1109 = vector.broadcast %1105 : vector<2x1x384xf32> to vector<2x6x384xf32>
    %1110 = vector.broadcast %1108 : vector<1x6x1xf32> to vector<2x6x384xf32>
    %1111 = arith.mulf %1109, %1110 : vector<2x6x384xf32>
    %1112 = arith.addf %1104, %1111 : vector<2x6x384xf32>
    %1113 = vector.extract_strided_slice %608 {offsets = [0, 7, 0], sizes = [2, 1, 384], strides = [1, 1, 1]} : vector<2x8x384xf32> to vector<2x1x384xf32>
    %c63 = arith.constant 63 : index
    %c0_334 = arith.constant 0 : index
    %c0_335 = arith.constant 0 : index
    %1114 = vector.load %arg10[%c63, %c0_334, %c0_335] : memref<72x6x1xf32, #tpu.memory_space<vmem>>, vector<1x6x1xf32>
    %1115 = vector.shape_cast %1114 : vector<1x6x1xf32> to vector<6x1xf32>
    %1116 = vector.shape_cast %1115 : vector<6x1xf32> to vector<1x6x1xf32>
    %1117 = vector.broadcast %1113 : vector<2x1x384xf32> to vector<2x6x384xf32>
    %1118 = vector.broadcast %1116 : vector<1x6x1xf32> to vector<2x6x384xf32>
    %1119 = arith.mulf %1117, %1118 : vector<2x6x384xf32>
    %1120 = arith.addf %1112, %1119 : vector<2x6x384xf32>
    %1121 = vector.extract_strided_slice %609 {offsets = [0, 0, 0], sizes = [2, 1, 384], strides = [1, 1, 1]} : vector<2x8x384xf32> to vector<2x1x384xf32>
    %c64 = arith.constant 64 : index
    %c0_336 = arith.constant 0 : index
    %c0_337 = arith.constant 0 : index
    %1122 = vector.load %arg10[%c64, %c0_336, %c0_337] : memref<72x6x1xf32, #tpu.memory_space<vmem>>, vector<1x6x1xf32>
    %1123 = vector.shape_cast %1122 : vector<1x6x1xf32> to vector<6x1xf32>
    %1124 = vector.shape_cast %1123 : vector<6x1xf32> to vector<1x6x1xf32>
    %1125 = vector.broadcast %1121 : vector<2x1x384xf32> to vector<2x6x384xf32>
    %1126 = vector.broadcast %1124 : vector<1x6x1xf32> to vector<2x6x384xf32>
    %1127 = arith.mulf %1125, %1126 : vector<2x6x384xf32>
    %1128 = arith.addf %1120, %1127 : vector<2x6x384xf32>
    %1129 = vector.extract_strided_slice %609 {offsets = [0, 1, 0], sizes = [2, 1, 384], strides = [1, 1, 1]} : vector<2x8x384xf32> to vector<2x1x384xf32>
    %c65 = arith.constant 65 : index
    %c0_338 = arith.constant 0 : index
    %c0_339 = arith.constant 0 : index
    %1130 = vector.load %arg10[%c65, %c0_338, %c0_339] : memref<72x6x1xf32, #tpu.memory_space<vmem>>, vector<1x6x1xf32>
    %1131 = vector.shape_cast %1130 : vector<1x6x1xf32> to vector<6x1xf32>
    %1132 = vector.shape_cast %1131 : vector<6x1xf32> to vector<1x6x1xf32>
    %1133 = vector.broadcast %1129 : vector<2x1x384xf32> to vector<2x6x384xf32>
    %1134 = vector.broadcast %1132 : vector<1x6x1xf32> to vector<2x6x384xf32>
    %1135 = arith.mulf %1133, %1134 : vector<2x6x384xf32>
    %1136 = arith.addf %1128, %1135 : vector<2x6x384xf32>
    %1137 = vector.extract_strided_slice %609 {offsets = [0, 2, 0], sizes = [2, 1, 384], strides = [1, 1, 1]} : vector<2x8x384xf32> to vector<2x1x384xf32>
    %c66 = arith.constant 66 : index
    %c0_340 = arith.constant 0 : index
    %c0_341 = arith.constant 0 : index
    %1138 = vector.load %arg10[%c66, %c0_340, %c0_341] : memref<72x6x1xf32, #tpu.memory_space<vmem>>, vector<1x6x1xf32>
    %1139 = vector.shape_cast %1138 : vector<1x6x1xf32> to vector<6x1xf32>
    %1140 = vector.shape_cast %1139 : vector<6x1xf32> to vector<1x6x1xf32>
    %1141 = vector.broadcast %1137 : vector<2x1x384xf32> to vector<2x6x384xf32>
    %1142 = vector.broadcast %1140 : vector<1x6x1xf32> to vector<2x6x384xf32>
    %1143 = arith.mulf %1141, %1142 : vector<2x6x384xf32>
    %1144 = arith.addf %1136, %1143 : vector<2x6x384xf32>
    %1145 = vector.extract_strided_slice %609 {offsets = [0, 3, 0], sizes = [2, 1, 384], strides = [1, 1, 1]} : vector<2x8x384xf32> to vector<2x1x384xf32>
    %c67 = arith.constant 67 : index
    %c0_342 = arith.constant 0 : index
    %c0_343 = arith.constant 0 : index
    %1146 = vector.load %arg10[%c67, %c0_342, %c0_343] : memref<72x6x1xf32, #tpu.memory_space<vmem>>, vector<1x6x1xf32>
    %1147 = vector.shape_cast %1146 : vector<1x6x1xf32> to vector<6x1xf32>
    %1148 = vector.shape_cast %1147 : vector<6x1xf32> to vector<1x6x1xf32>
    %1149 = vector.broadcast %1145 : vector<2x1x384xf32> to vector<2x6x384xf32>
    %1150 = vector.broadcast %1148 : vector<1x6x1xf32> to vector<2x6x384xf32>
    %1151 = arith.mulf %1149, %1150 : vector<2x6x384xf32>
    %1152 = arith.addf %1144, %1151 : vector<2x6x384xf32>
    %1153 = vector.extract_strided_slice %609 {offsets = [0, 4, 0], sizes = [2, 1, 384], strides = [1, 1, 1]} : vector<2x8x384xf32> to vector<2x1x384xf32>
    %c68 = arith.constant 68 : index
    %c0_344 = arith.constant 0 : index
    %c0_345 = arith.constant 0 : index
    %1154 = vector.load %arg10[%c68, %c0_344, %c0_345] : memref<72x6x1xf32, #tpu.memory_space<vmem>>, vector<1x6x1xf32>
    %1155 = vector.shape_cast %1154 : vector<1x6x1xf32> to vector<6x1xf32>
    %1156 = vector.shape_cast %1155 : vector<6x1xf32> to vector<1x6x1xf32>
    %1157 = vector.broadcast %1153 : vector<2x1x384xf32> to vector<2x6x384xf32>
    %1158 = vector.broadcast %1156 : vector<1x6x1xf32> to vector<2x6x384xf32>
    %1159 = arith.mulf %1157, %1158 : vector<2x6x384xf32>
    %1160 = arith.addf %1152, %1159 : vector<2x6x384xf32>
    %1161 = vector.extract_strided_slice %609 {offsets = [0, 5, 0], sizes = [2, 1, 384], strides = [1, 1, 1]} : vector<2x8x384xf32> to vector<2x1x384xf32>
    %c69 = arith.constant 69 : index
    %c0_346 = arith.constant 0 : index
    %c0_347 = arith.constant 0 : index
    %1162 = vector.load %arg10[%c69, %c0_346, %c0_347] : memref<72x6x1xf32, #tpu.memory_space<vmem>>, vector<1x6x1xf32>
    %1163 = vector.shape_cast %1162 : vector<1x6x1xf32> to vector<6x1xf32>
    %1164 = vector.shape_cast %1163 : vector<6x1xf32> to vector<1x6x1xf32>
    %1165 = vector.broadcast %1161 : vector<2x1x384xf32> to vector<2x6x384xf32>
    %1166 = vector.broadcast %1164 : vector<1x6x1xf32> to vector<2x6x384xf32>
    %1167 = arith.mulf %1165, %1166 : vector<2x6x384xf32>
    %1168 = arith.addf %1160, %1167 : vector<2x6x384xf32>
    %1169 = vector.extract_strided_slice %609 {offsets = [0, 6, 0], sizes = [2, 1, 384], strides = [1, 1, 1]} : vector<2x8x384xf32> to vector<2x1x384xf32>
    %c70 = arith.constant 70 : index
    %c0_348 = arith.constant 0 : index
    %c0_349 = arith.constant 0 : index
    %1170 = vector.load %arg10[%c70, %c0_348, %c0_349] : memref<72x6x1xf32, #tpu.memory_space<vmem>>, vector<1x6x1xf32>
    %1171 = vector.shape_cast %1170 : vector<1x6x1xf32> to vector<6x1xf32>
    %1172 = vector.shape_cast %1171 : vector<6x1xf32> to vector<1x6x1xf32>
    %1173 = vector.broadcast %1169 : vector<2x1x384xf32> to vector<2x6x384xf32>
    %1174 = vector.broadcast %1172 : vector<1x6x1xf32> to vector<2x6x384xf32>
    %1175 = arith.mulf %1173, %1174 : vector<2x6x384xf32>
    %1176 = arith.addf %1168, %1175 : vector<2x6x384xf32>
    %1177 = vector.extract_strided_slice %609 {offsets = [0, 7, 0], sizes = [2, 1, 384], strides = [1, 1, 1]} : vector<2x8x384xf32> to vector<2x1x384xf32>
    %c71 = arith.constant 71 : index
    %c0_350 = arith.constant 0 : index
    %c0_351 = arith.constant 0 : index
    %1178 = vector.load %arg10[%c71, %c0_350, %c0_351] : memref<72x6x1xf32, #tpu.memory_space<vmem>>, vector<1x6x1xf32>
    %1179 = vector.shape_cast %1178 : vector<1x6x1xf32> to vector<6x1xf32>
    %1180 = vector.shape_cast %1179 : vector<6x1xf32> to vector<1x6x1xf32>
    %1181 = vector.broadcast %1177 : vector<2x1x384xf32> to vector<2x6x384xf32>
    %1182 = vector.broadcast %1180 : vector<1x6x1xf32> to vector<2x6x384xf32>
    %1183 = arith.mulf %1181, %1182 : vector<2x6x384xf32>
    %1184 = arith.addf %1176, %1183 : vector<2x6x384xf32>
    %c0_352 = arith.constant 0 : index
    %c0_353 = arith.constant 0 : index
    %c0_354 = arith.constant 0 : index
    %1185 = vector.load %arg11[%c0_352, %c0_353, %c0_354] : memref<1x6x1xf32, #tpu.memory_space<vmem>>, vector<1x6x1xf32>
    %1186 = vector.broadcast %1185 : vector<1x6x1xf32> to vector<2x6x384xf32>
    %1187 = arith.addf %1184, %1186 : vector<2x6x384xf32>
    %cst_355 = arith.constant 0.000000e+00 : f32
    %1188 = vector.broadcast %cst_355 : f32 to vector<2x6x384xf32>
    %1189 = arith.maximumf %1187, %1188 : vector<2x6x384xf32>
    %1190 = arith.addf %602, %603 : vector<2x8x384xf32>
    %1191 = arith.addf %1190, %604 : vector<2x8x384xf32>
    %1192 = arith.addf %1191, %605 : vector<2x8x384xf32>
    %1193 = arith.addf %1192, %601 : vector<2x8x384xf32>
    %1194 = arith.addf %1193, %606 : vector<2x8x384xf32>
    %1195 = arith.addf %1194, %607 : vector<2x8x384xf32>
    %1196 = arith.addf %1195, %608 : vector<2x8x384xf32>
    %1197 = arith.addf %1196, %609 : vector<2x8x384xf32>
    %cst_356 = arith.constant 0.111111112 : f32
    %1198 = vector.broadcast %cst_356 : f32 to vector<2x8x384xf32>
    %1199 = arith.mulf %1197, %1198 : vector<2x8x384xf32>
    %1200 = vector.extract_strided_slice %1189 {offsets = [0, 0, 0], sizes = [2, 1, 384], strides = [1, 1, 1]} : vector<2x6x384xf32> to vector<2x1x384xf32>
    %c0_357 = arith.constant 0 : index
    %c0_358 = arith.constant 0 : index
    %c0_359 = arith.constant 0 : index
    %1201 = vector.load %arg12[%c0_357, %c0_358, %c0_359] : memref<6x8x1xf32, #tpu.memory_space<vmem>>, vector<1x8x1xf32>
    %1202 = vector.shape_cast %1201 : vector<1x8x1xf32> to vector<8x1xf32>
    %1203 = vector.shape_cast %1202 : vector<8x1xf32> to vector<1x8x1xf32>
    %1204 = vector.broadcast %1200 : vector<2x1x384xf32> to vector<2x8x384xf32>
    %1205 = vector.broadcast %1203 : vector<1x8x1xf32> to vector<2x8x384xf32>
    %1206 = arith.mulf %1204, %1205 : vector<2x8x384xf32>
    %1207 = vector.extract_strided_slice %1189 {offsets = [0, 1, 0], sizes = [2, 1, 384], strides = [1, 1, 1]} : vector<2x6x384xf32> to vector<2x1x384xf32>
    %c1_360 = arith.constant 1 : index
    %c0_361 = arith.constant 0 : index
    %c0_362 = arith.constant 0 : index
    %1208 = vector.load %arg12[%c1_360, %c0_361, %c0_362] : memref<6x8x1xf32, #tpu.memory_space<vmem>>, vector<1x8x1xf32>
    %1209 = vector.shape_cast %1208 : vector<1x8x1xf32> to vector<8x1xf32>
    %1210 = vector.shape_cast %1209 : vector<8x1xf32> to vector<1x8x1xf32>
    %1211 = vector.broadcast %1207 : vector<2x1x384xf32> to vector<2x8x384xf32>
    %1212 = vector.broadcast %1210 : vector<1x8x1xf32> to vector<2x8x384xf32>
    %1213 = arith.mulf %1211, %1212 : vector<2x8x384xf32>
    %1214 = arith.addf %1206, %1213 : vector<2x8x384xf32>
    %1215 = vector.extract_strided_slice %1189 {offsets = [0, 2, 0], sizes = [2, 1, 384], strides = [1, 1, 1]} : vector<2x6x384xf32> to vector<2x1x384xf32>
    %c2_363 = arith.constant 2 : index
    %c0_364 = arith.constant 0 : index
    %c0_365 = arith.constant 0 : index
    %1216 = vector.load %arg12[%c2_363, %c0_364, %c0_365] : memref<6x8x1xf32, #tpu.memory_space<vmem>>, vector<1x8x1xf32>
    %1217 = vector.shape_cast %1216 : vector<1x8x1xf32> to vector<8x1xf32>
    %1218 = vector.shape_cast %1217 : vector<8x1xf32> to vector<1x8x1xf32>
    %1219 = vector.broadcast %1215 : vector<2x1x384xf32> to vector<2x8x384xf32>
    %1220 = vector.broadcast %1218 : vector<1x8x1xf32> to vector<2x8x384xf32>
    %1221 = arith.mulf %1219, %1220 : vector<2x8x384xf32>
    %1222 = arith.addf %1214, %1221 : vector<2x8x384xf32>
    %1223 = vector.extract_strided_slice %1189 {offsets = [0, 3, 0], sizes = [2, 1, 384], strides = [1, 1, 1]} : vector<2x6x384xf32> to vector<2x1x384xf32>
    %c3_366 = arith.constant 3 : index
    %c0_367 = arith.constant 0 : index
    %c0_368 = arith.constant 0 : index
    %1224 = vector.load %arg12[%c3_366, %c0_367, %c0_368] : memref<6x8x1xf32, #tpu.memory_space<vmem>>, vector<1x8x1xf32>
    %1225 = vector.shape_cast %1224 : vector<1x8x1xf32> to vector<8x1xf32>
    %1226 = vector.shape_cast %1225 : vector<8x1xf32> to vector<1x8x1xf32>
    %1227 = vector.broadcast %1223 : vector<2x1x384xf32> to vector<2x8x384xf32>
    %1228 = vector.broadcast %1226 : vector<1x8x1xf32> to vector<2x8x384xf32>
    %1229 = arith.mulf %1227, %1228 : vector<2x8x384xf32>
    %1230 = arith.addf %1222, %1229 : vector<2x8x384xf32>
    %1231 = vector.extract_strided_slice %1189 {offsets = [0, 4, 0], sizes = [2, 1, 384], strides = [1, 1, 1]} : vector<2x6x384xf32> to vector<2x1x384xf32>
    %c4_369 = arith.constant 4 : index
    %c0_370 = arith.constant 0 : index
    %c0_371 = arith.constant 0 : index
    %1232 = vector.load %arg12[%c4_369, %c0_370, %c0_371] : memref<6x8x1xf32, #tpu.memory_space<vmem>>, vector<1x8x1xf32>
    %1233 = vector.shape_cast %1232 : vector<1x8x1xf32> to vector<8x1xf32>
    %1234 = vector.shape_cast %1233 : vector<8x1xf32> to vector<1x8x1xf32>
    %1235 = vector.broadcast %1231 : vector<2x1x384xf32> to vector<2x8x384xf32>
    %1236 = vector.broadcast %1234 : vector<1x8x1xf32> to vector<2x8x384xf32>
    %1237 = arith.mulf %1235, %1236 : vector<2x8x384xf32>
    %1238 = arith.addf %1230, %1237 : vector<2x8x384xf32>
    %1239 = vector.extract_strided_slice %1189 {offsets = [0, 5, 0], sizes = [2, 1, 384], strides = [1, 1, 1]} : vector<2x6x384xf32> to vector<2x1x384xf32>
    %c5_372 = arith.constant 5 : index
    %c0_373 = arith.constant 0 : index
    %c0_374 = arith.constant 0 : index
    %1240 = vector.load %arg12[%c5_372, %c0_373, %c0_374] : memref<6x8x1xf32, #tpu.memory_space<vmem>>, vector<1x8x1xf32>
    %1241 = vector.shape_cast %1240 : vector<1x8x1xf32> to vector<8x1xf32>
    %1242 = vector.shape_cast %1241 : vector<8x1xf32> to vector<1x8x1xf32>
    %1243 = vector.broadcast %1239 : vector<2x1x384xf32> to vector<2x8x384xf32>
    %1244 = vector.broadcast %1242 : vector<1x8x1xf32> to vector<2x8x384xf32>
    %1245 = arith.mulf %1243, %1244 : vector<2x8x384xf32>
    %1246 = arith.addf %1238, %1245 : vector<2x8x384xf32>
    %1247 = vector.extract_strided_slice %1199 {offsets = [0, 0, 0], sizes = [2, 1, 384], strides = [1, 1, 1]} : vector<2x8x384xf32> to vector<2x1x384xf32>
    %c0_375 = arith.constant 0 : index
    %c0_376 = arith.constant 0 : index
    %c0_377 = arith.constant 0 : index
    %1248 = vector.load %arg13[%c0_375, %c0_376, %c0_377] : memref<8x8x1xf32, #tpu.memory_space<vmem>>, vector<1x8x1xf32>
    %1249 = vector.shape_cast %1248 : vector<1x8x1xf32> to vector<8x1xf32>
    %1250 = vector.shape_cast %1249 : vector<8x1xf32> to vector<1x8x1xf32>
    %1251 = vector.broadcast %1247 : vector<2x1x384xf32> to vector<2x8x384xf32>
    %1252 = vector.broadcast %1250 : vector<1x8x1xf32> to vector<2x8x384xf32>
    %1253 = arith.mulf %1251, %1252 : vector<2x8x384xf32>
    %1254 = arith.addf %1246, %1253 : vector<2x8x384xf32>
    %1255 = vector.extract_strided_slice %1199 {offsets = [0, 1, 0], sizes = [2, 1, 384], strides = [1, 1, 1]} : vector<2x8x384xf32> to vector<2x1x384xf32>
    %c1_378 = arith.constant 1 : index
    %c0_379 = arith.constant 0 : index
    %c0_380 = arith.constant 0 : index
    %1256 = vector.load %arg13[%c1_378, %c0_379, %c0_380] : memref<8x8x1xf32, #tpu.memory_space<vmem>>, vector<1x8x1xf32>
    %1257 = vector.shape_cast %1256 : vector<1x8x1xf32> to vector<8x1xf32>
    %1258 = vector.shape_cast %1257 : vector<8x1xf32> to vector<1x8x1xf32>
    %1259 = vector.broadcast %1255 : vector<2x1x384xf32> to vector<2x8x384xf32>
    %1260 = vector.broadcast %1258 : vector<1x8x1xf32> to vector<2x8x384xf32>
    %1261 = arith.mulf %1259, %1260 : vector<2x8x384xf32>
    %1262 = arith.addf %1254, %1261 : vector<2x8x384xf32>
    %1263 = vector.extract_strided_slice %1199 {offsets = [0, 2, 0], sizes = [2, 1, 384], strides = [1, 1, 1]} : vector<2x8x384xf32> to vector<2x1x384xf32>
    %c2_381 = arith.constant 2 : index
    %c0_382 = arith.constant 0 : index
    %c0_383 = arith.constant 0 : index
    %1264 = vector.load %arg13[%c2_381, %c0_382, %c0_383] : memref<8x8x1xf32, #tpu.memory_space<vmem>>, vector<1x8x1xf32>
    %1265 = vector.shape_cast %1264 : vector<1x8x1xf32> to vector<8x1xf32>
    %1266 = vector.shape_cast %1265 : vector<8x1xf32> to vector<1x8x1xf32>
    %1267 = vector.broadcast %1263 : vector<2x1x384xf32> to vector<2x8x384xf32>
    %1268 = vector.broadcast %1266 : vector<1x8x1xf32> to vector<2x8x384xf32>
    %1269 = arith.mulf %1267, %1268 : vector<2x8x384xf32>
    %1270 = arith.addf %1262, %1269 : vector<2x8x384xf32>
    %1271 = vector.extract_strided_slice %1199 {offsets = [0, 3, 0], sizes = [2, 1, 384], strides = [1, 1, 1]} : vector<2x8x384xf32> to vector<2x1x384xf32>
    %c3_384 = arith.constant 3 : index
    %c0_385 = arith.constant 0 : index
    %c0_386 = arith.constant 0 : index
    %1272 = vector.load %arg13[%c3_384, %c0_385, %c0_386] : memref<8x8x1xf32, #tpu.memory_space<vmem>>, vector<1x8x1xf32>
    %1273 = vector.shape_cast %1272 : vector<1x8x1xf32> to vector<8x1xf32>
    %1274 = vector.shape_cast %1273 : vector<8x1xf32> to vector<1x8x1xf32>
    %1275 = vector.broadcast %1271 : vector<2x1x384xf32> to vector<2x8x384xf32>
    %1276 = vector.broadcast %1274 : vector<1x8x1xf32> to vector<2x8x384xf32>
    %1277 = arith.mulf %1275, %1276 : vector<2x8x384xf32>
    %1278 = arith.addf %1270, %1277 : vector<2x8x384xf32>
    %1279 = vector.extract_strided_slice %1199 {offsets = [0, 4, 0], sizes = [2, 1, 384], strides = [1, 1, 1]} : vector<2x8x384xf32> to vector<2x1x384xf32>
    %c4_387 = arith.constant 4 : index
    %c0_388 = arith.constant 0 : index
    %c0_389 = arith.constant 0 : index
    %1280 = vector.load %arg13[%c4_387, %c0_388, %c0_389] : memref<8x8x1xf32, #tpu.memory_space<vmem>>, vector<1x8x1xf32>
    %1281 = vector.shape_cast %1280 : vector<1x8x1xf32> to vector<8x1xf32>
    %1282 = vector.shape_cast %1281 : vector<8x1xf32> to vector<1x8x1xf32>
    %1283 = vector.broadcast %1279 : vector<2x1x384xf32> to vector<2x8x384xf32>
    %1284 = vector.broadcast %1282 : vector<1x8x1xf32> to vector<2x8x384xf32>
    %1285 = arith.mulf %1283, %1284 : vector<2x8x384xf32>
    %1286 = arith.addf %1278, %1285 : vector<2x8x384xf32>
    %1287 = vector.extract_strided_slice %1199 {offsets = [0, 5, 0], sizes = [2, 1, 384], strides = [1, 1, 1]} : vector<2x8x384xf32> to vector<2x1x384xf32>
    %c5_390 = arith.constant 5 : index
    %c0_391 = arith.constant 0 : index
    %c0_392 = arith.constant 0 : index
    %1288 = vector.load %arg13[%c5_390, %c0_391, %c0_392] : memref<8x8x1xf32, #tpu.memory_space<vmem>>, vector<1x8x1xf32>
    %1289 = vector.shape_cast %1288 : vector<1x8x1xf32> to vector<8x1xf32>
    %1290 = vector.shape_cast %1289 : vector<8x1xf32> to vector<1x8x1xf32>
    %1291 = vector.broadcast %1287 : vector<2x1x384xf32> to vector<2x8x384xf32>
    %1292 = vector.broadcast %1290 : vector<1x8x1xf32> to vector<2x8x384xf32>
    %1293 = arith.mulf %1291, %1292 : vector<2x8x384xf32>
    %1294 = arith.addf %1286, %1293 : vector<2x8x384xf32>
    %1295 = vector.extract_strided_slice %1199 {offsets = [0, 6, 0], sizes = [2, 1, 384], strides = [1, 1, 1]} : vector<2x8x384xf32> to vector<2x1x384xf32>
    %c6_393 = arith.constant 6 : index
    %c0_394 = arith.constant 0 : index
    %c0_395 = arith.constant 0 : index
    %1296 = vector.load %arg13[%c6_393, %c0_394, %c0_395] : memref<8x8x1xf32, #tpu.memory_space<vmem>>, vector<1x8x1xf32>
    %1297 = vector.shape_cast %1296 : vector<1x8x1xf32> to vector<8x1xf32>
    %1298 = vector.shape_cast %1297 : vector<8x1xf32> to vector<1x8x1xf32>
    %1299 = vector.broadcast %1295 : vector<2x1x384xf32> to vector<2x8x384xf32>
    %1300 = vector.broadcast %1298 : vector<1x8x1xf32> to vector<2x8x384xf32>
    %1301 = arith.mulf %1299, %1300 : vector<2x8x384xf32>
    %1302 = arith.addf %1294, %1301 : vector<2x8x384xf32>
    %1303 = vector.extract_strided_slice %1199 {offsets = [0, 7, 0], sizes = [2, 1, 384], strides = [1, 1, 1]} : vector<2x8x384xf32> to vector<2x1x384xf32>
    %c7_396 = arith.constant 7 : index
    %c0_397 = arith.constant 0 : index
    %c0_398 = arith.constant 0 : index
    %1304 = vector.load %arg13[%c7_396, %c0_397, %c0_398] : memref<8x8x1xf32, #tpu.memory_space<vmem>>, vector<1x8x1xf32>
    %1305 = vector.shape_cast %1304 : vector<1x8x1xf32> to vector<8x1xf32>
    %1306 = vector.shape_cast %1305 : vector<8x1xf32> to vector<1x8x1xf32>
    %1307 = vector.broadcast %1303 : vector<2x1x384xf32> to vector<2x8x384xf32>
    %1308 = vector.broadcast %1306 : vector<1x8x1xf32> to vector<2x8x384xf32>
    %1309 = arith.mulf %1307, %1308 : vector<2x8x384xf32>
    %1310 = arith.addf %1302, %1309 : vector<2x8x384xf32>
    %1311 = vector.extract_strided_slice %601 {offsets = [0, 0, 0], sizes = [2, 1, 384], strides = [1, 1, 1]} : vector<2x8x384xf32> to vector<2x1x384xf32>
    %c0_399 = arith.constant 0 : index
    %c0_400 = arith.constant 0 : index
    %c0_401 = arith.constant 0 : index
    %1312 = vector.load %arg14[%c0_399, %c0_400, %c0_401] : memref<8x8x1xf32, #tpu.memory_space<vmem>>, vector<1x8x1xf32>
    %1313 = vector.shape_cast %1312 : vector<1x8x1xf32> to vector<8x1xf32>
    %1314 = vector.shape_cast %1313 : vector<8x1xf32> to vector<1x8x1xf32>
    %1315 = vector.broadcast %1311 : vector<2x1x384xf32> to vector<2x8x384xf32>
    %1316 = vector.broadcast %1314 : vector<1x8x1xf32> to vector<2x8x384xf32>
    %1317 = arith.mulf %1315, %1316 : vector<2x8x384xf32>
    %1318 = arith.addf %1310, %1317 : vector<2x8x384xf32>
    %1319 = vector.extract_strided_slice %601 {offsets = [0, 1, 0], sizes = [2, 1, 384], strides = [1, 1, 1]} : vector<2x8x384xf32> to vector<2x1x384xf32>
    %c1_402 = arith.constant 1 : index
    %c0_403 = arith.constant 0 : index
    %c0_404 = arith.constant 0 : index
    %1320 = vector.load %arg14[%c1_402, %c0_403, %c0_404] : memref<8x8x1xf32, #tpu.memory_space<vmem>>, vector<1x8x1xf32>
    %1321 = vector.shape_cast %1320 : vector<1x8x1xf32> to vector<8x1xf32>
    %1322 = vector.shape_cast %1321 : vector<8x1xf32> to vector<1x8x1xf32>
    %1323 = vector.broadcast %1319 : vector<2x1x384xf32> to vector<2x8x384xf32>
    %1324 = vector.broadcast %1322 : vector<1x8x1xf32> to vector<2x8x384xf32>
    %1325 = arith.mulf %1323, %1324 : vector<2x8x384xf32>
    %1326 = arith.addf %1318, %1325 : vector<2x8x384xf32>
    %1327 = vector.extract_strided_slice %601 {offsets = [0, 2, 0], sizes = [2, 1, 384], strides = [1, 1, 1]} : vector<2x8x384xf32> to vector<2x1x384xf32>
    %c2_405 = arith.constant 2 : index
    %c0_406 = arith.constant 0 : index
    %c0_407 = arith.constant 0 : index
    %1328 = vector.load %arg14[%c2_405, %c0_406, %c0_407] : memref<8x8x1xf32, #tpu.memory_space<vmem>>, vector<1x8x1xf32>
    %1329 = vector.shape_cast %1328 : vector<1x8x1xf32> to vector<8x1xf32>
    %1330 = vector.shape_cast %1329 : vector<8x1xf32> to vector<1x8x1xf32>
    %1331 = vector.broadcast %1327 : vector<2x1x384xf32> to vector<2x8x384xf32>
    %1332 = vector.broadcast %1330 : vector<1x8x1xf32> to vector<2x8x384xf32>
    %1333 = arith.mulf %1331, %1332 : vector<2x8x384xf32>
    %1334 = arith.addf %1326, %1333 : vector<2x8x384xf32>
    %1335 = vector.extract_strided_slice %601 {offsets = [0, 3, 0], sizes = [2, 1, 384], strides = [1, 1, 1]} : vector<2x8x384xf32> to vector<2x1x384xf32>
    %c3_408 = arith.constant 3 : index
    %c0_409 = arith.constant 0 : index
    %c0_410 = arith.constant 0 : index
    %1336 = vector.load %arg14[%c3_408, %c0_409, %c0_410] : memref<8x8x1xf32, #tpu.memory_space<vmem>>, vector<1x8x1xf32>
    %1337 = vector.shape_cast %1336 : vector<1x8x1xf32> to vector<8x1xf32>
    %1338 = vector.shape_cast %1337 : vector<8x1xf32> to vector<1x8x1xf32>
    %1339 = vector.broadcast %1335 : vector<2x1x384xf32> to vector<2x8x384xf32>
    %1340 = vector.broadcast %1338 : vector<1x8x1xf32> to vector<2x8x384xf32>
    %1341 = arith.mulf %1339, %1340 : vector<2x8x384xf32>
    %1342 = arith.addf %1334, %1341 : vector<2x8x384xf32>
    %1343 = vector.extract_strided_slice %601 {offsets = [0, 4, 0], sizes = [2, 1, 384], strides = [1, 1, 1]} : vector<2x8x384xf32> to vector<2x1x384xf32>
    %c4_411 = arith.constant 4 : index
    %c0_412 = arith.constant 0 : index
    %c0_413 = arith.constant 0 : index
    %1344 = vector.load %arg14[%c4_411, %c0_412, %c0_413] : memref<8x8x1xf32, #tpu.memory_space<vmem>>, vector<1x8x1xf32>
    %1345 = vector.shape_cast %1344 : vector<1x8x1xf32> to vector<8x1xf32>
    %1346 = vector.shape_cast %1345 : vector<8x1xf32> to vector<1x8x1xf32>
    %1347 = vector.broadcast %1343 : vector<2x1x384xf32> to vector<2x8x384xf32>
    %1348 = vector.broadcast %1346 : vector<1x8x1xf32> to vector<2x8x384xf32>
    %1349 = arith.mulf %1347, %1348 : vector<2x8x384xf32>
    %1350 = arith.addf %1342, %1349 : vector<2x8x384xf32>
    %1351 = vector.extract_strided_slice %601 {offsets = [0, 5, 0], sizes = [2, 1, 384], strides = [1, 1, 1]} : vector<2x8x384xf32> to vector<2x1x384xf32>
    %c5_414 = arith.constant 5 : index
    %c0_415 = arith.constant 0 : index
    %c0_416 = arith.constant 0 : index
    %1352 = vector.load %arg14[%c5_414, %c0_415, %c0_416] : memref<8x8x1xf32, #tpu.memory_space<vmem>>, vector<1x8x1xf32>
    %1353 = vector.shape_cast %1352 : vector<1x8x1xf32> to vector<8x1xf32>
    %1354 = vector.shape_cast %1353 : vector<8x1xf32> to vector<1x8x1xf32>
    %1355 = vector.broadcast %1351 : vector<2x1x384xf32> to vector<2x8x384xf32>
    %1356 = vector.broadcast %1354 : vector<1x8x1xf32> to vector<2x8x384xf32>
    %1357 = arith.mulf %1355, %1356 : vector<2x8x384xf32>
    %1358 = arith.addf %1350, %1357 : vector<2x8x384xf32>
    %1359 = vector.extract_strided_slice %601 {offsets = [0, 6, 0], sizes = [2, 1, 384], strides = [1, 1, 1]} : vector<2x8x384xf32> to vector<2x1x384xf32>
    %c6_417 = arith.constant 6 : index
    %c0_418 = arith.constant 0 : index
    %c0_419 = arith.constant 0 : index
    %1360 = vector.load %arg14[%c6_417, %c0_418, %c0_419] : memref<8x8x1xf32, #tpu.memory_space<vmem>>, vector<1x8x1xf32>
    %1361 = vector.shape_cast %1360 : vector<1x8x1xf32> to vector<8x1xf32>
    %1362 = vector.shape_cast %1361 : vector<8x1xf32> to vector<1x8x1xf32>
    %1363 = vector.broadcast %1359 : vector<2x1x384xf32> to vector<2x8x384xf32>
    %1364 = vector.broadcast %1362 : vector<1x8x1xf32> to vector<2x8x384xf32>
    %1365 = arith.mulf %1363, %1364 : vector<2x8x384xf32>
    %1366 = arith.addf %1358, %1365 : vector<2x8x384xf32>
    %1367 = vector.extract_strided_slice %601 {offsets = [0, 7, 0], sizes = [2, 1, 384], strides = [1, 1, 1]} : vector<2x8x384xf32> to vector<2x1x384xf32>
    %c7_420 = arith.constant 7 : index
    %c0_421 = arith.constant 0 : index
    %c0_422 = arith.constant 0 : index
    %1368 = vector.load %arg14[%c7_420, %c0_421, %c0_422] : memref<8x8x1xf32, #tpu.memory_space<vmem>>, vector<1x8x1xf32>
    %1369 = vector.shape_cast %1368 : vector<1x8x1xf32> to vector<8x1xf32>
    %1370 = vector.shape_cast %1369 : vector<8x1xf32> to vector<1x8x1xf32>
    %1371 = vector.broadcast %1367 : vector<2x1x384xf32> to vector<2x8x384xf32>
    %1372 = vector.broadcast %1370 : vector<1x8x1xf32> to vector<2x8x384xf32>
    %1373 = arith.mulf %1371, %1372 : vector<2x8x384xf32>
    %1374 = arith.addf %1366, %1373 : vector<2x8x384xf32>
    %c0_423 = arith.constant 0 : index
    %c0_424 = arith.constant 0 : index
    %c0_425 = arith.constant 0 : index
    %1375 = vector.load %arg15[%c0_423, %c0_424, %c0_425] : memref<1x8x1xf32, #tpu.memory_space<vmem>>, vector<1x8x1xf32>
    %1376 = vector.broadcast %1375 : vector<1x8x1xf32> to vector<2x8x384xf32>
    %1377 = arith.addf %1374, %1376 : vector<2x8x384xf32>
    %cst_426 = arith.constant 0.000000e+00 : f32
    %1378 = vector.broadcast %cst_426 : f32 to vector<2x8x384xf32>
    %1379 = arith.maximumf %1377, %1378 : vector<2x8x384xf32>
    %1380 = vector.broadcast %97 : vector<1x1x384xf32> to vector<2x8x384xf32>
    %1381 = arith.mulf %1379, %1380 : vector<2x8x384xf32>
    %cst_427 = arith.constant dense<0.000000e+00> : vector<2x8xf32>
    %1382 = vector.multi_reduction <add>, %1381, %cst_427 [2] : vector<2x8x384xf32> to vector<2x8xf32>
    %cst_428 = arith.constant 3.906250e-03 : f32
    %1383 = vector.broadcast %cst_428 : f32 to vector<2x8xf32>
    %1384 = arith.mulf %1382, %1383 : vector<2x8xf32>
    %1385 = vector.extract_strided_slice %1384 {offsets = [0, 0], sizes = [2, 1], strides = [1, 1]} : vector<2x8xf32> to vector<2x1xf32>
    %c0_429 = arith.constant 0 : index
    %c0_430 = arith.constant 0 : index
    %c0_431 = arith.constant 0 : index
    %1386 = vector.load %arg16[%c0_429, %c0_430, %c0_431] : memref<8x1x10xf32, #tpu.memory_space<vmem>>, vector<1x1x10xf32>
    %1387 = vector.shape_cast %1386 : vector<1x1x10xf32> to vector<1x10xf32>
    %1388 = vector.broadcast %1385 : vector<2x1xf32> to vector<2x10xf32>
    %1389 = vector.broadcast %1387 : vector<1x10xf32> to vector<2x10xf32>
    %1390 = arith.mulf %1388, %1389 : vector<2x10xf32>
    %1391 = vector.extract_strided_slice %1384 {offsets = [0, 1], sizes = [2, 1], strides = [1, 1]} : vector<2x8xf32> to vector<2x1xf32>
    %c1_432 = arith.constant 1 : index
    %c0_433 = arith.constant 0 : index
    %c0_434 = arith.constant 0 : index
    %1392 = vector.load %arg16[%c1_432, %c0_433, %c0_434] : memref<8x1x10xf32, #tpu.memory_space<vmem>>, vector<1x1x10xf32>
    %1393 = vector.shape_cast %1392 : vector<1x1x10xf32> to vector<1x10xf32>
    %1394 = vector.broadcast %1391 : vector<2x1xf32> to vector<2x10xf32>
    %1395 = vector.broadcast %1393 : vector<1x10xf32> to vector<2x10xf32>
    %1396 = arith.mulf %1394, %1395 : vector<2x10xf32>
    %1397 = arith.addf %1390, %1396 : vector<2x10xf32>
    %1398 = vector.extract_strided_slice %1384 {offsets = [0, 2], sizes = [2, 1], strides = [1, 1]} : vector<2x8xf32> to vector<2x1xf32>
    %c2_435 = arith.constant 2 : index
    %c0_436 = arith.constant 0 : index
    %c0_437 = arith.constant 0 : index
    %1399 = vector.load %arg16[%c2_435, %c0_436, %c0_437] : memref<8x1x10xf32, #tpu.memory_space<vmem>>, vector<1x1x10xf32>
    %1400 = vector.shape_cast %1399 : vector<1x1x10xf32> to vector<1x10xf32>
    %1401 = vector.broadcast %1398 : vector<2x1xf32> to vector<2x10xf32>
    %1402 = vector.broadcast %1400 : vector<1x10xf32> to vector<2x10xf32>
    %1403 = arith.mulf %1401, %1402 : vector<2x10xf32>
    %1404 = arith.addf %1397, %1403 : vector<2x10xf32>
    %1405 = vector.extract_strided_slice %1384 {offsets = [0, 3], sizes = [2, 1], strides = [1, 1]} : vector<2x8xf32> to vector<2x1xf32>
    %c3_438 = arith.constant 3 : index
    %c0_439 = arith.constant 0 : index
    %c0_440 = arith.constant 0 : index
    %1406 = vector.load %arg16[%c3_438, %c0_439, %c0_440] : memref<8x1x10xf32, #tpu.memory_space<vmem>>, vector<1x1x10xf32>
    %1407 = vector.shape_cast %1406 : vector<1x1x10xf32> to vector<1x10xf32>
    %1408 = vector.broadcast %1405 : vector<2x1xf32> to vector<2x10xf32>
    %1409 = vector.broadcast %1407 : vector<1x10xf32> to vector<2x10xf32>
    %1410 = arith.mulf %1408, %1409 : vector<2x10xf32>
    %1411 = arith.addf %1404, %1410 : vector<2x10xf32>
    %1412 = vector.extract_strided_slice %1384 {offsets = [0, 4], sizes = [2, 1], strides = [1, 1]} : vector<2x8xf32> to vector<2x1xf32>
    %c4_441 = arith.constant 4 : index
    %c0_442 = arith.constant 0 : index
    %c0_443 = arith.constant 0 : index
    %1413 = vector.load %arg16[%c4_441, %c0_442, %c0_443] : memref<8x1x10xf32, #tpu.memory_space<vmem>>, vector<1x1x10xf32>
    %1414 = vector.shape_cast %1413 : vector<1x1x10xf32> to vector<1x10xf32>
    %1415 = vector.broadcast %1412 : vector<2x1xf32> to vector<2x10xf32>
    %1416 = vector.broadcast %1414 : vector<1x10xf32> to vector<2x10xf32>
    %1417 = arith.mulf %1415, %1416 : vector<2x10xf32>
    %1418 = arith.addf %1411, %1417 : vector<2x10xf32>
    %1419 = vector.extract_strided_slice %1384 {offsets = [0, 5], sizes = [2, 1], strides = [1, 1]} : vector<2x8xf32> to vector<2x1xf32>
    %c5_444 = arith.constant 5 : index
    %c0_445 = arith.constant 0 : index
    %c0_446 = arith.constant 0 : index
    %1420 = vector.load %arg16[%c5_444, %c0_445, %c0_446] : memref<8x1x10xf32, #tpu.memory_space<vmem>>, vector<1x1x10xf32>
    %1421 = vector.shape_cast %1420 : vector<1x1x10xf32> to vector<1x10xf32>
    %1422 = vector.broadcast %1419 : vector<2x1xf32> to vector<2x10xf32>
    %1423 = vector.broadcast %1421 : vector<1x10xf32> to vector<2x10xf32>
    %1424 = arith.mulf %1422, %1423 : vector<2x10xf32>
    %1425 = arith.addf %1418, %1424 : vector<2x10xf32>
    %1426 = vector.extract_strided_slice %1384 {offsets = [0, 6], sizes = [2, 1], strides = [1, 1]} : vector<2x8xf32> to vector<2x1xf32>
    %c6_447 = arith.constant 6 : index
    %c0_448 = arith.constant 0 : index
    %c0_449 = arith.constant 0 : index
    %1427 = vector.load %arg16[%c6_447, %c0_448, %c0_449] : memref<8x1x10xf32, #tpu.memory_space<vmem>>, vector<1x1x10xf32>
    %1428 = vector.shape_cast %1427 : vector<1x1x10xf32> to vector<1x10xf32>
    %1429 = vector.broadcast %1426 : vector<2x1xf32> to vector<2x10xf32>
    %1430 = vector.broadcast %1428 : vector<1x10xf32> to vector<2x10xf32>
    %1431 = arith.mulf %1429, %1430 : vector<2x10xf32>
    %1432 = arith.addf %1425, %1431 : vector<2x10xf32>
    %1433 = vector.extract_strided_slice %1384 {offsets = [0, 7], sizes = [2, 1], strides = [1, 1]} : vector<2x8xf32> to vector<2x1xf32>
    %c7_450 = arith.constant 7 : index
    %c0_451 = arith.constant 0 : index
    %c0_452 = arith.constant 0 : index
    %1434 = vector.load %arg16[%c7_450, %c0_451, %c0_452] : memref<8x1x10xf32, #tpu.memory_space<vmem>>, vector<1x1x10xf32>
    %1435 = vector.shape_cast %1434 : vector<1x1x10xf32> to vector<1x10xf32>
    %1436 = vector.broadcast %1433 : vector<2x1xf32> to vector<2x10xf32>
    %1437 = vector.broadcast %1435 : vector<1x10xf32> to vector<2x10xf32>
    %1438 = arith.mulf %1436, %1437 : vector<2x10xf32>
    %1439 = arith.addf %1432, %1438 : vector<2x10xf32>
    %c0_453 = arith.constant 0 : index
    %c0_454 = arith.constant 0 : index
    %1440 = vector.load %arg17[%c0_453, %c0_454] : memref<1x10xf32, #tpu.memory_space<vmem>>, vector<1x10xf32>
    %1441 = vector.broadcast %1440 : vector<1x10xf32> to vector<2x10xf32>
    %1442 = arith.addf %1439, %1441 : vector<2x10xf32>
    %c0_455 = arith.constant 0 : index
    %c0_456 = arith.constant 0 : index
    %1443 = vector.load %arg18[%c0_455, %c0_456] : memref<2x10xf32, #tpu.memory_space<vmem>>, vector<2x10xf32>
    tpu.vector_store %arg18[%c0_455, %c0_456], %1442 {strides = array<i32>} : memref<2x10xf32, #tpu.memory_space<vmem>>, vector<2x10xf32>,
    return
  }
  func.func @transform_0(%arg0: i32) -> (i32, i32, i32) {
    %c0_i32 = arith.constant 0 : i32
    %c0_i32_0 = arith.constant 0 : i32
    %c0_i32_1 = arith.constant 0 : i32
    return %arg0, %c0_i32, %c0_i32_0 : i32, i32, i32
  }
  func.func @transform_1(%arg0: i32) -> (i32, i32, i32) {
    %c0_i32 = arith.constant 0 : i32
    %c0_i32_0 = arith.constant 0 : i32
    %c0_i32_1 = arith.constant 0 : i32
    %c0_i32_2 = arith.constant 0 : i32
    return %c0_i32, %c0_i32_0, %c0_i32_1 : i32, i32, i32
  }
  func.func @transform_2(%arg0: i32) -> (i32, i32, i32) {
    %c0_i32 = arith.constant 0 : i32
    %c0_i32_0 = arith.constant 0 : i32
    %c0_i32_1 = arith.constant 0 : i32
    %c0_i32_2 = arith.constant 0 : i32
    return %c0_i32, %c0_i32_0, %c0_i32_1 : i32, i32, i32
  }
  func.func @transform_3(%arg0: i32) -> (i32, i32, i32) {
    %c0_i32 = arith.constant 0 : i32
    %c0_i32_0 = arith.constant 0 : i32
    %c0_i32_1 = arith.constant 0 : i32
    %c0_i32_2 = arith.constant 0 : i32
    return %c0_i32, %c0_i32_0, %c0_i32_1 : i32, i32, i32
  }
  func.func @transform_4(%arg0: i32) -> (i32, i32, i32) {
    %c0_i32 = arith.constant 0 : i32
    %c0_i32_0 = arith.constant 0 : i32
    %c0_i32_1 = arith.constant 0 : i32
    %c0_i32_2 = arith.constant 0 : i32
    return %c0_i32, %c0_i32_0, %c0_i32_1 : i32, i32, i32
  }
  func.func @transform_5(%arg0: i32) -> (i32, i32, i32) {
    %c0_i32 = arith.constant 0 : i32
    %c0_i32_0 = arith.constant 0 : i32
    %c0_i32_1 = arith.constant 0 : i32
    %c0_i32_2 = arith.constant 0 : i32
    return %c0_i32, %c0_i32_0, %c0_i32_1 : i32, i32, i32
  }
  func.func @transform_6(%arg0: i32) -> (i32, i32, i32) {
    %c0_i32 = arith.constant 0 : i32
    %c0_i32_0 = arith.constant 0 : i32
    %c0_i32_1 = arith.constant 0 : i32
    %c0_i32_2 = arith.constant 0 : i32
    return %c0_i32, %c0_i32_0, %c0_i32_1 : i32, i32, i32
  }
  func.func @transform_7(%arg0: i32) -> (i32, i32, i32) {
    %c0_i32 = arith.constant 0 : i32
    %c0_i32_0 = arith.constant 0 : i32
    %c0_i32_1 = arith.constant 0 : i32
    %c0_i32_2 = arith.constant 0 : i32
    return %c0_i32, %c0_i32_0, %c0_i32_1 : i32, i32, i32
  }
  func.func @transform_8(%arg0: i32) -> (i32, i32, i32) {
    %c0_i32 = arith.constant 0 : i32
    %c0_i32_0 = arith.constant 0 : i32
    %c0_i32_1 = arith.constant 0 : i32
    %c0_i32_2 = arith.constant 0 : i32
    return %c0_i32, %c0_i32_0, %c0_i32_1 : i32, i32, i32
  }
  func.func @transform_9(%arg0: i32) -> (i32, i32, i32) {
    %c0_i32 = arith.constant 0 : i32
    %c0_i32_0 = arith.constant 0 : i32
    %c0_i32_1 = arith.constant 0 : i32
    %c0_i32_2 = arith.constant 0 : i32
    return %c0_i32, %c0_i32_0, %c0_i32_1 : i32, i32, i32
  }
  func.func @transform_10(%arg0: i32) -> (i32, i32, i32) {
    %c0_i32 = arith.constant 0 : i32
    %c0_i32_0 = arith.constant 0 : i32
    %c0_i32_1 = arith.constant 0 : i32
    %c0_i32_2 = arith.constant 0 : i32
    return %c0_i32, %c0_i32_0, %c0_i32_1 : i32, i32, i32
  }
  func.func @transform_11(%arg0: i32) -> (i32, i32, i32) {
    %c0_i32 = arith.constant 0 : i32
    %c0_i32_0 = arith.constant 0 : i32
    %c0_i32_1 = arith.constant 0 : i32
    %c0_i32_2 = arith.constant 0 : i32
    return %c0_i32, %c0_i32_0, %c0_i32_1 : i32, i32, i32
  }
  func.func @transform_12(%arg0: i32) -> (i32, i32, i32) {
    %c0_i32 = arith.constant 0 : i32
    %c0_i32_0 = arith.constant 0 : i32
    %c0_i32_1 = arith.constant 0 : i32
    %c0_i32_2 = arith.constant 0 : i32
    return %c0_i32, %c0_i32_0, %c0_i32_1 : i32, i32, i32
  }
  func.func @transform_13(%arg0: i32) -> (i32, i32, i32) {
    %c0_i32 = arith.constant 0 : i32
    %c0_i32_0 = arith.constant 0 : i32
    %c0_i32_1 = arith.constant 0 : i32
    %c0_i32_2 = arith.constant 0 : i32
    return %c0_i32, %c0_i32_0, %c0_i32_1 : i32, i32, i32
  }
  func.func @transform_14(%arg0: i32) -> (i32, i32, i32) {
    %c0_i32 = arith.constant 0 : i32
    %c0_i32_0 = arith.constant 0 : i32
    %c0_i32_1 = arith.constant 0 : i32
    %c0_i32_2 = arith.constant 0 : i32
    return %c0_i32, %c0_i32_0, %c0_i32_1 : i32, i32, i32
  }
  func.func @transform_15(%arg0: i32) -> (i32, i32, i32) {
    %c0_i32 = arith.constant 0 : i32
    %c0_i32_0 = arith.constant 0 : i32
    %c0_i32_1 = arith.constant 0 : i32
    %c0_i32_2 = arith.constant 0 : i32
    return %c0_i32, %c0_i32_0, %c0_i32_1 : i32, i32, i32
  }
  func.func @transform_16(%arg0: i32) -> (i32, i32) {
    %c0_i32 = arith.constant 0 : i32
    %c0_i32_0 = arith.constant 0 : i32
    %c0_i32_1 = arith.constant 0 : i32
    return %c0_i32, %c0_i32_0 : i32, i32
  }
  func.func @transform_17(%arg0: i32) -> (i32, i32) {
    %c0_i32 = arith.constant 0 : i32
    %c0_i32_0 = arith.constant 0 : i32
    return %arg0, %c0_i32 : i32, i32
  }
}

</mosaic_0001>

<llo_original>
// kernel: forward.1
$region0: #{forward.1}
  #allocation0 [shape = 'u32[]', space=smem, size = 0x4, offset = 0x4, fixed_abs, tag = 'smem constant byte address 0x4 - core index']
  #allocation1 [shape = 'u32[144,128]{1,0:T(1,128)}', space=vmem, size = 0x12000, scoped, tag = 'internal scratch']
  %s0 = inlined_call_operand.vmem [shape: f32[2,1,384], index: 0, kind: input, shape index: {}]
  %s1 = inlined_call_operand.hbm [shape: f32[9,4,1], index: 1, kind: input, shape index: {}]
  %s2 = inlined_call_operand.hbm [shape: f32[1,4,1], index: 2, kind: input, shape index: {}]
  %s3 = inlined_call_operand.hbm [shape: f32[36,6,1], index: 3, kind: input, shape index: {}]
  %s4 = inlined_call_operand.hbm [shape: f32[1,6,1], index: 4, kind: input, shape index: {}]
  %s5 = inlined_call_operand.hbm [shape: f32[6,8,1], index: 5, kind: input, shape index: {}]
  %s6 = inlined_call_operand.hbm [shape: f32[4,8,1], index: 6, kind: input, shape index: {}]
  %s7 = inlined_call_operand.hbm [shape: f32[4,8,1], index: 7, kind: input, shape index: {}]
  %s8 = inlined_call_operand.hbm [shape: f32[1,8,1], index: 8, kind: input, shape index: {}]
  %s9 = inlined_call_operand.hbm [shape: f32[72,6,1], index: 9, kind: input, shape index: {}]
  %s10 = inlined_call_operand.hbm [shape: f32[1,6,1], index: 10, kind: input, shape index: {}]
  %s11 = inlined_call_operand.vmem [shape: f32[6,8,1], index: 11, kind: input, shape index: {}]
  %s12 = inlined_call_operand.vmem [shape: f32[8,8,1], index: 12, kind: input, shape index: {}]
  %s13 = inlined_call_operand.vmem [shape: f32[8,8,1], index: 13, kind: input, shape index: {}]
  %s14 = inlined_call_operand.vmem [shape: f32[1,8,1], index: 14, kind: input, shape index: {}]
  %s15 = inlined_call_operand.vmem [shape: f32[8,1,10], index: 15, kind: input, shape index: {}]
  %s16 = inlined_call_operand.vmem [shape: f32[1,10], index: 16, kind: input, shape index: {}]
  %s17 = inlined_call_operand.hbm [shape: f32[2,10], index: 17, kind: output, shape index: {}]
  %s18 = sld [smem:[#allocation0]]
  $region118: #{forward.1} parent=0
    _
  %s20 = ssub.s32 1, %s18
  %s21 = scalar_select 0, %s20, %s18
  $region1: #{forward.1} parent=0
    #allocation2 [shape = 'u8[18432]{0}', space=vmem, size = 0x4800, scoped, tag = 'input window, operand 1, single buffered']
    #allocation3 [shape = 's32[1]{0}', space=sflag, size = 0x4, scoped, tag = 'scoped memory for forward.1']
    #allocation4 [shape = 's32[1]{0}', space=sflag, size = 0x4, scoped, tag = 'scoped memory for forward.1']
    #allocation5 [shape = 'u8[2048]{0}', space=vmem, size = 0x800, scoped, tag = 'input window, operand 2, single buffered']
    #allocation6 [shape = 's32[1]{0}', space=sflag, size = 0x4, scoped, tag = 'scoped memory for forward.1']
    #allocation7 [shape = 'u8[147456]{0}', space=vmem, size = 0x24000, scoped, tag = 'input window, operand 3, single buffered']
    #allocation8 [shape = 'u8[4096]{0}', space=vmem, size = 0x1000, scoped, tag = 'input window, operand 4, single buffered']
    #allocation9 [shape = 's32[1]{0}', space=sflag, size = 0x4, scoped, tag = 'scoped memory for forward.1']
    #allocation10 [shape = 'u8[24576]{0}', space=vmem, size = 0x6000, scoped, tag = 'input window, operand 5, single buffered']
    #allocation11 [shape = 'u8[16384]{0}', space=vmem, size = 0x4000, scoped, tag = 'input window, operand 6, single buffered']
    #allocation12 [shape = 's32[1]{0}', space=sflag, size = 0x4, scoped, tag = 'scoped memory for forward.1']
    #allocation13 [shape = 'u8[16384]{0}', space=vmem, size = 0x4000, scoped, tag = 'input window, operand 7, single buffered']
    #allocation14 [shape = 'u8[4096]{0}', space=vmem, size = 0x1000, scoped, tag = 'input window, operand 8, single buffered']
    #allocation15 [shape = 's32[1]{0}', space=sflag, size = 0x4, scoped, tag = 'scoped memory for forward.1']
    #allocation16 [shape = 'u8[294912]{0}', space=vmem, size = 0x48000, scoped, tag = 'input window, operand 9, single buffered']
    #allocation17 [shape = 'u8[4096]{0}', space=vmem, size = 0x1000, scoped, tag = 'input window, operand 10, single buffered']
    #allocation18 [shape = 's32[1]{0}', space=sflag, size = 0x4, scoped, tag = 'scoped memory for forward.1']
    #allocation19 [shape = 'u8[1024]{0}', space=vmem, size = 0x400, scoped, tag = 'output window, operand 0, single buffered']
    %22 = vsyncpa [#allocation3], 0
    %23 = vsyncpa [#allocation6], 0
    %24 = vsyncpa [#allocation9], 0
    %25 = vsyncpa [#allocation12], 0
    %26 = vsyncpa [#allocation15], 0
    %27 = vsyncpa [#allocation18], 0
    %28 = vsyncpa [#allocation4], 0
    // Predicated region
    $region2: #{forward.1} parent=1 // pred_check
      _
    $region3: #{forward.1} parent=1 // pred_check_branch
      %30 = sbr.rel (0) target = $region5
    $region4: #{forward.1} parent=1 // pred_region
      _
    $region5: #{forward.1} parent=1 // pred_fallthru
      _
    // Predicated region
    $region6: #{forward.1} parent=1 // pred_check
      _
    $region7: #{forward.1} parent=1 // pred_check_branch
      %32 = sbr.rel (0) target = $region9
    $region8: #{forward.1} parent=1 // pred_region
      %s34 = ssub.s32 576, 576
      %35 = vsyncadd [#allocation3], %s34
      %s36 = sshll.u32 [#allocation2], 4
      %s37 = int_to_ptr.vmem [resolvable:$true] %s36
      %42 = dma.hbm_to_vmem [thread:$0]  %s1, 576, %s37, [#allocation3], 64, 64, 4
    $region9: #{forward.1} parent=1 // pred_fallthru
      _
    // Predicated region
    $region10: #{forward.1} parent=1 // pred_check
      _
    $region11: #{forward.1} parent=1 // pred_check_branch
      %44 = sbr.rel (0) target = $region13
    $region12: #{forward.1} parent=1 // pred_region
      %s46 = ssub.s32 64, 64
      %47 = vsyncadd [#allocation6], %s46
      %s49 = sshll.u32 [#allocation5], 4
      %s50 = int_to_ptr.vmem [resolvable:$true] %s49
      %52 = dma.hbm_to_vmem [thread:$0]  %s2, 64, %s50, [#allocation6]
    $region13: #{forward.1} parent=1 // pred_fallthru
      _
    // Predicated region
    $region14: #{forward.1} parent=1 // pred_check
      _
    $region15: #{forward.1} parent=1 // pred_check_branch
      %54 = sbr.rel (0) target = $region17
    $region16: #{forward.1} parent=1 // pred_region
      %s56 = ssub.s32 4608, 4608
      %57 = vsyncadd [#allocation6], %s56
      %s58 = sshll.u32 [#allocation7], 4
      %s59 = int_to_ptr.vmem [resolvable:$true] %s58
      %64 = dma.hbm_to_vmem [thread:$0]  %s3, 4608, %s59, [#allocation6], 128, 128, 8
    $region17: #{forward.1} parent=1 // pred_fallthru
      _
    // Predicated region
    $region18: #{forward.1} parent=1 // pred_check
      _
    $region19: #{forward.1} parent=1 // pred_check_branch
      %66 = sbr.rel (0) target = $region21
    $region20: #{forward.1} parent=1 // pred_region
      %s68 = ssub.s32 128, 128
      %69 = vsyncadd [#allocation9], %s68
      %s71 = sshll.u32 [#allocation8], 4
      %s72 = int_to_ptr.vmem [resolvable:$true] %s71
      %74 = dma.hbm_to_vmem [thread:$0]  %s4, 128, %s72, [#allocation9]
    $region21: #{forward.1} parent=1 // pred_fallthru
      _
    // Predicated region
    $region22: #{forward.1} parent=1 // pred_check
      _
    $region23: #{forward.1} parent=1 // pred_check_branch
      %76 = sbr.rel (0) target = $region25
    $region24: #{forward.1} parent=1 // pred_region
      %s78 = ssub.s32 768, 768
      %79 = vsyncadd [#allocation9], %s78
      %s80 = sshll.u32 [#allocation10], 4
      %s81 = int_to_ptr.vmem [resolvable:$true] %s80
      %86 = dma.hbm_to_vmem [thread:$0]  %s5, 768, %s81, [#allocation9], 128, 128, 8
    $region25: #{forward.1} parent=1 // pred_fallthru
      _
    // Predicated region
    $region26: #{forward.1} parent=1 // pred_check
      _
    $region27: #{forward.1} parent=1 // pred_check_branch
      %88 = sbr.rel (0) target = $region29
    $region28: #{forward.1} parent=1 // pred_region
      %s90 = ssub.s32 512, 512
      %91 = vsyncadd [#allocation12], %s90
      %s92 = sshll.u32 [#allocation11], 4
      %s93 = int_to_ptr.vmem [resolvable:$true] %s92
      %98 = dma.hbm_to_vmem [thread:$0]  %s6, 512, %s93, [#allocation12], 128, 128, 8
    $region29: #{forward.1} parent=1 // pred_fallthru
      _
    // Predicated region
    $region30: #{forward.1} parent=1 // pred_check
      _
    $region31: #{forward.1} parent=1 // pred_check_branch
      %100 = sbr.rel (0) target = $region33
    $region32: #{forward.1} parent=1 // pred_region
      %s102 = ssub.s32 512, 512
      %103 = vsyncadd [#allocation12], %s102
      %s104 = sshll.u32 [#allocation13], 4
      %s105 = int_to_ptr.vmem [resolvable:$true] %s104
      %110 = dma.hbm_to_vmem [thread:$0]  %s7, 512, %s105, [#allocation12], 128, 128, 8
    $region33: #{forward.1} parent=1 // pred_fallthru
      _
    // Predicated region
    $region34: #{forward.1} parent=1 // pred_check
      _
    $region35: #{forward.1} parent=1 // pred_check_branch
      %112 = sbr.rel (0) target = $region37
    $region36: #{forward.1} parent=1 // pred_region
      %s114 = ssub.s32 128, 128
      %115 = vsyncadd [#allocation15], %s114
      %s117 = sshll.u32 [#allocation14], 4
      %s118 = int_to_ptr.vmem [resolvable:$true] %s117
      %120 = dma.hbm_to_vmem [thread:$0]  %s8, 128, %s118, [#allocation15]
    $region37: #{forward.1} parent=1 // pred_fallthru
      _
    // Predicated region
    $region38: #{forward.1} parent=1 // pred_check
      _
    $region39: #{forward.1} parent=1 // pred_check_branch
      %122 = sbr.rel (0) target = $region41
    $region40: #{forward.1} parent=1 // pred_region
      %s124 = ssub.s32 9216, 9216
      %125 = vsyncadd [#allocation15], %s124
      %s126 = sshll.u32 [#allocation16], 4
      %s127 = int_to_ptr.vmem [resolvable:$true] %s126
      %132 = dma.hbm_to_vmem [thread:$0]  %s9, 9216, %s127, [#allocation15], 128, 128, 8
    $region41: #{forward.1} parent=1 // pred_fallthru
      _
    // Predicated region
    $region42: #{forward.1} parent=1 // pred_check
      _
    $region43: #{forward.1} parent=1 // pred_check_branch
      %134 = sbr.rel (0) target = $region45
    $region44: #{forward.1} parent=1 // pred_region
      %s136 = ssub.s32 128, 128
      %137 = vsyncadd [#allocation18], %s136
      %s139 = sshll.u32 [#allocation17], 4
      %s140 = int_to_ptr.vmem [resolvable:$true] %s139
      %142 = dma.hbm_to_vmem [thread:$0]  %s10, 128, %s140, [#allocation18]
    $region45: #{forward.1} parent=1 // pred_fallthru
      _
    // Predicated region
    $region46: #{forward.1} parent=1 // pred_check
      _
    $region47: #{forward.1} parent=1 // pred_check_branch
      %144 = sbr.rel (0) target = $region49
    $region48: #{forward.1} parent=1 // pred_region
      _
    $region49: #{forward.1} parent=1 // pred_fallthru
      _
    // Predicated region
    $region50: #{forward.1} parent=1 // pred_check
      _
    $region51: #{forward.1} parent=1 // pred_check_branch
      %146 = sbr.rel (0) target = $region53
    $region52: #{forward.1} parent=1 // pred_region
      _
    $region53: #{forward.1} parent=1 // pred_fallthru
      _
    // Predicated region
    $region54: #{forward.1} parent=1 // pred_check
      _
    $region55: #{forward.1} parent=1 // pred_check_branch
      %148 = sbr.rel (0) target = $region57
    $region56: #{forward.1} parent=1 // pred_region
      _
    $region57: #{forward.1} parent=1 // pred_fallthru
      _
    // Predicated region
    $region58: #{forward.1} parent=1 // pred_check
      _
    $region59: #{forward.1} parent=1 // pred_check_branch
      %150 = sbr.rel (0) target = $region61
    $region60: #{forward.1} parent=1 // pred_region
      _
    $region61: #{forward.1} parent=1 // pred_fallthru
      _
    // Predicated region
    $region62: #{forward.1} parent=1 // pred_check
      _
    $region63: #{forward.1} parent=1 // pred_check_branch
      %152 = sbr.rel (0) target = $region65
    $region64: #{forward.1} parent=1 // pred_region
      _
    $region65: #{forward.1} parent=1 // pred_fallthru
      _
    // Predicated region
    $region66: #{forward.1} parent=1 // pred_check
      _
    $region67: #{forward.1} parent=1 // pred_check_branch
      %154 = sbr.rel (0) target = $region69
    $region68: #{forward.1} parent=1 // pred_region
      _
    $region69: #{forward.1} parent=1 // pred_fallthru
      _
    // Predicated region
    $region70: #{forward.1} parent=1 // pred_check
      _
    $region71: #{forward.1} parent=1 // pred_check_branch
      %156 = sbr.rel (0) target = $region73
    $region72: #{forward.1} parent=1 // pred_region
      %157 = dma.done [#allocation3], 576
    $region73: #{forward.1} parent=1 // pred_fallthru
      _
    // Predicated region
    $region74: #{forward.1} parent=1 // pred_check
      _
    $region75: #{forward.1} parent=1 // pred_check_branch
      %159 = sbr.rel (0) target = $region77
    $region76: #{forward.1} parent=1 // pred_region
      %160 = dma.done [#allocation6], 64
    $region77: #{forward.1} parent=1 // pred_fallthru
      _
    // Predicated region
    $region78: #{forward.1} parent=1 // pred_check
      _
    $region79: #{forward.1} parent=1 // pred_check_branch
      %162 = sbr.rel (0) target = $region81
    $region80: #{forward.1} parent=1 // pred_region
      %163 = dma.done [#allocation6], 4608
    $region81: #{forward.1} parent=1 // pred_fallthru
      _
    // Predicated region
    $region82: #{forward.1} parent=1 // pred_check
      _
    $region83: #{forward.1} parent=1 // pred_check_branch
      %165 = sbr.rel (0) target = $region85
    $region84: #{forward.1} parent=1 // pred_region
      %166 = dma.done [#allocation9], 128
    $region85: #{forward.1} parent=1 // pred_fallthru
      _
    // Predicated region
    $region86: #{forward.1} parent=1 // pred_check
      _
    $region87: #{forward.1} parent=1 // pred_check_branch
      %168 = sbr.rel (0) target = $region89
    $region88: #{forward.1} parent=1 // pred_region
      %169 = dma.done [#allocation9], 768
    $region89: #{forward.1} parent=1 // pred_fallthru
      _
    // Predicated region
    $region90: #{forward.1} parent=1 // pred_check
      _
    $region91: #{forward.1} parent=1 // pred_check_branch
      %171 = sbr.rel (0) target = $region93
    $region92: #{forward.1} parent=1 // pred_region
      %172 = dma.done [#allocation12], 512
    $region93: #{forward.1} parent=1 // pred_fallthru
      _
    // Predicated region
    $region94: #{forward.1} parent=1 // pred_check
      _
    $region95: #{forward.1} parent=1 // pred_check_branch
      %174 = sbr.rel (0) target = $region97
    $region96: #{forward.1} parent=1 // pred_region
      %175 = dma.done [#allocation12], 512
    $region97: #{forward.1} parent=1 // pred_fallthru
      _
    // Predicated region
    $region98: #{forward.1} parent=1 // pred_check
      _
    $region99: #{forward.1} parent=1 // pred_check_branch
      %177 = sbr.rel (0) target = $region101
    $region100: #{forward.1} parent=1 // pred_region
      %178 = dma.done [#allocation15], 128
    $region101: #{forward.1} parent=1 // pred_fallthru
      _
    // Predicated region
    $region102: #{forward.1} parent=1 // pred_check
      _
    $region103: #{forward.1} parent=1 // pred_check_branch
      %180 = sbr.rel (0) target = $region105
    $region104: #{forward.1} parent=1 // pred_region
      %181 = dma.done [#allocation15], 9216
    $region105: #{forward.1} parent=1 // pred_fallthru
      _
    // Predicated region
    $region106: #{forward.1} parent=1 // pred_check
      _
    $region107: #{forward.1} parent=1 // pred_check_branch
      %183 = sbr.rel (0) target = $region109
    $region108: #{forward.1} parent=1 // pred_region
      %184 = dma.done [#allocation18], 128
    $region109: #{forward.1} parent=1 // pred_fallthru
      _
    %v185 = vlaneseq
    %v186 = vand.u32 %v185, 127
    %v187 = vadd.s32 %v186, 128
    %v188 = vadd.s32 %v186, 256
    %vm189 = vcmp.ge.s32.totalorder %v186, 19
    %vm190 = vcmp.ge.s32.totalorder %v187, 19
    %vm191 = vcmp.ge.s32.totalorder %v188, 19
    %vm192 = vcmp.lt.s32.totalorder %v186, 35
    %vm193 = vcmp.lt.s32.totalorder %v187, 35
    %vm194 = vcmp.lt.s32.totalorder %v188, 35
    %vm195 = vmand %vm189, %vm192
    %vm196 = vmand %vm190, %vm193
    %vm197 = vmand %vm191, %vm194
    %vm198 = vcmp.ge.s32.totalorder %v186, 37
    %vm199 = vcmp.ge.s32.totalorder %v187, 37
    %vm200 = vcmp.ge.s32.totalorder %v188, 37
    %vm201 = vcmp.lt.s32.totalorder %v186, 53
    %vm202 = vcmp.lt.s32.totalorder %v187, 53
    %vm203 = vcmp.lt.s32.totalorder %v188, 53
    %vm204 = vmand %vm198, %vm201
    %vm205 = vmand %vm199, %vm202
    %vm206 = vmand %vm200, %vm203
    %vm207 = vmor %vm195, %vm204
    %vm208 = vmor %vm196, %vm205
    %vm209 = vmor %vm197, %vm206
    %vm210 = vcmp.ge.s32.totalorder %v186, 55
    %vm211 = vcmp.ge.s32.totalorder %v187, 55
    %vm212 = vcmp.ge.s32.totalorder %v188, 55
    %vm213 = vcmp.lt.s32.totalorder %v186, 71
    %vm214 = vcmp.lt.s32.totalorder %v187, 71
    %vm215 = vcmp.lt.s32.totalorder %v188, 71
    %vm216 = vmand %vm210, %vm213
    %vm217 = vmand %vm211, %vm214
    %vm218 = vmand %vm212, %vm215
    %vm219 = vmor %vm207, %vm216
    %vm220 = vmor %vm208, %vm217
    %vm221 = vmor %vm209, %vm218
    %vm222 = vcmp.ge.s32.totalorder %v186, 73
    %vm223 = vcmp.ge.s32.totalorder %v187, 73
    %vm224 = vcmp.ge.s32.totalorder %v188, 73
    %vm225 = vcmp.lt.s32.totalorder %v186, 89
    %vm226 = vcmp.lt.s32.totalorder %v187, 89
    %vm227 = vcmp.lt.s32.totalorder %v188, 89
    %vm228 = vmand %vm222, %vm225
    %vm229 = vmand %vm223, %vm226
    %vm230 = vmand %vm224, %vm227
    %vm231 = vmor %vm219, %vm228
    %vm232 = vmor %vm220, %vm229
    %vm233 = vmor %vm221, %vm230
    %vm234 = vcmp.ge.s32.totalorder %v186, 91
    %vm235 = vcmp.ge.s32.totalorder %v187, 91
    %vm236 = vcmp.ge.s32.totalorder %v188, 91
    %vm237 = vcmp.lt.s32.totalorder %v186, 107
    %vm238 = vcmp.lt.s32.totalorder %v187, 107
    %vm239 = vcmp.lt.s32.totalorder %v188, 107
    %vm240 = vmand %vm234, %vm237
    %vm241 = vmand %vm235, %vm238
    %vm242 = vmand %vm236, %vm239
    %vm243 = vmor %vm231, %vm240
    %vm244 = vmor %vm232, %vm241
    %vm245 = vmor %vm233, %vm242
    %vm246 = vcmp.ge.s32.totalorder %v186, 109
    %vm247 = vcmp.ge.s32.totalorder %v187, 109
    %vm248 = vcmp.ge.s32.totalorder %v188, 109
    %vm249 = vcmp.lt.s32.totalorder %v186, 125
    %vm250 = vcmp.lt.s32.totalorder %v187, 125
    %vm251 = vcmp.lt.s32.totalorder %v188, 125
    %vm252 = vmand %vm246, %vm249
    %vm253 = vmand %vm247, %vm250
    %vm254 = vmand %vm248, %vm251
    %vm255 = vmor %vm243, %vm252
    %vm256 = vmor %vm244, %vm253
    %vm257 = vmor %vm245, %vm254
    %vm258 = vcmp.ge.s32.totalorder %v186, 127
    %vm259 = vcmp.ge.s32.totalorder %v187, 127
    %vm260 = vcmp.ge.s32.totalorder %v188, 127
    %vm261 = vcmp.lt.s32.totalorder %v186, 143
    %vm262 = vcmp.lt.s32.totalorder %v187, 143
    %vm263 = vcmp.lt.s32.totalorder %v188, 143
    %vm264 = vmand %vm258, %vm261
    %vm265 = vmand %vm259, %vm262
    %vm266 = vmand %vm260, %vm263
    %vm267 = vmor %vm255, %vm264
    %vm268 = vmor %vm256, %vm265
    %vm269 = vmor %vm257, %vm266
    %vm270 = vcmp.ge.s32.totalorder %v186, 145
    %vm271 = vcmp.ge.s32.totalorder %v187, 145
    %vm272 = vcmp.ge.s32.totalorder %v188, 145
    %vm273 = vcmp.lt.s32.totalorder %v186, 161
    %vm274 = vcmp.lt.s32.totalorder %v187, 161
    %vm275 = vcmp.lt.s32.totalorder %v188, 161
    %vm276 = vmand %vm270, %vm273
    %vm277 = vmand %vm271, %vm274
    %vm278 = vmand %vm272, %vm275
    %vm279 = vmor %vm267, %vm276
    %vm280 = vmor %vm268, %vm277
    %vm281 = vmor %vm269, %vm278
    %vm282 = vcmp.ge.s32.totalorder %v186, 163
    %vm283 = vcmp.ge.s32.totalorder %v187, 163
    %vm284 = vcmp.ge.s32.totalorder %v188, 163
    %vm285 = vcmp.lt.s32.totalorder %v186, 179
    %vm286 = vcmp.lt.s32.totalorder %v187, 179
    %vm287 = vcmp.lt.s32.totalorder %v188, 179
    %vm288 = vmand %vm282, %vm285
    %vm289 = vmand %vm283, %vm286
    %vm290 = vmand %vm284, %vm287
    %vm291 = vmor %vm279, %vm288
    %vm292 = vmor %vm280, %vm289
    %vm293 = vmor %vm281, %vm290
    %vm294 = vcmp.ge.s32.totalorder %v186, 181
    %vm295 = vcmp.ge.s32.totalorder %v187, 181
    %vm296 = vcmp.ge.s32.totalorder %v188, 181
    %vm297 = vcmp.lt.s32.totalorder %v186, 197
    %vm298 = vcmp.lt.s32.totalorder %v187, 197
    %vm299 = vcmp.lt.s32.totalorder %v188, 197
    %vm300 = vmand %vm294, %vm297
    %vm301 = vmand %vm295, %vm298
    %vm302 = vmand %vm296, %vm299
    %vm303 = vmor %vm291, %vm300
    %vm304 = vmor %vm292, %vm301
    %vm305 = vmor %vm293, %vm302
    %vm306 = vcmp.ge.s32.totalorder %v186, 199
    %vm307 = vcmp.ge.s32.totalorder %v187, 199
    %vm308 = vcmp.ge.s32.totalorder %v188, 199
    %vm309 = vcmp.lt.s32.totalorder %v186, 215
    %vm310 = vcmp.lt.s32.totalorder %v187, 215
    %vm311 = vcmp.lt.s32.totalorder %v188, 215
    %vm312 = vmand %vm306, %vm309
    %vm313 = vmand %vm307, %vm310
    %vm314 = vmand %vm308, %vm311
    %vm315 = vmor %vm303, %vm312
    %vm316 = vmor %vm304, %vm313
    %vm317 = vmor %vm305, %vm314
    %vm318 = vcmp.ge.s32.totalorder %v186, 217
    %vm319 = vcmp.ge.s32.totalorder %v187, 217
    %vm320 = vcmp.ge.s32.totalorder %v188, 217
    %vm321 = vcmp.lt.s32.totalorder %v186, 233
    %vm322 = vcmp.lt.s32.totalorder %v187, 233
    %vm323 = vcmp.lt.s32.totalorder %v188, 233
    %vm324 = vmand %vm318, %vm321
    %vm325 = vmand %vm319, %vm322
    %vm326 = vmand %vm320, %vm323
    %vm327 = vmor %vm315, %vm324
    %vm328 = vmor %vm316, %vm325
    %vm329 = vmor %vm317, %vm326
    %vm330 = vcmp.ge.s32.totalorder %v186, 235
    %vm331 = vcmp.ge.s32.totalorder %v187, 235
    %vm332 = vcmp.ge.s32.totalorder %v188, 235
    %vm333 = vcmp.lt.s32.totalorder %v186, 251
    %vm334 = vcmp.lt.s32.totalorder %v187, 251
    %vm335 = vcmp.lt.s32.totalorder %v188, 251
    %vm336 = vmand %vm330, %vm333
    %vm337 = vmand %vm331, %vm334
    %vm338 = vmand %vm332, %vm335
    %vm339 = vmor %vm327, %vm336
    %vm340 = vmor %vm328, %vm337
    %vm341 = vmor %vm329, %vm338
    %vm342 = vcmp.ge.s32.totalorder %v186, 253
    %vm343 = vcmp.ge.s32.totalorder %v187, 253
    %vm344 = vcmp.ge.s32.totalorder %v188, 253
    %vm345 = vcmp.lt.s32.totalorder %v186, 269
    %vm346 = vcmp.lt.s32.totalorder %v187, 269
    %vm347 = vcmp.lt.s32.totalorder %v188, 269
    %vm348 = vmand %vm342, %vm345
    %vm349 = vmand %vm343, %vm346
    %vm350 = vmand %vm344, %vm347
    %vm351 = vmor %vm339, %vm348
    %vm352 = vmor %vm340, %vm349
    %vm353 = vmor %vm341, %vm350
    %vm354 = vcmp.ge.s32.totalorder %v186, 271
    %vm355 = vcmp.ge.s32.totalorder %v187, 271
    %vm356 = vcmp.ge.s32.totalorder %v188, 271
    %vm357 = vcmp.lt.s32.totalorder %v186, 287
    %vm358 = vcmp.lt.s32.totalorder %v187, 287
    %vm359 = vcmp.lt.s32.totalorder %v188, 287
    %vm360 = vmand %vm354, %vm357
    %vm361 = vmand %vm355, %vm358
    %vm362 = vmand %vm356, %vm359
    %vm363 = vmor %vm351, %vm360
    %vm364 = vmor %vm352, %vm361
    %vm365 = vmor %vm353, %vm362
    %vm366 = vcmp.ge.s32.totalorder %v186, 289
    %vm367 = vcmp.ge.s32.totalorder %v187, 289
    %vm368 = vcmp.ge.s32.totalorder %v188, 289
    %vm369 = vcmp.lt.s32.totalorder %v186, 305
    %vm370 = vcmp.lt.s32.totalorder %v187, 305
    %vm371 = vcmp.lt.s32.totalorder %v188, 305
    %vm372 = vmand %vm366, %vm369
    %vm373 = vmand %vm367, %vm370
    %vm374 = vmand %vm368, %vm371
    %vm375 = vmor %vm363, %vm372
    %vm376 = vmor %vm364, %vm373
    %vm377 = vmor %vm365, %vm374
    %v378 = vsel %vm375, 1, 0
    %v379 = vsel %vm376, 1, 0
    %v380 = vsel %vm377, 1, 0
    %v381 = vcvt.s32.f32 %v378
    %v382 = vcvt.s32.f32 %v379
    %v383 = vcvt.s32.f32 %v380
    %v384 = vld [vmem:[%s0] sm:$0x7]
    %v385 = vld [vmem:[%s0 + $0x3] sm:$0x7]
    %v388 = vlaneseq
    %v389 = vshrl.u32 %v388, 7
    %v390 = vsub.s32 0, %v389
    %v391 = vrot.slane %v384, %v390
    %v392 = vlaneseq
    %v393 = vshrl.u32 %v392, 7
    %v394 = vsub.s32 1, %v393
    %v395 = vrot.slane %v384, %v394
    %v396 = vlaneseq
    %v397 = vshrl.u32 %v396, 7
    %v398 = vsub.s32 2, %v397
    %v399 = vrot.slane %v384, %v398
    %v400 = vlaneseq
    %v401 = vshrl.u32 %v400, 7
    %v402 = vsub.s32 0, %v401
    %v403 = vrot.slane %v385, %v402
    %v404 = vlaneseq
    %v405 = vshrl.u32 %v404, 7
    %v406 = vsub.s32 1, %v405
    %v407 = vrot.slane %v385, %v406
    %v408 = vlaneseq
    %v409 = vshrl.u32 %v408, 7
    %v410 = vsub.s32 2, %v409
    %v411 = vrot.slane %v385, %v410
    %418 = vrot.lane.b32.xlu0 %v391, 19
    %v419 = vpop.permute.xlu0 %418
    %420 = vrot.lane.b32.xlu0 %v403, 19
    %v421 = vpop.permute.xlu0 %420
    %422 = vrot.lane.b32.xlu0 %v395, 19
    %v423 = vpop.permute.xlu0 %422
    %424 = vrot.lane.b32.xlu0 %v407, 19
    %v425 = vpop.permute.xlu0 %424
    %426 = vrot.lane.b32.xlu0 %v399, 19
    %v427 = vpop.permute.xlu0 %426
    %428 = vrot.lane.b32.xlu0 %v411, 19
    %v429 = vpop.permute.xlu0 %428
    %vm430 = vcmp.lt.s32.totalorder %v186, 19
    %v431 = vsel %vm430, %v423, %v427
    %v432 = vsel %vm430, %v425, %v429
    %v433 = vsel %vm430, %v419, %v423
    %v434 = vsel %vm430, %v421, %v425
    %v435 = vsel %vm430, %v427, %v419
    %v436 = vsel %vm430, %v429, %v421
    %437 = vrot.lane.b32.xlu0 %v391, 18
    %v438 = vpop.permute.xlu0 %437
    %439 = vrot.lane.b32.xlu0 %v403, 18
    %v440 = vpop.permute.xlu0 %439
    %441 = vrot.lane.b32.xlu0 %v395, 18
    %v442 = vpop.permute.xlu0 %441
    %443 = vrot.lane.b32.xlu0 %v407, 18
    %v444 = vpop.permute.xlu0 %443
    %445 = vrot.lane.b32.xlu0 %v399, 18
    %v446 = vpop.permute.xlu0 %445
    %447 = vrot.lane.b32.xlu0 %v411, 18
    %v448 = vpop.permute.xlu0 %447
    %vm449 = vcmp.lt.s32.totalorder %v186, 18
    %v450 = vsel %vm449, %v442, %v446
    %v451 = vsel %vm449, %v444, %v448
    %v452 = vsel %vm449, %v438, %v442
    %v453 = vsel %vm449, %v440, %v444
    %v454 = vsel %vm449, %v446, %v438
    %v455 = vsel %vm449, %v448, %v440
    %456 = vrot.lane.b32.xlu0 %v391, 17
    %v457 = vpop.permute.xlu0 %456
    %458 = vrot.lane.b32.xlu0 %v403, 17
    %v459 = vpop.permute.xlu0 %458
    %460 = vrot.lane.b32.xlu0 %v395, 17
    %v461 = vpop.permute.xlu0 %460
    %462 = vrot.lane.b32.xlu0 %v407, 17
    %v463 = vpop.permute.xlu0 %462
    %464 = vrot.lane.b32.xlu0 %v399, 17
    %v465 = vpop.permute.xlu0 %464
    %466 = vrot.lane.b32.xlu0 %v411, 17
    %v467 = vpop.permute.xlu0 %466
    %vm468 = vcmp.lt.s32.totalorder %v186, 17
    %v469 = vsel %vm468, %v461, %v465
    %v470 = vsel %vm468, %v463, %v467
    %v471 = vsel %vm468, %v457, %v461
    %v472 = vsel %vm468, %v459, %v463
    %v473 = vsel %vm468, %v465, %v457
    %v474 = vsel %vm468, %v467, %v459
    %475 = vrot.lane.b32.xlu0 %v391, 1
    %v476 = vpop.permute.xlu0 %475
    %477 = vrot.lane.b32.xlu0 %v403, 1
    %v478 = vpop.permute.xlu0 %477
    %479 = vrot.lane.b32.xlu0 %v395, 1
    %v480 = vpop.permute.xlu0 %479
    %481 = vrot.lane.b32.xlu0 %v407, 1
    %v482 = vpop.permute.xlu0 %481
    %483 = vrot.lane.b32.xlu0 %v399, 1
    %v484 = vpop.permute.xlu0 %483
    %485 = vrot.lane.b32.xlu0 %v411, 1
    %v486 = vpop.permute.xlu0 %485
    %vm487 = vcmp.lt.s32.totalorder %v186, 1
    %v488 = vsel %vm487, %v480, %v484
    %v489 = vsel %vm487, %v482, %v486
    %v490 = vsel %vm487, %v476, %v480
    %v491 = vsel %vm487, %v478, %v482
    %v492 = vsel %vm487, %v484, %v476
    %v493 = vsel %vm487, %v486, %v478
    %494 = vrot.lane.b32.xlu0 %v391, 127
    %v495 = vpop.permute.xlu0 %494
    %496 = vrot.lane.b32.xlu0 %v403, 127
    %v497 = vpop.permute.xlu0 %496
    %498 = vrot.lane.b32.xlu0 %v395, 127
    %v499 = vpop.permute.xlu0 %498
    %500 = vrot.lane.b32.xlu0 %v407, 127
    %v501 = vpop.permute.xlu0 %500
    %502 = vrot.lane.b32.xlu0 %v399, 127
    %v503 = vpop.permute.xlu0 %502
    %504 = vrot.lane.b32.xlu0 %v411, 127
    %v505 = vpop.permute.xlu0 %504
    %vm506 = vcmp.lt.s32.totalorder %v186, 127
    %v507 = vsel %vm506, %v499, %v503
    %v508 = vsel %vm506, %v501, %v505
    %v509 = vsel %vm506, %v495, %v499
    %v510 = vsel %vm506, %v497, %v501
    %v511 = vsel %vm506, %v503, %v495
    %v512 = vsel %vm506, %v505, %v497
    %513 = vrot.lane.b32.xlu0 %v391, 111
    %v514 = vpop.permute.xlu0 %513
    %515 = vrot.lane.b32.xlu0 %v403, 111
    %v516 = vpop.permute.xlu0 %515
    %517 = vrot.lane.b32.xlu0 %v395, 111
    %v518 = vpop.permute.xlu0 %517
    %519 = vrot.lane.b32.xlu0 %v407, 111
    %v520 = vpop.permute.xlu0 %519
    %521 = vrot.lane.b32.xlu0 %v399, 111
    %v522 = vpop.permute.xlu0 %521
    %523 = vrot.lane.b32.xlu0 %v411, 111
    %v524 = vpop.permute.xlu0 %523
    %vm525 = vcmp.lt.s32.totalorder %v186, 111
    %v526 = vsel %vm525, %v518, %v522
    %v527 = vsel %vm525, %v520, %v524
    %v528 = vsel %vm525, %v514, %v518
    %v529 = vsel %vm525, %v516, %v520
    %v530 = vsel %vm525, %v522, %v514
    %v531 = vsel %vm525, %v524, %v516
    %532 = vrot.lane.b32.xlu0 %v391, 110
    %v533 = vpop.permute.xlu0 %532
    %534 = vrot.lane.b32.xlu0 %v403, 110
    %v535 = vpop.permute.xlu0 %534
    %536 = vrot.lane.b32.xlu0 %v395, 110
    %v537 = vpop.permute.xlu0 %536
    %538 = vrot.lane.b32.xlu0 %v407, 110
    %v539 = vpop.permute.xlu0 %538
    %540 = vrot.lane.b32.xlu0 %v399, 110
    %v541 = vpop.permute.xlu0 %540
    %542 = vrot.lane.b32.xlu0 %v411, 110
    %v543 = vpop.permute.xlu0 %542
    %vm544 = vcmp.lt.s32.totalorder %v186, 110
    %v545 = vsel %vm544, %v537, %v541
    %v546 = vsel %vm544, %v539, %v543
    %v547 = vsel %vm544, %v533, %v537
    %v548 = vsel %vm544, %v535, %v539
    %v549 = vsel %vm544, %v541, %v533
    %v550 = vsel %vm544, %v543, %v535
    %551 = vrot.lane.b32.xlu0 %v391, 109
    %v552 = vpop.permute.xlu0 %551
    %553 = vrot.lane.b32.xlu0 %v403, 109
    %v554 = vpop.permute.xlu0 %553
    %555 = vrot.lane.b32.xlu0 %v395, 109
    %v556 = vpop.permute.xlu0 %555
    %557 = vrot.lane.b32.xlu0 %v407, 109
    %v558 = vpop.permute.xlu0 %557
    %559 = vrot.lane.b32.xlu0 %v399, 109
    %v560 = vpop.permute.xlu0 %559
    %561 = vrot.lane.b32.xlu0 %v411, 109
    %v562 = vpop.permute.xlu0 %561
    %vm563 = vcmp.lt.s32.totalorder %v186, 109
    %v564 = vsel %vm563, %v556, %v560
    %v565 = vsel %vm563, %v558, %v562
    %v566 = vsel %vm563, %v552, %v556
    %v567 = vsel %vm563, %v554, %v558
    %v568 = vsel %vm563, %v560, %v552
    %v569 = vsel %vm563, %v562, %v554
    %v570 = vld [vmem:[#allocation2] sm:$0xf]
    %v571 = vlaneseq
    %v572 = vshrl.u32 %v571, 7
    %v573 = vsub.s32 0, %v572
    %v574 = vrot.slane %v435, %v573
    %v575 = vlaneseq
    %v576 = vshrl.u32 %v575, 7
    %v577 = vsub.s32 0, %v576
    %v578 = vrot.slane %v433, %v577
    %v579 = vlaneseq
    %v580 = vshrl.u32 %v579, 7
    %v581 = vsub.s32 0, %v580
    %v582 = vrot.slane %v431, %v581
    %v583 = vlaneseq
    %v584 = vshrl.u32 %v583, 7
    %v585 = vsub.s32 0, %v584
    %v586 = vrot.slane %v436, %v585
    %v587 = vlaneseq
    %v588 = vshrl.u32 %v587, 7
    %v589 = vsub.s32 0, %v588
    %v590 = vrot.slane %v434, %v589
    %v591 = vlaneseq
    %v592 = vshrl.u32 %v591, 7
    %v593 = vsub.s32 0, %v592
    %v594 = vrot.slane %v432, %v593
    %596 = vset.pattern.permute.xlu0 0
    %597 = vperm.xlu0 %596, %v570
    %v598 = vpop.permute.xlu0 %597
    %v600 = vmul.f32 %v574, %v598
    %v601 = vmul.f32 %v578, %v598
    %v602 = vmul.f32 %v582, %v598
    %v603 = vmul.f32 %v586, %v598
    %v604 = vmul.f32 %v590, %v598
    %v605 = vmul.f32 %v594, %v598
    %s606 = scalar_lea.vmem [#allocation2], 4
    %v607 = vld [vmem:[%s606] sm:$0xf]
    %v608 = vlaneseq
    %v609 = vshrl.u32 %v608, 7
    %v610 = vsub.s32 0, %v609
    %v611 = vrot.slane %v454, %v610
    %v612 = vlaneseq
    %v613 = vshrl.u32 %v612, 7
    %v614 = vsub.s32 0, %v613
    %v615 = vrot.slane %v452, %v614
    %v616 = vlaneseq
    %v617 = vshrl.u32 %v616, 7
    %v618 = vsub.s32 0, %v617
    %v619 = vrot.slane %v450, %v618
    %v620 = vlaneseq
    %v621 = vshrl.u32 %v620, 7
    %v622 = vsub.s32 0, %v621
    %v623 = vrot.slane %v455, %v622
    %v624 = vlaneseq
    %v625 = vshrl.u32 %v624, 7
    %v626 = vsub.s32 0, %v625
    %v627 = vrot.slane %v453, %v626
    %v628 = vlaneseq
    %v629 = vshrl.u32 %v628, 7
    %v630 = vsub.s32 0, %v629
    %v631 = vrot.slane %v451, %v630
    %633 = vset.pattern.permute.xlu0 0
    %634 = vperm.xlu0 %633, %v607
    %v635 = vpop.permute.xlu0 %634
    %v637 = vmul.f32 %v611, %v635
    %v638 = vmul.f32 %v615, %v635
    %v639 = vmul.f32 %v619, %v635
    %v640 = vmul.f32 %v623, %v635
    %v641 = vmul.f32 %v627, %v635
    %v642 = vmul.f32 %v631, %v635
    %v643 = vadd.f32 %v600, %v637
    %v644 = vadd.f32 %v601, %v638
    %v645 = vadd.f32 %v602, %v639
    %v646 = vadd.f32 %v603, %v640
    %v647 = vadd.f32 %v604, %v641
    %v648 = vadd.f32 %v605, %v642
    %s649 = scalar_lea.vmem [#allocation2], 8
    %v650 = vld [vmem:[%s649] sm:$0xf]
    %v651 = vlaneseq
    %v652 = vshrl.u32 %v651, 7
    %v653 = vsub.s32 0, %v652
    %v654 = vrot.slane %v473, %v653
    %v655 = vlaneseq
    %v656 = vshrl.u32 %v655, 7
    %v657 = vsub.s32 0, %v656
    %v658 = vrot.slane %v471, %v657
    %v659 = vlaneseq
    %v660 = vshrl.u32 %v659, 7
    %v661 = vsub.s32 0, %v660
    %v662 = vrot.slane %v469, %v661
    %v663 = vlaneseq
    %v664 = vshrl.u32 %v663, 7
    %v665 = vsub.s32 0, %v664
    %v666 = vrot.slane %v474, %v665
    %v667 = vlaneseq
    %v668 = vshrl.u32 %v667, 7
    %v669 = vsub.s32 0, %v668
    %v670 = vrot.slane %v472, %v669
    %v671 = vlaneseq
    %v672 = vshrl.u32 %v671, 7
    %v673 = vsub.s32 0, %v672
    %v674 = vrot.slane %v470, %v673
    %676 = vset.pattern.permute.xlu0 0
    %677 = vperm.xlu0 %676, %v650
    %v678 = vpop.permute.xlu0 %677
    %v680 = vmul.f32 %v654, %v678
    %v681 = vmul.f32 %v658, %v678
    %v682 = vmul.f32 %v662, %v678
    %v683 = vmul.f32 %v666, %v678
    %v684 = vmul.f32 %v670, %v678
    %v685 = vmul.f32 %v674, %v678
    %v686 = vadd.f32 %v643, %v680
    %v687 = vadd.f32 %v644, %v681
    %v688 = vadd.f32 %v645, %v682
    %v689 = vadd.f32 %v646, %v683
    %v690 = vadd.f32 %v647, %v684
    %v691 = vadd.f32 %v648, %v685
    %s692 = scalar_lea.vmem [#allocation2], 12
    %v693 = vld [vmem:[%s692] sm:$0xf]
    %v694 = vlaneseq
    %v695 = vshrl.u32 %v694, 7
    %v696 = vsub.s32 0, %v695
    %v697 = vrot.slane %v492, %v696
    %v698 = vlaneseq
    %v699 = vshrl.u32 %v698, 7
    %v700 = vsub.s32 0, %v699
    %v701 = vrot.slane %v490, %v700
    %v702 = vlaneseq
    %v703 = vshrl.u32 %v702, 7
    %v704 = vsub.s32 0, %v703
    %v705 = vrot.slane %v488, %v704
    %v706 = vlaneseq
    %v707 = vshrl.u32 %v706, 7
    %v708 = vsub.s32 0, %v707
    %v709 = vrot.slane %v493, %v708
    %v710 = vlaneseq
    %v711 = vshrl.u32 %v710, 7
    %v712 = vsub.s32 0, %v711
    %v713 = vrot.slane %v491, %v712
    %v714 = vlaneseq
    %v715 = vshrl.u32 %v714, 7
    %v716 = vsub.s32 0, %v715
    %v717 = vrot.slane %v489, %v716
    %719 = vset.pattern.permute.xlu0 0
    %720 = vperm.xlu0 %719, %v693
    %v721 = vpop.permute.xlu0 %720
    %v723 = vmul.f32 %v697, %v721
    %v724 = vmul.f32 %v701, %v721
    %v725 = vmul.f32 %v705, %v721
    %v726 = vmul.f32 %v709, %v721
    %v727 = vmul.f32 %v713, %v721
    %v728 = vmul.f32 %v717, %v721
    %v729 = vadd.f32 %v686, %v723
    %v730 = vadd.f32 %v687, %v724
    %v731 = vadd.f32 %v688, %v725
    %v732 = vadd.f32 %v689, %v726
    %v733 = vadd.f32 %v690, %v727
    %v734 = vadd.f32 %v691, %v728
    %s735 = scalar_lea.vmem [#allocation2], 16
    %v736 = vld [vmem:[%s735] sm:$0xf]
    %738 = vset.pattern.permute.xlu0 0
    %739 = vperm.xlu0 %738, %v736
    %v740 = vpop.permute.xlu0 %739
    %v742 = vmul.f32 %v391, %v740
    %v743 = vmul.f32 %v395, %v740
    %v744 = vmul.f32 %v399, %v740
    %v745 = vmul.f32 %v403, %v740
    %v746 = vmul.f32 %v407, %v740
    %v747 = vmul.f32 %v411, %v740
    %v748 = vadd.f32 %v729, %v742
    %v749 = vadd.f32 %v730, %v743
    %v750 = vadd.f32 %v731, %v744
    %v751 = vadd.f32 %v732, %v745
    %v752 = vadd.f32 %v733, %v746
    %v753 = vadd.f32 %v734, %v747
    %s754 = scalar_lea.vmem [#allocation2], 20
    %v755 = vld [vmem:[%s754] sm:$0xf]
    %v756 = vlaneseq
    %v757 = vshrl.u32 %v756, 7
    %v758 = vsub.s32 0, %v757
    %v759 = vrot.slane %v509, %v758
    %v760 = vlaneseq
    %v761 = vshrl.u32 %v760, 7
    %v762 = vsub.s32 0, %v761
    %v763 = vrot.slane %v507, %v762
    %v764 = vlaneseq
    %v765 = vshrl.u32 %v764, 7
    %v766 = vsub.s32 0, %v765
    %v767 = vrot.slane %v511, %v766
    %v768 = vlaneseq
    %v769 = vshrl.u32 %v768, 7
    %v770 = vsub.s32 0, %v769
    %v771 = vrot.slane %v510, %v770
    %v772 = vlaneseq
    %v773 = vshrl.u32 %v772, 7
    %v774 = vsub.s32 0, %v773
    %v775 = vrot.slane %v508, %v774
    %v776 = vlaneseq
    %v777 = vshrl.u32 %v776, 7
    %v778 = vsub.s32 0, %v777
    %v779 = vrot.slane %v512, %v778
    %781 = vset.pattern.permute.xlu0 0
    %782 = vperm.xlu0 %781, %v755
    %v783 = vpop.permute.xlu0 %782
    %v785 = vmul.f32 %v759, %v783
    %v786 = vmul.f32 %v763, %v783
    %v787 = vmul.f32 %v767, %v783
    %v788 = vmul.f32 %v771, %v783
    %v789 = vmul.f32 %v775, %v783
    %v790 = vmul.f32 %v779, %v783
    %v791 = vadd.f32 %v748, %v785
    %v792 = vadd.f32 %v749, %v786
    %v793 = vadd.f32 %v750, %v787
    %v794 = vadd.f32 %v751, %v788
    %v795 = vadd.f32 %v752, %v789
    %v796 = vadd.f32 %v753, %v790
    %s797 = scalar_lea.vmem [#allocation2], 24
    %v798 = vld [vmem:[%s797] sm:$0xf]
    %v799 = vlaneseq
    %v800 = vshrl.u32 %v799, 7
    %v801 = vsub.s32 0, %v800
    %v802 = vrot.slane %v528, %v801
    %v803 = vlaneseq
    %v804 = vshrl.u32 %v803, 7
    %v805 = vsub.s32 0, %v804
    %v806 = vrot.slane %v526, %v805
    %v807 = vlaneseq
    %v808 = vshrl.u32 %v807, 7
    %v809 = vsub.s32 0, %v808
    %v810 = vrot.slane %v530, %v809
    %v811 = vlaneseq
    %v812 = vshrl.u32 %v811, 7
    %v813 = vsub.s32 0, %v812
    %v814 = vrot.slane %v529, %v813
    %v815 = vlaneseq
    %v816 = vshrl.u32 %v815, 7
    %v817 = vsub.s32 0, %v816
    %v818 = vrot.slane %v527, %v817
    %v819 = vlaneseq
    %v820 = vshrl.u32 %v819, 7
    %v821 = vsub.s32 0, %v820
    %v822 = vrot.slane %v531, %v821
    %824 = vset.pattern.permute.xlu0 0
    %825 = vperm.xlu0 %824, %v798
    %v826 = vpop.permute.xlu0 %825
    %v828 = vmul.f32 %v802, %v826
    %v829 = vmul.f32 %v806, %v826
    %v830 = vmul.f32 %v810, %v826
    %v831 = vmul.f32 %v814, %v826
    %v832 = vmul.f32 %v818, %v826
    %v833 = vmul.f32 %v822, %v826
    %v834 = vadd.f32 %v791, %v828
    %v835 = vadd.f32 %v792, %v829
    %v836 = vadd.f32 %v793, %v830
    %v837 = vadd.f32 %v794, %v831
    %v838 = vadd.f32 %v795, %v832
    %v839 = vadd.f32 %v796, %v833
    %s840 = scalar_lea.vmem [#allocation2], 28
    %v841 = vld [vmem:[%s840] sm:$0xf]
    %v842 = vlaneseq
    %v843 = vshrl.u32 %v842, 7
    %v844 = vsub.s32 0, %v843
    %v845 = vrot.slane %v547, %v844
    %v846 = vlaneseq
    %v847 = vshrl.u32 %v846, 7
    %v848 = vsub.s32 0, %v847
    %v849 = vrot.slane %v545, %v848
    %v850 = vlaneseq
    %v851 = vshrl.u32 %v850, 7
    %v852 = vsub.s32 0, %v851
    %v853 = vrot.slane %v549, %v852
    %v854 = vlaneseq
    %v855 = vshrl.u32 %v854, 7
    %v856 = vsub.s32 0, %v855
    %v857 = vrot.slane %v548, %v856
    %v858 = vlaneseq
    %v859 = vshrl.u32 %v858, 7
    %v860 = vsub.s32 0, %v859
    %v861 = vrot.slane %v546, %v860
    %v862 = vlaneseq
    %v863 = vshrl.u32 %v862, 7
    %v864 = vsub.s32 0, %v863
    %v865 = vrot.slane %v550, %v864
    %867 = vset.pattern.permute.xlu0 0
    %868 = vperm.xlu0 %867, %v841
    %v869 = vpop.permute.xlu0 %868
    %v871 = vmul.f32 %v845, %v869
    %v872 = vmul.f32 %v849, %v869
    %v873 = vmul.f32 %v853, %v869
    %v874 = vmul.f32 %v857, %v869
    %v875 = vmul.f32 %v861, %v869
    %v876 = vmul.f32 %v865, %v869
    %v877 = vadd.f32 %v834, %v871
    %v878 = vadd.f32 %v835, %v872
    %v879 = vadd.f32 %v836, %v873
    %v880 = vadd.f32 %v837, %v874
    %v881 = vadd.f32 %v838, %v875
    %v882 = vadd.f32 %v839, %v876
    %s883 = scalar_lea.vmem [#allocation2], 32
    %v884 = vld [vmem:[%s883] sm:$0xf]
    %v885 = vlaneseq
    %v886 = vshrl.u32 %v885, 7
    %v887 = vsub.s32 0, %v886
    %v888 = vrot.slane %v566, %v887
    %v889 = vlaneseq
    %v890 = vshrl.u32 %v889, 7
    %v891 = vsub.s32 0, %v890
    %v892 = vrot.slane %v564, %v891
    %v893 = vlaneseq
    %v894 = vshrl.u32 %v893, 7
    %v895 = vsub.s32 0, %v894
    %v896 = vrot.slane %v568, %v895
    %v897 = vlaneseq
    %v898 = vshrl.u32 %v897, 7
    %v899 = vsub.s32 0, %v898
    %v900 = vrot.slane %v567, %v899
    %v901 = vlaneseq
    %v902 = vshrl.u32 %v901, 7
    %v903 = vsub.s32 0, %v902
    %v904 = vrot.slane %v565, %v903
    %v905 = vlaneseq
    %v906 = vshrl.u32 %v905, 7
    %v907 = vsub.s32 0, %v906
    %v908 = vrot.slane %v569, %v907
    %910 = vset.pattern.permute.xlu0 0
    %911 = vperm.xlu0 %910, %v884
    %v912 = vpop.permute.xlu0 %911
    %v914 = vmul.f32 %v888, %v912
    %v915 = vmul.f32 %v892, %v912
    %v916 = vmul.f32 %v896, %v912
    %v917 = vmul.f32 %v900, %v912
    %v918 = vmul.f32 %v904, %v912
    %v919 = vmul.f32 %v908, %v912
    %v920 = vadd.f32 %v877, %v914
    %v921 = vadd.f32 %v878, %v915
    %v922 = vadd.f32 %v879, %v916
    %v923 = vadd.f32 %v880, %v917
    %v924 = vadd.f32 %v881, %v918
    %v925 = vadd.f32 %v882, %v919
    %v926 = vld [vmem:[#allocation5] sm:$0xf]
    %928 = vset.pattern.permute.xlu0 0
    %929 = vperm.xlu0 %928, %v926
    %v930 = vpop.permute.xlu0 %929
    %v932 = vadd.f32 %v920, %v930
    %v933 = vadd.f32 %v921, %v930
    %v934 = vadd.f32 %v922, %v930
    %v935 = vadd.f32 %v923, %v930
    %v936 = vadd.f32 %v924, %v930
    %v937 = vadd.f32 %v925, %v930
    %v938 = vmax.f32 %v932, 0.0
    %v939 = vmax.f32 %v933, 0.0
    %v940 = vmax.f32 %v934, 0.0
    %v941 = vmax.f32 %v935, 0.0
    %v942 = vmax.f32 %v936, 0.0
    %v943 = vmax.f32 %v937, 0.0
    %v944 = vmul.f32 %v938, %v381
    %v945 = vmul.f32 %v939, %v382
    %v946 = vmul.f32 %v940, %v383
    %v947 = vmul.f32 %v941, %v381
    %v948 = vmul.f32 %v942, %v382
    %v949 = vmul.f32 %v943, %v383
    %950 = vrot.lane.b32.xlu0 %v944, 19
    %v951 = vpop.permute.xlu0 %950
    %952 = vrot.lane.b32.xlu0 %v947, 19
    %v953 = vpop.permute.xlu0 %952
    %954 = vrot.lane.b32.xlu0 %v945, 19
    %v955 = vpop.permute.xlu0 %954
    %956 = vrot.lane.b32.xlu0 %v948, 19
    %v957 = vpop.permute.xlu0 %956
    %958 = vrot.lane.b32.xlu0 %v946, 19
    %v959 = vpop.permute.xlu0 %958
    %960 = vrot.lane.b32.xlu0 %v949, 19
    %v961 = vpop.permute.xlu0 %960
    %v962 = vsel %vm430, %v955, %v959
    %v963 = vsel %vm430, %v957, %v961
    %v964 = vsel %vm430, %v951, %v955
    %v965 = vsel %vm430, %v953, %v957
    %v966 = vsel %vm430, %v959, %v951
    %v967 = vsel %vm430, %v961, %v953
    %968 = vrot.lane.b32.xlu0 %v944, 18
    %v969 = vpop.permute.xlu0 %968
    %970 = vrot.lane.b32.xlu0 %v947, 18
    %v971 = vpop.permute.xlu0 %970
    %972 = vrot.lane.b32.xlu0 %v945, 18
    %v973 = vpop.permute.xlu0 %972
    %974 = vrot.lane.b32.xlu0 %v948, 18
    %v975 = vpop.permute.xlu0 %974
    %976 = vrot.lane.b32.xlu0 %v946, 18
    %v977 = vpop.permute.xlu0 %976
    %978 = vrot.lane.b32.xlu0 %v949, 18
    %v979 = vpop.permute.xlu0 %978
    %v980 = vsel %vm449, %v973, %v977
    %v981 = vsel %vm449, %v975, %v979
    %v982 = vsel %vm449, %v969, %v973
    %v983 = vsel %vm449, %v971, %v975
    %v984 = vsel %vm449, %v977, %v969
    %v985 = vsel %vm449, %v979, %v971
    %986 = vrot.lane.b32.xlu0 %v944, 17
    %v987 = vpop.permute.xlu0 %986
    %988 = vrot.lane.b32.xlu0 %v947, 17
    %v989 = vpop.permute.xlu0 %988
    %990 = vrot.lane.b32.xlu0 %v945, 17
    %v991 = vpop.permute.xlu0 %990
    %992 = vrot.lane.b32.xlu0 %v948, 17
    %v993 = vpop.permute.xlu0 %992
    %994 = vrot.lane.b32.xlu0 %v946, 17
    %v995 = vpop.permute.xlu0 %994
    %996 = vrot.lane.b32.xlu0 %v949, 17
    %v997 = vpop.permute.xlu0 %996
    %v998 = vsel %vm468, %v991, %v995
    %v999 = vsel %vm468, %v993, %v997
    %v1000 = vsel %vm468, %v987, %v991
    %v1001 = vsel %vm468, %v989, %v993
    %v1002 = vsel %vm468, %v995, %v987
    %v1003 = vsel %vm468, %v997, %v989
    %1004 = vrot.lane.b32.xlu0 %v944, 1
    %v1005 = vpop.permute.xlu0 %1004
    %1006 = vrot.lane.b32.xlu0 %v947, 1
    %v1007 = vpop.permute.xlu0 %1006
    %1008 = vrot.lane.b32.xlu0 %v945, 1
    %v1009 = vpop.permute.xlu0 %1008
    %1010 = vrot.lane.b32.xlu0 %v948, 1
    %v1011 = vpop.permute.xlu0 %1010
    %1012 = vrot.lane.b32.xlu0 %v946, 1
    %v1013 = vpop.permute.xlu0 %1012
    %1014 = vrot.lane.b32.xlu0 %v949, 1
    %v1015 = vpop.permute.xlu0 %1014
    %v1016 = vsel %vm487, %v1009, %v1013
    %v1017 = vsel %vm487, %v1011, %v1015
    %v1018 = vsel %vm487, %v1005, %v1009
    %v1019 = vsel %vm487, %v1007, %v1011
    %v1020 = vsel %vm487, %v1013, %v1005
    %v1021 = vsel %vm487, %v1015, %v1007
    %1022 = vrot.lane.b32.xlu0 %v944, 127
    %v1023 = vpop.permute.xlu0 %1022
    %1024 = vrot.lane.b32.xlu0 %v947, 127
    %v1025 = vpop.permute.xlu0 %1024
    %1026 = vrot.lane.b32.xlu0 %v945, 127
    %v1027 = vpop.permute.xlu0 %1026
    %1028 = vrot.lane.b32.xlu0 %v948, 127
    %v1029 = vpop.permute.xlu0 %1028
    %1030 = vrot.lane.b32.xlu0 %v946, 127
    %v1031 = vpop.permute.xlu0 %1030
    %1032 = vrot.lane.b32.xlu0 %v949, 127
    %v1033 = vpop.permute.xlu0 %1032
    %v1034 = vsel %vm506, %v1027, %v1031
    %v1035 = vsel %vm506, %v1029, %v1033
    %v1036 = vsel %vm506, %v1023, %v1027
    %v1037 = vsel %vm506, %v1025, %v1029
    %v1038 = vsel %vm506, %v1031, %v1023
    %v1039 = vsel %vm506, %v1033, %v1025
    %1040 = vrot.lane.b32.xlu0 %v944, 111
    %v1041 = vpop.permute.xlu0 %1040
    %1042 = vrot.lane.b32.xlu0 %v947, 111
    %v1043 = vpop.permute.xlu0 %1042
    %1044 = vrot.lane.b32.xlu0 %v945, 111
    %v1045 = vpop.permute.xlu0 %1044
    %1046 = vrot.lane.b32.xlu0 %v948, 111
    %v1047 = vpop.permute.xlu0 %1046
    %1048 = vrot.lane.b32.xlu0 %v946, 111
    %v1049 = vpop.permute.xlu0 %1048
    %1050 = vrot.lane.b32.xlu0 %v949, 111
    %v1051 = vpop.permute.xlu0 %1050
    %v1052 = vsel %vm525, %v1045, %v1049
    %v1053 = vsel %vm525, %v1047, %v1051
    %v1054 = vsel %vm525, %v1041, %v1045
    %v1055 = vsel %vm525, %v1043, %v1047
    %v1056 = vsel %vm525, %v1049, %v1041
    %v1057 = vsel %vm525, %v1051, %v1043
    %1058 = vrot.lane.b32.xlu0 %v944, 110
    %v1059 = vpop.permute.xlu0 %1058
    %1060 = vrot.lane.b32.xlu0 %v947, 110
    %v1061 = vpop.permute.xlu0 %1060
    %1062 = vrot.lane.b32.xlu0 %v945, 110
    %v1063 = vpop.permute.xlu0 %1062
    %1064 = vrot.lane.b32.xlu0 %v948, 110
    %v1065 = vpop.permute.xlu0 %1064
    %1066 = vrot.lane.b32.xlu0 %v946, 110
    %v1067 = vpop.permute.xlu0 %1066
    %1068 = vrot.lane.b32.xlu0 %v949, 110
    %v1069 = vpop.permute.xlu0 %1068
    %v1070 = vsel %vm544, %v1063, %v1067
    %v1071 = vsel %vm544, %v1065, %v1069
    %v1072 = vsel %vm544, %v1059, %v1063
    %v1073 = vsel %vm544, %v1061, %v1065
    %v1074 = vsel %vm544, %v1067, %v1059
    %v1075 = vsel %vm544, %v1069, %v1061
    %1076 = vrot.lane.b32.xlu0 %v944, 109
    %v1077 = vpop.permute.xlu0 %1076
    %1078 = vrot.lane.b32.xlu0 %v947, 109
    %v1079 = vpop.permute.xlu0 %1078
    %1080 = vrot.lane.b32.xlu0 %v945, 109
    %v1081 = vpop.permute.xlu0 %1080
    %1082 = vrot.lane.b32.xlu0 %v948, 109
    %v1083 = vpop.permute.xlu0 %1082
    %1084 = vrot.lane.b32.xlu0 %v946, 109
    %v1085 = vpop.permute.xlu0 %1084
    %1086 = vrot.lane.b32.xlu0 %v949, 109
    %v1087 = vpop.permute.xlu0 %1086
    %v1088 = vsel %vm563, %v1081, %v1085
    %v1089 = vsel %vm563, %v1083, %v1087
    %v1090 = vsel %vm563, %v1077, %v1081
    %v1091 = vsel %vm563, %v1079, %v1083
    %v1092 = vsel %vm563, %v1085, %v1077
    %v1093 = vsel %vm563, %v1087, %v1079
    %v1094 = vld [vmem:[#allocation7] sm:$0x3f]
    %v1095 = vlaneseq
    %v1096 = vshrl.u32 %v1095, 7
    %v1097 = vsub.s32 0, %v1096
    %v1098 = vrot.slane %v966, %v1097
    %v1099 = vlaneseq
    %v1100 = vshrl.u32 %v1099, 7
    %v1101 = vsub.s32 0, %v1100
    %v1102 = vrot.slane %v964, %v1101
    %v1103 = vlaneseq
    %v1104 = vshrl.u32 %v1103, 7
    %v1105 = vsub.s32 0, %v1104
    %v1106 = vrot.slane %v962, %v1105
    %v1107 = vlaneseq
    %v1108 = vshrl.u32 %v1107, 7
    %v1109 = vsub.s32 0, %v1108
    %v1110 = vrot.slane %v967, %v1109
    %v1111 = vlaneseq
    %v1112 = vshrl.u32 %v1111, 7
    %v1113 = vsub.s32 0, %v1112
    %v1114 = vrot.slane %v965, %v1113
    %v1115 = vlaneseq
    %v1116 = vshrl.u32 %v1115, 7
    %v1117 = vsub.s32 0, %v1116
    %v1118 = vrot.slane %v963, %v1117
    %1120 = vset.pattern.permute.xlu0 0
    %1121 = vperm.xlu0 %1120, %v1094
    %v1122 = vpop.permute.xlu0 %1121
    %v1124 = vmul.f32 %v1098, %v1122
    %v1125 = vmul.f32 %v1102, %v1122
    %v1126 = vmul.f32 %v1106, %v1122
    %v1127 = vmul.f32 %v1110, %v1122
    %v1128 = vmul.f32 %v1114, %v1122
    %v1129 = vmul.f32 %v1118, %v1122
    %s1130 = scalar_lea.vmem [#allocation7], 8
    %v1131 = vld [vmem:[%s1130] sm:$0x3f]
    %v1132 = vlaneseq
    %v1133 = vshrl.u32 %v1132, 7
    %v1134 = vsub.s32 1, %v1133
    %v1135 = vrot.slane %v966, %v1134
    %v1136 = vlaneseq
    %v1137 = vshrl.u32 %v1136, 7
    %v1138 = vsub.s32 1, %v1137
    %v1139 = vrot.slane %v964, %v1138
    %v1140 = vlaneseq
    %v1141 = vshrl.u32 %v1140, 7
    %v1142 = vsub.s32 1, %v1141
    %v1143 = vrot.slane %v962, %v1142
    %v1144 = vlaneseq
    %v1145 = vshrl.u32 %v1144, 7
    %v1146 = vsub.s32 1, %v1145
    %v1147 = vrot.slane %v967, %v1146
    %v1148 = vlaneseq
    %v1149 = vshrl.u32 %v1148, 7
    %v1150 = vsub.s32 1, %v1149
    %v1151 = vrot.slane %v965, %v1150
    %v1152 = vlaneseq
    %v1153 = vshrl.u32 %v1152, 7
    %v1154 = vsub.s32 1, %v1153
    %v1155 = vrot.slane %v963, %v1154
    %1157 = vset.pattern.permute.xlu0 0
    %1158 = vperm.xlu0 %1157, %v1131
    %v1159 = vpop.permute.xlu0 %1158
    %v1161 = vmul.f32 %v1135, %v1159
    %v1162 = vmul.f32 %v1139, %v1159
    %v1163 = vmul.f32 %v1143, %v1159
    %v1164 = vmul.f32 %v1147, %v1159
    %v1165 = vmul.f32 %v1151, %v1159
    %v1166 = vmul.f32 %v1155, %v1159
    %v1167 = vadd.f32 %v1124, %v1161
    %v1168 = vadd.f32 %v1125, %v1162
    %v1169 = vadd.f32 %v1126, %v1163
    %v1170 = vadd.f32 %v1127, %v1164
    %v1171 = vadd.f32 %v1128, %v1165
    %v1172 = vadd.f32 %v1129, %v1166
    %s1173 = scalar_lea.vmem [#allocation7], 16
    %v1174 = vld [vmem:[%s1173] sm:$0x3f]
    %v1175 = vlaneseq
    %v1176 = vshrl.u32 %v1175, 7
    %v1177 = vsub.s32 2, %v1176
    %v1178 = vrot.slane %v966, %v1177
    %v1179 = vlaneseq
    %v1180 = vshrl.u32 %v1179, 7
    %v1181 = vsub.s32 2, %v1180
    %v1182 = vrot.slane %v964, %v1181
    %v1183 = vlaneseq
    %v1184 = vshrl.u32 %v1183, 7
    %v1185 = vsub.s32 2, %v1184
    %v1186 = vrot.slane %v962, %v1185
    %v1187 = vlaneseq
    %v1188 = vshrl.u32 %v1187, 7
    %v1189 = vsub.s32 2, %v1188
    %v1190 = vrot.slane %v967, %v1189
    %v1191 = vlaneseq
    %v1192 = vshrl.u32 %v1191, 7
    %v1193 = vsub.s32 2, %v1192
    %v1194 = vrot.slane %v965, %v1193
    %v1195 = vlaneseq
    %v1196 = vshrl.u32 %v1195, 7
    %v1197 = vsub.s32 2, %v1196
    %v1198 = vrot.slane %v963, %v1197
    %1200 = vset.pattern.permute.xlu0 0
    %1201 = vperm.xlu0 %1200, %v1174
    %v1202 = vpop.permute.xlu0 %1201
    %v1204 = vmul.f32 %v1178, %v1202
    %v1205 = vmul.f32 %v1182, %v1202
    %v1206 = vmul.f32 %v1186, %v1202
    %v1207 = vmul.f32 %v1190, %v1202
    %v1208 = vmul.f32 %v1194, %v1202
    %v1209 = vmul.f32 %v1198, %v1202
    %v1210 = vadd.f32 %v1167, %v1204
    %v1211 = vadd.f32 %v1168, %v1205
    %v1212 = vadd.f32 %v1169, %v1206
    %v1213 = vadd.f32 %v1170, %v1207
    %v1214 = vadd.f32 %v1171, %v1208
    %v1215 = vadd.f32 %v1172, %v1209
    %s1216 = scalar_lea.vmem [#allocation7], 24
    %v1217 = vld [vmem:[%s1216] sm:$0x3f]
    %v1218 = vlaneseq
    %v1219 = vshrl.u32 %v1218, 7
    %v1220 = vsub.s32 3, %v1219
    %v1221 = vrot.slane %v966, %v1220
    %v1222 = vlaneseq
    %v1223 = vshrl.u32 %v1222, 7
    %v1224 = vsub.s32 3, %v1223
    %v1225 = vrot.slane %v964, %v1224
    %v1226 = vlaneseq
    %v1227 = vshrl.u32 %v1226, 7
    %v1228 = vsub.s32 3, %v1227
    %v1229 = vrot.slane %v962, %v1228
    %v1230 = vlaneseq
    %v1231 = vshrl.u32 %v1230, 7
    %v1232 = vsub.s32 3, %v1231
    %v1233 = vrot.slane %v967, %v1232
    %v1234 = vlaneseq
    %v1235 = vshrl.u32 %v1234, 7
    %v1236 = vsub.s32 3, %v1235
    %v1237 = vrot.slane %v965, %v1236
    %v1238 = vlaneseq
    %v1239 = vshrl.u32 %v1238, 7
    %v1240 = vsub.s32 3, %v1239
    %v1241 = vrot.slane %v963, %v1240
    %1243 = vset.pattern.permute.xlu0 0
    %1244 = vperm.xlu0 %1243, %v1217
    %v1245 = vpop.permute.xlu0 %1244
    %v1247 = vmul.f32 %v1221, %v1245
    %v1248 = vmul.f32 %v1225, %v1245
    %v1249 = vmul.f32 %v1229, %v1245
    %v1250 = vmul.f32 %v1233, %v1245
    %v1251 = vmul.f32 %v1237, %v1245
    %v1252 = vmul.f32 %v1241, %v1245
    %v1253 = vadd.f32 %v1210, %v1247
    %v1254 = vadd.f32 %v1211, %v1248
    %v1255 = vadd.f32 %v1212, %v1249
    %v1256 = vadd.f32 %v1213, %v1250
    %v1257 = vadd.f32 %v1214, %v1251
    %v1258 = vadd.f32 %v1215, %v1252
    %s1259 = scalar_lea.vmem [#allocation7], 32
    %v1260 = vld [vmem:[%s1259] sm:$0x3f]
    %v1261 = vlaneseq
    %v1262 = vshrl.u32 %v1261, 7
    %v1263 = vsub.s32 0, %v1262
    %v1264 = vrot.slane %v984, %v1263
    %v1265 = vlaneseq
    %v1266 = vshrl.u32 %v1265, 7
    %v1267 = vsub.s32 0, %v1266
    %v1268 = vrot.slane %v982, %v1267
    %v1269 = vlaneseq
    %v1270 = vshrl.u32 %v1269, 7
    %v1271 = vsub.s32 0, %v1270
    %v1272 = vrot.slane %v980, %v1271
    %v1273 = vlaneseq
    %v1274 = vshrl.u32 %v1273, 7
    %v1275 = vsub.s32 0, %v1274
    %v1276 = vrot.slane %v985, %v1275
    %v1277 = vlaneseq
    %v1278 = vshrl.u32 %v1277, 7
    %v1279 = vsub.s32 0, %v1278
    %v1280 = vrot.slane %v983, %v1279
    %v1281 = vlaneseq
    %v1282 = vshrl.u32 %v1281, 7
    %v1283 = vsub.s32 0, %v1282
    %v1284 = vrot.slane %v981, %v1283
    %1286 = vset.pattern.permute.xlu0 0
    %1287 = vperm.xlu0 %1286, %v1260
    %v1288 = vpop.permute.xlu0 %1287
    %v1290 = vmul.f32 %v1264, %v1288
    %v1291 = vmul.f32 %v1268, %v1288
    %v1292 = vmul.f32 %v1272, %v1288
    %v1293 = vmul.f32 %v1276, %v1288
    %v1294 = vmul.f32 %v1280, %v1288
    %v1295 = vmul.f32 %v1284, %v1288
    %v1296 = vadd.f32 %v1253, %v1290
    %v1297 = vadd.f32 %v1254, %v1291
    %v1298 = vadd.f32 %v1255, %v1292
    %v1299 = vadd.f32 %v1256, %v1293
    %v1300 = vadd.f32 %v1257, %v1294
    %v1301 = vadd.f32 %v1258, %v1295
    %s1302 = scalar_lea.vmem [#allocation7], 40
    %v1303 = vld [vmem:[%s1302] sm:$0x3f]
    %v1304 = vlaneseq
    %v1305 = vshrl.u32 %v1304, 7
    %v1306 = vsub.s32 1, %v1305
    %v1307 = vrot.slane %v984, %v1306
    %v1308 = vlaneseq
    %v1309 = vshrl.u32 %v1308, 7
    %v1310 = vsub.s32 1, %v1309
    %v1311 = vrot.slane %v982, %v1310
    %v1312 = vlaneseq
    %v1313 = vshrl.u32 %v1312, 7
    %v1314 = vsub.s32 1, %v1313
    %v1315 = vrot.slane %v980, %v1314
    %v1316 = vlaneseq
    %v1317 = vshrl.u32 %v1316, 7
    %v1318 = vsub.s32 1, %v1317
    %v1319 = vrot.slane %v985, %v1318
    %v1320 = vlaneseq
    %v1321 = vshrl.u32 %v1320, 7
    %v1322 = vsub.s32 1, %v1321
    %v1323 = vrot.slane %v983, %v1322
    %v1324 = vlaneseq
    %v1325 = vshrl.u32 %v1324, 7
    %v1326 = vsub.s32 1, %v1325
    %v1327 = vrot.slane %v981, %v1326
    %1329 = vset.pattern.permute.xlu0 0
    %1330 = vperm.xlu0 %1329, %v1303
    %v1331 = vpop.permute.xlu0 %1330
    %v1333 = vmul.f32 %v1307, %v1331
    %v1334 = vmul.f32 %v1311, %v1331
    %v1335 = vmul.f32 %v1315, %v1331
    %v1336 = vmul.f32 %v1319, %v1331
    %v1337 = vmul.f32 %v1323, %v1331
    %v1338 = vmul.f32 %v1327, %v1331
    %v1339 = vadd.f32 %v1296, %v1333
    %v1340 = vadd.f32 %v1297, %v1334
    %v1341 = vadd.f32 %v1298, %v1335
    %v1342 = vadd.f32 %v1299, %v1336
    %v1343 = vadd.f32 %v1300, %v1337
    %v1344 = vadd.f32 %v1301, %v1338
    %s1345 = scalar_lea.vmem [#allocation7], 48
    %v1346 = vld [vmem:[%s1345] sm:$0x3f]
    %v1347 = vlaneseq
    %v1348 = vshrl.u32 %v1347, 7
    %v1349 = vsub.s32 2, %v1348
    %v1350 = vrot.slane %v984, %v1349
    %v1351 = vlaneseq
    %v1352 = vshrl.u32 %v1351, 7
    %v1353 = vsub.s32 2, %v1352
    %v1354 = vrot.slane %v982, %v1353
    %v1355 = vlaneseq
    %v1356 = vshrl.u32 %v1355, 7
    %v1357 = vsub.s32 2, %v1356
    %v1358 = vrot.slane %v980, %v1357
    %v1359 = vlaneseq
    %v1360 = vshrl.u32 %v1359, 7
    %v1361 = vsub.s32 2, %v1360
    %v1362 = vrot.slane %v985, %v1361
    %v1363 = vlaneseq
    %v1364 = vshrl.u32 %v1363, 7
    %v1365 = vsub.s32 2, %v1364
    %v1366 = vrot.slane %v983, %v1365
    %v1367 = vlaneseq
    %v1368 = vshrl.u32 %v1367, 7
    %v1369 = vsub.s32 2, %v1368
    %v1370 = vrot.slane %v981, %v1369
    %1372 = vset.pattern.permute.xlu0 0
    %1373 = vperm.xlu0 %1372, %v1346
    %v1374 = vpop.permute.xlu0 %1373
    %v1376 = vmul.f32 %v1350, %v1374
    %v1377 = vmul.f32 %v1354, %v1374
    %v1378 = vmul.f32 %v1358, %v1374
    %v1379 = vmul.f32 %v1362, %v1374
    %v1380 = vmul.f32 %v1366, %v1374
    %v1381 = vmul.f32 %v1370, %v1374
    %v1382 = vadd.f32 %v1339, %v1376
    %v1383 = vadd.f32 %v1340, %v1377
    %v1384 = vadd.f32 %v1341, %v1378
    %v1385 = vadd.f32 %v1342, %v1379
    %v1386 = vadd.f32 %v1343, %v1380
    %v1387 = vadd.f32 %v1344, %v1381
    %s1388 = scalar_lea.vmem [#allocation7], 56
    %v1389 = vld [vmem:[%s1388] sm:$0x3f]
    %v1390 = vlaneseq
    %v1391 = vshrl.u32 %v1390, 7
    %v1392 = vsub.s32 3, %v1391
    %v1393 = vrot.slane %v984, %v1392
    %v1394 = vlaneseq
    %v1395 = vshrl.u32 %v1394, 7
    %v1396 = vsub.s32 3, %v1395
    %v1397 = vrot.slane %v982, %v1396
    %v1398 = vlaneseq
    %v1399 = vshrl.u32 %v1398, 7
    %v1400 = vsub.s32 3, %v1399
    %v1401 = vrot.slane %v980, %v1400
    %v1402 = vlaneseq
    %v1403 = vshrl.u32 %v1402, 7
    %v1404 = vsub.s32 3, %v1403
    %v1405 = vrot.slane %v985, %v1404
    %v1406 = vlaneseq
    %v1407 = vshrl.u32 %v1406, 7
    %v1408 = vsub.s32 3, %v1407
    %v1409 = vrot.slane %v983, %v1408
    %v1410 = vlaneseq
    %v1411 = vshrl.u32 %v1410, 7
    %v1412 = vsub.s32 3, %v1411
    %v1413 = vrot.slane %v981, %v1412
    %1415 = vset.pattern.permute.xlu0 0
    %1416 = vperm.xlu0 %1415, %v1389
    %v1417 = vpop.permute.xlu0 %1416
    %v1419 = vmul.f32 %v1393, %v1417
    %v1420 = vmul.f32 %v1397, %v1417
    %v1421 = vmul.f32 %v1401, %v1417
    %v1422 = vmul.f32 %v1405, %v1417
    %v1423 = vmul.f32 %v1409, %v1417
    %v1424 = vmul.f32 %v1413, %v1417
    %v1425 = vadd.f32 %v1382, %v1419
    %v1426 = vadd.f32 %v1383, %v1420
    %v1427 = vadd.f32 %v1384, %v1421
    %v1428 = vadd.f32 %v1385, %v1422
    %v1429 = vadd.f32 %v1386, %v1423
    %v1430 = vadd.f32 %v1387, %v1424
    %s1431 = scalar_lea.vmem [#allocation7], 64
    %v1432 = vld [vmem:[%s1431] sm:$0x3f]
    %v1433 = vlaneseq
    %v1434 = vshrl.u32 %v1433, 7
    %v1435 = vsub.s32 0, %v1434
    %v1436 = vrot.slane %v1002, %v1435
    %v1437 = vlaneseq
    %v1438 = vshrl.u32 %v1437, 7
    %v1439 = vsub.s32 0, %v1438
    %v1440 = vrot.slane %v1000, %v1439
    %v1441 = vlaneseq
    %v1442 = vshrl.u32 %v1441, 7
    %v1443 = vsub.s32 0, %v1442
    %v1444 = vrot.slane %v998, %v1443
    %v1445 = vlaneseq
    %v1446 = vshrl.u32 %v1445, 7
    %v1447 = vsub.s32 0, %v1446
    %v1448 = vrot.slane %v1003, %v1447
    %v1449 = vlaneseq
    %v1450 = vshrl.u32 %v1449, 7
    %v1451 = vsub.s32 0, %v1450
    %v1452 = vrot.slane %v1001, %v1451
    %v1453 = vlaneseq
    %v1454 = vshrl.u32 %v1453, 7
    %v1455 = vsub.s32 0, %v1454
    %v1456 = vrot.slane %v999, %v1455
    %1458 = vset.pattern.permute.xlu0 0
    %1459 = vperm.xlu0 %1458, %v1432
    %v1460 = vpop.permute.xlu0 %1459
    %v1462 = vmul.f32 %v1436, %v1460
    %v1463 = vmul.f32 %v1440, %v1460
    %v1464 = vmul.f32 %v1444, %v1460
    %v1465 = vmul.f32 %v1448, %v1460
    %v1466 = vmul.f32 %v1452, %v1460
    %v1467 = vmul.f32 %v1456, %v1460
    %v1468 = vadd.f32 %v1425, %v1462
    %v1469 = vadd.f32 %v1426, %v1463
    %v1470 = vadd.f32 %v1427, %v1464
    %v1471 = vadd.f32 %v1428, %v1465
    %v1472 = vadd.f32 %v1429, %v1466
    %v1473 = vadd.f32 %v1430, %v1467
    %s1474 = scalar_lea.vmem [#allocation7], 72
    %v1475 = vld [vmem:[%s1474] sm:$0x3f]
    %v1476 = vlaneseq
    %v1477 = vshrl.u32 %v1476, 7
    %v1478 = vsub.s32 1, %v1477
    %v1479 = vrot.slane %v1002, %v1478
    %v1480 = vlaneseq
    %v1481 = vshrl.u32 %v1480, 7
    %v1482 = vsub.s32 1, %v1481
    %v1483 = vrot.slane %v1000, %v1482
    %v1484 = vlaneseq
    %v1485 = vshrl.u32 %v1484, 7
    %v1486 = vsub.s32 1, %v1485
    %v1487 = vrot.slane %v998, %v1486
    %v1488 = vlaneseq
    %v1489 = vshrl.u32 %v1488, 7
    %v1490 = vsub.s32 1, %v1489
    %v1491 = vrot.slane %v1003, %v1490
    %v1492 = vlaneseq
    %v1493 = vshrl.u32 %v1492, 7
    %v1494 = vsub.s32 1, %v1493
    %v1495 = vrot.slane %v1001, %v1494
    %v1496 = vlaneseq
    %v1497 = vshrl.u32 %v1496, 7
    %v1498 = vsub.s32 1, %v1497
    %v1499 = vrot.slane %v999, %v1498
    %1501 = vset.pattern.permute.xlu0 0
    %1502 = vperm.xlu0 %1501, %v1475
    %v1503 = vpop.permute.xlu0 %1502
    %v1505 = vmul.f32 %v1479, %v1503
    %v1506 = vmul.f32 %v1483, %v1503
    %v1507 = vmul.f32 %v1487, %v1503
    %v1508 = vmul.f32 %v1491, %v1503
    %v1509 = vmul.f32 %v1495, %v1503
    %v1510 = vmul.f32 %v1499, %v1503
    %v1511 = vadd.f32 %v1468, %v1505
    %v1512 = vadd.f32 %v1469, %v1506
    %v1513 = vadd.f32 %v1470, %v1507
    %v1514 = vadd.f32 %v1471, %v1508
    %v1515 = vadd.f32 %v1472, %v1509
    %v1516 = vadd.f32 %v1473, %v1510
    %s1517 = scalar_lea.vmem [#allocation7], 80
    %v1518 = vld [vmem:[%s1517] sm:$0x3f]
    %v1519 = vlaneseq
    %v1520 = vshrl.u32 %v1519, 7
    %v1521 = vsub.s32 2, %v1520
    %v1522 = vrot.slane %v1002, %v1521
    %v1523 = vlaneseq
    %v1524 = vshrl.u32 %v1523, 7
    %v1525 = vsub.s32 2, %v1524
    %v1526 = vrot.slane %v1000, %v1525
    %v1527 = vlaneseq
    %v1528 = vshrl.u32 %v1527, 7
    %v1529 = vsub.s32 2, %v1528
    %v1530 = vrot.slane %v998, %v1529
    %v1531 = vlaneseq
    %v1532 = vshrl.u32 %v1531, 7
    %v1533 = vsub.s32 2, %v1532
    %v1534 = vrot.slane %v1003, %v1533
    %v1535 = vlaneseq
    %v1536 = vshrl.u32 %v1535, 7
    %v1537 = vsub.s32 2, %v1536
    %v1538 = vrot.slane %v1001, %v1537
    %v1539 = vlaneseq
    %v1540 = vshrl.u32 %v1539, 7
    %v1541 = vsub.s32 2, %v1540
    %v1542 = vrot.slane %v999, %v1541
    %1544 = vset.pattern.permute.xlu0 0
    %1545 = vperm.xlu0 %1544, %v1518
    %v1546 = vpop.permute.xlu0 %1545
    %v1548 = vmul.f32 %v1522, %v1546
    %v1549 = vmul.f32 %v1526, %v1546
    %v1550 = vmul.f32 %v1530, %v1546
    %v1551 = vmul.f32 %v1534, %v1546
    %v1552 = vmul.f32 %v1538, %v1546
    %v1553 = vmul.f32 %v1542, %v1546
    %v1554 = vadd.f32 %v1511, %v1548
    %v1555 = vadd.f32 %v1512, %v1549
    %v1556 = vadd.f32 %v1513, %v1550
    %v1557 = vadd.f32 %v1514, %v1551
    %v1558 = vadd.f32 %v1515, %v1552
    %v1559 = vadd.f32 %v1516, %v1553
    %s1560 = scalar_lea.vmem [#allocation7], 88
    %v1561 = vld [vmem:[%s1560] sm:$0x3f]
    %v1562 = vlaneseq
    %v1563 = vshrl.u32 %v1562, 7
    %v1564 = vsub.s32 3, %v1563
    %v1565 = vrot.slane %v1002, %v1564
    %v1566 = vlaneseq
    %v1567 = vshrl.u32 %v1566, 7
    %v1568 = vsub.s32 3, %v1567
    %v1569 = vrot.slane %v1000, %v1568
    %v1570 = vlaneseq
    %v1571 = vshrl.u32 %v1570, 7
    %v1572 = vsub.s32 3, %v1571
    %v1573 = vrot.slane %v998, %v1572
    %v1574 = vlaneseq
    %v1575 = vshrl.u32 %v1574, 7
    %v1576 = vsub.s32 3, %v1575
    %v1577 = vrot.slane %v1003, %v1576
    %v1578 = vlaneseq
    %v1579 = vshrl.u32 %v1578, 7
    %v1580 = vsub.s32 3, %v1579
    %v1581 = vrot.slane %v1001, %v1580
    %v1582 = vlaneseq
    %v1583 = vshrl.u32 %v1582, 7
    %v1584 = vsub.s32 3, %v1583
    %v1585 = vrot.slane %v999, %v1584
    %1587 = vset.pattern.permute.xlu0 0
    %1588 = vperm.xlu0 %1587, %v1561
    %v1589 = vpop.permute.xlu0 %1588
    %v1591 = vmul.f32 %v1565, %v1589
    %v1592 = vmul.f32 %v1569, %v1589
    %v1593 = vmul.f32 %v1573, %v1589
    %v1594 = vmul.f32 %v1577, %v1589
    %v1595 = vmul.f32 %v1581, %v1589
    %v1596 = vmul.f32 %v1585, %v1589
    %v1597 = vadd.f32 %v1554, %v1591
    %v1598 = vadd.f32 %v1555, %v1592
    %v1599 = vadd.f32 %v1556, %v1593
    %v1600 = vadd.f32 %v1557, %v1594
    %v1601 = vadd.f32 %v1558, %v1595
    %v1602 = vadd.f32 %v1559, %v1596
    %s1603 = scalar_lea.vmem [#allocation7], 96
    %v1604 = vld [vmem:[%s1603] sm:$0x3f]
    %v1605 = vlaneseq
    %v1606 = vshrl.u32 %v1605, 7
    %v1607 = vsub.s32 0, %v1606
    %v1608 = vrot.slane %v1020, %v1607
    %v1609 = vlaneseq
    %v1610 = vshrl.u32 %v1609, 7
    %v1611 = vsub.s32 0, %v1610
    %v1612 = vrot.slane %v1018, %v1611
    %v1613 = vlaneseq
    %v1614 = vshrl.u32 %v1613, 7
    %v1615 = vsub.s32 0, %v1614
    %v1616 = vrot.slane %v1016, %v1615
    %v1617 = vlaneseq
    %v1618 = vshrl.u32 %v1617, 7
    %v1619 = vsub.s32 0, %v1618
    %v1620 = vrot.slane %v1021, %v1619
    %v1621 = vlaneseq
    %v1622 = vshrl.u32 %v1621, 7
    %v1623 = vsub.s32 0, %v1622
    %v1624 = vrot.slane %v1019, %v1623
    %v1625 = vlaneseq
    %v1626 = vshrl.u32 %v1625, 7
    %v1627 = vsub.s32 0, %v1626
    %v1628 = vrot.slane %v1017, %v1627
    %1630 = vset.pattern.permute.xlu0 0
    %1631 = vperm.xlu0 %1630, %v1604
    %v1632 = vpop.permute.xlu0 %1631
    %v1634 = vmul.f32 %v1608, %v1632
    %v1635 = vmul.f32 %v1612, %v1632
    %v1636 = vmul.f32 %v1616, %v1632
    %v1637 = vmul.f32 %v1620, %v1632
    %v1638 = vmul.f32 %v1624, %v1632
    %v1639 = vmul.f32 %v1628, %v1632
    %v1640 = vadd.f32 %v1597, %v1634
    %v1641 = vadd.f32 %v1598, %v1635
    %v1642 = vadd.f32 %v1599, %v1636
    %v1643 = vadd.f32 %v1600, %v1637
    %v1644 = vadd.f32 %v1601, %v1638
    %v1645 = vadd.f32 %v1602, %v1639
    %s1646 = scalar_lea.vmem [#allocation7], 104
    %v1647 = vld [vmem:[%s1646] sm:$0x3f]
    %v1648 = vlaneseq
    %v1649 = vshrl.u32 %v1648, 7
    %v1650 = vsub.s32 1, %v1649
    %v1651 = vrot.slane %v1020, %v1650
    %v1652 = vlaneseq
    %v1653 = vshrl.u32 %v1652, 7
    %v1654 = vsub.s32 1, %v1653
    %v1655 = vrot.slane %v1018, %v1654
    %v1656 = vlaneseq
    %v1657 = vshrl.u32 %v1656, 7
    %v1658 = vsub.s32 1, %v1657
    %v1659 = vrot.slane %v1016, %v1658
    %v1660 = vlaneseq
    %v1661 = vshrl.u32 %v1660, 7
    %v1662 = vsub.s32 1, %v1661
    %v1663 = vrot.slane %v1021, %v1662
    %v1664 = vlaneseq
    %v1665 = vshrl.u32 %v1664, 7
    %v1666 = vsub.s32 1, %v1665
    %v1667 = vrot.slane %v1019, %v1666
    %v1668 = vlaneseq
    %v1669 = vshrl.u32 %v1668, 7
    %v1670 = vsub.s32 1, %v1669
    %v1671 = vrot.slane %v1017, %v1670
    %1673 = vset.pattern.permute.xlu0 0
    %1674 = vperm.xlu0 %1673, %v1647
    %v1675 = vpop.permute.xlu0 %1674
    %v1677 = vmul.f32 %v1651, %v1675
    %v1678 = vmul.f32 %v1655, %v1675
    %v1679 = vmul.f32 %v1659, %v1675
    %v1680 = vmul.f32 %v1663, %v1675
    %v1681 = vmul.f32 %v1667, %v1675
    %v1682 = vmul.f32 %v1671, %v1675
    %v1683 = vadd.f32 %v1640, %v1677
    %v1684 = vadd.f32 %v1641, %v1678
    %v1685 = vadd.f32 %v1642, %v1679
    %v1686 = vadd.f32 %v1643, %v1680
    %v1687 = vadd.f32 %v1644, %v1681
    %v1688 = vadd.f32 %v1645, %v1682
    %s1689 = scalar_lea.vmem [#allocation7], 112
    %v1690 = vld [vmem:[%s1689] sm:$0x3f]
    %v1691 = vlaneseq
    %v1692 = vshrl.u32 %v1691, 7
    %v1693 = vsub.s32 2, %v1692
    %v1694 = vrot.slane %v1020, %v1693
    %v1695 = vlaneseq
    %v1696 = vshrl.u32 %v1695, 7
    %v1697 = vsub.s32 2, %v1696
    %v1698 = vrot.slane %v1018, %v1697
    %v1699 = vlaneseq
    %v1700 = vshrl.u32 %v1699, 7
    %v1701 = vsub.s32 2, %v1700
    %v1702 = vrot.slane %v1016, %v1701
    %v1703 = vlaneseq
    %v1704 = vshrl.u32 %v1703, 7
    %v1705 = vsub.s32 2, %v1704
    %v1706 = vrot.slane %v1021, %v1705
    %v1707 = vlaneseq
    %v1708 = vshrl.u32 %v1707, 7
    %v1709 = vsub.s32 2, %v1708
    %v1710 = vrot.slane %v1019, %v1709
    %v1711 = vlaneseq
    %v1712 = vshrl.u32 %v1711, 7
    %v1713 = vsub.s32 2, %v1712
    %v1714 = vrot.slane %v1017, %v1713
    %1716 = vset.pattern.permute.xlu0 0
    %1717 = vperm.xlu0 %1716, %v1690
    %v1718 = vpop.permute.xlu0 %1717
    %v1720 = vmul.f32 %v1694, %v1718
    %v1721 = vmul.f32 %v1698, %v1718
    %v1722 = vmul.f32 %v1702, %v1718
    %v1723 = vmul.f32 %v1706, %v1718
    %v1724 = vmul.f32 %v1710, %v1718
    %v1725 = vmul.f32 %v1714, %v1718
    %v1726 = vadd.f32 %v1683, %v1720
    %v1727 = vadd.f32 %v1684, %v1721
    %v1728 = vadd.f32 %v1685, %v1722
    %v1729 = vadd.f32 %v1686, %v1723
    %v1730 = vadd.f32 %v1687, %v1724
    %v1731 = vadd.f32 %v1688, %v1725
    %s1732 = scalar_lea.vmem [#allocation7], 120
    %v1733 = vld [vmem:[%s1732] sm:$0x3f]
    %v1734 = vlaneseq
    %v1735 = vshrl.u32 %v1734, 7
    %v1736 = vsub.s32 3, %v1735
    %v1737 = vrot.slane %v1020, %v1736
    %v1738 = vlaneseq
    %v1739 = vshrl.u32 %v1738, 7
    %v1740 = vsub.s32 3, %v1739
    %v1741 = vrot.slane %v1018, %v1740
    %v1742 = vlaneseq
    %v1743 = vshrl.u32 %v1742, 7
    %v1744 = vsub.s32 3, %v1743
    %v1745 = vrot.slane %v1016, %v1744
    %v1746 = vlaneseq
    %v1747 = vshrl.u32 %v1746, 7
    %v1748 = vsub.s32 3, %v1747
    %v1749 = vrot.slane %v1021, %v1748
    %v1750 = vlaneseq
    %v1751 = vshrl.u32 %v1750, 7
    %v1752 = vsub.s32 3, %v1751
    %v1753 = vrot.slane %v1019, %v1752
    %v1754 = vlaneseq
    %v1755 = vshrl.u32 %v1754, 7
    %v1756 = vsub.s32 3, %v1755
    %v1757 = vrot.slane %v1017, %v1756
    %1759 = vset.pattern.permute.xlu0 0
    %1760 = vperm.xlu0 %1759, %v1733
    %v1761 = vpop.permute.xlu0 %1760
    %v1763 = vmul.f32 %v1737, %v1761
    %v1764 = vmul.f32 %v1741, %v1761
    %v1765 = vmul.f32 %v1745, %v1761
    %v1766 = vmul.f32 %v1749, %v1761
    %v1767 = vmul.f32 %v1753, %v1761
    %v1768 = vmul.f32 %v1757, %v1761
    %v1769 = vadd.f32 %v1726, %v1763
    %v1770 = vadd.f32 %v1727, %v1764
    %v1771 = vadd.f32 %v1728, %v1765
    %v1772 = vadd.f32 %v1729, %v1766
    %v1773 = vadd.f32 %v1730, %v1767
    %v1774 = vadd.f32 %v1731, %v1768
    %s1775 = scalar_lea.vmem [#allocation7], 128
    %v1776 = vld [vmem:[%s1775] sm:$0x3f]
    %v1777 = vlaneseq
    %v1778 = vshrl.u32 %v1777, 7
    %v1779 = vsub.s32 0, %v1778
    %v1780 = vrot.slane %v944, %v1779
    %v1781 = vlaneseq
    %v1782 = vshrl.u32 %v1781, 7
    %v1783 = vsub.s32 0, %v1782
    %v1784 = vrot.slane %v945, %v1783
    %v1785 = vlaneseq
    %v1786 = vshrl.u32 %v1785, 7
    %v1787 = vsub.s32 0, %v1786
    %v1788 = vrot.slane %v946, %v1787
    %v1789 = vlaneseq
    %v1790 = vshrl.u32 %v1789, 7
    %v1791 = vsub.s32 0, %v1790
    %v1792 = vrot.slane %v947, %v1791
    %v1793 = vlaneseq
    %v1794 = vshrl.u32 %v1793, 7
    %v1795 = vsub.s32 0, %v1794
    %v1796 = vrot.slane %v948, %v1795
    %v1797 = vlaneseq
    %v1798 = vshrl.u32 %v1797, 7
    %v1799 = vsub.s32 0, %v1798
    %v1800 = vrot.slane %v949, %v1799
    %1802 = vset.pattern.permute.xlu0 0
    %1803 = vperm.xlu0 %1802, %v1776
    %v1804 = vpop.permute.xlu0 %1803
    %v1806 = vmul.f32 %v1780, %v1804
    %v1807 = vmul.f32 %v1784, %v1804
    %v1808 = vmul.f32 %v1788, %v1804
    %v1809 = vmul.f32 %v1792, %v1804
    %v1810 = vmul.f32 %v1796, %v1804
    %v1811 = vmul.f32 %v1800, %v1804
    %v1812 = vadd.f32 %v1769, %v1806
    %v1813 = vadd.f32 %v1770, %v1807
    %v1814 = vadd.f32 %v1771, %v1808
    %v1815 = vadd.f32 %v1772, %v1809
    %v1816 = vadd.f32 %v1773, %v1810
    %v1817 = vadd.f32 %v1774, %v1811
    %s1818 = scalar_lea.vmem [#allocation7], 136
    %v1819 = vld [vmem:[%s1818] sm:$0x3f]
    %v1820 = vlaneseq
    %v1821 = vshrl.u32 %v1820, 7
    %v1822 = vsub.s32 1, %v1821
    %v1823 = vrot.slane %v944, %v1822
    %v1824 = vlaneseq
    %v1825 = vshrl.u32 %v1824, 7
    %v1826 = vsub.s32 1, %v1825
    %v1827 = vrot.slane %v945, %v1826
    %v1828 = vlaneseq
    %v1829 = vshrl.u32 %v1828, 7
    %v1830 = vsub.s32 1, %v1829
    %v1831 = vrot.slane %v946, %v1830
    %v1832 = vlaneseq
    %v1833 = vshrl.u32 %v1832, 7
    %v1834 = vsub.s32 1, %v1833
    %v1835 = vrot.slane %v947, %v1834
    %v1836 = vlaneseq
    %v1837 = vshrl.u32 %v1836, 7
    %v1838 = vsub.s32 1, %v1837
    %v1839 = vrot.slane %v948, %v1838
    %v1840 = vlaneseq
    %v1841 = vshrl.u32 %v1840, 7
    %v1842 = vsub.s32 1, %v1841
    %v1843 = vrot.slane %v949, %v1842
    %1845 = vset.pattern.permute.xlu0 0
    %1846 = vperm.xlu0 %1845, %v1819
    %v1847 = vpop.permute.xlu0 %1846
    %v1849 = vmul.f32 %v1823, %v1847
    %v1850 = vmul.f32 %v1827, %v1847
    %v1851 = vmul.f32 %v1831, %v1847
    %v1852 = vmul.f32 %v1835, %v1847
    %v1853 = vmul.f32 %v1839, %v1847
    %v1854 = vmul.f32 %v1843, %v1847
    %v1855 = vadd.f32 %v1812, %v1849
    %v1856 = vadd.f32 %v1813, %v1850
    %v1857 = vadd.f32 %v1814, %v1851
    %v1858 = vadd.f32 %v1815, %v1852
    %v1859 = vadd.f32 %v1816, %v1853
    %v1860 = vadd.f32 %v1817, %v1854
    %s1861 = scalar_lea.vmem [#allocation7], 144
    %v1862 = vld [vmem:[%s1861] sm:$0x3f]
    %v1863 = vlaneseq
    %v1864 = vshrl.u32 %v1863, 7
    %v1865 = vsub.s32 2, %v1864
    %v1866 = vrot.slane %v944, %v1865
    %v1867 = vlaneseq
    %v1868 = vshrl.u32 %v1867, 7
    %v1869 = vsub.s32 2, %v1868
    %v1870 = vrot.slane %v945, %v1869
    %v1871 = vlaneseq
    %v1872 = vshrl.u32 %v1871, 7
    %v1873 = vsub.s32 2, %v1872
    %v1874 = vrot.slane %v946, %v1873
    %v1875 = vlaneseq
    %v1876 = vshrl.u32 %v1875, 7
    %v1877 = vsub.s32 2, %v1876
    %v1878 = vrot.slane %v947, %v1877
    %v1879 = vlaneseq
    %v1880 = vshrl.u32 %v1879, 7
    %v1881 = vsub.s32 2, %v1880
    %v1882 = vrot.slane %v948, %v1881
    %v1883 = vlaneseq
    %v1884 = vshrl.u32 %v1883, 7
    %v1885 = vsub.s32 2, %v1884
    %v1886 = vrot.slane %v949, %v1885
    %1888 = vset.pattern.permute.xlu0 0
    %1889 = vperm.xlu0 %1888, %v1862
    %v1890 = vpop.permute.xlu0 %1889
    %v1892 = vmul.f32 %v1866, %v1890
    %v1893 = vmul.f32 %v1870, %v1890
    %v1894 = vmul.f32 %v1874, %v1890
    %v1895 = vmul.f32 %v1878, %v1890
    %v1896 = vmul.f32 %v1882, %v1890
    %v1897 = vmul.f32 %v1886, %v1890
    %v1898 = vadd.f32 %v1855, %v1892
    %v1899 = vadd.f32 %v1856, %v1893
    %v1900 = vadd.f32 %v1857, %v1894
    %v1901 = vadd.f32 %v1858, %v1895
    %v1902 = vadd.f32 %v1859, %v1896
    %v1903 = vadd.f32 %v1860, %v1897
    %s1904 = scalar_lea.vmem [#allocation7], 152
    %v1905 = vld [vmem:[%s1904] sm:$0x3f]
    %v1906 = vlaneseq
    %v1907 = vshrl.u32 %v1906, 7
    %v1908 = vsub.s32 3, %v1907
    %v1909 = vrot.slane %v944, %v1908
    %v1910 = vlaneseq
    %v1911 = vshrl.u32 %v1910, 7
    %v1912 = vsub.s32 3, %v1911
    %v1913 = vrot.slane %v945, %v1912
    %v1914 = vlaneseq
    %v1915 = vshrl.u32 %v1914, 7
    %v1916 = vsub.s32 3, %v1915
    %v1917 = vrot.slane %v946, %v1916
    %v1918 = vlaneseq
    %v1919 = vshrl.u32 %v1918, 7
    %v1920 = vsub.s32 3, %v1919
    %v1921 = vrot.slane %v947, %v1920
    %v1922 = vlaneseq
    %v1923 = vshrl.u32 %v1922, 7
    %v1924 = vsub.s32 3, %v1923
    %v1925 = vrot.slane %v948, %v1924
    %v1926 = vlaneseq
    %v1927 = vshrl.u32 %v1926, 7
    %v1928 = vsub.s32 3, %v1927
    %v1929 = vrot.slane %v949, %v1928
    %1931 = vset.pattern.permute.xlu0 0
    %1932 = vperm.xlu0 %1931, %v1905
    %v1933 = vpop.permute.xlu0 %1932
    %v1935 = vmul.f32 %v1909, %v1933
    %v1936 = vmul.f32 %v1913, %v1933
    %v1937 = vmul.f32 %v1917, %v1933
    %v1938 = vmul.f32 %v1921, %v1933
    %v1939 = vmul.f32 %v1925, %v1933
    %v1940 = vmul.f32 %v1929, %v1933
    %v1941 = vadd.f32 %v1898, %v1935
    %v1942 = vadd.f32 %v1899, %v1936
    %v1943 = vadd.f32 %v1900, %v1937
    %v1944 = vadd.f32 %v1901, %v1938
    %v1945 = vadd.f32 %v1902, %v1939
    %v1946 = vadd.f32 %v1903, %v1940
    %s1947 = scalar_lea.vmem [#allocation7], 160
    %v1948 = vld [vmem:[%s1947] sm:$0x3f]
    %v1949 = vlaneseq
    %v1950 = vshrl.u32 %v1949, 7
    %v1951 = vsub.s32 0, %v1950
    %v1952 = vrot.slane %v1036, %v1951
    %v1953 = vlaneseq
    %v1954 = vshrl.u32 %v1953, 7
    %v1955 = vsub.s32 0, %v1954
    %v1956 = vrot.slane %v1034, %v1955
    %v1957 = vlaneseq
    %v1958 = vshrl.u32 %v1957, 7
    %v1959 = vsub.s32 0, %v1958
    %v1960 = vrot.slane %v1038, %v1959
    %v1961 = vlaneseq
    %v1962 = vshrl.u32 %v1961, 7
    %v1963 = vsub.s32 0, %v1962
    %v1964 = vrot.slane %v1037, %v1963
    %v1965 = vlaneseq
    %v1966 = vshrl.u32 %v1965, 7
    %v1967 = vsub.s32 0, %v1966
    %v1968 = vrot.slane %v1035, %v1967
    %v1969 = vlaneseq
    %v1970 = vshrl.u32 %v1969, 7
    %v1971 = vsub.s32 0, %v1970
    %v1972 = vrot.slane %v1039, %v1971
    %1974 = vset.pattern.permute.xlu0 0
    %1975 = vperm.xlu0 %1974, %v1948
    %v1976 = vpop.permute.xlu0 %1975
    %v1978 = vmul.f32 %v1952, %v1976
    %v1979 = vmul.f32 %v1956, %v1976
    %v1980 = vmul.f32 %v1960, %v1976
    %v1981 = vmul.f32 %v1964, %v1976
    %v1982 = vmul.f32 %v1968, %v1976
    %v1983 = vmul.f32 %v1972, %v1976
    %v1984 = vadd.f32 %v1941, %v1978
    %v1985 = vadd.f32 %v1942, %v1979
    %v1986 = vadd.f32 %v1943, %v1980
    %v1987 = vadd.f32 %v1944, %v1981
    %v1988 = vadd.f32 %v1945, %v1982
    %v1989 = vadd.f32 %v1946, %v1983
    %s1990 = scalar_lea.vmem [#allocation7], 168
    %v1991 = vld [vmem:[%s1990] sm:$0x3f]
    %v1992 = vlaneseq
    %v1993 = vshrl.u32 %v1992, 7
    %v1994 = vsub.s32 1, %v1993
    %v1995 = vrot.slane %v1036, %v1994
    %v1996 = vlaneseq
    %v1997 = vshrl.u32 %v1996, 7
    %v1998 = vsub.s32 1, %v1997
    %v1999 = vrot.slane %v1034, %v1998
    %v2000 = vlaneseq
    %v2001 = vshrl.u32 %v2000, 7
    %v2002 = vsub.s32 1, %v2001
    %v2003 = vrot.slane %v1038, %v2002
    %v2004 = vlaneseq
    %v2005 = vshrl.u32 %v2004, 7
    %v2006 = vsub.s32 1, %v2005
    %v2007 = vrot.slane %v1037, %v2006
    %v2008 = vlaneseq
    %v2009 = vshrl.u32 %v2008, 7
    %v2010 = vsub.s32 1, %v2009
    %v2011 = vrot.slane %v1035, %v2010
    %v2012 = vlaneseq
    %v2013 = vshrl.u32 %v2012, 7
    %v2014 = vsub.s32 1, %v2013
    %v2015 = vrot.slane %v1039, %v2014
    %2017 = vset.pattern.permute.xlu0 0
    %2018 = vperm.xlu0 %2017, %v1991
    %v2019 = vpop.permute.xlu0 %2018
    %v2021 = vmul.f32 %v1995, %v2019
    %v2022 = vmul.f32 %v1999, %v2019
    %v2023 = vmul.f32 %v2003, %v2019
    %v2024 = vmul.f32 %v2007, %v2019
    %v2025 = vmul.f32 %v2011, %v2019
    %v2026 = vmul.f32 %v2015, %v2019
    %v2027 = vadd.f32 %v1984, %v2021
    %v2028 = vadd.f32 %v1985, %v2022
    %v2029 = vadd.f32 %v1986, %v2023
    %v2030 = vadd.f32 %v1987, %v2024
    %v2031 = vadd.f32 %v1988, %v2025
    %v2032 = vadd.f32 %v1989, %v2026
    %s2033 = scalar_lea.vmem [#allocation7], 176
    %v2034 = vld [vmem:[%s2033] sm:$0x3f]
    %v2035 = vlaneseq
    %v2036 = vshrl.u32 %v2035, 7
    %v2037 = vsub.s32 2, %v2036
    %v2038 = vrot.slane %v1036, %v2037
    %v2039 = vlaneseq
    %v2040 = vshrl.u32 %v2039, 7
    %v2041 = vsub.s32 2, %v2040
    %v2042 = vrot.slane %v1034, %v2041
    %v2043 = vlaneseq
    %v2044 = vshrl.u32 %v2043, 7
    %v2045 = vsub.s32 2, %v2044
    %v2046 = vrot.slane %v1038, %v2045
    %v2047 = vlaneseq
    %v2048 = vshrl.u32 %v2047, 7
    %v2049 = vsub.s32 2, %v2048
    %v2050 = vrot.slane %v1037, %v2049
    %v2051 = vlaneseq
    %v2052 = vshrl.u32 %v2051, 7
    %v2053 = vsub.s32 2, %v2052
    %v2054 = vrot.slane %v1035, %v2053
    %v2055 = vlaneseq
    %v2056 = vshrl.u32 %v2055, 7
    %v2057 = vsub.s32 2, %v2056
    %v2058 = vrot.slane %v1039, %v2057
    %2060 = vset.pattern.permute.xlu0 0
    %2061 = vperm.xlu0 %2060, %v2034
    %v2062 = vpop.permute.xlu0 %2061
    %v2064 = vmul.f32 %v2038, %v2062
    %v2065 = vmul.f32 %v2042, %v2062
    %v2066 = vmul.f32 %v2046, %v2062
    %v2067 = vmul.f32 %v2050, %v2062
    %v2068 = vmul.f32 %v2054, %v2062
    %v2069 = vmul.f32 %v2058, %v2062
    %v2070 = vadd.f32 %v2027, %v2064
    %v2071 = vadd.f32 %v2028, %v2065
    %v2072 = vadd.f32 %v2029, %v2066
    %v2073 = vadd.f32 %v2030, %v2067
    %v2074 = vadd.f32 %v2031, %v2068
    %v2075 = vadd.f32 %v2032, %v2069
    %s2076 = scalar_lea.vmem [#allocation7], 184
    %v2077 = vld [vmem:[%s2076] sm:$0x3f]
    %v2078 = vlaneseq
    %v2079 = vshrl.u32 %v2078, 7
    %v2080 = vsub.s32 3, %v2079
    %v2081 = vrot.slane %v1036, %v2080
    %v2082 = vlaneseq
    %v2083 = vshrl.u32 %v2082, 7
    %v2084 = vsub.s32 3, %v2083
    %v2085 = vrot.slane %v1034, %v2084
    %v2086 = vlaneseq
    %v2087 = vshrl.u32 %v2086, 7
    %v2088 = vsub.s32 3, %v2087
    %v2089 = vrot.slane %v1038, %v2088
    %v2090 = vlaneseq
    %v2091 = vshrl.u32 %v2090, 7
    %v2092 = vsub.s32 3, %v2091
    %v2093 = vrot.slane %v1037, %v2092
    %v2094 = vlaneseq
    %v2095 = vshrl.u32 %v2094, 7
    %v2096 = vsub.s32 3, %v2095
    %v2097 = vrot.slane %v1035, %v2096
    %v2098 = vlaneseq
    %v2099 = vshrl.u32 %v2098, 7
    %v2100 = vsub.s32 3, %v2099
    %v2101 = vrot.slane %v1039, %v2100
    %2103 = vset.pattern.permute.xlu0 0
    %2104 = vperm.xlu0 %2103, %v2077
    %v2105 = vpop.permute.xlu0 %2104
    %v2107 = vmul.f32 %v2081, %v2105
    %v2108 = vmul.f32 %v2085, %v2105
    %v2109 = vmul.f32 %v2089, %v2105
    %v2110 = vmul.f32 %v2093, %v2105
    %v2111 = vmul.f32 %v2097, %v2105
    %v2112 = vmul.f32 %v2101, %v2105
    %v2113 = vadd.f32 %v2070, %v2107
    %v2114 = vadd.f32 %v2071, %v2108
    %v2115 = vadd.f32 %v2072, %v2109
    %v2116 = vadd.f32 %v2073, %v2110
    %v2117 = vadd.f32 %v2074, %v2111
    %v2118 = vadd.f32 %v2075, %v2112
    %s2119 = scalar_lea.vmem [#allocation7], 192
    %v2120 = vld [vmem:[%s2119] sm:$0x3f]
    %v2121 = vlaneseq
    %v2122 = vshrl.u32 %v2121, 7
    %v2123 = vsub.s32 0, %v2122
    %v2124 = vrot.slane %v1054, %v2123
    %v2125 = vlaneseq
    %v2126 = vshrl.u32 %v2125, 7
    %v2127 = vsub.s32 0, %v2126
    %v2128 = vrot.slane %v1052, %v2127
    %v2129 = vlaneseq
    %v2130 = vshrl.u32 %v2129, 7
    %v2131 = vsub.s32 0, %v2130
    %v2132 = vrot.slane %v1056, %v2131
    %v2133 = vlaneseq
    %v2134 = vshrl.u32 %v2133, 7
    %v2135 = vsub.s32 0, %v2134
    %v2136 = vrot.slane %v1055, %v2135
    %v2137 = vlaneseq
    %v2138 = vshrl.u32 %v2137, 7
    %v2139 = vsub.s32 0, %v2138
    %v2140 = vrot.slane %v1053, %v2139
    %v2141 = vlaneseq
    %v2142 = vshrl.u32 %v2141, 7
    %v2143 = vsub.s32 0, %v2142
    %v2144 = vrot.slane %v1057, %v2143
    %2146 = vset.pattern.permute.xlu0 0
    %2147 = vperm.xlu0 %2146, %v2120
    %v2148 = vpop.permute.xlu0 %2147
    %v2150 = vmul.f32 %v2124, %v2148
    %v2151 = vmul.f32 %v2128, %v2148
    %v2152 = vmul.f32 %v2132, %v2148
    %v2153 = vmul.f32 %v2136, %v2148
    %v2154 = vmul.f32 %v2140, %v2148
    %v2155 = vmul.f32 %v2144, %v2148
    %v2156 = vadd.f32 %v2113, %v2150
    %v2157 = vadd.f32 %v2114, %v2151
    %v2158 = vadd.f32 %v2115, %v2152
    %v2159 = vadd.f32 %v2116, %v2153
    %v2160 = vadd.f32 %v2117, %v2154
    %v2161 = vadd.f32 %v2118, %v2155
    %s2162 = scalar_lea.vmem [#allocation7], 200
    %v2163 = vld [vmem:[%s2162] sm:$0x3f]
    %v2164 = vlaneseq
    %v2165 = vshrl.u32 %v2164, 7
    %v2166 = vsub.s32 1, %v2165
    %v2167 = vrot.slane %v1054, %v2166
    %v2168 = vlaneseq
    %v2169 = vshrl.u32 %v2168, 7
    %v2170 = vsub.s32 1, %v2169
    %v2171 = vrot.slane %v1052, %v2170
    %v2172 = vlaneseq
    %v2173 = vshrl.u32 %v2172, 7
    %v2174 = vsub.s32 1, %v2173
    %v2175 = vrot.slane %v1056, %v2174
    %v2176 = vlaneseq
    %v2177 = vshrl.u32 %v2176, 7
    %v2178 = vsub.s32 1, %v2177
    %v2179 = vrot.slane %v1055, %v2178
    %v2180 = vlaneseq
    %v2181 = vshrl.u32 %v2180, 7
    %v2182 = vsub.s32 1, %v2181
    %v2183 = vrot.slane %v1053, %v2182
    %v2184 = vlaneseq
    %v2185 = vshrl.u32 %v2184, 7
    %v2186 = vsub.s32 1, %v2185
    %v2187 = vrot.slane %v1057, %v2186
    %2189 = vset.pattern.permute.xlu0 0
    %2190 = vperm.xlu0 %2189, %v2163
    %v2191 = vpop.permute.xlu0 %2190
    %v2193 = vmul.f32 %v2167, %v2191
    %v2194 = vmul.f32 %v2171, %v2191
    %v2195 = vmul.f32 %v2175, %v2191
    %v2196 = vmul.f32 %v2179, %v2191
    %v2197 = vmul.f32 %v2183, %v2191
    %v2198 = vmul.f32 %v2187, %v2191
    %v2199 = vadd.f32 %v2156, %v2193
    %v2200 = vadd.f32 %v2157, %v2194
    %v2201 = vadd.f32 %v2158, %v2195
    %v2202 = vadd.f32 %v2159, %v2196
    %v2203 = vadd.f32 %v2160, %v2197
    %v2204 = vadd.f32 %v2161, %v2198
    %s2205 = scalar_lea.vmem [#allocation7], 208
    %v2206 = vld [vmem:[%s2205] sm:$0x3f]
    %v2207 = vlaneseq
    %v2208 = vshrl.u32 %v2207, 7
    %v2209 = vsub.s32 2, %v2208
    %v2210 = vrot.slane %v1054, %v2209
    %v2211 = vlaneseq
    %v2212 = vshrl.u32 %v2211, 7
    %v2213 = vsub.s32 2, %v2212
    %v2214 = vrot.slane %v1052, %v2213
    %v2215 = vlaneseq
    %v2216 = vshrl.u32 %v2215, 7
    %v2217 = vsub.s32 2, %v2216
    %v2218 = vrot.slane %v1056, %v2217
    %v2219 = vlaneseq
    %v2220 = vshrl.u32 %v2219, 7
    %v2221 = vsub.s32 2, %v2220
    %v2222 = vrot.slane %v1055, %v2221
    %v2223 = vlaneseq
    %v2224 = vshrl.u32 %v2223, 7
    %v2225 = vsub.s32 2, %v2224
    %v2226 = vrot.slane %v1053, %v2225
    %v2227 = vlaneseq
    %v2228 = vshrl.u32 %v2227, 7
    %v2229 = vsub.s32 2, %v2228
    %v2230 = vrot.slane %v1057, %v2229
    %2232 = vset.pattern.permute.xlu0 0
    %2233 = vperm.xlu0 %2232, %v2206
    %v2234 = vpop.permute.xlu0 %2233
    %v2236 = vmul.f32 %v2210, %v2234
    %v2237 = vmul.f32 %v2214, %v2234
    %v2238 = vmul.f32 %v2218, %v2234
    %v2239 = vmul.f32 %v2222, %v2234
    %v2240 = vmul.f32 %v2226, %v2234
    %v2241 = vmul.f32 %v2230, %v2234
    %v2242 = vadd.f32 %v2199, %v2236
    %v2243 = vadd.f32 %v2200, %v2237
    %v2244 = vadd.f32 %v2201, %v2238
    %v2245 = vadd.f32 %v2202, %v2239
    %v2246 = vadd.f32 %v2203, %v2240
    %v2247 = vadd.f32 %v2204, %v2241
    %s2248 = scalar_lea.vmem [#allocation7], 216
    %v2249 = vld [vmem:[%s2248] sm:$0x3f]
    %v2250 = vlaneseq
    %v2251 = vshrl.u32 %v2250, 7
    %v2252 = vsub.s32 3, %v2251
    %v2253 = vrot.slane %v1054, %v2252
    %v2254 = vlaneseq
    %v2255 = vshrl.u32 %v2254, 7
    %v2256 = vsub.s32 3, %v2255
    %v2257 = vrot.slane %v1052, %v2256
    %v2258 = vlaneseq
    %v2259 = vshrl.u32 %v2258, 7
    %v2260 = vsub.s32 3, %v2259
    %v2261 = vrot.slane %v1056, %v2260
    %v2262 = vlaneseq
    %v2263 = vshrl.u32 %v2262, 7
    %v2264 = vsub.s32 3, %v2263
    %v2265 = vrot.slane %v1055, %v2264
    %v2266 = vlaneseq
    %v2267 = vshrl.u32 %v2266, 7
    %v2268 = vsub.s32 3, %v2267
    %v2269 = vrot.slane %v1053, %v2268
    %v2270 = vlaneseq
    %v2271 = vshrl.u32 %v2270, 7
    %v2272 = vsub.s32 3, %v2271
    %v2273 = vrot.slane %v1057, %v2272
    %2275 = vset.pattern.permute.xlu0 0
    %2276 = vperm.xlu0 %2275, %v2249
    %v2277 = vpop.permute.xlu0 %2276
    %v2279 = vmul.f32 %v2253, %v2277
    %v2280 = vmul.f32 %v2257, %v2277
    %v2281 = vmul.f32 %v2261, %v2277
    %v2282 = vmul.f32 %v2265, %v2277
    %v2283 = vmul.f32 %v2269, %v2277
    %v2284 = vmul.f32 %v2273, %v2277
    %v2285 = vadd.f32 %v2242, %v2279
    %v2286 = vadd.f32 %v2243, %v2280
    %v2287 = vadd.f32 %v2244, %v2281
    %v2288 = vadd.f32 %v2245, %v2282
    %v2289 = vadd.f32 %v2246, %v2283
    %v2290 = vadd.f32 %v2247, %v2284
    %s2291 = scalar_lea.vmem [#allocation7], 224
    %v2292 = vld [vmem:[%s2291] sm:$0x3f]
    %v2293 = vlaneseq
    %v2294 = vshrl.u32 %v2293, 7
    %v2295 = vsub.s32 0, %v2294
    %v2296 = vrot.slane %v1072, %v2295
    %v2297 = vlaneseq
    %v2298 = vshrl.u32 %v2297, 7
    %v2299 = vsub.s32 0, %v2298
    %v2300 = vrot.slane %v1070, %v2299
    %v2301 = vlaneseq
    %v2302 = vshrl.u32 %v2301, 7
    %v2303 = vsub.s32 0, %v2302
    %v2304 = vrot.slane %v1074, %v2303
    %v2305 = vlaneseq
    %v2306 = vshrl.u32 %v2305, 7
    %v2307 = vsub.s32 0, %v2306
    %v2308 = vrot.slane %v1073, %v2307
    %v2309 = vlaneseq
    %v2310 = vshrl.u32 %v2309, 7
    %v2311 = vsub.s32 0, %v2310
    %v2312 = vrot.slane %v1071, %v2311
    %v2313 = vlaneseq
    %v2314 = vshrl.u32 %v2313, 7
    %v2315 = vsub.s32 0, %v2314
    %v2316 = vrot.slane %v1075, %v2315
    %2318 = vset.pattern.permute.xlu0 0
    %2319 = vperm.xlu0 %2318, %v2292
    %v2320 = vpop.permute.xlu0 %2319
    %v2322 = vmul.f32 %v2296, %v2320
    %v2323 = vmul.f32 %v2300, %v2320
    %v2324 = vmul.f32 %v2304, %v2320
    %v2325 = vmul.f32 %v2308, %v2320
    %v2326 = vmul.f32 %v2312, %v2320
    %v2327 = vmul.f32 %v2316, %v2320
    %v2328 = vadd.f32 %v2285, %v2322
    %v2329 = vadd.f32 %v2286, %v2323
    %v2330 = vadd.f32 %v2287, %v2324
    %v2331 = vadd.f32 %v2288, %v2325
    %v2332 = vadd.f32 %v2289, %v2326
    %v2333 = vadd.f32 %v2290, %v2327
    %s2334 = scalar_lea.vmem [#allocation7], 232
    %v2335 = vld [vmem:[%s2334] sm:$0x3f]
    %v2336 = vlaneseq
    %v2337 = vshrl.u32 %v2336, 7
    %v2338 = vsub.s32 1, %v2337
    %v2339 = vrot.slane %v1072, %v2338
    %v2340 = vlaneseq
    %v2341 = vshrl.u32 %v2340, 7
    %v2342 = vsub.s32 1, %v2341
    %v2343 = vrot.slane %v1070, %v2342
    %v2344 = vlaneseq
    %v2345 = vshrl.u32 %v2344, 7
    %v2346 = vsub.s32 1, %v2345
    %v2347 = vrot.slane %v1074, %v2346
    %v2348 = vlaneseq
    %v2349 = vshrl.u32 %v2348, 7
    %v2350 = vsub.s32 1, %v2349
    %v2351 = vrot.slane %v1073, %v2350
    %v2352 = vlaneseq
    %v2353 = vshrl.u32 %v2352, 7
    %v2354 = vsub.s32 1, %v2353
    %v2355 = vrot.slane %v1071, %v2354
    %v2356 = vlaneseq
    %v2357 = vshrl.u32 %v2356, 7
    %v2358 = vsub.s32 1, %v2357
    %v2359 = vrot.slane %v1075, %v2358
    %2361 = vset.pattern.permute.xlu0 0
    %2362 = vperm.xlu0 %2361, %v2335
    %v2363 = vpop.permute.xlu0 %2362
    %v2365 = vmul.f32 %v2339, %v2363
    %v2366 = vmul.f32 %v2343, %v2363
    %v2367 = vmul.f32 %v2347, %v2363
    %v2368 = vmul.f32 %v2351, %v2363
    %v2369 = vmul.f32 %v2355, %v2363
    %v2370 = vmul.f32 %v2359, %v2363
    %v2371 = vadd.f32 %v2328, %v2365
    %v2372 = vadd.f32 %v2329, %v2366
    %v2373 = vadd.f32 %v2330, %v2367
    %v2374 = vadd.f32 %v2331, %v2368
    %v2375 = vadd.f32 %v2332, %v2369
    %v2376 = vadd.f32 %v2333, %v2370
    %s2377 = scalar_lea.vmem [#allocation7], 240
    %v2378 = vld [vmem:[%s2377] sm:$0x3f]
    %v2379 = vlaneseq
    %v2380 = vshrl.u32 %v2379, 7
    %v2381 = vsub.s32 2, %v2380
    %v2382 = vrot.slane %v1072, %v2381
    %v2383 = vlaneseq
    %v2384 = vshrl.u32 %v2383, 7
    %v2385 = vsub.s32 2, %v2384
    %v2386 = vrot.slane %v1070, %v2385
    %v2387 = vlaneseq
    %v2388 = vshrl.u32 %v2387, 7
    %v2389 = vsub.s32 2, %v2388
    %v2390 = vrot.slane %v1074, %v2389
    %v2391 = vlaneseq
    %v2392 = vshrl.u32 %v2391, 7
    %v2393 = vsub.s32 2, %v2392
    %v2394 = vrot.slane %v1073, %v2393
    %v2395 = vlaneseq
    %v2396 = vshrl.u32 %v2395, 7
    %v2397 = vsub.s32 2, %v2396
    %v2398 = vrot.slane %v1071, %v2397
    %v2399 = vlaneseq
    %v2400 = vshrl.u32 %v2399, 7
    %v2401 = vsub.s32 2, %v2400
    %v2402 = vrot.slane %v1075, %v2401
    %2404 = vset.pattern.permute.xlu0 0
    %2405 = vperm.xlu0 %2404, %v2378
    %v2406 = vpop.permute.xlu0 %2405
    %v2408 = vmul.f32 %v2382, %v2406
    %v2409 = vmul.f32 %v2386, %v2406
    %v2410 = vmul.f32 %v2390, %v2406
    %v2411 = vmul.f32 %v2394, %v2406
    %v2412 = vmul.f32 %v2398, %v2406
    %v2413 = vmul.f32 %v2402, %v2406
    %v2414 = vadd.f32 %v2371, %v2408
    %v2415 = vadd.f32 %v2372, %v2409
    %v2416 = vadd.f32 %v2373, %v2410
    %v2417 = vadd.f32 %v2374, %v2411
    %v2418 = vadd.f32 %v2375, %v2412
    %v2419 = vadd.f32 %v2376, %v2413
    %s2420 = scalar_lea.vmem [#allocation7], 248
    %v2421 = vld [vmem:[%s2420] sm:$0x3f]
    %v2422 = vlaneseq
    %v2423 = vshrl.u32 %v2422, 7
    %v2424 = vsub.s32 3, %v2423
    %v2425 = vrot.slane %v1072, %v2424
    %v2426 = vlaneseq
    %v2427 = vshrl.u32 %v2426, 7
    %v2428 = vsub.s32 3, %v2427
    %v2429 = vrot.slane %v1070, %v2428
    %v2430 = vlaneseq
    %v2431 = vshrl.u32 %v2430, 7
    %v2432 = vsub.s32 3, %v2431
    %v2433 = vrot.slane %v1074, %v2432
    %v2434 = vlaneseq
    %v2435 = vshrl.u32 %v2434, 7
    %v2436 = vsub.s32 3, %v2435
    %v2437 = vrot.slane %v1073, %v2436
    %v2438 = vlaneseq
    %v2439 = vshrl.u32 %v2438, 7
    %v2440 = vsub.s32 3, %v2439
    %v2441 = vrot.slane %v1071, %v2440
    %v2442 = vlaneseq
    %v2443 = vshrl.u32 %v2442, 7
    %v2444 = vsub.s32 3, %v2443
    %v2445 = vrot.slane %v1075, %v2444
    %2447 = vset.pattern.permute.xlu0 0
    %2448 = vperm.xlu0 %2447, %v2421
    %v2449 = vpop.permute.xlu0 %2448
    %v2451 = vmul.f32 %v2425, %v2449
    %v2452 = vmul.f32 %v2429, %v2449
    %v2453 = vmul.f32 %v2433, %v2449
    %v2454 = vmul.f32 %v2437, %v2449
    %v2455 = vmul.f32 %v2441, %v2449
    %v2456 = vmul.f32 %v2445, %v2449
    %v2457 = vadd.f32 %v2414, %v2451
    %v2458 = vadd.f32 %v2415, %v2452
    %v2459 = vadd.f32 %v2416, %v2453
    %v2460 = vadd.f32 %v2417, %v2454
    %v2461 = vadd.f32 %v2418, %v2455
    %v2462 = vadd.f32 %v2419, %v2456
    %s2463 = scalar_lea.vmem [#allocation7], 256
    %v2464 = vld [vmem:[%s2463] sm:$0x3f]
    %v2465 = vlaneseq
    %v2466 = vshrl.u32 %v2465, 7
    %v2467 = vsub.s32 0, %v2466
    %v2468 = vrot.slane %v1090, %v2467
    %v2469 = vlaneseq
    %v2470 = vshrl.u32 %v2469, 7
    %v2471 = vsub.s32 0, %v2470
    %v2472 = vrot.slane %v1088, %v2471
    %v2473 = vlaneseq
    %v2474 = vshrl.u32 %v2473, 7
    %v2475 = vsub.s32 0, %v2474
    %v2476 = vrot.slane %v1092, %v2475
    %v2477 = vlaneseq
    %v2478 = vshrl.u32 %v2477, 7
    %v2479 = vsub.s32 0, %v2478
    %v2480 = vrot.slane %v1091, %v2479
    %v2481 = vlaneseq
    %v2482 = vshrl.u32 %v2481, 7
    %v2483 = vsub.s32 0, %v2482
    %v2484 = vrot.slane %v1089, %v2483
    %v2485 = vlaneseq
    %v2486 = vshrl.u32 %v2485, 7
    %v2487 = vsub.s32 0, %v2486
    %v2488 = vrot.slane %v1093, %v2487
    %2490 = vset.pattern.permute.xlu0 0
    %2491 = vperm.xlu0 %2490, %v2464
    %v2492 = vpop.permute.xlu0 %2491
    %v2494 = vmul.f32 %v2468, %v2492
    %v2495 = vmul.f32 %v2472, %v2492
    %v2496 = vmul.f32 %v2476, %v2492
    %v2497 = vmul.f32 %v2480, %v2492
    %v2498 = vmul.f32 %v2484, %v2492
    %v2499 = vmul.f32 %v2488, %v2492
    %v2500 = vadd.f32 %v2457, %v2494
    %v2501 = vadd.f32 %v2458, %v2495
    %v2502 = vadd.f32 %v2459, %v2496
    %v2503 = vadd.f32 %v2460, %v2497
    %v2504 = vadd.f32 %v2461, %v2498
    %v2505 = vadd.f32 %v2462, %v2499
    %s2506 = scalar_lea.vmem [#allocation7], 264
    %v2507 = vld [vmem:[%s2506] sm:$0x3f]
    %v2508 = vlaneseq
    %v2509 = vshrl.u32 %v2508, 7
    %v2510 = vsub.s32 1, %v2509
    %v2511 = vrot.slane %v1090, %v2510
    %v2512 = vlaneseq
    %v2513 = vshrl.u32 %v2512, 7
    %v2514 = vsub.s32 1, %v2513
    %v2515 = vrot.slane %v1088, %v2514
    %v2516 = vlaneseq
    %v2517 = vshrl.u32 %v2516, 7
    %v2518 = vsub.s32 1, %v2517
    %v2519 = vrot.slane %v1092, %v2518
    %v2520 = vlaneseq
    %v2521 = vshrl.u32 %v2520, 7
    %v2522 = vsub.s32 1, %v2521
    %v2523 = vrot.slane %v1091, %v2522
    %v2524 = vlaneseq
    %v2525 = vshrl.u32 %v2524, 7
    %v2526 = vsub.s32 1, %v2525
    %v2527 = vrot.slane %v1089, %v2526
    %v2528 = vlaneseq
    %v2529 = vshrl.u32 %v2528, 7
    %v2530 = vsub.s32 1, %v2529
    %v2531 = vrot.slane %v1093, %v2530
    %2533 = vset.pattern.permute.xlu0 0
    %2534 = vperm.xlu0 %2533, %v2507
    %v2535 = vpop.permute.xlu0 %2534
    %v2537 = vmul.f32 %v2511, %v2535
    %v2538 = vmul.f32 %v2515, %v2535
    %v2539 = vmul.f32 %v2519, %v2535
    %v2540 = vmul.f32 %v2523, %v2535
    %v2541 = vmul.f32 %v2527, %v2535
    %v2542 = vmul.f32 %v2531, %v2535
    %v2543 = vadd.f32 %v2500, %v2537
    %v2544 = vadd.f32 %v2501, %v2538
    %v2545 = vadd.f32 %v2502, %v2539
    %v2546 = vadd.f32 %v2503, %v2540
    %v2547 = vadd.f32 %v2504, %v2541
    %v2548 = vadd.f32 %v2505, %v2542
    %s2549 = scalar_lea.vmem [#allocation7], 272
    %v2550 = vld [vmem:[%s2549] sm:$0x3f]
    %v2551 = vlaneseq
    %v2552 = vshrl.u32 %v2551, 7
    %v2553 = vsub.s32 2, %v2552
    %v2554 = vrot.slane %v1090, %v2553
    %v2555 = vlaneseq
    %v2556 = vshrl.u32 %v2555, 7
    %v2557 = vsub.s32 2, %v2556
    %v2558 = vrot.slane %v1088, %v2557
    %v2559 = vlaneseq
    %v2560 = vshrl.u32 %v2559, 7
    %v2561 = vsub.s32 2, %v2560
    %v2562 = vrot.slane %v1092, %v2561
    %v2563 = vlaneseq
    %v2564 = vshrl.u32 %v2563, 7
    %v2565 = vsub.s32 2, %v2564
    %v2566 = vrot.slane %v1091, %v2565
    %v2567 = vlaneseq
    %v2568 = vshrl.u32 %v2567, 7
    %v2569 = vsub.s32 2, %v2568
    %v2570 = vrot.slane %v1089, %v2569
    %v2571 = vlaneseq
    %v2572 = vshrl.u32 %v2571, 7
    %v2573 = vsub.s32 2, %v2572
    %v2574 = vrot.slane %v1093, %v2573
    %2576 = vset.pattern.permute.xlu0 0
    %2577 = vperm.xlu0 %2576, %v2550
    %v2578 = vpop.permute.xlu0 %2577
    %v2580 = vmul.f32 %v2554, %v2578
    %v2581 = vmul.f32 %v2558, %v2578
    %v2582 = vmul.f32 %v2562, %v2578
    %v2583 = vmul.f32 %v2566, %v2578
    %v2584 = vmul.f32 %v2570, %v2578
    %v2585 = vmul.f32 %v2574, %v2578
    %v2586 = vadd.f32 %v2543, %v2580
    %v2587 = vadd.f32 %v2544, %v2581
    %v2588 = vadd.f32 %v2545, %v2582
    %v2589 = vadd.f32 %v2546, %v2583
    %v2590 = vadd.f32 %v2547, %v2584
    %v2591 = vadd.f32 %v2548, %v2585
    %s2592 = scalar_lea.vmem [#allocation7], 280
    %v2593 = vld [vmem:[%s2592] sm:$0x3f]
    %v2594 = vlaneseq
    %v2595 = vshrl.u32 %v2594, 7
    %v2596 = vsub.s32 3, %v2595
    %v2597 = vrot.slane %v1090, %v2596
    %v2598 = vlaneseq
    %v2599 = vshrl.u32 %v2598, 7
    %v2600 = vsub.s32 3, %v2599
    %v2601 = vrot.slane %v1088, %v2600
    %v2602 = vlaneseq
    %v2603 = vshrl.u32 %v2602, 7
    %v2604 = vsub.s32 3, %v2603
    %v2605 = vrot.slane %v1092, %v2604
    %v2606 = vlaneseq
    %v2607 = vshrl.u32 %v2606, 7
    %v2608 = vsub.s32 3, %v2607
    %v2609 = vrot.slane %v1091, %v2608
    %v2610 = vlaneseq
    %v2611 = vshrl.u32 %v2610, 7
    %v2612 = vsub.s32 3, %v2611
    %v2613 = vrot.slane %v1089, %v2612
    %v2614 = vlaneseq
    %v2615 = vshrl.u32 %v2614, 7
    %v2616 = vsub.s32 3, %v2615
    %v2617 = vrot.slane %v1093, %v2616
    %2619 = vset.pattern.permute.xlu0 0
    %2620 = vperm.xlu0 %2619, %v2593
    %v2621 = vpop.permute.xlu0 %2620
    %v2623 = vmul.f32 %v2597, %v2621
    %v2624 = vmul.f32 %v2601, %v2621
    %v2625 = vmul.f32 %v2605, %v2621
    %v2626 = vmul.f32 %v2609, %v2621
    %v2627 = vmul.f32 %v2613, %v2621
    %v2628 = vmul.f32 %v2617, %v2621
    %v2629 = vadd.f32 %v2586, %v2623
    %v2630 = vadd.f32 %v2587, %v2624
    %v2631 = vadd.f32 %v2588, %v2625
    %v2632 = vadd.f32 %v2589, %v2626
    %v2633 = vadd.f32 %v2590, %v2627
    %v2634 = vadd.f32 %v2591, %v2628
    %v2635 = vld [vmem:[#allocation8] sm:$0x3f]
    %2637 = vset.pattern.permute.xlu0 0
    %2638 = vperm.xlu0 %2637, %v2635
    %v2639 = vpop.permute.xlu0 %2638
    %v2641 = vadd.f32 %v2629, %v2639
    %v2642 = vadd.f32 %v2630, %v2639
    %v2643 = vadd.f32 %v2631, %v2639
    %v2644 = vadd.f32 %v2632, %v2639
    %v2645 = vadd.f32 %v2633, %v2639
    %v2646 = vadd.f32 %v2634, %v2639
    %v2647 = vmax.f32 %v2641, 0.0
    %v2648 = vmax.f32 %v2642, 0.0
    %v2649 = vmax.f32 %v2643, 0.0
    %v2650 = vmax.f32 %v2644, 0.0
    %v2651 = vmax.f32 %v2645, 0.0
    %v2652 = vmax.f32 %v2646, 0.0
    %v2653 = vmax.f32 %v966, %v984
    %v2654 = vmax.f32 %v964, %v982
    %v2655 = vmax.f32 %v962, %v980
    %v2656 = vmax.f32 %v967, %v985
    %v2657 = vmax.f32 %v965, %v983
    %v2658 = vmax.f32 %v963, %v981
    %v2659 = vmax.f32 %v2653, %v1002
    %v2660 = vmax.f32 %v2654, %v1000
    %v2661 = vmax.f32 %v2655, %v998
    %v2662 = vmax.f32 %v2656, %v1003
    %v2663 = vmax.f32 %v2657, %v1001
    %v2664 = vmax.f32 %v2658, %v999
    %v2665 = vmax.f32 %v2659, %v1020
    %v2666 = vmax.f32 %v2660, %v1018
    %v2667 = vmax.f32 %v2661, %v1016
    %v2668 = vmax.f32 %v2662, %v1021
    %v2669 = vmax.f32 %v2663, %v1019
    %v2670 = vmax.f32 %v2664, %v1017
    %v2671 = vmax.f32 %v2665, %v944
    %v2672 = vmax.f32 %v2666, %v945
    %v2673 = vmax.f32 %v2667, %v946
    %v2674 = vmax.f32 %v2668, %v947
    %v2675 = vmax.f32 %v2669, %v948
    %v2676 = vmax.f32 %v2670, %v949
    %v2677 = vmax.f32 %v2671, %v1036
    %v2678 = vmax.f32 %v2672, %v1034
    %v2679 = vmax.f32 %v2673, %v1038
    %v2680 = vmax.f32 %v2674, %v1037
    %v2681 = vmax.f32 %v2675, %v1035
    %v2682 = vmax.f32 %v2676, %v1039
    %v2683 = vmax.f32 %v2677, %v1054
    %v2684 = vmax.f32 %v2678, %v1052
    %v2685 = vmax.f32 %v2679, %v1056
    %v2686 = vmax.f32 %v2680, %v1055
    %v2687 = vmax.f32 %v2681, %v1053
    %v2688 = vmax.f32 %v2682, %v1057
    %v2689 = vmax.f32 %v2683, %v1072
    %v2690 = vmax.f32 %v2684, %v1070
    %v2691 = vmax.f32 %v2685, %v1074
    %v2692 = vmax.f32 %v2686, %v1073
    %v2693 = vmax.f32 %v2687, %v1071
    %v2694 = vmax.f32 %v2688, %v1075
    %v2695 = vmax.f32 %v2689, %v1090
    %v2696 = vmax.f32 %v2690, %v1088
    %v2697 = vmax.f32 %v2691, %v1092
    %v2698 = vmax.f32 %v2692, %v1091
    %v2699 = vmax.f32 %v2693, %v1089
    %v2700 = vmax.f32 %v2694, %v1093
    %v2701 = vld [vmem:[#allocation10] sm:$0xff]
    %v2702 = vlaneseq
    %v2703 = vshrl.u32 %v2702, 7
    %v2704 = vsub.s32 0, %v2703
    %v2705 = vrot.slane %v2647, %v2704
    %v2706 = vlaneseq
    %v2707 = vshrl.u32 %v2706, 7
    %v2708 = vsub.s32 0, %v2707
    %v2709 = vrot.slane %v2648, %v2708
    %v2710 = vlaneseq
    %v2711 = vshrl.u32 %v2710, 7
    %v2712 = vsub.s32 0, %v2711
    %v2713 = vrot.slane %v2649, %v2712
    %v2714 = vlaneseq
    %v2715 = vshrl.u32 %v2714, 7
    %v2716 = vsub.s32 0, %v2715
    %v2717 = vrot.slane %v2650, %v2716
    %v2718 = vlaneseq
    %v2719 = vshrl.u32 %v2718, 7
    %v2720 = vsub.s32 0, %v2719
    %v2721 = vrot.slane %v2651, %v2720
    %v2722 = vlaneseq
    %v2723 = vshrl.u32 %v2722, 7
    %v2724 = vsub.s32 0, %v2723
    %v2725 = vrot.slane %v2652, %v2724
    %2727 = vset.pattern.permute.xlu0 0
    %2728 = vperm.xlu0 %2727, %v2701
    %v2729 = vpop.permute.xlu0 %2728
    %v2731 = vmul.f32 %v2705, %v2729
    %v2732 = vmul.f32 %v2709, %v2729
    %v2733 = vmul.f32 %v2713, %v2729
    %v2734 = vmul.f32 %v2717, %v2729
    %v2735 = vmul.f32 %v2721, %v2729
    %v2736 = vmul.f32 %v2725, %v2729
    %s2737 = scalar_lea.vmem [#allocation10], 8
    %v2738 = vld [vmem:[%s2737] sm:$0xff]
    %v2739 = vlaneseq
    %v2740 = vshrl.u32 %v2739, 7
    %v2741 = vsub.s32 1, %v2740
    %v2742 = vrot.slane %v2647, %v2741
    %v2743 = vlaneseq
    %v2744 = vshrl.u32 %v2743, 7
    %v2745 = vsub.s32 1, %v2744
    %v2746 = vrot.slane %v2648, %v2745
    %v2747 = vlaneseq
    %v2748 = vshrl.u32 %v2747, 7
    %v2749 = vsub.s32 1, %v2748
    %v2750 = vrot.slane %v2649, %v2749
    %v2751 = vlaneseq
    %v2752 = vshrl.u32 %v2751, 7
    %v2753 = vsub.s32 1, %v2752
    %v2754 = vrot.slane %v2650, %v2753
    %v2755 = vlaneseq
    %v2756 = vshrl.u32 %v2755, 7
    %v2757 = vsub.s32 1, %v2756
    %v2758 = vrot.slane %v2651, %v2757
    %v2759 = vlaneseq
    %v2760 = vshrl.u32 %v2759, 7
    %v2761 = vsub.s32 1, %v2760
    %v2762 = vrot.slane %v2652, %v2761
    %2764 = vset.pattern.permute.xlu0 0
    %2765 = vperm.xlu0 %2764, %v2738
    %v2766 = vpop.permute.xlu0 %2765
    %v2768 = vmul.f32 %v2742, %v2766
    %v2769 = vmul.f32 %v2746, %v2766
    %v2770 = vmul.f32 %v2750, %v2766
    %v2771 = vmul.f32 %v2754, %v2766
    %v2772 = vmul.f32 %v2758, %v2766
    %v2773 = vmul.f32 %v2762, %v2766
    %v2774 = vadd.f32 %v2731, %v2768
    %v2775 = vadd.f32 %v2732, %v2769
    %v2776 = vadd.f32 %v2733, %v2770
    %v2777 = vadd.f32 %v2734, %v2771
    %v2778 = vadd.f32 %v2735, %v2772
    %v2779 = vadd.f32 %v2736, %v2773
    %s2780 = scalar_lea.vmem [#allocation10], 16
    %v2781 = vld [vmem:[%s2780] sm:$0xff]
    %v2782 = vlaneseq
    %v2783 = vshrl.u32 %v2782, 7
    %v2784 = vsub.s32 2, %v2783
    %v2785 = vrot.slane %v2647, %v2784
    %v2786 = vlaneseq
    %v2787 = vshrl.u32 %v2786, 7
    %v2788 = vsub.s32 2, %v2787
    %v2789 = vrot.slane %v2648, %v2788
    %v2790 = vlaneseq
    %v2791 = vshrl.u32 %v2790, 7
    %v2792 = vsub.s32 2, %v2791
    %v2793 = vrot.slane %v2649, %v2792
    %v2794 = vlaneseq
    %v2795 = vshrl.u32 %v2794, 7
    %v2796 = vsub.s32 2, %v2795
    %v2797 = vrot.slane %v2650, %v2796
    %v2798 = vlaneseq
    %v2799 = vshrl.u32 %v2798, 7
    %v2800 = vsub.s32 2, %v2799
    %v2801 = vrot.slane %v2651, %v2800
    %v2802 = vlaneseq
    %v2803 = vshrl.u32 %v2802, 7
    %v2804 = vsub.s32 2, %v2803
    %v2805 = vrot.slane %v2652, %v2804
    %2807 = vset.pattern.permute.xlu0 0
    %2808 = vperm.xlu0 %2807, %v2781
    %v2809 = vpop.permute.xlu0 %2808
    %v2811 = vmul.f32 %v2785, %v2809
    %v2812 = vmul.f32 %v2789, %v2809
    %v2813 = vmul.f32 %v2793, %v2809
    %v2814 = vmul.f32 %v2797, %v2809
    %v2815 = vmul.f32 %v2801, %v2809
    %v2816 = vmul.f32 %v2805, %v2809
    %v2817 = vadd.f32 %v2774, %v2811
    %v2818 = vadd.f32 %v2775, %v2812
    %v2819 = vadd.f32 %v2776, %v2813
    %v2820 = vadd.f32 %v2777, %v2814
    %v2821 = vadd.f32 %v2778, %v2815
    %v2822 = vadd.f32 %v2779, %v2816
    %s2823 = scalar_lea.vmem [#allocation10], 24
    %v2824 = vld [vmem:[%s2823] sm:$0xff]
    %v2825 = vlaneseq
    %v2826 = vshrl.u32 %v2825, 7
    %v2827 = vsub.s32 3, %v2826
    %v2828 = vrot.slane %v2647, %v2827
    %v2829 = vlaneseq
    %v2830 = vshrl.u32 %v2829, 7
    %v2831 = vsub.s32 3, %v2830
    %v2832 = vrot.slane %v2648, %v2831
    %v2833 = vlaneseq
    %v2834 = vshrl.u32 %v2833, 7
    %v2835 = vsub.s32 3, %v2834
    %v2836 = vrot.slane %v2649, %v2835
    %v2837 = vlaneseq
    %v2838 = vshrl.u32 %v2837, 7
    %v2839 = vsub.s32 3, %v2838
    %v2840 = vrot.slane %v2650, %v2839
    %v2841 = vlaneseq
    %v2842 = vshrl.u32 %v2841, 7
    %v2843 = vsub.s32 3, %v2842
    %v2844 = vrot.slane %v2651, %v2843
    %v2845 = vlaneseq
    %v2846 = vshrl.u32 %v2845, 7
    %v2847 = vsub.s32 3, %v2846
    %v2848 = vrot.slane %v2652, %v2847
    %2850 = vset.pattern.permute.xlu0 0
    %2851 = vperm.xlu0 %2850, %v2824
    %v2852 = vpop.permute.xlu0 %2851
    %v2854 = vmul.f32 %v2828, %v2852
    %v2855 = vmul.f32 %v2832, %v2852
    %v2856 = vmul.f32 %v2836, %v2852
    %v2857 = vmul.f32 %v2840, %v2852
    %v2858 = vmul.f32 %v2844, %v2852
    %v2859 = vmul.f32 %v2848, %v2852
    %v2860 = vadd.f32 %v2817, %v2854
    %v2861 = vadd.f32 %v2818, %v2855
    %v2862 = vadd.f32 %v2819, %v2856
    %v2863 = vadd.f32 %v2820, %v2857
    %v2864 = vadd.f32 %v2821, %v2858
    %v2865 = vadd.f32 %v2822, %v2859
    %s2866 = scalar_lea.vmem [#allocation10], 32
    %v2867 = vld [vmem:[%s2866] sm:$0xff]
    %v2868 = vlaneseq
    %v2869 = vshrl.u32 %v2868, 7
    %v2870 = vsub.s32 4, %v2869
    %v2871 = vrot.slane %v2647, %v2870
    %v2872 = vlaneseq
    %v2873 = vshrl.u32 %v2872, 7
    %v2874 = vsub.s32 4, %v2873
    %v2875 = vrot.slane %v2648, %v2874
    %v2876 = vlaneseq
    %v2877 = vshrl.u32 %v2876, 7
    %v2878 = vsub.s32 4, %v2877
    %v2879 = vrot.slane %v2649, %v2878
    %v2880 = vlaneseq
    %v2881 = vshrl.u32 %v2880, 7
    %v2882 = vsub.s32 4, %v2881
    %v2883 = vrot.slane %v2650, %v2882
    %v2884 = vlaneseq
    %v2885 = vshrl.u32 %v2884, 7
    %v2886 = vsub.s32 4, %v2885
    %v2887 = vrot.slane %v2651, %v2886
    %v2888 = vlaneseq
    %v2889 = vshrl.u32 %v2888, 7
    %v2890 = vsub.s32 4, %v2889
    %v2891 = vrot.slane %v2652, %v2890
    %2893 = vset.pattern.permute.xlu0 0
    %2894 = vperm.xlu0 %2893, %v2867
    %v2895 = vpop.permute.xlu0 %2894
    %v2897 = vmul.f32 %v2871, %v2895
    %v2898 = vmul.f32 %v2875, %v2895
    %v2899 = vmul.f32 %v2879, %v2895
    %v2900 = vmul.f32 %v2883, %v2895
    %v2901 = vmul.f32 %v2887, %v2895
    %v2902 = vmul.f32 %v2891, %v2895
    %v2903 = vadd.f32 %v2860, %v2897
    %v2904 = vadd.f32 %v2861, %v2898
    %v2905 = vadd.f32 %v2862, %v2899
    %v2906 = vadd.f32 %v2863, %v2900
    %v2907 = vadd.f32 %v2864, %v2901
    %v2908 = vadd.f32 %v2865, %v2902
    %s2909 = scalar_lea.vmem [#allocation10], 40
    %v2910 = vld [vmem:[%s2909] sm:$0xff]
    %v2911 = vlaneseq
    %v2912 = vshrl.u32 %v2911, 7
    %v2913 = vsub.s32 5, %v2912
    %v2914 = vrot.slane %v2647, %v2913
    %v2915 = vlaneseq
    %v2916 = vshrl.u32 %v2915, 7
    %v2917 = vsub.s32 5, %v2916
    %v2918 = vrot.slane %v2648, %v2917
    %v2919 = vlaneseq
    %v2920 = vshrl.u32 %v2919, 7
    %v2921 = vsub.s32 5, %v2920
    %v2922 = vrot.slane %v2649, %v2921
    %v2923 = vlaneseq
    %v2924 = vshrl.u32 %v2923, 7
    %v2925 = vsub.s32 5, %v2924
    %v2926 = vrot.slane %v2650, %v2925
    %v2927 = vlaneseq
    %v2928 = vshrl.u32 %v2927, 7
    %v2929 = vsub.s32 5, %v2928
    %v2930 = vrot.slane %v2651, %v2929
    %v2931 = vlaneseq
    %v2932 = vshrl.u32 %v2931, 7
    %v2933 = vsub.s32 5, %v2932
    %v2934 = vrot.slane %v2652, %v2933
    %2936 = vset.pattern.permute.xlu0 0
    %2937 = vperm.xlu0 %2936, %v2910
    %v2938 = vpop.permute.xlu0 %2937
    %v2940 = vmul.f32 %v2914, %v2938
    %v2941 = vmul.f32 %v2918, %v2938
    %v2942 = vmul.f32 %v2922, %v2938
    %v2943 = vmul.f32 %v2926, %v2938
    %v2944 = vmul.f32 %v2930, %v2938
    %v2945 = vmul.f32 %v2934, %v2938
    %v2946 = vadd.f32 %v2903, %v2940
    %v2947 = vadd.f32 %v2904, %v2941
    %v2948 = vadd.f32 %v2905, %v2942
    %v2949 = vadd.f32 %v2906, %v2943
    %v2950 = vadd.f32 %v2907, %v2944
    %v2951 = vadd.f32 %v2908, %v2945
    %v2952 = vld [vmem:[#allocation11] sm:$0xff]
    %v2953 = vlaneseq
    %v2954 = vshrl.u32 %v2953, 7
    %v2955 = vsub.s32 0, %v2954
    %v2956 = vrot.slane %v2695, %v2955
    %v2957 = vlaneseq
    %v2958 = vshrl.u32 %v2957, 7
    %v2959 = vsub.s32 0, %v2958
    %v2960 = vrot.slane %v2696, %v2959
    %v2961 = vlaneseq
    %v2962 = vshrl.u32 %v2961, 7
    %v2963 = vsub.s32 0, %v2962
    %v2964 = vrot.slane %v2697, %v2963
    %v2965 = vlaneseq
    %v2966 = vshrl.u32 %v2965, 7
    %v2967 = vsub.s32 0, %v2966
    %v2968 = vrot.slane %v2698, %v2967
    %v2969 = vlaneseq
    %v2970 = vshrl.u32 %v2969, 7
    %v2971 = vsub.s32 0, %v2970
    %v2972 = vrot.slane %v2699, %v2971
    %v2973 = vlaneseq
    %v2974 = vshrl.u32 %v2973, 7
    %v2975 = vsub.s32 0, %v2974
    %v2976 = vrot.slane %v2700, %v2975
    %2978 = vset.pattern.permute.xlu0 0
    %2979 = vperm.xlu0 %2978, %v2952
    %v2980 = vpop.permute.xlu0 %2979
    %v2982 = vmul.f32 %v2956, %v2980
    %v2983 = vmul.f32 %v2960, %v2980
    %v2984 = vmul.f32 %v2964, %v2980
    %v2985 = vmul.f32 %v2968, %v2980
    %v2986 = vmul.f32 %v2972, %v2980
    %v2987 = vmul.f32 %v2976, %v2980
    %v2988 = vadd.f32 %v2946, %v2982
    %v2989 = vadd.f32 %v2947, %v2983
    %v2990 = vadd.f32 %v2948, %v2984
    %v2991 = vadd.f32 %v2949, %v2985
    %v2992 = vadd.f32 %v2950, %v2986
    %v2993 = vadd.f32 %v2951, %v2987
    %s2994 = scalar_lea.vmem [#allocation11], 8
    %v2995 = vld [vmem:[%s2994] sm:$0xff]
    %v2996 = vlaneseq
    %v2997 = vshrl.u32 %v2996, 7
    %v2998 = vsub.s32 1, %v2997
    %v2999 = vrot.slane %v2695, %v2998
    %v3000 = vlaneseq
    %v3001 = vshrl.u32 %v3000, 7
    %v3002 = vsub.s32 1, %v3001
    %v3003 = vrot.slane %v2696, %v3002
    %v3004 = vlaneseq
    %v3005 = vshrl.u32 %v3004, 7
    %v3006 = vsub.s32 1, %v3005
    %v3007 = vrot.slane %v2697, %v3006
    %v3008 = vlaneseq
    %v3009 = vshrl.u32 %v3008, 7
    %v3010 = vsub.s32 1, %v3009
    %v3011 = vrot.slane %v2698, %v3010
    %v3012 = vlaneseq
    %v3013 = vshrl.u32 %v3012, 7
    %v3014 = vsub.s32 1, %v3013
    %v3015 = vrot.slane %v2699, %v3014
    %v3016 = vlaneseq
    %v3017 = vshrl.u32 %v3016, 7
    %v3018 = vsub.s32 1, %v3017
    %v3019 = vrot.slane %v2700, %v3018
    %3021 = vset.pattern.permute.xlu0 0
    %3022 = vperm.xlu0 %3021, %v2995
    %v3023 = vpop.permute.xlu0 %3022
    %v3025 = vmul.f32 %v2999, %v3023
    %v3026 = vmul.f32 %v3003, %v3023
    %v3027 = vmul.f32 %v3007, %v3023
    %v3028 = vmul.f32 %v3011, %v3023
    %v3029 = vmul.f32 %v3015, %v3023
    %v3030 = vmul.f32 %v3019, %v3023
    %v3031 = vadd.f32 %v2988, %v3025
    %v3032 = vadd.f32 %v2989, %v3026
    %v3033 = vadd.f32 %v2990, %v3027
    %v3034 = vadd.f32 %v2991, %v3028
    %v3035 = vadd.f32 %v2992, %v3029
    %v3036 = vadd.f32 %v2993, %v3030
    %s3037 = scalar_lea.vmem [#allocation11], 16
    %v3038 = vld [vmem:[%s3037] sm:$0xff]
    %v3039 = vlaneseq
    %v3040 = vshrl.u32 %v3039, 7
    %v3041 = vsub.s32 2, %v3040
    %v3042 = vrot.slane %v2695, %v3041
    %v3043 = vlaneseq
    %v3044 = vshrl.u32 %v3043, 7
    %v3045 = vsub.s32 2, %v3044
    %v3046 = vrot.slane %v2696, %v3045
    %v3047 = vlaneseq
    %v3048 = vshrl.u32 %v3047, 7
    %v3049 = vsub.s32 2, %v3048
    %v3050 = vrot.slane %v2697, %v3049
    %v3051 = vlaneseq
    %v3052 = vshrl.u32 %v3051, 7
    %v3053 = vsub.s32 2, %v3052
    %v3054 = vrot.slane %v2698, %v3053
    %v3055 = vlaneseq
    %v3056 = vshrl.u32 %v3055, 7
    %v3057 = vsub.s32 2, %v3056
    %v3058 = vrot.slane %v2699, %v3057
    %v3059 = vlaneseq
    %v3060 = vshrl.u32 %v3059, 7
    %v3061 = vsub.s32 2, %v3060
    %v3062 = vrot.slane %v2700, %v3061
    %3064 = vset.pattern.permute.xlu0 0
    %3065 = vperm.xlu0 %3064, %v3038
    %v3066 = vpop.permute.xlu0 %3065
    %v3068 = vmul.f32 %v3042, %v3066
    %v3069 = vmul.f32 %v3046, %v3066
    %v3070 = vmul.f32 %v3050, %v3066
    %v3071 = vmul.f32 %v3054, %v3066
    %v3072 = vmul.f32 %v3058, %v3066
    %v3073 = vmul.f32 %v3062, %v3066
    %v3074 = vadd.f32 %v3031, %v3068
    %v3075 = vadd.f32 %v3032, %v3069
    %v3076 = vadd.f32 %v3033, %v3070
    %v3077 = vadd.f32 %v3034, %v3071
    %v3078 = vadd.f32 %v3035, %v3072
    %v3079 = vadd.f32 %v3036, %v3073
    %s3080 = scalar_lea.vmem [#allocation11], 24
    %v3081 = vld [vmem:[%s3080] sm:$0xff]
    %v3082 = vlaneseq
    %v3083 = vshrl.u32 %v3082, 7
    %v3084 = vsub.s32 3, %v3083
    %v3085 = vrot.slane %v2695, %v3084
    %v3086 = vlaneseq
    %v3087 = vshrl.u32 %v3086, 7
    %v3088 = vsub.s32 3, %v3087
    %v3089 = vrot.slane %v2696, %v3088
    %v3090 = vlaneseq
    %v3091 = vshrl.u32 %v3090, 7
    %v3092 = vsub.s32 3, %v3091
    %v3093 = vrot.slane %v2697, %v3092
    %v3094 = vlaneseq
    %v3095 = vshrl.u32 %v3094, 7
    %v3096 = vsub.s32 3, %v3095
    %v3097 = vrot.slane %v2698, %v3096
    %v3098 = vlaneseq
    %v3099 = vshrl.u32 %v3098, 7
    %v3100 = vsub.s32 3, %v3099
    %v3101 = vrot.slane %v2699, %v3100
    %v3102 = vlaneseq
    %v3103 = vshrl.u32 %v3102, 7
    %v3104 = vsub.s32 3, %v3103
    %v3105 = vrot.slane %v2700, %v3104
    %3107 = vset.pattern.permute.xlu0 0
    %3108 = vperm.xlu0 %3107, %v3081
    %v3109 = vpop.permute.xlu0 %3108
    %v3111 = vmul.f32 %v3085, %v3109
    %v3112 = vmul.f32 %v3089, %v3109
    %v3113 = vmul.f32 %v3093, %v3109
    %v3114 = vmul.f32 %v3097, %v3109
    %v3115 = vmul.f32 %v3101, %v3109
    %v3116 = vmul.f32 %v3105, %v3109
    %v3117 = vadd.f32 %v3074, %v3111
    %v3118 = vadd.f32 %v3075, %v3112
    %v3119 = vadd.f32 %v3076, %v3113
    %v3120 = vadd.f32 %v3077, %v3114
    %v3121 = vadd.f32 %v3078, %v3115
    %v3122 = vadd.f32 %v3079, %v3116
    %v3123 = vld [vmem:[#allocation13] sm:$0xff]
    %3125 = vset.pattern.permute.xlu0 0
    %3126 = vperm.xlu0 %3125, %v3123
    %v3127 = vpop.permute.xlu0 %3126
    %v3129 = vmul.f32 %v1780, %v3127
    %v3130 = vmul.f32 %v1784, %v3127
    %v3131 = vmul.f32 %v1788, %v3127
    %v3132 = vmul.f32 %v1792, %v3127
    %v3133 = vmul.f32 %v1796, %v3127
    %v3134 = vmul.f32 %v1800, %v3127
    %v3135 = vadd.f32 %v3117, %v3129
    %v3136 = vadd.f32 %v3118, %v3130
    %v3137 = vadd.f32 %v3119, %v3131
    %v3138 = vadd.f32 %v3120, %v3132
    %v3139 = vadd.f32 %v3121, %v3133
    %v3140 = vadd.f32 %v3122, %v3134
    %s3141 = scalar_lea.vmem [#allocation13], 8
    %v3142 = vld [vmem:[%s3141] sm:$0xff]
    %3144 = vset.pattern.permute.xlu0 0
    %3145 = vperm.xlu0 %3144, %v3142
    %v3146 = vpop.permute.xlu0 %3145
    %v3148 = vmul.f32 %v1823, %v3146
    %v3149 = vmul.f32 %v1827, %v3146
    %v3150 = vmul.f32 %v1831, %v3146
    %v3151 = vmul.f32 %v1835, %v3146
    %v3152 = vmul.f32 %v1839, %v3146
    %v3153 = vmul.f32 %v1843, %v3146
    %v3154 = vadd.f32 %v3135, %v3148
    %v3155 = vadd.f32 %v3136, %v3149
    %v3156 = vadd.f32 %v3137, %v3150
    %v3157 = vadd.f32 %v3138, %v3151
    %v3158 = vadd.f32 %v3139, %v3152
    %v3159 = vadd.f32 %v3140, %v3153
    %s3160 = scalar_lea.vmem [#allocation13], 16
    %v3161 = vld [vmem:[%s3160] sm:$0xff]
    %3163 = vset.pattern.permute.xlu0 0
    %3164 = vperm.xlu0 %3163, %v3161
    %v3165 = vpop.permute.xlu0 %3164
    %v3167 = vmul.f32 %v1866, %v3165
    %v3168 = vmul.f32 %v1870, %v3165
    %v3169 = vmul.f32 %v1874, %v3165
    %v3170 = vmul.f32 %v1878, %v3165
    %v3171 = vmul.f32 %v1882, %v3165
    %v3172 = vmul.f32 %v1886, %v3165
    %v3173 = vadd.f32 %v3154, %v3167
    %v3174 = vadd.f32 %v3155, %v3168
    %v3175 = vadd.f32 %v3156, %v3169
    %v3176 = vadd.f32 %v3157, %v3170
    %v3177 = vadd.f32 %v3158, %v3171
    %v3178 = vadd.f32 %v3159, %v3172
    %s3179 = scalar_lea.vmem [#allocation13], 24
    %v3180 = vld [vmem:[%s3179] sm:$0xff]
    %3182 = vset.pattern.permute.xlu0 0
    %3183 = vperm.xlu0 %3182, %v3180
    %v3184 = vpop.permute.xlu0 %3183
    %v3186 = vmul.f32 %v1909, %v3184
    %v3187 = vmul.f32 %v1913, %v3184
    %v3188 = vmul.f32 %v1917, %v3184
    %v3189 = vmul.f32 %v1921, %v3184
    %v3190 = vmul.f32 %v1925, %v3184
    %v3191 = vmul.f32 %v1929, %v3184
    %v3192 = vadd.f32 %v3173, %v3186
    %v3193 = vadd.f32 %v3174, %v3187
    %v3194 = vadd.f32 %v3175, %v3188
    %v3195 = vadd.f32 %v3176, %v3189
    %v3196 = vadd.f32 %v3177, %v3190
    %v3197 = vadd.f32 %v3178, %v3191
    %v3198 = vld [vmem:[#allocation14] sm:$0xff]
    %3200 = vset.pattern.permute.xlu0 0
    %3201 = vperm.xlu0 %3200, %v3198
    %v3202 = vpop.permute.xlu0 %3201
    %v3204 = vadd.f32 %v3192, %v3202
    %v3205 = vadd.f32 %v3193, %v3202
    %v3206 = vadd.f32 %v3194, %v3202
    %v3207 = vadd.f32 %v3195, %v3202
    %v3208 = vadd.f32 %v3196, %v3202
    %v3209 = vadd.f32 %v3197, %v3202
    %v3210 = vmax.f32 %v3204, 0.0
    %v3211 = vmax.f32 %v3205, 0.0
    %v3212 = vmax.f32 %v3206, 0.0
    %v3213 = vmax.f32 %v3207, 0.0
    %v3214 = vmax.f32 %v3208, 0.0
    %v3215 = vmax.f32 %v3209, 0.0
    %v3216 = vmul.f32 %v3210, %v381
    %v3217 = vmul.f32 %v3211, %v382
    %v3218 = vmul.f32 %v3212, %v383
    %v3219 = vmul.f32 %v3213, %v381
    %v3220 = vmul.f32 %v3214, %v382
    %v3221 = vmul.f32 %v3215, %v383
    %3222 = vrot.lane.b32.xlu0 %v3216, 19
    %v3223 = vpop.permute.xlu0 %3222
    %3224 = vrot.lane.b32.xlu0 %v3219, 19
    %v3225 = vpop.permute.xlu0 %3224
    %3226 = vrot.lane.b32.xlu0 %v3217, 19
    %v3227 = vpop.permute.xlu0 %3226
    %3228 = vrot.lane.b32.xlu0 %v3220, 19
    %v3229 = vpop.permute.xlu0 %3228
    %3230 = vrot.lane.b32.xlu0 %v3218, 19
    %v3231 = vpop.permute.xlu0 %3230
    %3232 = vrot.lane.b32.xlu0 %v3221, 19
    %v3233 = vpop.permute.xlu0 %3232
    %v3234 = vsel %vm430, %v3227, %v3231
    %v3235 = vsel %vm430, %v3229, %v3233
    %v3236 = vsel %vm430, %v3223, %v3227
    %v3237 = vsel %vm430, %v3225, %v3229
    %v3238 = vsel %vm430, %v3231, %v3223
    %v3239 = vsel %vm430, %v3233, %v3225
    %3240 = vrot.lane.b32.xlu0 %v3216, 18
    %v3241 = vpop.permute.xlu0 %3240
    %3242 = vrot.lane.b32.xlu0 %v3219, 18
    %v3243 = vpop.permute.xlu0 %3242
    %3244 = vrot.lane.b32.xlu0 %v3217, 18
    %v3245 = vpop.permute.xlu0 %3244
    %3246 = vrot.lane.b32.xlu0 %v3220, 18
    %v3247 = vpop.permute.xlu0 %3246
    %3248 = vrot.lane.b32.xlu0 %v3218, 18
    %v3249 = vpop.permute.xlu0 %3248
    %3250 = vrot.lane.b32.xlu0 %v3221, 18
    %v3251 = vpop.permute.xlu0 %3250
    %v3252 = vsel %vm449, %v3245, %v3249
    %v3253 = vsel %vm449, %v3247, %v3251
    %v3254 = vsel %vm449, %v3241, %v3245
    %v3255 = vsel %vm449, %v3243, %v3247
    %v3256 = vsel %vm449, %v3249, %v3241
    %v3257 = vsel %vm449, %v3251, %v3243
    %3258 = vrot.lane.b32.xlu0 %v3216, 17
    %v3259 = vpop.permute.xlu0 %3258
    %3260 = vrot.lane.b32.xlu0 %v3219, 17
    %v3261 = vpop.permute.xlu0 %3260
    %3262 = vrot.lane.b32.xlu0 %v3217, 17
    %v3263 = vpop.permute.xlu0 %3262
    %3264 = vrot.lane.b32.xlu0 %v3220, 17
    %v3265 = vpop.permute.xlu0 %3264
    %3266 = vrot.lane.b32.xlu0 %v3218, 17
    %v3267 = vpop.permute.xlu0 %3266
    %3268 = vrot.lane.b32.xlu0 %v3221, 17
    %v3269 = vpop.permute.xlu0 %3268
    %v3270 = vsel %vm468, %v3263, %v3267
    %v3271 = vsel %vm468, %v3265, %v3269
    %v3272 = vsel %vm468, %v3259, %v3263
    %v3273 = vsel %vm468, %v3261, %v3265
    %v3274 = vsel %vm468, %v3267, %v3259
    %v3275 = vsel %vm468, %v3269, %v3261
    %3276 = vrot.lane.b32.xlu0 %v3216, 1
    %v3277 = vpop.permute.xlu0 %3276
    %3278 = vrot.lane.b32.xlu0 %v3219, 1
    %v3279 = vpop.permute.xlu0 %3278
    %3280 = vrot.lane.b32.xlu0 %v3217, 1
    %v3281 = vpop.permute.xlu0 %3280
    %3282 = vrot.lane.b32.xlu0 %v3220, 1
    %v3283 = vpop.permute.xlu0 %3282
    %3284 = vrot.lane.b32.xlu0 %v3218, 1
    %v3285 = vpop.permute.xlu0 %3284
    %3286 = vrot.lane.b32.xlu0 %v3221, 1
    %v3287 = vpop.permute.xlu0 %3286
    %v3288 = vsel %vm487, %v3281, %v3285
    %v3289 = vsel %vm487, %v3283, %v3287
    %v3290 = vsel %vm487, %v3277, %v3281
    %v3291 = vsel %vm487, %v3279, %v3283
    %v3292 = vsel %vm487, %v3285, %v3277
    %v3293 = vsel %vm487, %v3287, %v3279
    %3294 = vrot.lane.b32.xlu0 %v3216, 127
    %v3295 = vpop.permute.xlu0 %3294
    %3296 = vrot.lane.b32.xlu0 %v3219, 127
    %v3297 = vpop.permute.xlu0 %3296
    %3298 = vrot.lane.b32.xlu0 %v3217, 127
    %v3299 = vpop.permute.xlu0 %3298
    %3300 = vrot.lane.b32.xlu0 %v3220, 127
    %v3301 = vpop.permute.xlu0 %3300
    %3302 = vrot.lane.b32.xlu0 %v3218, 127
    %v3303 = vpop.permute.xlu0 %3302
    %3304 = vrot.lane.b32.xlu0 %v3221, 127
    %v3305 = vpop.permute.xlu0 %3304
    %v3306 = vsel %vm506, %v3299, %v3303
    %v3307 = vsel %vm506, %v3301, %v3305
    %v3308 = vsel %vm506, %v3295, %v3299
    %v3309 = vsel %vm506, %v3297, %v3301
    %v3310 = vsel %vm506, %v3303, %v3295
    %v3311 = vsel %vm506, %v3305, %v3297
    %3312 = vrot.lane.b32.xlu0 %v3216, 111
    %v3313 = vpop.permute.xlu0 %3312
    %3314 = vrot.lane.b32.xlu0 %v3219, 111
    %v3315 = vpop.permute.xlu0 %3314
    %3316 = vrot.lane.b32.xlu0 %v3217, 111
    %v3317 = vpop.permute.xlu0 %3316
    %3318 = vrot.lane.b32.xlu0 %v3220, 111
    %v3319 = vpop.permute.xlu0 %3318
    %3320 = vrot.lane.b32.xlu0 %v3218, 111
    %v3321 = vpop.permute.xlu0 %3320
    %3322 = vrot.lane.b32.xlu0 %v3221, 111
    %v3323 = vpop.permute.xlu0 %3322
    %v3324 = vsel %vm525, %v3317, %v3321
    %v3325 = vsel %vm525, %v3319, %v3323
    %v3326 = vsel %vm525, %v3313, %v3317
    %v3327 = vsel %vm525, %v3315, %v3319
    %v3328 = vsel %vm525, %v3321, %v3313
    %v3329 = vsel %vm525, %v3323, %v3315
    %3330 = vrot.lane.b32.xlu0 %v3216, 110
    %v3331 = vpop.permute.xlu0 %3330
    %3332 = vrot.lane.b32.xlu0 %v3219, 110
    %v3333 = vpop.permute.xlu0 %3332
    %3334 = vrot.lane.b32.xlu0 %v3217, 110
    %v3335 = vpop.permute.xlu0 %3334
    %3336 = vrot.lane.b32.xlu0 %v3220, 110
    %v3337 = vpop.permute.xlu0 %3336
    %3338 = vrot.lane.b32.xlu0 %v3218, 110
    %v3339 = vpop.permute.xlu0 %3338
    %3340 = vrot.lane.b32.xlu0 %v3221, 110
    %v3341 = vpop.permute.xlu0 %3340
    %v3342 = vsel %vm544, %v3335, %v3339
    %v3343 = vsel %vm544, %v3337, %v3341
    %v3344 = vsel %vm544, %v3331, %v3335
    %v3345 = vsel %vm544, %v3333, %v3337
    %v3346 = vsel %vm544, %v3339, %v3331
    %v3347 = vsel %vm544, %v3341, %v3333
    %3348 = vrot.lane.b32.xlu0 %v3216, 109
    %v3349 = vpop.permute.xlu0 %3348
    %3350 = vrot.lane.b32.xlu0 %v3219, 109
    %v3351 = vpop.permute.xlu0 %3350
    %3352 = vrot.lane.b32.xlu0 %v3217, 109
    %v3353 = vpop.permute.xlu0 %3352
    %3354 = vrot.lane.b32.xlu0 %v3220, 109
    %v3355 = vpop.permute.xlu0 %3354
    %3356 = vrot.lane.b32.xlu0 %v3218, 109
    %v3357 = vpop.permute.xlu0 %3356
    %3358 = vrot.lane.b32.xlu0 %v3221, 109
    %v3359 = vpop.permute.xlu0 %3358
    %v3360 = vsel %vm563, %v3353, %v3357
    %v3361 = vsel %vm563, %v3355, %v3359
    %v3362 = vsel %vm563, %v3349, %v3353
    %v3363 = vsel %vm563, %v3351, %v3355
    %v3364 = vsel %vm563, %v3357, %v3349
    %v3365 = vsel %vm563, %v3359, %v3351
    %v3366 = vld [vmem:[#allocation16] sm:$0x3f]
    %v3367 = vlaneseq
    %v3368 = vshrl.u32 %v3367, 7
    %v3369 = vsub.s32 0, %v3368
    %v3370 = vrot.slane %v3238, %v3369
    %v3371 = vlaneseq
    %v3372 = vshrl.u32 %v3371, 7
    %v3373 = vsub.s32 0, %v3372
    %v3374 = vrot.slane %v3236, %v3373
    %v3375 = vlaneseq
    %v3376 = vshrl.u32 %v3375, 7
    %v3377 = vsub.s32 0, %v3376
    %v3378 = vrot.slane %v3234, %v3377
    %v3379 = vlaneseq
    %v3380 = vshrl.u32 %v3379, 7
    %v3381 = vsub.s32 0, %v3380
    %v3382 = vrot.slane %v3239, %v3381
    %v3383 = vlaneseq
    %v3384 = vshrl.u32 %v3383, 7
    %v3385 = vsub.s32 0, %v3384
    %v3386 = vrot.slane %v3237, %v3385
    %v3387 = vlaneseq
    %v3388 = vshrl.u32 %v3387, 7
    %v3389 = vsub.s32 0, %v3388
    %v3390 = vrot.slane %v3235, %v3389
    %3392 = vset.pattern.permute.xlu0 0
    %3393 = vperm.xlu0 %3392, %v3366
    %v3394 = vpop.permute.xlu0 %3393
    %v3396 = vmul.f32 %v3370, %v3394
    %v3397 = vmul.f32 %v3374, %v3394
    %v3398 = vmul.f32 %v3378, %v3394
    %v3399 = vmul.f32 %v3382, %v3394
    %v3400 = vmul.f32 %v3386, %v3394
    %v3401 = vmul.f32 %v3390, %v3394
    %s3402 = scalar_lea.vmem [#allocation16], 8
    %v3403 = vld [vmem:[%s3402] sm:$0x3f]
    %v3404 = vlaneseq
    %v3405 = vshrl.u32 %v3404, 7
    %v3406 = vsub.s32 1, %v3405
    %v3407 = vrot.slane %v3238, %v3406
    %v3408 = vlaneseq
    %v3409 = vshrl.u32 %v3408, 7
    %v3410 = vsub.s32 1, %v3409
    %v3411 = vrot.slane %v3236, %v3410
    %v3412 = vlaneseq
    %v3413 = vshrl.u32 %v3412, 7
    %v3414 = vsub.s32 1, %v3413
    %v3415 = vrot.slane %v3234, %v3414
    %v3416 = vlaneseq
    %v3417 = vshrl.u32 %v3416, 7
    %v3418 = vsub.s32 1, %v3417
    %v3419 = vrot.slane %v3239, %v3418
    %v3420 = vlaneseq
    %v3421 = vshrl.u32 %v3420, 7
    %v3422 = vsub.s32 1, %v3421
    %v3423 = vrot.slane %v3237, %v3422
    %v3424 = vlaneseq
    %v3425 = vshrl.u32 %v3424, 7
    %v3426 = vsub.s32 1, %v3425
    %v3427 = vrot.slane %v3235, %v3426
    %3429 = vset.pattern.permute.xlu0 0
    %3430 = vperm.xlu0 %3429, %v3403
    %v3431 = vpop.permute.xlu0 %3430
    %v3433 = vmul.f32 %v3407, %v3431
    %v3434 = vmul.f32 %v3411, %v3431
    %v3435 = vmul.f32 %v3415, %v3431
    %v3436 = vmul.f32 %v3419, %v3431
    %v3437 = vmul.f32 %v3423, %v3431
    %v3438 = vmul.f32 %v3427, %v3431
    %v3439 = vadd.f32 %v3396, %v3433
    %v3440 = vadd.f32 %v3397, %v3434
    %v3441 = vadd.f32 %v3398, %v3435
    %v3442 = vadd.f32 %v3399, %v3436
    %v3443 = vadd.f32 %v3400, %v3437
    %v3444 = vadd.f32 %v3401, %v3438
    %s3445 = scalar_lea.vmem [#allocation16], 16
    %v3446 = vld [vmem:[%s3445] sm:$0x3f]
    %v3447 = vlaneseq
    %v3448 = vshrl.u32 %v3447, 7
    %v3449 = vsub.s32 2, %v3448
    %v3450 = vrot.slane %v3238, %v3449
    %v3451 = vlaneseq
    %v3452 = vshrl.u32 %v3451, 7
    %v3453 = vsub.s32 2, %v3452
    %v3454 = vrot.slane %v3236, %v3453
    %v3455 = vlaneseq
    %v3456 = vshrl.u32 %v3455, 7
    %v3457 = vsub.s32 2, %v3456
    %v3458 = vrot.slane %v3234, %v3457
    %v3459 = vlaneseq
    %v3460 = vshrl.u32 %v3459, 7
    %v3461 = vsub.s32 2, %v3460
    %v3462 = vrot.slane %v3239, %v3461
    %v3463 = vlaneseq
    %v3464 = vshrl.u32 %v3463, 7
    %v3465 = vsub.s32 2, %v3464
    %v3466 = vrot.slane %v3237, %v3465
    %v3467 = vlaneseq
    %v3468 = vshrl.u32 %v3467, 7
    %v3469 = vsub.s32 2, %v3468
    %v3470 = vrot.slane %v3235, %v3469
    %3472 = vset.pattern.permute.xlu0 0
    %3473 = vperm.xlu0 %3472, %v3446
    %v3474 = vpop.permute.xlu0 %3473
    %v3476 = vmul.f32 %v3450, %v3474
    %v3477 = vmul.f32 %v3454, %v3474
    %v3478 = vmul.f32 %v3458, %v3474
    %v3479 = vmul.f32 %v3462, %v3474
    %v3480 = vmul.f32 %v3466, %v3474
    %v3481 = vmul.f32 %v3470, %v3474
    %v3482 = vadd.f32 %v3439, %v3476
    %v3483 = vadd.f32 %v3440, %v3477
    %v3484 = vadd.f32 %v3441, %v3478
    %v3485 = vadd.f32 %v3442, %v3479
    %v3486 = vadd.f32 %v3443, %v3480
    %v3487 = vadd.f32 %v3444, %v3481
    %s3488 = scalar_lea.vmem [#allocation16], 24
    %v3489 = vld [vmem:[%s3488] sm:$0x3f]
    %v3490 = vlaneseq
    %v3491 = vshrl.u32 %v3490, 7
    %v3492 = vsub.s32 3, %v3491
    %v3493 = vrot.slane %v3238, %v3492
    %v3494 = vlaneseq
    %v3495 = vshrl.u32 %v3494, 7
    %v3496 = vsub.s32 3, %v3495
    %v3497 = vrot.slane %v3236, %v3496
    %v3498 = vlaneseq
    %v3499 = vshrl.u32 %v3498, 7
    %v3500 = vsub.s32 3, %v3499
    %v3501 = vrot.slane %v3234, %v3500
    %v3502 = vlaneseq
    %v3503 = vshrl.u32 %v3502, 7
    %v3504 = vsub.s32 3, %v3503
    %v3505 = vrot.slane %v3239, %v3504
    %v3506 = vlaneseq
    %v3507 = vshrl.u32 %v3506, 7
    %v3508 = vsub.s32 3, %v3507
    %v3509 = vrot.slane %v3237, %v3508
    %v3510 = vlaneseq
    %v3511 = vshrl.u32 %v3510, 7
    %v3512 = vsub.s32 3, %v3511
    %v3513 = vrot.slane %v3235, %v3512
    %3515 = vset.pattern.permute.xlu0 0
    %3516 = vperm.xlu0 %3515, %v3489
    %v3517 = vpop.permute.xlu0 %3516
    %v3519 = vmul.f32 %v3493, %v3517
    %v3520 = vmul.f32 %v3497, %v3517
    %v3521 = vmul.f32 %v3501, %v3517
    %v3522 = vmul.f32 %v3505, %v3517
    %v3523 = vmul.f32 %v3509, %v3517
    %v3524 = vmul.f32 %v3513, %v3517
    %v3525 = vadd.f32 %v3482, %v3519
    %v3526 = vadd.f32 %v3483, %v3520
    %v3527 = vadd.f32 %v3484, %v3521
    %v3528 = vadd.f32 %v3485, %v3522
    %v3529 = vadd.f32 %v3486, %v3523
    %v3530 = vadd.f32 %v3487, %v3524
    %s3531 = scalar_lea.vmem [#allocation16], 32
    %v3532 = vld [vmem:[%s3531] sm:$0x3f]
    %v3533 = vlaneseq
    %v3534 = vshrl.u32 %v3533, 7
    %v3535 = vsub.s32 4, %v3534
    %v3536 = vrot.slane %v3238, %v3535
    %v3537 = vlaneseq
    %v3538 = vshrl.u32 %v3537, 7
    %v3539 = vsub.s32 4, %v3538
    %v3540 = vrot.slane %v3236, %v3539
    %v3541 = vlaneseq
    %v3542 = vshrl.u32 %v3541, 7
    %v3543 = vsub.s32 4, %v3542
    %v3544 = vrot.slane %v3234, %v3543
    %v3545 = vlaneseq
    %v3546 = vshrl.u32 %v3545, 7
    %v3547 = vsub.s32 4, %v3546
    %v3548 = vrot.slane %v3239, %v3547
    %v3549 = vlaneseq
    %v3550 = vshrl.u32 %v3549, 7
    %v3551 = vsub.s32 4, %v3550
    %v3552 = vrot.slane %v3237, %v3551
    %v3553 = vlaneseq
    %v3554 = vshrl.u32 %v3553, 7
    %v3555 = vsub.s32 4, %v3554
    %v3556 = vrot.slane %v3235, %v3555
    %3558 = vset.pattern.permute.xlu0 0
    %3559 = vperm.xlu0 %3558, %v3532
    %v3560 = vpop.permute.xlu0 %3559
    %v3562 = vmul.f32 %v3536, %v3560
    %v3563 = vmul.f32 %v3540, %v3560
    %v3564 = vmul.f32 %v3544, %v3560
    %v3565 = vmul.f32 %v3548, %v3560
    %v3566 = vmul.f32 %v3552, %v3560
    %v3567 = vmul.f32 %v3556, %v3560
    %v3568 = vadd.f32 %v3525, %v3562
    %v3569 = vadd.f32 %v3526, %v3563
    %v3570 = vadd.f32 %v3527, %v3564
    %v3571 = vadd.f32 %v3528, %v3565
    %v3572 = vadd.f32 %v3529, %v3566
    %v3573 = vadd.f32 %v3530, %v3567
    %s3574 = scalar_lea.vmem [#allocation16], 40
    %v3575 = vld [vmem:[%s3574] sm:$0x3f]
    %v3576 = vlaneseq
    %v3577 = vshrl.u32 %v3576, 7
    %v3578 = vsub.s32 5, %v3577
    %v3579 = vrot.slane %v3238, %v3578
    %v3580 = vlaneseq
    %v3581 = vshrl.u32 %v3580, 7
    %v3582 = vsub.s32 5, %v3581
    %v3583 = vrot.slane %v3236, %v3582
    %v3584 = vlaneseq
    %v3585 = vshrl.u32 %v3584, 7
    %v3586 = vsub.s32 5, %v3585
    %v3587 = vrot.slane %v3234, %v3586
    %v3588 = vlaneseq
    %v3589 = vshrl.u32 %v3588, 7
    %v3590 = vsub.s32 5, %v3589
    %v3591 = vrot.slane %v3239, %v3590
    %v3592 = vlaneseq
    %v3593 = vshrl.u32 %v3592, 7
    %v3594 = vsub.s32 5, %v3593
    %v3595 = vrot.slane %v3237, %v3594
    %v3596 = vlaneseq
    %v3597 = vshrl.u32 %v3596, 7
    %v3598 = vsub.s32 5, %v3597
    %v3599 = vrot.slane %v3235, %v3598
    %3601 = vset.pattern.permute.xlu0 0
    %3602 = vperm.xlu0 %3601, %v3575
    %v3603 = vpop.permute.xlu0 %3602
    %v3605 = vmul.f32 %v3579, %v3603
    %v3606 = vmul.f32 %v3583, %v3603
    %v3607 = vmul.f32 %v3587, %v3603
    %v3608 = vmul.f32 %v3591, %v3603
    %v3609 = vmul.f32 %v3595, %v3603
    %v3610 = vmul.f32 %v3599, %v3603
    %v3611 = vadd.f32 %v3568, %v3605
    %v3612 = vadd.f32 %v3569, %v3606
    %v3613 = vadd.f32 %v3570, %v3607
    %v3614 = vadd.f32 %v3571, %v3608
    %v3615 = vadd.f32 %v3572, %v3609
    %v3616 = vadd.f32 %v3573, %v3610
    %s3617 = scalar_lea.vmem [#allocation16], 48
    %v3618 = vld [vmem:[%s3617] sm:$0x3f]
    %v3619 = vlaneseq
    %v3620 = vshrl.u32 %v3619, 7
    %v3621 = vsub.s32 6, %v3620
    %v3622 = vrot.slane %v3238, %v3621
    %v3623 = vlaneseq
    %v3624 = vshrl.u32 %v3623, 7
    %v3625 = vsub.s32 6, %v3624
    %v3626 = vrot.slane %v3236, %v3625
    %v3627 = vlaneseq
    %v3628 = vshrl.u32 %v3627, 7
    %v3629 = vsub.s32 6, %v3628
    %v3630 = vrot.slane %v3234, %v3629
    %v3631 = vlaneseq
    %v3632 = vshrl.u32 %v3631, 7
    %v3633 = vsub.s32 6, %v3632
    %v3634 = vrot.slane %v3239, %v3633
    %v3635 = vlaneseq
    %v3636 = vshrl.u32 %v3635, 7
    %v3637 = vsub.s32 6, %v3636
    %v3638 = vrot.slane %v3237, %v3637
    %v3639 = vlaneseq
    %v3640 = vshrl.u32 %v3639, 7
    %v3641 = vsub.s32 6, %v3640
    %v3642 = vrot.slane %v3235, %v3641
    %3644 = vset.pattern.permute.xlu0 0
    %3645 = vperm.xlu0 %3644, %v3618
    %v3646 = vpop.permute.xlu0 %3645
    %v3648 = vmul.f32 %v3622, %v3646
    %v3649 = vmul.f32 %v3626, %v3646
    %v3650 = vmul.f32 %v3630, %v3646
    %v3651 = vmul.f32 %v3634, %v3646
    %v3652 = vmul.f32 %v3638, %v3646
    %v3653 = vmul.f32 %v3642, %v3646
    %v3654 = vadd.f32 %v3611, %v3648
    %v3655 = vadd.f32 %v3612, %v3649
    %v3656 = vadd.f32 %v3613, %v3650
    %v3657 = vadd.f32 %v3614, %v3651
    %v3658 = vadd.f32 %v3615, %v3652
    %v3659 = vadd.f32 %v3616, %v3653
    %s3660 = scalar_lea.vmem [#allocation16], 56
    %v3661 = vld [vmem:[%s3660] sm:$0x3f]
    %v3662 = vlaneseq
    %v3663 = vshrl.u32 %v3662, 7
    %v3664 = vsub.s32 7, %v3663
    %v3665 = vrot.slane %v3238, %v3664
    %v3666 = vlaneseq
    %v3667 = vshrl.u32 %v3666, 7
    %v3668 = vsub.s32 7, %v3667
    %v3669 = vrot.slane %v3236, %v3668
    %v3670 = vlaneseq
    %v3671 = vshrl.u32 %v3670, 7
    %v3672 = vsub.s32 7, %v3671
    %v3673 = vrot.slane %v3234, %v3672
    %v3674 = vlaneseq
    %v3675 = vshrl.u32 %v3674, 7
    %v3676 = vsub.s32 7, %v3675
    %v3677 = vrot.slane %v3239, %v3676
    %v3678 = vlaneseq
    %v3679 = vshrl.u32 %v3678, 7
    %v3680 = vsub.s32 7, %v3679
    %v3681 = vrot.slane %v3237, %v3680
    %v3682 = vlaneseq
    %v3683 = vshrl.u32 %v3682, 7
    %v3684 = vsub.s32 7, %v3683
    %v3685 = vrot.slane %v3235, %v3684
    %3687 = vset.pattern.permute.xlu0 0
    %3688 = vperm.xlu0 %3687, %v3661
    %v3689 = vpop.permute.xlu0 %3688
    %v3691 = vmul.f32 %v3665, %v3689
    %v3692 = vmul.f32 %v3669, %v3689
    %v3693 = vmul.f32 %v3673, %v3689
    %v3694 = vmul.f32 %v3677, %v3689
    %v3695 = vmul.f32 %v3681, %v3689
    %v3696 = vmul.f32 %v3685, %v3689
    %v3697 = vadd.f32 %v3654, %v3691
    %v3698 = vadd.f32 %v3655, %v3692
    %v3699 = vadd.f32 %v3656, %v3693
    %v3700 = vadd.f32 %v3657, %v3694
    %v3701 = vadd.f32 %v3658, %v3695
    %v3702 = vadd.f32 %v3659, %v3696
    %s3703 = scalar_lea.vmem [#allocation16], 64
    %v3704 = vld [vmem:[%s3703] sm:$0x3f]
    %v3705 = vlaneseq
    %v3706 = vshrl.u32 %v3705, 7
    %v3707 = vsub.s32 0, %v3706
    %v3708 = vrot.slane %v3256, %v3707
    %v3709 = vlaneseq
    %v3710 = vshrl.u32 %v3709, 7
    %v3711 = vsub.s32 0, %v3710
    %v3712 = vrot.slane %v3254, %v3711
    %v3713 = vlaneseq
    %v3714 = vshrl.u32 %v3713, 7
    %v3715 = vsub.s32 0, %v3714
    %v3716 = vrot.slane %v3252, %v3715
    %v3717 = vlaneseq
    %v3718 = vshrl.u32 %v3717, 7
    %v3719 = vsub.s32 0, %v3718
    %v3720 = vrot.slane %v3257, %v3719
    %v3721 = vlaneseq
    %v3722 = vshrl.u32 %v3721, 7
    %v3723 = vsub.s32 0, %v3722
    %v3724 = vrot.slane %v3255, %v3723
    %v3725 = vlaneseq
    %v3726 = vshrl.u32 %v3725, 7
    %v3727 = vsub.s32 0, %v3726
    %v3728 = vrot.slane %v3253, %v3727
    %3730 = vset.pattern.permute.xlu0 0
    %3731 = vperm.xlu0 %3730, %v3704
    %v3732 = vpop.permute.xlu0 %3731
    %v3734 = vmul.f32 %v3708, %v3732
    %v3735 = vmul.f32 %v3712, %v3732
    %v3736 = vmul.f32 %v3716, %v3732
    %v3737 = vmul.f32 %v3720, %v3732
    %v3738 = vmul.f32 %v3724, %v3732
    %v3739 = vmul.f32 %v3728, %v3732
    %v3740 = vadd.f32 %v3697, %v3734
    %v3741 = vadd.f32 %v3698, %v3735
    %v3742 = vadd.f32 %v3699, %v3736
    %v3743 = vadd.f32 %v3700, %v3737
    %v3744 = vadd.f32 %v3701, %v3738
    %v3745 = vadd.f32 %v3702, %v3739
    %s3746 = scalar_lea.vmem [#allocation16], 72
    %v3747 = vld [vmem:[%s3746] sm:$0x3f]
    %v3748 = vlaneseq
    %v3749 = vshrl.u32 %v3748, 7
    %v3750 = vsub.s32 1, %v3749
    %v3751 = vrot.slane %v3256, %v3750
    %v3752 = vlaneseq
    %v3753 = vshrl.u32 %v3752, 7
    %v3754 = vsub.s32 1, %v3753
    %v3755 = vrot.slane %v3254, %v3754
    %v3756 = vlaneseq
    %v3757 = vshrl.u32 %v3756, 7
    %v3758 = vsub.s32 1, %v3757
    %v3759 = vrot.slane %v3252, %v3758
    %v3760 = vlaneseq
    %v3761 = vshrl.u32 %v3760, 7
    %v3762 = vsub.s32 1, %v3761
    %v3763 = vrot.slane %v3257, %v3762
    %v3764 = vlaneseq
    %v3765 = vshrl.u32 %v3764, 7
    %v3766 = vsub.s32 1, %v3765
    %v3767 = vrot.slane %v3255, %v3766
    %v3768 = vlaneseq
    %v3769 = vshrl.u32 %v3768, 7
    %v3770 = vsub.s32 1, %v3769
    %v3771 = vrot.slane %v3253, %v3770
    %3773 = vset.pattern.permute.xlu0 0
    %3774 = vperm.xlu0 %3773, %v3747
    %v3775 = vpop.permute.xlu0 %3774
    %v3777 = vmul.f32 %v3751, %v3775
    %v3778 = vmul.f32 %v3755, %v3775
    %v3779 = vmul.f32 %v3759, %v3775
    %v3780 = vmul.f32 %v3763, %v3775
    %v3781 = vmul.f32 %v3767, %v3775
    %v3782 = vmul.f32 %v3771, %v3775
    %v3783 = vadd.f32 %v3740, %v3777
    %v3784 = vadd.f32 %v3741, %v3778
    %v3785 = vadd.f32 %v3742, %v3779
    %v3786 = vadd.f32 %v3743, %v3780
    %v3787 = vadd.f32 %v3744, %v3781
    %v3788 = vadd.f32 %v3745, %v3782
    %s3789 = scalar_lea.vmem [#allocation16], 80
    %v3790 = vld [vmem:[%s3789] sm:$0x3f]
    %v3791 = vlaneseq
    %v3792 = vshrl.u32 %v3791, 7
    %v3793 = vsub.s32 2, %v3792
    %v3794 = vrot.slane %v3256, %v3793
    %v3795 = vlaneseq
    %v3796 = vshrl.u32 %v3795, 7
    %v3797 = vsub.s32 2, %v3796
    %v3798 = vrot.slane %v3254, %v3797
    %v3799 = vlaneseq
    %v3800 = vshrl.u32 %v3799, 7
    %v3801 = vsub.s32 2, %v3800
    %v3802 = vrot.slane %v3252, %v3801
    %v3803 = vlaneseq
    %v3804 = vshrl.u32 %v3803, 7
    %v3805 = vsub.s32 2, %v3804
    %v3806 = vrot.slane %v3257, %v3805
    %v3807 = vlaneseq
    %v3808 = vshrl.u32 %v3807, 7
    %v3809 = vsub.s32 2, %v3808
    %v3810 = vrot.slane %v3255, %v3809
    %v3811 = vlaneseq
    %v3812 = vshrl.u32 %v3811, 7
    %v3813 = vsub.s32 2, %v3812
    %v3814 = vrot.slane %v3253, %v3813
    %3816 = vset.pattern.permute.xlu0 0
    %3817 = vperm.xlu0 %3816, %v3790
    %v3818 = vpop.permute.xlu0 %3817
    %v3820 = vmul.f32 %v3794, %v3818
    %v3821 = vmul.f32 %v3798, %v3818
    %v3822 = vmul.f32 %v3802, %v3818
    %v3823 = vmul.f32 %v3806, %v3818
    %v3824 = vmul.f32 %v3810, %v3818
    %v3825 = vmul.f32 %v3814, %v3818
    %v3826 = vadd.f32 %v3783, %v3820
    %v3827 = vadd.f32 %v3784, %v3821
    %v3828 = vadd.f32 %v3785, %v3822
    %v3829 = vadd.f32 %v3786, %v3823
    %v3830 = vadd.f32 %v3787, %v3824
    %v3831 = vadd.f32 %v3788, %v3825
    %s3832 = scalar_lea.vmem [#allocation16], 88
    %v3833 = vld [vmem:[%s3832] sm:$0x3f]
    %v3834 = vlaneseq
    %v3835 = vshrl.u32 %v3834, 7
    %v3836 = vsub.s32 3, %v3835
    %v3837 = vrot.slane %v3256, %v3836
    %v3838 = vlaneseq
    %v3839 = vshrl.u32 %v3838, 7
    %v3840 = vsub.s32 3, %v3839
    %v3841 = vrot.slane %v3254, %v3840
    %v3842 = vlaneseq
    %v3843 = vshrl.u32 %v3842, 7
    %v3844 = vsub.s32 3, %v3843
    %v3845 = vrot.slane %v3252, %v3844
    %v3846 = vlaneseq
    %v3847 = vshrl.u32 %v3846, 7
    %v3848 = vsub.s32 3, %v3847
    %v3849 = vrot.slane %v3257, %v3848
    %v3850 = vlaneseq
    %v3851 = vshrl.u32 %v3850, 7
    %v3852 = vsub.s32 3, %v3851
    %v3853 = vrot.slane %v3255, %v3852
    %v3854 = vlaneseq
    %v3855 = vshrl.u32 %v3854, 7
    %v3856 = vsub.s32 3, %v3855
    %v3857 = vrot.slane %v3253, %v3856
    %3859 = vset.pattern.permute.xlu0 0
    %3860 = vperm.xlu0 %3859, %v3833
    %v3861 = vpop.permute.xlu0 %3860
    %v3863 = vmul.f32 %v3837, %v3861
    %v3864 = vmul.f32 %v3841, %v3861
    %v3865 = vmul.f32 %v3845, %v3861
    %v3866 = vmul.f32 %v3849, %v3861
    %v3867 = vmul.f32 %v3853, %v3861
    %v3868 = vmul.f32 %v3857, %v3861
    %v3869 = vadd.f32 %v3826, %v3863
    %v3870 = vadd.f32 %v3827, %v3864
    %v3871 = vadd.f32 %v3828, %v3865
    %v3872 = vadd.f32 %v3829, %v3866
    %v3873 = vadd.f32 %v3830, %v3867
    %v3874 = vadd.f32 %v3831, %v3868
    %s3875 = scalar_lea.vmem [#allocation16], 96
    %v3876 = vld [vmem:[%s3875] sm:$0x3f]
    %v3877 = vlaneseq
    %v3878 = vshrl.u32 %v3877, 7
    %v3879 = vsub.s32 4, %v3878
    %v3880 = vrot.slane %v3256, %v3879
    %v3881 = vlaneseq
    %v3882 = vshrl.u32 %v3881, 7
    %v3883 = vsub.s32 4, %v3882
    %v3884 = vrot.slane %v3254, %v3883
    %v3885 = vlaneseq
    %v3886 = vshrl.u32 %v3885, 7
    %v3887 = vsub.s32 4, %v3886
    %v3888 = vrot.slane %v3252, %v3887
    %v3889 = vlaneseq
    %v3890 = vshrl.u32 %v3889, 7
    %v3891 = vsub.s32 4, %v3890
    %v3892 = vrot.slane %v3257, %v3891
    %v3893 = vlaneseq
    %v3894 = vshrl.u32 %v3893, 7
    %v3895 = vsub.s32 4, %v3894
    %v3896 = vrot.slane %v3255, %v3895
    %v3897 = vlaneseq
    %v3898 = vshrl.u32 %v3897, 7
    %v3899 = vsub.s32 4, %v3898
    %v3900 = vrot.slane %v3253, %v3899
    %3902 = vset.pattern.permute.xlu0 0
    %3903 = vperm.xlu0 %3902, %v3876
    %v3904 = vpop.permute.xlu0 %3903
    %v3906 = vmul.f32 %v3880, %v3904
    %v3907 = vmul.f32 %v3884, %v3904
    %v3908 = vmul.f32 %v3888, %v3904
    %v3909 = vmul.f32 %v3892, %v3904
    %v3910 = vmul.f32 %v3896, %v3904
    %v3911 = vmul.f32 %v3900, %v3904
    %v3912 = vadd.f32 %v3869, %v3906
    %v3913 = vadd.f32 %v3870, %v3907
    %v3914 = vadd.f32 %v3871, %v3908
    %v3915 = vadd.f32 %v3872, %v3909
    %v3916 = vadd.f32 %v3873, %v3910
    %v3917 = vadd.f32 %v3874, %v3911
    %s3918 = scalar_lea.vmem [#allocation16], 104
    %v3919 = vld [vmem:[%s3918] sm:$0x3f]
    %v3920 = vlaneseq
    %v3921 = vshrl.u32 %v3920, 7
    %v3922 = vsub.s32 5, %v3921
    %v3923 = vrot.slane %v3256, %v3922
    %v3924 = vlaneseq
    %v3925 = vshrl.u32 %v3924, 7
    %v3926 = vsub.s32 5, %v3925
    %v3927 = vrot.slane %v3254, %v3926
    %v3928 = vlaneseq
    %v3929 = vshrl.u32 %v3928, 7
    %v3930 = vsub.s32 5, %v3929
    %v3931 = vrot.slane %v3252, %v3930
    %v3932 = vlaneseq
    %v3933 = vshrl.u32 %v3932, 7
    %v3934 = vsub.s32 5, %v3933
    %v3935 = vrot.slane %v3257, %v3934
    %v3936 = vlaneseq
    %v3937 = vshrl.u32 %v3936, 7
    %v3938 = vsub.s32 5, %v3937
    %v3939 = vrot.slane %v3255, %v3938
    %v3940 = vlaneseq
    %v3941 = vshrl.u32 %v3940, 7
    %v3942 = vsub.s32 5, %v3941
    %v3943 = vrot.slane %v3253, %v3942
    %3945 = vset.pattern.permute.xlu0 0
    %3946 = vperm.xlu0 %3945, %v3919
    %v3947 = vpop.permute.xlu0 %3946
    %v3949 = vmul.f32 %v3923, %v3947
    %v3950 = vmul.f32 %v3927, %v3947
    %v3951 = vmul.f32 %v3931, %v3947
    %v3952 = vmul.f32 %v3935, %v3947
    %v3953 = vmul.f32 %v3939, %v3947
    %v3954 = vmul.f32 %v3943, %v3947
    %v3955 = vadd.f32 %v3912, %v3949
    %v3956 = vadd.f32 %v3913, %v3950
    %v3957 = vadd.f32 %v3914, %v3951
    %v3958 = vadd.f32 %v3915, %v3952
    %v3959 = vadd.f32 %v3916, %v3953
    %v3960 = vadd.f32 %v3917, %v3954
    %s3961 = scalar_lea.vmem [#allocation16], 112
    %v3962 = vld [vmem:[%s3961] sm:$0x3f]
    %v3963 = vlaneseq
    %v3964 = vshrl.u32 %v3963, 7
    %v3965 = vsub.s32 6, %v3964
    %v3966 = vrot.slane %v3256, %v3965
    %v3967 = vlaneseq
    %v3968 = vshrl.u32 %v3967, 7
    %v3969 = vsub.s32 6, %v3968
    %v3970 = vrot.slane %v3254, %v3969
    %v3971 = vlaneseq
    %v3972 = vshrl.u32 %v3971, 7
    %v3973 = vsub.s32 6, %v3972
    %v3974 = vrot.slane %v3252, %v3973
    %v3975 = vlaneseq
    %v3976 = vshrl.u32 %v3975, 7
    %v3977 = vsub.s32 6, %v3976
    %v3978 = vrot.slane %v3257, %v3977
    %v3979 = vlaneseq
    %v3980 = vshrl.u32 %v3979, 7
    %v3981 = vsub.s32 6, %v3980
    %v3982 = vrot.slane %v3255, %v3981
    %v3983 = vlaneseq
    %v3984 = vshrl.u32 %v3983, 7
    %v3985 = vsub.s32 6, %v3984
    %v3986 = vrot.slane %v3253, %v3985
    %3988 = vset.pattern.permute.xlu0 0
    %3989 = vperm.xlu0 %3988, %v3962
    %v3990 = vpop.permute.xlu0 %3989
    %v3992 = vmul.f32 %v3966, %v3990
    %v3993 = vmul.f32 %v3970, %v3990
    %v3994 = vmul.f32 %v3974, %v3990
    %v3995 = vmul.f32 %v3978, %v3990
    %v3996 = vmul.f32 %v3982, %v3990
    %v3997 = vmul.f32 %v3986, %v3990
    %v3998 = vadd.f32 %v3955, %v3992
    %v3999 = vadd.f32 %v3956, %v3993
    %v4000 = vadd.f32 %v3957, %v3994
    %v4001 = vadd.f32 %v3958, %v3995
    %v4002 = vadd.f32 %v3959, %v3996
    %v4003 = vadd.f32 %v3960, %v3997
    %s4004 = scalar_lea.vmem [#allocation16], 120
    %v4005 = vld [vmem:[%s4004] sm:$0x3f]
    %v4006 = vlaneseq
    %v4007 = vshrl.u32 %v4006, 7
    %v4008 = vsub.s32 7, %v4007
    %v4009 = vrot.slane %v3256, %v4008
    %v4010 = vlaneseq
    %v4011 = vshrl.u32 %v4010, 7
    %v4012 = vsub.s32 7, %v4011
    %v4013 = vrot.slane %v3254, %v4012
    %v4014 = vlaneseq
    %v4015 = vshrl.u32 %v4014, 7
    %v4016 = vsub.s32 7, %v4015
    %v4017 = vrot.slane %v3252, %v4016
    %v4018 = vlaneseq
    %v4019 = vshrl.u32 %v4018, 7
    %v4020 = vsub.s32 7, %v4019
    %v4021 = vrot.slane %v3257, %v4020
    %v4022 = vlaneseq
    %v4023 = vshrl.u32 %v4022, 7
    %v4024 = vsub.s32 7, %v4023
    %v4025 = vrot.slane %v3255, %v4024
    %v4026 = vlaneseq
    %v4027 = vshrl.u32 %v4026, 7
    %v4028 = vsub.s32 7, %v4027
    %v4029 = vrot.slane %v3253, %v4028
    %4031 = vset.pattern.permute.xlu0 0
    %4032 = vperm.xlu0 %4031, %v4005
    %v4033 = vpop.permute.xlu0 %4032
    %v4035 = vmul.f32 %v4009, %v4033
    %v4036 = vmul.f32 %v4013, %v4033
    %v4037 = vmul.f32 %v4017, %v4033
    %v4038 = vmul.f32 %v4021, %v4033
    %v4039 = vmul.f32 %v4025, %v4033
    %v4040 = vmul.f32 %v4029, %v4033
    %v4041 = vadd.f32 %v3998, %v4035
    %v4042 = vadd.f32 %v3999, %v4036
    %v4043 = vadd.f32 %v4000, %v4037
    %v4044 = vadd.f32 %v4001, %v4038
    %v4045 = vadd.f32 %v4002, %v4039
    %v4046 = vadd.f32 %v4003, %v4040
    %s4047 = scalar_lea.vmem [#allocation16], 128
    %v4048 = vld [vmem:[%s4047] sm:$0x3f]
    %v4049 = vlaneseq
    %v4050 = vshrl.u32 %v4049, 7
    %v4051 = vsub.s32 0, %v4050
    %v4052 = vrot.slane %v3274, %v4051
    %v4053 = vlaneseq
    %v4054 = vshrl.u32 %v4053, 7
    %v4055 = vsub.s32 0, %v4054
    %v4056 = vrot.slane %v3272, %v4055
    %v4057 = vlaneseq
    %v4058 = vshrl.u32 %v4057, 7
    %v4059 = vsub.s32 0, %v4058
    %v4060 = vrot.slane %v3270, %v4059
    %v4061 = vlaneseq
    %v4062 = vshrl.u32 %v4061, 7
    %v4063 = vsub.s32 0, %v4062
    %v4064 = vrot.slane %v3275, %v4063
    %v4065 = vlaneseq
    %v4066 = vshrl.u32 %v4065, 7
    %v4067 = vsub.s32 0, %v4066
    %v4068 = vrot.slane %v3273, %v4067
    %v4069 = vlaneseq
    %v4070 = vshrl.u32 %v4069, 7
    %v4071 = vsub.s32 0, %v4070
    %v4072 = vrot.slane %v3271, %v4071
    %4074 = vset.pattern.permute.xlu0 0
    %4075 = vperm.xlu0 %4074, %v4048
    %v4076 = vpop.permute.xlu0 %4075
    %v4078 = vmul.f32 %v4052, %v4076
    %v4079 = vmul.f32 %v4056, %v4076
    %v4080 = vmul.f32 %v4060, %v4076
    %v4081 = vmul.f32 %v4064, %v4076
    %v4082 = vmul.f32 %v4068, %v4076
    %v4083 = vmul.f32 %v4072, %v4076
    %v4084 = vadd.f32 %v4041, %v4078
    %v4085 = vadd.f32 %v4042, %v4079
    %v4086 = vadd.f32 %v4043, %v4080
    %v4087 = vadd.f32 %v4044, %v4081
    %v4088 = vadd.f32 %v4045, %v4082
    %v4089 = vadd.f32 %v4046, %v4083
    %s4090 = scalar_lea.vmem [#allocation16], 136
    %v4091 = vld [vmem:[%s4090] sm:$0x3f]
    %v4092 = vlaneseq
    %v4093 = vshrl.u32 %v4092, 7
    %v4094 = vsub.s32 1, %v4093
    %v4095 = vrot.slane %v3274, %v4094
    %v4096 = vlaneseq
    %v4097 = vshrl.u32 %v4096, 7
    %v4098 = vsub.s32 1, %v4097
    %v4099 = vrot.slane %v3272, %v4098
    %v4100 = vlaneseq
    %v4101 = vshrl.u32 %v4100, 7
    %v4102 = vsub.s32 1, %v4101
    %v4103 = vrot.slane %v3270, %v4102
    %v4104 = vlaneseq
    %v4105 = vshrl.u32 %v4104, 7
    %v4106 = vsub.s32 1, %v4105
    %v4107 = vrot.slane %v3275, %v4106
    %v4108 = vlaneseq
    %v4109 = vshrl.u32 %v4108, 7
    %v4110 = vsub.s32 1, %v4109
    %v4111 = vrot.slane %v3273, %v4110
    %v4112 = vlaneseq
    %v4113 = vshrl.u32 %v4112, 7
    %v4114 = vsub.s32 1, %v4113
    %v4115 = vrot.slane %v3271, %v4114
    %4117 = vset.pattern.permute.xlu0 0
    %4118 = vperm.xlu0 %4117, %v4091
    %v4119 = vpop.permute.xlu0 %4118
    %v4121 = vmul.f32 %v4095, %v4119
    %v4122 = vmul.f32 %v4099, %v4119
    %v4123 = vmul.f32 %v4103, %v4119
    %v4124 = vmul.f32 %v4107, %v4119
    %v4125 = vmul.f32 %v4111, %v4119
    %v4126 = vmul.f32 %v4115, %v4119
    %v4127 = vadd.f32 %v4084, %v4121
    %v4128 = vadd.f32 %v4085, %v4122
    %v4129 = vadd.f32 %v4086, %v4123
    %v4130 = vadd.f32 %v4087, %v4124
    %v4131 = vadd.f32 %v4088, %v4125
    %v4132 = vadd.f32 %v4089, %v4126
    %s4133 = scalar_lea.vmem [#allocation16], 144
    %v4134 = vld [vmem:[%s4133] sm:$0x3f]
    %v4135 = vlaneseq
    %v4136 = vshrl.u32 %v4135, 7
    %v4137 = vsub.s32 2, %v4136
    %v4138 = vrot.slane %v3274, %v4137
    %v4139 = vlaneseq
    %v4140 = vshrl.u32 %v4139, 7
    %v4141 = vsub.s32 2, %v4140
    %v4142 = vrot.slane %v3272, %v4141
    %v4143 = vlaneseq
    %v4144 = vshrl.u32 %v4143, 7
    %v4145 = vsub.s32 2, %v4144
    %v4146 = vrot.slane %v3270, %v4145
    %v4147 = vlaneseq
    %v4148 = vshrl.u32 %v4147, 7
    %v4149 = vsub.s32 2, %v4148
    %v4150 = vrot.slane %v3275, %v4149
    %v4151 = vlaneseq
    %v4152 = vshrl.u32 %v4151, 7
    %v4153 = vsub.s32 2, %v4152
    %v4154 = vrot.slane %v3273, %v4153
    %v4155 = vlaneseq
    %v4156 = vshrl.u32 %v4155, 7
    %v4157 = vsub.s32 2, %v4156
    %v4158 = vrot.slane %v3271, %v4157
    %4160 = vset.pattern.permute.xlu0 0
    %4161 = vperm.xlu0 %4160, %v4134
    %v4162 = vpop.permute.xlu0 %4161
    %v4164 = vmul.f32 %v4138, %v4162
    %v4165 = vmul.f32 %v4142, %v4162
    %v4166 = vmul.f32 %v4146, %v4162
    %v4167 = vmul.f32 %v4150, %v4162
    %v4168 = vmul.f32 %v4154, %v4162
    %v4169 = vmul.f32 %v4158, %v4162
    %v4170 = vadd.f32 %v4127, %v4164
    %v4171 = vadd.f32 %v4128, %v4165
    %v4172 = vadd.f32 %v4129, %v4166
    %v4173 = vadd.f32 %v4130, %v4167
    %v4174 = vadd.f32 %v4131, %v4168
    %v4175 = vadd.f32 %v4132, %v4169
    %s4176 = scalar_lea.vmem [#allocation16], 152
    %v4177 = vld [vmem:[%s4176] sm:$0x3f]
    %v4178 = vlaneseq
    %v4179 = vshrl.u32 %v4178, 7
    %v4180 = vsub.s32 3, %v4179
    %v4181 = vrot.slane %v3274, %v4180
    %v4182 = vlaneseq
    %v4183 = vshrl.u32 %v4182, 7
    %v4184 = vsub.s32 3, %v4183
    %v4185 = vrot.slane %v3272, %v4184
    %v4186 = vlaneseq
    %v4187 = vshrl.u32 %v4186, 7
    %v4188 = vsub.s32 3, %v4187
    %v4189 = vrot.slane %v3270, %v4188
    %v4190 = vlaneseq
    %v4191 = vshrl.u32 %v4190, 7
    %v4192 = vsub.s32 3, %v4191
    %v4193 = vrot.slane %v3275, %v4192
    %v4194 = vlaneseq
    %v4195 = vshrl.u32 %v4194, 7
    %v4196 = vsub.s32 3, %v4195
    %v4197 = vrot.slane %v3273, %v4196
    %v4198 = vlaneseq
    %v4199 = vshrl.u32 %v4198, 7
    %v4200 = vsub.s32 3, %v4199
    %v4201 = vrot.slane %v3271, %v4200
    %4203 = vset.pattern.permute.xlu0 0
    %4204 = vperm.xlu0 %4203, %v4177
    %v4205 = vpop.permute.xlu0 %4204
    %v4207 = vmul.f32 %v4181, %v4205
    %v4208 = vmul.f32 %v4185, %v4205
    %v4209 = vmul.f32 %v4189, %v4205
    %v4210 = vmul.f32 %v4193, %v4205
    %v4211 = vmul.f32 %v4197, %v4205
    %v4212 = vmul.f32 %v4201, %v4205
    %v4213 = vadd.f32 %v4170, %v4207
    %v4214 = vadd.f32 %v4171, %v4208
    %v4215 = vadd.f32 %v4172, %v4209
    %v4216 = vadd.f32 %v4173, %v4210
    %v4217 = vadd.f32 %v4174, %v4211
    %v4218 = vadd.f32 %v4175, %v4212
    %s4219 = scalar_lea.vmem [#allocation16], 160
    %v4220 = vld [vmem:[%s4219] sm:$0x3f]
    %v4221 = vlaneseq
    %v4222 = vshrl.u32 %v4221, 7
    %v4223 = vsub.s32 4, %v4222
    %v4224 = vrot.slane %v3274, %v4223
    %v4225 = vlaneseq
    %v4226 = vshrl.u32 %v4225, 7
    %v4227 = vsub.s32 4, %v4226
    %v4228 = vrot.slane %v3272, %v4227
    %v4229 = vlaneseq
    %v4230 = vshrl.u32 %v4229, 7
    %v4231 = vsub.s32 4, %v4230
    %v4232 = vrot.slane %v3270, %v4231
    %v4233 = vlaneseq
    %v4234 = vshrl.u32 %v4233, 7
    %v4235 = vsub.s32 4, %v4234
    %v4236 = vrot.slane %v3275, %v4235
    %v4237 = vlaneseq
    %v4238 = vshrl.u32 %v4237, 7
    %v4239 = vsub.s32 4, %v4238
    %v4240 = vrot.slane %v3273, %v4239
    %v4241 = vlaneseq
    %v4242 = vshrl.u32 %v4241, 7
    %v4243 = vsub.s32 4, %v4242
    %v4244 = vrot.slane %v3271, %v4243
    %4246 = vset.pattern.permute.xlu0 0
    %4247 = vperm.xlu0 %4246, %v4220
    %v4248 = vpop.permute.xlu0 %4247
    %v4250 = vmul.f32 %v4224, %v4248
    %v4251 = vmul.f32 %v4228, %v4248
    %v4252 = vmul.f32 %v4232, %v4248
    %v4253 = vmul.f32 %v4236, %v4248
    %v4254 = vmul.f32 %v4240, %v4248
    %v4255 = vmul.f32 %v4244, %v4248
    %v4256 = vadd.f32 %v4213, %v4250
    %v4257 = vadd.f32 %v4214, %v4251
    %v4258 = vadd.f32 %v4215, %v4252
    %v4259 = vadd.f32 %v4216, %v4253
    %v4260 = vadd.f32 %v4217, %v4254
    %v4261 = vadd.f32 %v4218, %v4255
    %s4262 = scalar_lea.vmem [#allocation16], 168
    %v4263 = vld [vmem:[%s4262] sm:$0x3f]
    %v4264 = vlaneseq
    %v4265 = vshrl.u32 %v4264, 7
    %v4266 = vsub.s32 5, %v4265
    %v4267 = vrot.slane %v3274, %v4266
    %v4268 = vlaneseq
    %v4269 = vshrl.u32 %v4268, 7
    %v4270 = vsub.s32 5, %v4269
    %v4271 = vrot.slane %v3272, %v4270
    %v4272 = vlaneseq
    %v4273 = vshrl.u32 %v4272, 7
    %v4274 = vsub.s32 5, %v4273
    %v4275 = vrot.slane %v3270, %v4274
    %v4276 = vlaneseq
    %v4277 = vshrl.u32 %v4276, 7
    %v4278 = vsub.s32 5, %v4277
    %v4279 = vrot.slane %v3275, %v4278
    %v4280 = vlaneseq
    %v4281 = vshrl.u32 %v4280, 7
    %v4282 = vsub.s32 5, %v4281
    %v4283 = vrot.slane %v3273, %v4282
    %v4284 = vlaneseq
    %v4285 = vshrl.u32 %v4284, 7
    %v4286 = vsub.s32 5, %v4285
    %v4287 = vrot.slane %v3271, %v4286
    %4289 = vset.pattern.permute.xlu0 0
    %4290 = vperm.xlu0 %4289, %v4263
    %v4291 = vpop.permute.xlu0 %4290
    %v4293 = vmul.f32 %v4267, %v4291
    %v4294 = vmul.f32 %v4271, %v4291
    %v4295 = vmul.f32 %v4275, %v4291
    %v4296 = vmul.f32 %v4279, %v4291
    %v4297 = vmul.f32 %v4283, %v4291
    %v4298 = vmul.f32 %v4287, %v4291
    %v4299 = vadd.f32 %v4256, %v4293
    %v4300 = vadd.f32 %v4257, %v4294
    %v4301 = vadd.f32 %v4258, %v4295
    %v4302 = vadd.f32 %v4259, %v4296
    %v4303 = vadd.f32 %v4260, %v4297
    %v4304 = vadd.f32 %v4261, %v4298
    %s4305 = scalar_lea.vmem [#allocation16], 176
    %v4306 = vld [vmem:[%s4305] sm:$0x3f]
    %v4307 = vlaneseq
    %v4308 = vshrl.u32 %v4307, 7
    %v4309 = vsub.s32 6, %v4308
    %v4310 = vrot.slane %v3274, %v4309
    %v4311 = vlaneseq
    %v4312 = vshrl.u32 %v4311, 7
    %v4313 = vsub.s32 6, %v4312
    %v4314 = vrot.slane %v3272, %v4313
    %v4315 = vlaneseq
    %v4316 = vshrl.u32 %v4315, 7
    %v4317 = vsub.s32 6, %v4316
    %v4318 = vrot.slane %v3270, %v4317
    %v4319 = vlaneseq
    %v4320 = vshrl.u32 %v4319, 7
    %v4321 = vsub.s32 6, %v4320
    %v4322 = vrot.slane %v3275, %v4321
    %v4323 = vlaneseq
    %v4324 = vshrl.u32 %v4323, 7
    %v4325 = vsub.s32 6, %v4324
    %v4326 = vrot.slane %v3273, %v4325
    %v4327 = vlaneseq
    %v4328 = vshrl.u32 %v4327, 7
    %v4329 = vsub.s32 6, %v4328
    %v4330 = vrot.slane %v3271, %v4329
    %4332 = vset.pattern.permute.xlu0 0
    %4333 = vperm.xlu0 %4332, %v4306
    %v4334 = vpop.permute.xlu0 %4333
    %v4336 = vmul.f32 %v4310, %v4334
    %v4337 = vmul.f32 %v4314, %v4334
    %v4338 = vmul.f32 %v4318, %v4334
    %v4339 = vmul.f32 %v4322, %v4334
    %v4340 = vmul.f32 %v4326, %v4334
    %v4341 = vmul.f32 %v4330, %v4334
    %v4342 = vadd.f32 %v4299, %v4336
    %v4343 = vadd.f32 %v4300, %v4337
    %v4344 = vadd.f32 %v4301, %v4338
    %v4345 = vadd.f32 %v4302, %v4339
    %v4346 = vadd.f32 %v4303, %v4340
    %v4347 = vadd.f32 %v4304, %v4341
    %s4348 = scalar_lea.vmem [#allocation16], 184
    %v4349 = vld [vmem:[%s4348] sm:$0x3f]
    %v4350 = vlaneseq
    %v4351 = vshrl.u32 %v4350, 7
    %v4352 = vsub.s32 7, %v4351
    %v4353 = vrot.slane %v3274, %v4352
    %v4354 = vlaneseq
    %v4355 = vshrl.u32 %v4354, 7
    %v4356 = vsub.s32 7, %v4355
    %v4357 = vrot.slane %v3272, %v4356
    %v4358 = vlaneseq
    %v4359 = vshrl.u32 %v4358, 7
    %v4360 = vsub.s32 7, %v4359
    %v4361 = vrot.slane %v3270, %v4360
    %v4362 = vlaneseq
    %v4363 = vshrl.u32 %v4362, 7
    %v4364 = vsub.s32 7, %v4363
    %v4365 = vrot.slane %v3275, %v4364
    %v4366 = vlaneseq
    %v4367 = vshrl.u32 %v4366, 7
    %v4368 = vsub.s32 7, %v4367
    %v4369 = vrot.slane %v3273, %v4368
    %v4370 = vlaneseq
    %v4371 = vshrl.u32 %v4370, 7
    %v4372 = vsub.s32 7, %v4371
    %v4373 = vrot.slane %v3271, %v4372
    %4375 = vset.pattern.permute.xlu0 0
    %4376 = vperm.xlu0 %4375, %v4349
    %v4377 = vpop.permute.xlu0 %4376
    %v4379 = vmul.f32 %v4353, %v4377
    %v4380 = vmul.f32 %v4357, %v4377
    %v4381 = vmul.f32 %v4361, %v4377
    %v4382 = vmul.f32 %v4365, %v4377
    %v4383 = vmul.f32 %v4369, %v4377
    %v4384 = vmul.f32 %v4373, %v4377
    %v4385 = vadd.f32 %v4342, %v4379
    %v4386 = vadd.f32 %v4343, %v4380
    %v4387 = vadd.f32 %v4344, %v4381
    %v4388 = vadd.f32 %v4345, %v4382
    %v4389 = vadd.f32 %v4346, %v4383
    %v4390 = vadd.f32 %v4347, %v4384
    %s4391 = scalar_lea.vmem [#allocation16], 192
    %v4392 = vld [vmem:[%s4391] sm:$0x3f]
    %v4393 = vlaneseq
    %v4394 = vshrl.u32 %v4393, 7
    %v4395 = vsub.s32 0, %v4394
    %v4396 = vrot.slane %v3292, %v4395
    %v4397 = vlaneseq
    %v4398 = vshrl.u32 %v4397, 7
    %v4399 = vsub.s32 0, %v4398
    %v4400 = vrot.slane %v3290, %v4399
    %v4401 = vlaneseq
    %v4402 = vshrl.u32 %v4401, 7
    %v4403 = vsub.s32 0, %v4402
    %v4404 = vrot.slane %v3288, %v4403
    %v4405 = vlaneseq
    %v4406 = vshrl.u32 %v4405, 7
    %v4407 = vsub.s32 0, %v4406
    %v4408 = vrot.slane %v3293, %v4407
    %v4409 = vlaneseq
    %v4410 = vshrl.u32 %v4409, 7
    %v4411 = vsub.s32 0, %v4410
    %v4412 = vrot.slane %v3291, %v4411
    %v4413 = vlaneseq
    %v4414 = vshrl.u32 %v4413, 7
    %v4415 = vsub.s32 0, %v4414
    %v4416 = vrot.slane %v3289, %v4415
    %4418 = vset.pattern.permute.xlu0 0
    %4419 = vperm.xlu0 %4418, %v4392
    %v4420 = vpop.permute.xlu0 %4419
    %v4422 = vmul.f32 %v4396, %v4420
    %v4423 = vmul.f32 %v4400, %v4420
    %v4424 = vmul.f32 %v4404, %v4420
    %v4425 = vmul.f32 %v4408, %v4420
    %v4426 = vmul.f32 %v4412, %v4420
    %v4427 = vmul.f32 %v4416, %v4420
    %v4428 = vadd.f32 %v4385, %v4422
    %v4429 = vadd.f32 %v4386, %v4423
    %v4430 = vadd.f32 %v4387, %v4424
    %v4431 = vadd.f32 %v4388, %v4425
    %v4432 = vadd.f32 %v4389, %v4426
    %v4433 = vadd.f32 %v4390, %v4427
    %s4434 = scalar_lea.vmem [#allocation16], 200
    %v4435 = vld [vmem:[%s4434] sm:$0x3f]
    %v4436 = vlaneseq
    %v4437 = vshrl.u32 %v4436, 7
    %v4438 = vsub.s32 1, %v4437
    %v4439 = vrot.slane %v3292, %v4438
    %v4440 = vlaneseq
    %v4441 = vshrl.u32 %v4440, 7
    %v4442 = vsub.s32 1, %v4441
    %v4443 = vrot.slane %v3290, %v4442
    %v4444 = vlaneseq
    %v4445 = vshrl.u32 %v4444, 7
    %v4446 = vsub.s32 1, %v4445
    %v4447 = vrot.slane %v3288, %v4446
    %v4448 = vlaneseq
    %v4449 = vshrl.u32 %v4448, 7
    %v4450 = vsub.s32 1, %v4449
    %v4451 = vrot.slane %v3293, %v4450
    %v4452 = vlaneseq
    %v4453 = vshrl.u32 %v4452, 7
    %v4454 = vsub.s32 1, %v4453
    %v4455 = vrot.slane %v3291, %v4454
    %v4456 = vlaneseq
    %v4457 = vshrl.u32 %v4456, 7
    %v4458 = vsub.s32 1, %v4457
    %v4459 = vrot.slane %v3289, %v4458
    %4461 = vset.pattern.permute.xlu0 0
    %4462 = vperm.xlu0 %4461, %v4435
    %v4463 = vpop.permute.xlu0 %4462
    %v4465 = vmul.f32 %v4439, %v4463
    %v4466 = vmul.f32 %v4443, %v4463
    %v4467 = vmul.f32 %v4447, %v4463
    %v4468 = vmul.f32 %v4451, %v4463
    %v4469 = vmul.f32 %v4455, %v4463
    %v4470 = vmul.f32 %v4459, %v4463
    %v4471 = vadd.f32 %v4428, %v4465
    %v4472 = vadd.f32 %v4429, %v4466
    %v4473 = vadd.f32 %v4430, %v4467
    %v4474 = vadd.f32 %v4431, %v4468
    %v4475 = vadd.f32 %v4432, %v4469
    %v4476 = vadd.f32 %v4433, %v4470
    %s4477 = scalar_lea.vmem [#allocation16], 208
    %v4478 = vld [vmem:[%s4477] sm:$0x3f]
    %v4479 = vlaneseq
    %v4480 = vshrl.u32 %v4479, 7
    %v4481 = vsub.s32 2, %v4480
    %v4482 = vrot.slane %v3292, %v4481
    %v4483 = vlaneseq
    %v4484 = vshrl.u32 %v4483, 7
    %v4485 = vsub.s32 2, %v4484
    %v4486 = vrot.slane %v3290, %v4485
    %v4487 = vlaneseq
    %v4488 = vshrl.u32 %v4487, 7
    %v4489 = vsub.s32 2, %v4488
    %v4490 = vrot.slane %v3288, %v4489
    %v4491 = vlaneseq
    %v4492 = vshrl.u32 %v4491, 7
    %v4493 = vsub.s32 2, %v4492
    %v4494 = vrot.slane %v3293, %v4493
    %v4495 = vlaneseq
    %v4496 = vshrl.u32 %v4495, 7
    %v4497 = vsub.s32 2, %v4496
    %v4498 = vrot.slane %v3291, %v4497
    %v4499 = vlaneseq
    %v4500 = vshrl.u32 %v4499, 7
    %v4501 = vsub.s32 2, %v4500
    %v4502 = vrot.slane %v3289, %v4501
    %4504 = vset.pattern.permute.xlu0 0
    %4505 = vperm.xlu0 %4504, %v4478
    %v4506 = vpop.permute.xlu0 %4505
    %v4508 = vmul.f32 %v4482, %v4506
    %v4509 = vmul.f32 %v4486, %v4506
    %v4510 = vmul.f32 %v4490, %v4506
    %v4511 = vmul.f32 %v4494, %v4506
    %v4512 = vmul.f32 %v4498, %v4506
    %v4513 = vmul.f32 %v4502, %v4506
    %v4514 = vadd.f32 %v4471, %v4508
    %v4515 = vadd.f32 %v4472, %v4509
    %v4516 = vadd.f32 %v4473, %v4510
    %v4517 = vadd.f32 %v4474, %v4511
    %v4518 = vadd.f32 %v4475, %v4512
    %v4519 = vadd.f32 %v4476, %v4513
    %s4520 = scalar_lea.vmem [#allocation16], 216
    %v4521 = vld [vmem:[%s4520] sm:$0x3f]
    %v4522 = vlaneseq
    %v4523 = vshrl.u32 %v4522, 7
    %v4524 = vsub.s32 3, %v4523
    %v4525 = vrot.slane %v3292, %v4524
    %v4526 = vlaneseq
    %v4527 = vshrl.u32 %v4526, 7
    %v4528 = vsub.s32 3, %v4527
    %v4529 = vrot.slane %v3290, %v4528
    %v4530 = vlaneseq
    %v4531 = vshrl.u32 %v4530, 7
    %v4532 = vsub.s32 3, %v4531
    %v4533 = vrot.slane %v3288, %v4532
    %v4534 = vlaneseq
    %v4535 = vshrl.u32 %v4534, 7
    %v4536 = vsub.s32 3, %v4535
    %v4537 = vrot.slane %v3293, %v4536
    %v4538 = vlaneseq
    %v4539 = vshrl.u32 %v4538, 7
    %v4540 = vsub.s32 3, %v4539
    %v4541 = vrot.slane %v3291, %v4540
    %v4542 = vlaneseq
    %v4543 = vshrl.u32 %v4542, 7
    %v4544 = vsub.s32 3, %v4543
    %v4545 = vrot.slane %v3289, %v4544
    %4547 = vset.pattern.permute.xlu0 0
    %4548 = vperm.xlu0 %4547, %v4521
    %v4549 = vpop.permute.xlu0 %4548
    %v4551 = vmul.f32 %v4525, %v4549
    %v4552 = vmul.f32 %v4529, %v4549
    %v4553 = vmul.f32 %v4533, %v4549
    %v4554 = vmul.f32 %v4537, %v4549
    %v4555 = vmul.f32 %v4541, %v4549
    %v4556 = vmul.f32 %v4545, %v4549
    %v4557 = vadd.f32 %v4514, %v4551
    %v4558 = vadd.f32 %v4515, %v4552
    %v4559 = vadd.f32 %v4516, %v4553
    %v4560 = vadd.f32 %v4517, %v4554
    %v4561 = vadd.f32 %v4518, %v4555
    %v4562 = vadd.f32 %v4519, %v4556
    %s4563 = scalar_lea.vmem [#allocation16], 224
    %v4564 = vld [vmem:[%s4563] sm:$0x3f]
    %v4565 = vlaneseq
    %v4566 = vshrl.u32 %v4565, 7
    %v4567 = vsub.s32 4, %v4566
    %v4568 = vrot.slane %v3292, %v4567
    %v4569 = vlaneseq
    %v4570 = vshrl.u32 %v4569, 7
    %v4571 = vsub.s32 4, %v4570
    %v4572 = vrot.slane %v3290, %v4571
    %v4573 = vlaneseq
    %v4574 = vshrl.u32 %v4573, 7
    %v4575 = vsub.s32 4, %v4574
    %v4576 = vrot.slane %v3288, %v4575
    %v4577 = vlaneseq
    %v4578 = vshrl.u32 %v4577, 7
    %v4579 = vsub.s32 4, %v4578
    %v4580 = vrot.slane %v3293, %v4579
    %v4581 = vlaneseq
    %v4582 = vshrl.u32 %v4581, 7
    %v4583 = vsub.s32 4, %v4582
    %v4584 = vrot.slane %v3291, %v4583
    %v4585 = vlaneseq
    %v4586 = vshrl.u32 %v4585, 7
    %v4587 = vsub.s32 4, %v4586
    %v4588 = vrot.slane %v3289, %v4587
    %4590 = vset.pattern.permute.xlu0 0
    %4591 = vperm.xlu0 %4590, %v4564
    %v4592 = vpop.permute.xlu0 %4591
    %v4594 = vmul.f32 %v4568, %v4592
    %v4595 = vmul.f32 %v4572, %v4592
    %v4596 = vmul.f32 %v4576, %v4592
    %v4597 = vmul.f32 %v4580, %v4592
    %v4598 = vmul.f32 %v4584, %v4592
    %v4599 = vmul.f32 %v4588, %v4592
    %v4600 = vadd.f32 %v4557, %v4594
    %v4601 = vadd.f32 %v4558, %v4595
    %v4602 = vadd.f32 %v4559, %v4596
    %v4603 = vadd.f32 %v4560, %v4597
    %v4604 = vadd.f32 %v4561, %v4598
    %v4605 = vadd.f32 %v4562, %v4599
    %s4606 = scalar_lea.vmem [#allocation16], 232
    %v4607 = vld [vmem:[%s4606] sm:$0x3f]
    %v4608 = vlaneseq
    %v4609 = vshrl.u32 %v4608, 7
    %v4610 = vsub.s32 5, %v4609
    %v4611 = vrot.slane %v3292, %v4610
    %v4612 = vlaneseq
    %v4613 = vshrl.u32 %v4612, 7
    %v4614 = vsub.s32 5, %v4613
    %v4615 = vrot.slane %v3290, %v4614
    %v4616 = vlaneseq
    %v4617 = vshrl.u32 %v4616, 7
    %v4618 = vsub.s32 5, %v4617
    %v4619 = vrot.slane %v3288, %v4618
    %v4620 = vlaneseq
    %v4621 = vshrl.u32 %v4620, 7
    %v4622 = vsub.s32 5, %v4621
    %v4623 = vrot.slane %v3293, %v4622
    %v4624 = vlaneseq
    %v4625 = vshrl.u32 %v4624, 7
    %v4626 = vsub.s32 5, %v4625
    %v4627 = vrot.slane %v3291, %v4626
    %v4628 = vlaneseq
    %v4629 = vshrl.u32 %v4628, 7
    %v4630 = vsub.s32 5, %v4629
    %v4631 = vrot.slane %v3289, %v4630
    %4633 = vset.pattern.permute.xlu0 0
    %4634 = vperm.xlu0 %4633, %v4607
    %v4635 = vpop.permute.xlu0 %4634
    %v4637 = vmul.f32 %v4611, %v4635
    %v4638 = vmul.f32 %v4615, %v4635
    %v4639 = vmul.f32 %v4619, %v4635
    %v4640 = vmul.f32 %v4623, %v4635
    %v4641 = vmul.f32 %v4627, %v4635
    %v4642 = vmul.f32 %v4631, %v4635
    %v4643 = vadd.f32 %v4600, %v4637
    %v4644 = vadd.f32 %v4601, %v4638
    %v4645 = vadd.f32 %v4602, %v4639
    %v4646 = vadd.f32 %v4603, %v4640
    %v4647 = vadd.f32 %v4604, %v4641
    %v4648 = vadd.f32 %v4605, %v4642
    %s4649 = scalar_lea.vmem [#allocation16], 240
    %v4650 = vld [vmem:[%s4649] sm:$0x3f]
    %v4651 = vlaneseq
    %v4652 = vshrl.u32 %v4651, 7
    %v4653 = vsub.s32 6, %v4652
    %v4654 = vrot.slane %v3292, %v4653
    %v4655 = vlaneseq
    %v4656 = vshrl.u32 %v4655, 7
    %v4657 = vsub.s32 6, %v4656
    %v4658 = vrot.slane %v3290, %v4657
    %v4659 = vlaneseq
    %v4660 = vshrl.u32 %v4659, 7
    %v4661 = vsub.s32 6, %v4660
    %v4662 = vrot.slane %v3288, %v4661
    %v4663 = vlaneseq
    %v4664 = vshrl.u32 %v4663, 7
    %v4665 = vsub.s32 6, %v4664
    %v4666 = vrot.slane %v3293, %v4665
    %v4667 = vlaneseq
    %v4668 = vshrl.u32 %v4667, 7
    %v4669 = vsub.s32 6, %v4668
    %v4670 = vrot.slane %v3291, %v4669
    %v4671 = vlaneseq
    %v4672 = vshrl.u32 %v4671, 7
    %v4673 = vsub.s32 6, %v4672
    %v4674 = vrot.slane %v3289, %v4673
    %4676 = vset.pattern.permute.xlu0 0
    %4677 = vperm.xlu0 %4676, %v4650
    %v4678 = vpop.permute.xlu0 %4677
    %v4680 = vmul.f32 %v4654, %v4678
    %v4681 = vmul.f32 %v4658, %v4678
    %v4682 = vmul.f32 %v4662, %v4678
    %v4683 = vmul.f32 %v4666, %v4678
    %v4684 = vmul.f32 %v4670, %v4678
    %v4685 = vmul.f32 %v4674, %v4678
    %v4686 = vadd.f32 %v4643, %v4680
    %v4687 = vadd.f32 %v4644, %v4681
    %v4688 = vadd.f32 %v4645, %v4682
    %v4689 = vadd.f32 %v4646, %v4683
    %v4690 = vadd.f32 %v4647, %v4684
    %v4691 = vadd.f32 %v4648, %v4685
    %s4692 = scalar_lea.vmem [#allocation16], 248
    %v4693 = vld [vmem:[%s4692] sm:$0x3f]
    %v4694 = vlaneseq
    %v4695 = vshrl.u32 %v4694, 7
    %v4696 = vsub.s32 7, %v4695
    %v4697 = vrot.slane %v3292, %v4696
    %v4698 = vlaneseq
    %v4699 = vshrl.u32 %v4698, 7
    %v4700 = vsub.s32 7, %v4699
    %v4701 = vrot.slane %v3290, %v4700
    %v4702 = vlaneseq
    %v4703 = vshrl.u32 %v4702, 7
    %v4704 = vsub.s32 7, %v4703
    %v4705 = vrot.slane %v3288, %v4704
    %v4706 = vlaneseq
    %v4707 = vshrl.u32 %v4706, 7
    %v4708 = vsub.s32 7, %v4707
    %v4709 = vrot.slane %v3293, %v4708
    %v4710 = vlaneseq
    %v4711 = vshrl.u32 %v4710, 7
    %v4712 = vsub.s32 7, %v4711
    %v4713 = vrot.slane %v3291, %v4712
    %v4714 = vlaneseq
    %v4715 = vshrl.u32 %v4714, 7
    %v4716 = vsub.s32 7, %v4715
    %v4717 = vrot.slane %v3289, %v4716
    %4719 = vset.pattern.permute.xlu0 0
    %4720 = vperm.xlu0 %4719, %v4693
    %v4721 = vpop.permute.xlu0 %4720
    %v4723 = vmul.f32 %v4697, %v4721
    %v4724 = vmul.f32 %v4701, %v4721
    %v4725 = vmul.f32 %v4705, %v4721
    %v4726 = vmul.f32 %v4709, %v4721
    %v4727 = vmul.f32 %v4713, %v4721
    %v4728 = vmul.f32 %v4717, %v4721
    %v4729 = vadd.f32 %v4686, %v4723
    %v4730 = vadd.f32 %v4687, %v4724
    %v4731 = vadd.f32 %v4688, %v4725
    %v4732 = vadd.f32 %v4689, %v4726
    %v4733 = vadd.f32 %v4690, %v4727
    %v4734 = vadd.f32 %v4691, %v4728
    %s4735 = scalar_lea.vmem [#allocation16], 256
    %v4736 = vld [vmem:[%s4735] sm:$0x3f]
    %v4737 = vlaneseq
    %v4738 = vshrl.u32 %v4737, 7
    %v4739 = vsub.s32 0, %v4738
    %v4740 = vrot.slane %v3216, %v4739
    %v4741 = vlaneseq
    %v4742 = vshrl.u32 %v4741, 7
    %v4743 = vsub.s32 0, %v4742
    %v4744 = vrot.slane %v3217, %v4743
    %v4745 = vlaneseq
    %v4746 = vshrl.u32 %v4745, 7
    %v4747 = vsub.s32 0, %v4746
    %v4748 = vrot.slane %v3218, %v4747
    %v4749 = vlaneseq
    %v4750 = vshrl.u32 %v4749, 7
    %v4751 = vsub.s32 0, %v4750
    %v4752 = vrot.slane %v3219, %v4751
    %v4753 = vlaneseq
    %v4754 = vshrl.u32 %v4753, 7
    %v4755 = vsub.s32 0, %v4754
    %v4756 = vrot.slane %v3220, %v4755
    %v4757 = vlaneseq
    %v4758 = vshrl.u32 %v4757, 7
    %v4759 = vsub.s32 0, %v4758
    %v4760 = vrot.slane %v3221, %v4759
    %4762 = vset.pattern.permute.xlu0 0
    %4763 = vperm.xlu0 %4762, %v4736
    %v4764 = vpop.permute.xlu0 %4763
    %v4766 = vmul.f32 %v4740, %v4764
    %v4767 = vmul.f32 %v4744, %v4764
    %v4768 = vmul.f32 %v4748, %v4764
    %v4769 = vmul.f32 %v4752, %v4764
    %v4770 = vmul.f32 %v4756, %v4764
    %v4771 = vmul.f32 %v4760, %v4764
    %v4772 = vadd.f32 %v4729, %v4766
    %v4773 = vadd.f32 %v4730, %v4767
    %v4774 = vadd.f32 %v4731, %v4768
    %v4775 = vadd.f32 %v4732, %v4769
    %v4776 = vadd.f32 %v4733, %v4770
    %v4777 = vadd.f32 %v4734, %v4771
    %s4778 = scalar_lea.vmem [#allocation16], 264
    %v4779 = vld [vmem:[%s4778] sm:$0x3f]
    %v4780 = vlaneseq
    %v4781 = vshrl.u32 %v4780, 7
    %v4782 = vsub.s32 1, %v4781
    %v4783 = vrot.slane %v3216, %v4782
    %v4784 = vlaneseq
    %v4785 = vshrl.u32 %v4784, 7
    %v4786 = vsub.s32 1, %v4785
    %v4787 = vrot.slane %v3217, %v4786
    %v4788 = vlaneseq
    %v4789 = vshrl.u32 %v4788, 7
    %v4790 = vsub.s32 1, %v4789
    %v4791 = vrot.slane %v3218, %v4790
    %v4792 = vlaneseq
    %v4793 = vshrl.u32 %v4792, 7
    %v4794 = vsub.s32 1, %v4793
    %v4795 = vrot.slane %v3219, %v4794
    %v4796 = vlaneseq
    %v4797 = vshrl.u32 %v4796, 7
    %v4798 = vsub.s32 1, %v4797
    %v4799 = vrot.slane %v3220, %v4798
    %v4800 = vlaneseq
    %v4801 = vshrl.u32 %v4800, 7
    %v4802 = vsub.s32 1, %v4801
    %v4803 = vrot.slane %v3221, %v4802
    %4805 = vset.pattern.permute.xlu0 0
    %4806 = vperm.xlu0 %4805, %v4779
    %v4807 = vpop.permute.xlu0 %4806
    %v4809 = vmul.f32 %v4783, %v4807
    %v4810 = vmul.f32 %v4787, %v4807
    %v4811 = vmul.f32 %v4791, %v4807
    %v4812 = vmul.f32 %v4795, %v4807
    %v4813 = vmul.f32 %v4799, %v4807
    %v4814 = vmul.f32 %v4803, %v4807
    %v4815 = vadd.f32 %v4772, %v4809
    %v4816 = vadd.f32 %v4773, %v4810
    %v4817 = vadd.f32 %v4774, %v4811
    %v4818 = vadd.f32 %v4775, %v4812
    %v4819 = vadd.f32 %v4776, %v4813
    %v4820 = vadd.f32 %v4777, %v4814
    %s4821 = scalar_lea.vmem [#allocation16], 272
    %v4822 = vld [vmem:[%s4821] sm:$0x3f]
    %v4823 = vlaneseq
    %v4824 = vshrl.u32 %v4823, 7
    %v4825 = vsub.s32 2, %v4824
    %v4826 = vrot.slane %v3216, %v4825
    %v4827 = vlaneseq
    %v4828 = vshrl.u32 %v4827, 7
    %v4829 = vsub.s32 2, %v4828
    %v4830 = vrot.slane %v3217, %v4829
    %v4831 = vlaneseq
    %v4832 = vshrl.u32 %v4831, 7
    %v4833 = vsub.s32 2, %v4832
    %v4834 = vrot.slane %v3218, %v4833
    %v4835 = vlaneseq
    %v4836 = vshrl.u32 %v4835, 7
    %v4837 = vsub.s32 2, %v4836
    %v4838 = vrot.slane %v3219, %v4837
    %v4839 = vlaneseq
    %v4840 = vshrl.u32 %v4839, 7
    %v4841 = vsub.s32 2, %v4840
    %v4842 = vrot.slane %v3220, %v4841
    %v4843 = vlaneseq
    %v4844 = vshrl.u32 %v4843, 7
    %v4845 = vsub.s32 2, %v4844
    %v4846 = vrot.slane %v3221, %v4845
    %4848 = vset.pattern.permute.xlu0 0
    %4849 = vperm.xlu0 %4848, %v4822
    %v4850 = vpop.permute.xlu0 %4849
    %v4852 = vmul.f32 %v4826, %v4850
    %v4853 = vmul.f32 %v4830, %v4850
    %v4854 = vmul.f32 %v4834, %v4850
    %v4855 = vmul.f32 %v4838, %v4850
    %v4856 = vmul.f32 %v4842, %v4850
    %v4857 = vmul.f32 %v4846, %v4850
    %v4858 = vadd.f32 %v4815, %v4852
    %v4859 = vadd.f32 %v4816, %v4853
    %v4860 = vadd.f32 %v4817, %v4854
    %v4861 = vadd.f32 %v4818, %v4855
    %v4862 = vadd.f32 %v4819, %v4856
    %v4863 = vadd.f32 %v4820, %v4857
    %s4864 = scalar_lea.vmem [#allocation16], 280
    %v4865 = vld [vmem:[%s4864] sm:$0x3f]
    %v4866 = vlaneseq
    %v4867 = vshrl.u32 %v4866, 7
    %v4868 = vsub.s32 3, %v4867
    %v4869 = vrot.slane %v3216, %v4868
    %v4870 = vlaneseq
    %v4871 = vshrl.u32 %v4870, 7
    %v4872 = vsub.s32 3, %v4871
    %v4873 = vrot.slane %v3217, %v4872
    %v4874 = vlaneseq
    %v4875 = vshrl.u32 %v4874, 7
    %v4876 = vsub.s32 3, %v4875
    %v4877 = vrot.slane %v3218, %v4876
    %v4878 = vlaneseq
    %v4879 = vshrl.u32 %v4878, 7
    %v4880 = vsub.s32 3, %v4879
    %v4881 = vrot.slane %v3219, %v4880
    %v4882 = vlaneseq
    %v4883 = vshrl.u32 %v4882, 7
    %v4884 = vsub.s32 3, %v4883
    %v4885 = vrot.slane %v3220, %v4884
    %v4886 = vlaneseq
    %v4887 = vshrl.u32 %v4886, 7
    %v4888 = vsub.s32 3, %v4887
    %v4889 = vrot.slane %v3221, %v4888
    %4891 = vset.pattern.permute.xlu0 0
    %4892 = vperm.xlu0 %4891, %v4865
    %v4893 = vpop.permute.xlu0 %4892
    %v4895 = vmul.f32 %v4869, %v4893
    %v4896 = vmul.f32 %v4873, %v4893
    %v4897 = vmul.f32 %v4877, %v4893
    %v4898 = vmul.f32 %v4881, %v4893
    %v4899 = vmul.f32 %v4885, %v4893
    %v4900 = vmul.f32 %v4889, %v4893
    %v4901 = vadd.f32 %v4858, %v4895
    %v4902 = vadd.f32 %v4859, %v4896
    %v4903 = vadd.f32 %v4860, %v4897
    %v4904 = vadd.f32 %v4861, %v4898
    %v4905 = vadd.f32 %v4862, %v4899
    %v4906 = vadd.f32 %v4863, %v4900
    %s4907 = scalar_lea.vmem [#allocation16], 288
    %v4908 = vld [vmem:[%s4907] sm:$0x3f]
    %v4909 = vlaneseq
    %v4910 = vshrl.u32 %v4909, 7
    %v4911 = vsub.s32 4, %v4910
    %v4912 = vrot.slane %v3216, %v4911
    %v4913 = vlaneseq
    %v4914 = vshrl.u32 %v4913, 7
    %v4915 = vsub.s32 4, %v4914
    %v4916 = vrot.slane %v3217, %v4915
    %v4917 = vlaneseq
    %v4918 = vshrl.u32 %v4917, 7
    %v4919 = vsub.s32 4, %v4918
    %v4920 = vrot.slane %v3218, %v4919
    %v4921 = vlaneseq
    %v4922 = vshrl.u32 %v4921, 7
    %v4923 = vsub.s32 4, %v4922
    %v4924 = vrot.slane %v3219, %v4923
    %v4925 = vlaneseq
    %v4926 = vshrl.u32 %v4925, 7
    %v4927 = vsub.s32 4, %v4926
    %v4928 = vrot.slane %v3220, %v4927
    %v4929 = vlaneseq
    %v4930 = vshrl.u32 %v4929, 7
    %v4931 = vsub.s32 4, %v4930
    %v4932 = vrot.slane %v3221, %v4931
    %4934 = vset.pattern.permute.xlu0 0
    %4935 = vperm.xlu0 %4934, %v4908
    %v4936 = vpop.permute.xlu0 %4935
    %v4938 = vmul.f32 %v4912, %v4936
    %v4939 = vmul.f32 %v4916, %v4936
    %v4940 = vmul.f32 %v4920, %v4936
    %v4941 = vmul.f32 %v4924, %v4936
    %v4942 = vmul.f32 %v4928, %v4936
    %v4943 = vmul.f32 %v4932, %v4936
    %v4944 = vadd.f32 %v4901, %v4938
    %v4945 = vadd.f32 %v4902, %v4939
    %v4946 = vadd.f32 %v4903, %v4940
    %v4947 = vadd.f32 %v4904, %v4941
    %v4948 = vadd.f32 %v4905, %v4942
    %v4949 = vadd.f32 %v4906, %v4943
    %s4950 = scalar_lea.vmem [#allocation16], 296
    %v4951 = vld [vmem:[%s4950] sm:$0x3f]
    %v4952 = vlaneseq
    %v4953 = vshrl.u32 %v4952, 7
    %v4954 = vsub.s32 5, %v4953
    %v4955 = vrot.slane %v3216, %v4954
    %v4956 = vlaneseq
    %v4957 = vshrl.u32 %v4956, 7
    %v4958 = vsub.s32 5, %v4957
    %v4959 = vrot.slane %v3217, %v4958
    %v4960 = vlaneseq
    %v4961 = vshrl.u32 %v4960, 7
    %v4962 = vsub.s32 5, %v4961
    %v4963 = vrot.slane %v3218, %v4962
    %v4964 = vlaneseq
    %v4965 = vshrl.u32 %v4964, 7
    %v4966 = vsub.s32 5, %v4965
    %v4967 = vrot.slane %v3219, %v4966
    %v4968 = vlaneseq
    %v4969 = vshrl.u32 %v4968, 7
    %v4970 = vsub.s32 5, %v4969
    %v4971 = vrot.slane %v3220, %v4970
    %v4972 = vlaneseq
    %v4973 = vshrl.u32 %v4972, 7
    %v4974 = vsub.s32 5, %v4973
    %v4975 = vrot.slane %v3221, %v4974
    %4977 = vset.pattern.permute.xlu0 0
    %4978 = vperm.xlu0 %4977, %v4951
    %v4979 = vpop.permute.xlu0 %4978
    %v4981 = vmul.f32 %v4955, %v4979
    %v4982 = vmul.f32 %v4959, %v4979
    %v4983 = vmul.f32 %v4963, %v4979
    %v4984 = vmul.f32 %v4967, %v4979
    %v4985 = vmul.f32 %v4971, %v4979
    %v4986 = vmul.f32 %v4975, %v4979
    %v4987 = vadd.f32 %v4944, %v4981
    %v4988 = vadd.f32 %v4945, %v4982
    %v4989 = vadd.f32 %v4946, %v4983
    %v4990 = vadd.f32 %v4947, %v4984
    %v4991 = vadd.f32 %v4948, %v4985
    %v4992 = vadd.f32 %v4949, %v4986
    %s4993 = scalar_lea.vmem [#allocation16], 304
    %v4994 = vld [vmem:[%s4993] sm:$0x3f]
    %v4995 = vlaneseq
    %v4996 = vshrl.u32 %v4995, 7
    %v4997 = vsub.s32 6, %v4996
    %v4998 = vrot.slane %v3216, %v4997
    %v4999 = vlaneseq
    %v5000 = vshrl.u32 %v4999, 7
    %v5001 = vsub.s32 6, %v5000
    %v5002 = vrot.slane %v3217, %v5001
    %v5003 = vlaneseq
    %v5004 = vshrl.u32 %v5003, 7
    %v5005 = vsub.s32 6, %v5004
    %v5006 = vrot.slane %v3218, %v5005
    %v5007 = vlaneseq
    %v5008 = vshrl.u32 %v5007, 7
    %v5009 = vsub.s32 6, %v5008
    %v5010 = vrot.slane %v3219, %v5009
    %v5011 = vlaneseq
    %v5012 = vshrl.u32 %v5011, 7
    %v5013 = vsub.s32 6, %v5012
    %v5014 = vrot.slane %v3220, %v5013
    %v5015 = vlaneseq
    %v5016 = vshrl.u32 %v5015, 7
    %v5017 = vsub.s32 6, %v5016
    %v5018 = vrot.slane %v3221, %v5017
    %5020 = vset.pattern.permute.xlu0 0
    %5021 = vperm.xlu0 %5020, %v4994
    %v5022 = vpop.permute.xlu0 %5021
    %v5024 = vmul.f32 %v4998, %v5022
    %v5025 = vmul.f32 %v5002, %v5022
    %v5026 = vmul.f32 %v5006, %v5022
    %v5027 = vmul.f32 %v5010, %v5022
    %v5028 = vmul.f32 %v5014, %v5022
    %v5029 = vmul.f32 %v5018, %v5022
    %v5030 = vadd.f32 %v4987, %v5024
    %v5031 = vadd.f32 %v4988, %v5025
    %v5032 = vadd.f32 %v4989, %v5026
    %v5033 = vadd.f32 %v4990, %v5027
    %v5034 = vadd.f32 %v4991, %v5028
    %v5035 = vadd.f32 %v4992, %v5029
    %s5036 = scalar_lea.vmem [#allocation16], 312
    %v5037 = vld [vmem:[%s5036] sm:$0x3f]
    %v5038 = vlaneseq
    %v5039 = vshrl.u32 %v5038, 7
    %v5040 = vsub.s32 7, %v5039
    %v5041 = vrot.slane %v3216, %v5040
    %v5042 = vlaneseq
    %v5043 = vshrl.u32 %v5042, 7
    %v5044 = vsub.s32 7, %v5043
    %v5045 = vrot.slane %v3217, %v5044
    %v5046 = vlaneseq
    %v5047 = vshrl.u32 %v5046, 7
    %v5048 = vsub.s32 7, %v5047
    %v5049 = vrot.slane %v3218, %v5048
    %v5050 = vlaneseq
    %v5051 = vshrl.u32 %v5050, 7
    %v5052 = vsub.s32 7, %v5051
    %v5053 = vrot.slane %v3219, %v5052
    %v5054 = vlaneseq
    %v5055 = vshrl.u32 %v5054, 7
    %v5056 = vsub.s32 7, %v5055
    %v5057 = vrot.slane %v3220, %v5056
    %v5058 = vlaneseq
    %v5059 = vshrl.u32 %v5058, 7
    %v5060 = vsub.s32 7, %v5059
    %v5061 = vrot.slane %v3221, %v5060
    %5063 = vset.pattern.permute.xlu0 0
    %5064 = vperm.xlu0 %5063, %v5037
    %v5065 = vpop.permute.xlu0 %5064
    %v5067 = vmul.f32 %v5041, %v5065
    %v5068 = vmul.f32 %v5045, %v5065
    %v5069 = vmul.f32 %v5049, %v5065
    %v5070 = vmul.f32 %v5053, %v5065
    %v5071 = vmul.f32 %v5057, %v5065
    %v5072 = vmul.f32 %v5061, %v5065
    %v5073 = vadd.f32 %v5030, %v5067
    %v5074 = vadd.f32 %v5031, %v5068
    %v5075 = vadd.f32 %v5032, %v5069
    %v5076 = vadd.f32 %v5033, %v5070
    %v5077 = vadd.f32 %v5034, %v5071
    %v5078 = vadd.f32 %v5035, %v5072
    %s5079 = scalar_lea.vmem [#allocation16], 320
    %v5080 = vld [vmem:[%s5079] sm:$0x3f]
    %v5081 = vlaneseq
    %v5082 = vshrl.u32 %v5081, 7
    %v5083 = vsub.s32 0, %v5082
    %v5084 = vrot.slane %v3308, %v5083
    %v5085 = vlaneseq
    %v5086 = vshrl.u32 %v5085, 7
    %v5087 = vsub.s32 0, %v5086
    %v5088 = vrot.slane %v3306, %v5087
    %v5089 = vlaneseq
    %v5090 = vshrl.u32 %v5089, 7
    %v5091 = vsub.s32 0, %v5090
    %v5092 = vrot.slane %v3310, %v5091
    %v5093 = vlaneseq
    %v5094 = vshrl.u32 %v5093, 7
    %v5095 = vsub.s32 0, %v5094
    %v5096 = vrot.slane %v3309, %v5095
    %v5097 = vlaneseq
    %v5098 = vshrl.u32 %v5097, 7
    %v5099 = vsub.s32 0, %v5098
    %v5100 = vrot.slane %v3307, %v5099
    %v5101 = vlaneseq
    %v5102 = vshrl.u32 %v5101, 7
    %v5103 = vsub.s32 0, %v5102
    %v5104 = vrot.slane %v3311, %v5103
    %5106 = vset.pattern.permute.xlu0 0
    %5107 = vperm.xlu0 %5106, %v5080
    %v5108 = vpop.permute.xlu0 %5107
    %v5110 = vmul.f32 %v5084, %v5108
    %v5111 = vmul.f32 %v5088, %v5108
    %v5112 = vmul.f32 %v5092, %v5108
    %v5113 = vmul.f32 %v5096, %v5108
    %v5114 = vmul.f32 %v5100, %v5108
    %v5115 = vmul.f32 %v5104, %v5108
    %v5116 = vadd.f32 %v5073, %v5110
    %v5117 = vadd.f32 %v5074, %v5111
    %v5118 = vadd.f32 %v5075, %v5112
    %v5119 = vadd.f32 %v5076, %v5113
    %v5120 = vadd.f32 %v5077, %v5114
    %v5121 = vadd.f32 %v5078, %v5115
    %s5122 = scalar_lea.vmem [#allocation16], 328
    %v5123 = vld [vmem:[%s5122] sm:$0x3f]
    %v5124 = vlaneseq
    %v5125 = vshrl.u32 %v5124, 7
    %v5126 = vsub.s32 1, %v5125
    %v5127 = vrot.slane %v3308, %v5126
    %v5128 = vlaneseq
    %v5129 = vshrl.u32 %v5128, 7
    %v5130 = vsub.s32 1, %v5129
    %v5131 = vrot.slane %v3306, %v5130
    %v5132 = vlaneseq
    %v5133 = vshrl.u32 %v5132, 7
    %v5134 = vsub.s32 1, %v5133
    %v5135 = vrot.slane %v3310, %v5134
    %v5136 = vlaneseq
    %v5137 = vshrl.u32 %v5136, 7
    %v5138 = vsub.s32 1, %v5137
    %v5139 = vrot.slane %v3309, %v5138
    %v5140 = vlaneseq
    %v5141 = vshrl.u32 %v5140, 7
    %v5142 = vsub.s32 1, %v5141
    %v5143 = vrot.slane %v3307, %v5142
    %v5144 = vlaneseq
    %v5145 = vshrl.u32 %v5144, 7
    %v5146 = vsub.s32 1, %v5145
    %v5147 = vrot.slane %v3311, %v5146
    %5149 = vset.pattern.permute.xlu0 0
    %5150 = vperm.xlu0 %5149, %v5123
    %v5151 = vpop.permute.xlu0 %5150
    %v5153 = vmul.f32 %v5127, %v5151
    %v5154 = vmul.f32 %v5131, %v5151
    %v5155 = vmul.f32 %v5135, %v5151
    %v5156 = vmul.f32 %v5139, %v5151
    %v5157 = vmul.f32 %v5143, %v5151
    %v5158 = vmul.f32 %v5147, %v5151
    %v5159 = vadd.f32 %v5116, %v5153
    %v5160 = vadd.f32 %v5117, %v5154
    %v5161 = vadd.f32 %v5118, %v5155
    %v5162 = vadd.f32 %v5119, %v5156
    %v5163 = vadd.f32 %v5120, %v5157
    %v5164 = vadd.f32 %v5121, %v5158
    %s5165 = scalar_lea.vmem [#allocation16], 336
    %v5166 = vld [vmem:[%s5165] sm:$0x3f]
    %v5167 = vlaneseq
    %v5168 = vshrl.u32 %v5167, 7
    %v5169 = vsub.s32 2, %v5168
    %v5170 = vrot.slane %v3308, %v5169
    %v5171 = vlaneseq
    %v5172 = vshrl.u32 %v5171, 7
    %v5173 = vsub.s32 2, %v5172
    %v5174 = vrot.slane %v3306, %v5173
    %v5175 = vlaneseq
    %v5176 = vshrl.u32 %v5175, 7
    %v5177 = vsub.s32 2, %v5176
    %v5178 = vrot.slane %v3310, %v5177
    %v5179 = vlaneseq
    %v5180 = vshrl.u32 %v5179, 7
    %v5181 = vsub.s32 2, %v5180
    %v5182 = vrot.slane %v3309, %v5181
    %v5183 = vlaneseq
    %v5184 = vshrl.u32 %v5183, 7
    %v5185 = vsub.s32 2, %v5184
    %v5186 = vrot.slane %v3307, %v5185
    %v5187 = vlaneseq
    %v5188 = vshrl.u32 %v5187, 7
    %v5189 = vsub.s32 2, %v5188
    %v5190 = vrot.slane %v3311, %v5189
    %5192 = vset.pattern.permute.xlu0 0
    %5193 = vperm.xlu0 %5192, %v5166
    %v5194 = vpop.permute.xlu0 %5193
    %v5196 = vmul.f32 %v5170, %v5194
    %v5197 = vmul.f32 %v5174, %v5194
    %v5198 = vmul.f32 %v5178, %v5194
    %v5199 = vmul.f32 %v5182, %v5194
    %v5200 = vmul.f32 %v5186, %v5194
    %v5201 = vmul.f32 %v5190, %v5194
    %v5202 = vadd.f32 %v5159, %v5196
    %v5203 = vadd.f32 %v5160, %v5197
    %v5204 = vadd.f32 %v5161, %v5198
    %v5205 = vadd.f32 %v5162, %v5199
    %v5206 = vadd.f32 %v5163, %v5200
    %v5207 = vadd.f32 %v5164, %v5201
    %s5208 = scalar_lea.vmem [#allocation16], 344
    %v5209 = vld [vmem:[%s5208] sm:$0x3f]
    %v5210 = vlaneseq
    %v5211 = vshrl.u32 %v5210, 7
    %v5212 = vsub.s32 3, %v5211
    %v5213 = vrot.slane %v3308, %v5212
    %v5214 = vlaneseq
    %v5215 = vshrl.u32 %v5214, 7
    %v5216 = vsub.s32 3, %v5215
    %v5217 = vrot.slane %v3306, %v5216
    %v5218 = vlaneseq
    %v5219 = vshrl.u32 %v5218, 7
    %v5220 = vsub.s32 3, %v5219
    %v5221 = vrot.slane %v3310, %v5220
    %v5222 = vlaneseq
    %v5223 = vshrl.u32 %v5222, 7
    %v5224 = vsub.s32 3, %v5223
    %v5225 = vrot.slane %v3309, %v5224
    %v5226 = vlaneseq
    %v5227 = vshrl.u32 %v5226, 7
    %v5228 = vsub.s32 3, %v5227
    %v5229 = vrot.slane %v3307, %v5228
    %v5230 = vlaneseq
    %v5231 = vshrl.u32 %v5230, 7
    %v5232 = vsub.s32 3, %v5231
    %v5233 = vrot.slane %v3311, %v5232
    %5235 = vset.pattern.permute.xlu0 0
    %5236 = vperm.xlu0 %5235, %v5209
    %v5237 = vpop.permute.xlu0 %5236
    %v5239 = vmul.f32 %v5213, %v5237
    %v5240 = vmul.f32 %v5217, %v5237
    %v5241 = vmul.f32 %v5221, %v5237
    %v5242 = vmul.f32 %v5225, %v5237
    %v5243 = vmul.f32 %v5229, %v5237
    %v5244 = vmul.f32 %v5233, %v5237
    %v5245 = vadd.f32 %v5202, %v5239
    %v5246 = vadd.f32 %v5203, %v5240
    %v5247 = vadd.f32 %v5204, %v5241
    %v5248 = vadd.f32 %v5205, %v5242
    %v5249 = vadd.f32 %v5206, %v5243
    %v5250 = vadd.f32 %v5207, %v5244
    %s5251 = scalar_lea.vmem [#allocation16], 352
    %v5252 = vld [vmem:[%s5251] sm:$0x3f]
    %v5253 = vlaneseq
    %v5254 = vshrl.u32 %v5253, 7
    %v5255 = vsub.s32 4, %v5254
    %v5256 = vrot.slane %v3308, %v5255
    %v5257 = vlaneseq
    %v5258 = vshrl.u32 %v5257, 7
    %v5259 = vsub.s32 4, %v5258
    %v5260 = vrot.slane %v3306, %v5259
    %v5261 = vlaneseq
    %v5262 = vshrl.u32 %v5261, 7
    %v5263 = vsub.s32 4, %v5262
    %v5264 = vrot.slane %v3310, %v5263
    %v5265 = vlaneseq
    %v5266 = vshrl.u32 %v5265, 7
    %v5267 = vsub.s32 4, %v5266
    %v5268 = vrot.slane %v3309, %v5267
    %v5269 = vlaneseq
    %v5270 = vshrl.u32 %v5269, 7
    %v5271 = vsub.s32 4, %v5270
    %v5272 = vrot.slane %v3307, %v5271
    %v5273 = vlaneseq
    %v5274 = vshrl.u32 %v5273, 7
    %v5275 = vsub.s32 4, %v5274
    %v5276 = vrot.slane %v3311, %v5275
    %5278 = vset.pattern.permute.xlu0 0
    %5279 = vperm.xlu0 %5278, %v5252
    %v5280 = vpop.permute.xlu0 %5279
    %v5282 = vmul.f32 %v5256, %v5280
    %v5283 = vmul.f32 %v5260, %v5280
    %v5284 = vmul.f32 %v5264, %v5280
    %v5285 = vmul.f32 %v5268, %v5280
    %v5286 = vmul.f32 %v5272, %v5280
    %v5287 = vmul.f32 %v5276, %v5280
    %v5288 = vadd.f32 %v5245, %v5282
    %v5289 = vadd.f32 %v5246, %v5283
    %v5290 = vadd.f32 %v5247, %v5284
    %v5291 = vadd.f32 %v5248, %v5285
    %v5292 = vadd.f32 %v5249, %v5286
    %v5293 = vadd.f32 %v5250, %v5287
    %s5294 = scalar_lea.vmem [#allocation16], 360
    %v5295 = vld [vmem:[%s5294] sm:$0x3f]
    %v5296 = vlaneseq
    %v5297 = vshrl.u32 %v5296, 7
    %v5298 = vsub.s32 5, %v5297
    %v5299 = vrot.slane %v3308, %v5298
    %v5300 = vlaneseq
    %v5301 = vshrl.u32 %v5300, 7
    %v5302 = vsub.s32 5, %v5301
    %v5303 = vrot.slane %v3306, %v5302
    %v5304 = vlaneseq
    %v5305 = vshrl.u32 %v5304, 7
    %v5306 = vsub.s32 5, %v5305
    %v5307 = vrot.slane %v3310, %v5306
    %v5308 = vlaneseq
    %v5309 = vshrl.u32 %v5308, 7
    %v5310 = vsub.s32 5, %v5309
    %v5311 = vrot.slane %v3309, %v5310
    %v5312 = vlaneseq
    %v5313 = vshrl.u32 %v5312, 7
    %v5314 = vsub.s32 5, %v5313
    %v5315 = vrot.slane %v3307, %v5314
    %v5316 = vlaneseq
    %v5317 = vshrl.u32 %v5316, 7
    %v5318 = vsub.s32 5, %v5317
    %v5319 = vrot.slane %v3311, %v5318
    %5321 = vset.pattern.permute.xlu0 0
    %5322 = vperm.xlu0 %5321, %v5295
    %v5323 = vpop.permute.xlu0 %5322
    %v5325 = vmul.f32 %v5299, %v5323
    %v5326 = vmul.f32 %v5303, %v5323
    %v5327 = vmul.f32 %v5307, %v5323
    %v5328 = vmul.f32 %v5311, %v5323
    %v5329 = vmul.f32 %v5315, %v5323
    %v5330 = vmul.f32 %v5319, %v5323
    %v5331 = vadd.f32 %v5288, %v5325
    %v5332 = vadd.f32 %v5289, %v5326
    %v5333 = vadd.f32 %v5290, %v5327
    %v5334 = vadd.f32 %v5291, %v5328
    %v5335 = vadd.f32 %v5292, %v5329
    %v5336 = vadd.f32 %v5293, %v5330
    %s5337 = scalar_lea.vmem [#allocation16], 368
    %v5338 = vld [vmem:[%s5337] sm:$0x3f]
    %v5339 = vlaneseq
    %v5340 = vshrl.u32 %v5339, 7
    %v5341 = vsub.s32 6, %v5340
    %v5342 = vrot.slane %v3308, %v5341
    %v5343 = vlaneseq
    %v5344 = vshrl.u32 %v5343, 7
    %v5345 = vsub.s32 6, %v5344
    %v5346 = vrot.slane %v3306, %v5345
    %v5347 = vlaneseq
    %v5348 = vshrl.u32 %v5347, 7
    %v5349 = vsub.s32 6, %v5348
    %v5350 = vrot.slane %v3310, %v5349
    %v5351 = vlaneseq
    %v5352 = vshrl.u32 %v5351, 7
    %v5353 = vsub.s32 6, %v5352
    %v5354 = vrot.slane %v3309, %v5353
    %v5355 = vlaneseq
    %v5356 = vshrl.u32 %v5355, 7
    %v5357 = vsub.s32 6, %v5356
    %v5358 = vrot.slane %v3307, %v5357
    %v5359 = vlaneseq
    %v5360 = vshrl.u32 %v5359, 7
    %v5361 = vsub.s32 6, %v5360
    %v5362 = vrot.slane %v3311, %v5361
    %5364 = vset.pattern.permute.xlu0 0
    %5365 = vperm.xlu0 %5364, %v5338
    %v5366 = vpop.permute.xlu0 %5365
    %v5368 = vmul.f32 %v5342, %v5366
    %v5369 = vmul.f32 %v5346, %v5366
    %v5370 = vmul.f32 %v5350, %v5366
    %v5371 = vmul.f32 %v5354, %v5366
    %v5372 = vmul.f32 %v5358, %v5366
    %v5373 = vmul.f32 %v5362, %v5366
    %v5374 = vadd.f32 %v5331, %v5368
    %v5375 = vadd.f32 %v5332, %v5369
    %v5376 = vadd.f32 %v5333, %v5370
    %v5377 = vadd.f32 %v5334, %v5371
    %v5378 = vadd.f32 %v5335, %v5372
    %v5379 = vadd.f32 %v5336, %v5373
    %s5380 = scalar_lea.vmem [#allocation16], 376
    %v5381 = vld [vmem:[%s5380] sm:$0x3f]
    %v5382 = vlaneseq
    %v5383 = vshrl.u32 %v5382, 7
    %v5384 = vsub.s32 7, %v5383
    %v5385 = vrot.slane %v3308, %v5384
    %v5386 = vlaneseq
    %v5387 = vshrl.u32 %v5386, 7
    %v5388 = vsub.s32 7, %v5387
    %v5389 = vrot.slane %v3306, %v5388
    %v5390 = vlaneseq
    %v5391 = vshrl.u32 %v5390, 7
    %v5392 = vsub.s32 7, %v5391
    %v5393 = vrot.slane %v3310, %v5392
    %v5394 = vlaneseq
    %v5395 = vshrl.u32 %v5394, 7
    %v5396 = vsub.s32 7, %v5395
    %v5397 = vrot.slane %v3309, %v5396
    %v5398 = vlaneseq
    %v5399 = vshrl.u32 %v5398, 7
    %v5400 = vsub.s32 7, %v5399
    %v5401 = vrot.slane %v3307, %v5400
    %v5402 = vlaneseq
    %v5403 = vshrl.u32 %v5402, 7
    %v5404 = vsub.s32 7, %v5403
    %v5405 = vrot.slane %v3311, %v5404
    %5407 = vset.pattern.permute.xlu0 0
    %5408 = vperm.xlu0 %5407, %v5381
    %v5409 = vpop.permute.xlu0 %5408
    %v5411 = vmul.f32 %v5385, %v5409
    %v5412 = vmul.f32 %v5389, %v5409
    %v5413 = vmul.f32 %v5393, %v5409
    %v5414 = vmul.f32 %v5397, %v5409
    %v5415 = vmul.f32 %v5401, %v5409
    %v5416 = vmul.f32 %v5405, %v5409
    %v5417 = vadd.f32 %v5374, %v5411
    %v5418 = vadd.f32 %v5375, %v5412
    %v5419 = vadd.f32 %v5376, %v5413
    %v5420 = vadd.f32 %v5377, %v5414
    %v5421 = vadd.f32 %v5378, %v5415
    %v5422 = vadd.f32 %v5379, %v5416
    %s5423 = scalar_lea.vmem [#allocation16], 384
    %v5424 = vld [vmem:[%s5423] sm:$0x3f]
    %v5425 = vlaneseq
    %v5426 = vshrl.u32 %v5425, 7
    %v5427 = vsub.s32 0, %v5426
    %v5428 = vrot.slane %v3326, %v5427
    %v5429 = vlaneseq
    %v5430 = vshrl.u32 %v5429, 7
    %v5431 = vsub.s32 0, %v5430
    %v5432 = vrot.slane %v3324, %v5431
    %v5433 = vlaneseq
    %v5434 = vshrl.u32 %v5433, 7
    %v5435 = vsub.s32 0, %v5434
    %v5436 = vrot.slane %v3328, %v5435
    %v5437 = vlaneseq
    %v5438 = vshrl.u32 %v5437, 7
    %v5439 = vsub.s32 0, %v5438
    %v5440 = vrot.slane %v3327, %v5439
    %v5441 = vlaneseq
    %v5442 = vshrl.u32 %v5441, 7
    %v5443 = vsub.s32 0, %v5442
    %v5444 = vrot.slane %v3325, %v5443
    %v5445 = vlaneseq
    %v5446 = vshrl.u32 %v5445, 7
    %v5447 = vsub.s32 0, %v5446
    %v5448 = vrot.slane %v3329, %v5447
    %5450 = vset.pattern.permute.xlu0 0
    %5451 = vperm.xlu0 %5450, %v5424
    %v5452 = vpop.permute.xlu0 %5451
    %v5454 = vmul.f32 %v5428, %v5452
    %v5455 = vmul.f32 %v5432, %v5452
    %v5456 = vmul.f32 %v5436, %v5452
    %v5457 = vmul.f32 %v5440, %v5452
    %v5458 = vmul.f32 %v5444, %v5452
    %v5459 = vmul.f32 %v5448, %v5452
    %v5460 = vadd.f32 %v5417, %v5454
    %v5461 = vadd.f32 %v5418, %v5455
    %v5462 = vadd.f32 %v5419, %v5456
    %v5463 = vadd.f32 %v5420, %v5457
    %v5464 = vadd.f32 %v5421, %v5458
    %v5465 = vadd.f32 %v5422, %v5459
    %s5466 = scalar_lea.vmem [#allocation16], 392
    %v5467 = vld [vmem:[%s5466] sm:$0x3f]
    %v5468 = vlaneseq
    %v5469 = vshrl.u32 %v5468, 7
    %v5470 = vsub.s32 1, %v5469
    %v5471 = vrot.slane %v3326, %v5470
    %v5472 = vlaneseq
    %v5473 = vshrl.u32 %v5472, 7
    %v5474 = vsub.s32 1, %v5473
    %v5475 = vrot.slane %v3324, %v5474
    %v5476 = vlaneseq
    %v5477 = vshrl.u32 %v5476, 7
    %v5478 = vsub.s32 1, %v5477
    %v5479 = vrot.slane %v3328, %v5478
    %v5480 = vlaneseq
    %v5481 = vshrl.u32 %v5480, 7
    %v5482 = vsub.s32 1, %v5481
    %v5483 = vrot.slane %v3327, %v5482
    %v5484 = vlaneseq
    %v5485 = vshrl.u32 %v5484, 7
    %v5486 = vsub.s32 1, %v5485
    %v5487 = vrot.slane %v3325, %v5486
    %v5488 = vlaneseq
    %v5489 = vshrl.u32 %v5488, 7
    %v5490 = vsub.s32 1, %v5489
    %v5491 = vrot.slane %v3329, %v5490
    %5493 = vset.pattern.permute.xlu0 0
    %5494 = vperm.xlu0 %5493, %v5467
    %v5495 = vpop.permute.xlu0 %5494
    %v5497 = vmul.f32 %v5471, %v5495
    %v5498 = vmul.f32 %v5475, %v5495
    %v5499 = vmul.f32 %v5479, %v5495
    %v5500 = vmul.f32 %v5483, %v5495
    %v5501 = vmul.f32 %v5487, %v5495
    %v5502 = vmul.f32 %v5491, %v5495
    %v5503 = vadd.f32 %v5460, %v5497
    %v5504 = vadd.f32 %v5461, %v5498
    %v5505 = vadd.f32 %v5462, %v5499
    %v5506 = vadd.f32 %v5463, %v5500
    %v5507 = vadd.f32 %v5464, %v5501
    %v5508 = vadd.f32 %v5465, %v5502
    %s5509 = scalar_lea.vmem [#allocation16], 400
    %v5510 = vld [vmem:[%s5509] sm:$0x3f]
    %v5511 = vlaneseq
    %v5512 = vshrl.u32 %v5511, 7
    %v5513 = vsub.s32 2, %v5512
    %v5514 = vrot.slane %v3326, %v5513
    %v5515 = vlaneseq
    %v5516 = vshrl.u32 %v5515, 7
    %v5517 = vsub.s32 2, %v5516
    %v5518 = vrot.slane %v3324, %v5517
    %v5519 = vlaneseq
    %v5520 = vshrl.u32 %v5519, 7
    %v5521 = vsub.s32 2, %v5520
    %v5522 = vrot.slane %v3328, %v5521
    %v5523 = vlaneseq
    %v5524 = vshrl.u32 %v5523, 7
    %v5525 = vsub.s32 2, %v5524
    %v5526 = vrot.slane %v3327, %v5525
    %v5527 = vlaneseq
    %v5528 = vshrl.u32 %v5527, 7
    %v5529 = vsub.s32 2, %v5528
    %v5530 = vrot.slane %v3325, %v5529
    %v5531 = vlaneseq
    %v5532 = vshrl.u32 %v5531, 7
    %v5533 = vsub.s32 2, %v5532
    %v5534 = vrot.slane %v3329, %v5533
    %5536 = vset.pattern.permute.xlu0 0
    %5537 = vperm.xlu0 %5536, %v5510
    %v5538 = vpop.permute.xlu0 %5537
    %v5540 = vmul.f32 %v5514, %v5538
    %v5541 = vmul.f32 %v5518, %v5538
    %v5542 = vmul.f32 %v5522, %v5538
    %v5543 = vmul.f32 %v5526, %v5538
    %v5544 = vmul.f32 %v5530, %v5538
    %v5545 = vmul.f32 %v5534, %v5538
    %v5546 = vadd.f32 %v5503, %v5540
    %v5547 = vadd.f32 %v5504, %v5541
    %v5548 = vadd.f32 %v5505, %v5542
    %v5549 = vadd.f32 %v5506, %v5543
    %v5550 = vadd.f32 %v5507, %v5544
    %v5551 = vadd.f32 %v5508, %v5545
    %s5552 = scalar_lea.vmem [#allocation16], 408
    %v5553 = vld [vmem:[%s5552] sm:$0x3f]
    %v5554 = vlaneseq
    %v5555 = vshrl.u32 %v5554, 7
    %v5556 = vsub.s32 3, %v5555
    %v5557 = vrot.slane %v3326, %v5556
    %v5558 = vlaneseq
    %v5559 = vshrl.u32 %v5558, 7
    %v5560 = vsub.s32 3, %v5559
    %v5561 = vrot.slane %v3324, %v5560
    %v5562 = vlaneseq
    %v5563 = vshrl.u32 %v5562, 7
    %v5564 = vsub.s32 3, %v5563
    %v5565 = vrot.slane %v3328, %v5564
    %v5566 = vlaneseq
    %v5567 = vshrl.u32 %v5566, 7
    %v5568 = vsub.s32 3, %v5567
    %v5569 = vrot.slane %v3327, %v5568
    %v5570 = vlaneseq
    %v5571 = vshrl.u32 %v5570, 7
    %v5572 = vsub.s32 3, %v5571
    %v5573 = vrot.slane %v3325, %v5572
    %v5574 = vlaneseq
    %v5575 = vshrl.u32 %v5574, 7
    %v5576 = vsub.s32 3, %v5575
    %v5577 = vrot.slane %v3329, %v5576
    %5579 = vset.pattern.permute.xlu0 0
    %5580 = vperm.xlu0 %5579, %v5553
    %v5581 = vpop.permute.xlu0 %5580
    %v5583 = vmul.f32 %v5557, %v5581
    %v5584 = vmul.f32 %v5561, %v5581
    %v5585 = vmul.f32 %v5565, %v5581
    %v5586 = vmul.f32 %v5569, %v5581
    %v5587 = vmul.f32 %v5573, %v5581
    %v5588 = vmul.f32 %v5577, %v5581
    %v5589 = vadd.f32 %v5546, %v5583
    %v5590 = vadd.f32 %v5547, %v5584
    %v5591 = vadd.f32 %v5548, %v5585
    %v5592 = vadd.f32 %v5549, %v5586
    %v5593 = vadd.f32 %v5550, %v5587
    %v5594 = vadd.f32 %v5551, %v5588
    %s5595 = scalar_lea.vmem [#allocation16], 416
    %v5596 = vld [vmem:[%s5595] sm:$0x3f]
    %v5597 = vlaneseq
    %v5598 = vshrl.u32 %v5597, 7
    %v5599 = vsub.s32 4, %v5598
    %v5600 = vrot.slane %v3326, %v5599
    %v5601 = vlaneseq
    %v5602 = vshrl.u32 %v5601, 7
    %v5603 = vsub.s32 4, %v5602
    %v5604 = vrot.slane %v3324, %v5603
    %v5605 = vlaneseq
    %v5606 = vshrl.u32 %v5605, 7
    %v5607 = vsub.s32 4, %v5606
    %v5608 = vrot.slane %v3328, %v5607
    %v5609 = vlaneseq
    %v5610 = vshrl.u32 %v5609, 7
    %v5611 = vsub.s32 4, %v5610
    %v5612 = vrot.slane %v3327, %v5611
    %v5613 = vlaneseq
    %v5614 = vshrl.u32 %v5613, 7
    %v5615 = vsub.s32 4, %v5614
    %v5616 = vrot.slane %v3325, %v5615
    %v5617 = vlaneseq
    %v5618 = vshrl.u32 %v5617, 7
    %v5619 = vsub.s32 4, %v5618
    %v5620 = vrot.slane %v3329, %v5619
    %5622 = vset.pattern.permute.xlu0 0
    %5623 = vperm.xlu0 %5622, %v5596
    %v5624 = vpop.permute.xlu0 %5623
    %v5626 = vmul.f32 %v5600, %v5624
    %v5627 = vmul.f32 %v5604, %v5624
    %v5628 = vmul.f32 %v5608, %v5624
    %v5629 = vmul.f32 %v5612, %v5624
    %v5630 = vmul.f32 %v5616, %v5624
    %v5631 = vmul.f32 %v5620, %v5624
    %v5632 = vadd.f32 %v5589, %v5626
    %v5633 = vadd.f32 %v5590, %v5627
    %v5634 = vadd.f32 %v5591, %v5628
    %v5635 = vadd.f32 %v5592, %v5629
    %v5636 = vadd.f32 %v5593, %v5630
    %v5637 = vadd.f32 %v5594, %v5631
    %s5638 = scalar_lea.vmem [#allocation16], 424
    %v5639 = vld [vmem:[%s5638] sm:$0x3f]
    %v5640 = vlaneseq
    %v5641 = vshrl.u32 %v5640, 7
    %v5642 = vsub.s32 5, %v5641
    %v5643 = vrot.slane %v3326, %v5642
    %v5644 = vlaneseq
    %v5645 = vshrl.u32 %v5644, 7
    %v5646 = vsub.s32 5, %v5645
    %v5647 = vrot.slane %v3324, %v5646
    %v5648 = vlaneseq
    %v5649 = vshrl.u32 %v5648, 7
    %v5650 = vsub.s32 5, %v5649
    %v5651 = vrot.slane %v3328, %v5650
    %v5652 = vlaneseq
    %v5653 = vshrl.u32 %v5652, 7
    %v5654 = vsub.s32 5, %v5653
    %v5655 = vrot.slane %v3327, %v5654
    %v5656 = vlaneseq
    %v5657 = vshrl.u32 %v5656, 7
    %v5658 = vsub.s32 5, %v5657
    %v5659 = vrot.slane %v3325, %v5658
    %v5660 = vlaneseq
    %v5661 = vshrl.u32 %v5660, 7
    %v5662 = vsub.s32 5, %v5661
    %v5663 = vrot.slane %v3329, %v5662
    %5665 = vset.pattern.permute.xlu0 0
    %5666 = vperm.xlu0 %5665, %v5639
    %v5667 = vpop.permute.xlu0 %5666
    %v5669 = vmul.f32 %v5643, %v5667
    %v5670 = vmul.f32 %v5647, %v5667
    %v5671 = vmul.f32 %v5651, %v5667
    %v5672 = vmul.f32 %v5655, %v5667
    %v5673 = vmul.f32 %v5659, %v5667
    %v5674 = vmul.f32 %v5663, %v5667
    %v5675 = vadd.f32 %v5632, %v5669
    %v5676 = vadd.f32 %v5633, %v5670
    %v5677 = vadd.f32 %v5634, %v5671
    %v5678 = vadd.f32 %v5635, %v5672
    %v5679 = vadd.f32 %v5636, %v5673
    %v5680 = vadd.f32 %v5637, %v5674
    %s5681 = scalar_lea.vmem [#allocation16], 432
    %v5682 = vld [vmem:[%s5681] sm:$0x3f]
    %v5683 = vlaneseq
    %v5684 = vshrl.u32 %v5683, 7
    %v5685 = vsub.s32 6, %v5684
    %v5686 = vrot.slane %v3326, %v5685
    %v5687 = vlaneseq
    %v5688 = vshrl.u32 %v5687, 7
    %v5689 = vsub.s32 6, %v5688
    %v5690 = vrot.slane %v3324, %v5689
    %v5691 = vlaneseq
    %v5692 = vshrl.u32 %v5691, 7
    %v5693 = vsub.s32 6, %v5692
    %v5694 = vrot.slane %v3328, %v5693
    %v5695 = vlaneseq
    %v5696 = vshrl.u32 %v5695, 7
    %v5697 = vsub.s32 6, %v5696
    %v5698 = vrot.slane %v3327, %v5697
    %v5699 = vlaneseq
    %v5700 = vshrl.u32 %v5699, 7
    %v5701 = vsub.s32 6, %v5700
    %v5702 = vrot.slane %v3325, %v5701
    %v5703 = vlaneseq
    %v5704 = vshrl.u32 %v5703, 7
    %v5705 = vsub.s32 6, %v5704
    %v5706 = vrot.slane %v3329, %v5705
    %5708 = vset.pattern.permute.xlu0 0
    %5709 = vperm.xlu0 %5708, %v5682
    %v5710 = vpop.permute.xlu0 %5709
    %v5712 = vmul.f32 %v5686, %v5710
    %v5713 = vmul.f32 %v5690, %v5710
    %v5714 = vmul.f32 %v5694, %v5710
    %v5715 = vmul.f32 %v5698, %v5710
    %v5716 = vmul.f32 %v5702, %v5710
    %v5717 = vmul.f32 %v5706, %v5710
    %v5718 = vadd.f32 %v5675, %v5712
    %v5719 = vadd.f32 %v5676, %v5713
    %v5720 = vadd.f32 %v5677, %v5714
    %v5721 = vadd.f32 %v5678, %v5715
    %v5722 = vadd.f32 %v5679, %v5716
    %v5723 = vadd.f32 %v5680, %v5717
    %s5724 = scalar_lea.vmem [#allocation16], 440
    %v5725 = vld [vmem:[%s5724] sm:$0x3f]
    %v5726 = vlaneseq
    %v5727 = vshrl.u32 %v5726, 7
    %v5728 = vsub.s32 7, %v5727
    %v5729 = vrot.slane %v3326, %v5728
    %v5730 = vlaneseq
    %v5731 = vshrl.u32 %v5730, 7
    %v5732 = vsub.s32 7, %v5731
    %v5733 = vrot.slane %v3324, %v5732
    %v5734 = vlaneseq
    %v5735 = vshrl.u32 %v5734, 7
    %v5736 = vsub.s32 7, %v5735
    %v5737 = vrot.slane %v3328, %v5736
    %v5738 = vlaneseq
    %v5739 = vshrl.u32 %v5738, 7
    %v5740 = vsub.s32 7, %v5739
    %v5741 = vrot.slane %v3327, %v5740
    %v5742 = vlaneseq
    %v5743 = vshrl.u32 %v5742, 7
    %v5744 = vsub.s32 7, %v5743
    %v5745 = vrot.slane %v3325, %v5744
    %v5746 = vlaneseq
    %v5747 = vshrl.u32 %v5746, 7
    %v5748 = vsub.s32 7, %v5747
    %v5749 = vrot.slane %v3329, %v5748
    %5751 = vset.pattern.permute.xlu0 0
    %5752 = vperm.xlu0 %5751, %v5725
    %v5753 = vpop.permute.xlu0 %5752
    %v5755 = vmul.f32 %v5729, %v5753
    %v5756 = vmul.f32 %v5733, %v5753
    %v5757 = vmul.f32 %v5737, %v5753
    %v5758 = vmul.f32 %v5741, %v5753
    %v5759 = vmul.f32 %v5745, %v5753
    %v5760 = vmul.f32 %v5749, %v5753
    %v5761 = vadd.f32 %v5718, %v5755
    %v5762 = vadd.f32 %v5719, %v5756
    %v5763 = vadd.f32 %v5720, %v5757
    %v5764 = vadd.f32 %v5721, %v5758
    %v5765 = vadd.f32 %v5722, %v5759
    %v5766 = vadd.f32 %v5723, %v5760
    %s5767 = scalar_lea.vmem [#allocation16], 448
    %v5768 = vld [vmem:[%s5767] sm:$0x3f]
    %v5769 = vlaneseq
    %v5770 = vshrl.u32 %v5769, 7
    %v5771 = vsub.s32 0, %v5770
    %v5772 = vrot.slane %v3344, %v5771
    %v5773 = vlaneseq
    %v5774 = vshrl.u32 %v5773, 7
    %v5775 = vsub.s32 0, %v5774
    %v5776 = vrot.slane %v3342, %v5775
    %v5777 = vlaneseq
    %v5778 = vshrl.u32 %v5777, 7
    %v5779 = vsub.s32 0, %v5778
    %v5780 = vrot.slane %v3346, %v5779
    %v5781 = vlaneseq
    %v5782 = vshrl.u32 %v5781, 7
    %v5783 = vsub.s32 0, %v5782
    %v5784 = vrot.slane %v3345, %v5783
    %v5785 = vlaneseq
    %v5786 = vshrl.u32 %v5785, 7
    %v5787 = vsub.s32 0, %v5786
    %v5788 = vrot.slane %v3343, %v5787
    %v5789 = vlaneseq
    %v5790 = vshrl.u32 %v5789, 7
    %v5791 = vsub.s32 0, %v5790
    %v5792 = vrot.slane %v3347, %v5791
    %5794 = vset.pattern.permute.xlu0 0
    %5795 = vperm.xlu0 %5794, %v5768
    %v5796 = vpop.permute.xlu0 %5795
    %v5798 = vmul.f32 %v5772, %v5796
    %v5799 = vmul.f32 %v5776, %v5796
    %v5800 = vmul.f32 %v5780, %v5796
    %v5801 = vmul.f32 %v5784, %v5796
    %v5802 = vmul.f32 %v5788, %v5796
    %v5803 = vmul.f32 %v5792, %v5796
    %v5804 = vadd.f32 %v5761, %v5798
    %v5805 = vadd.f32 %v5762, %v5799
    %v5806 = vadd.f32 %v5763, %v5800
    %v5807 = vadd.f32 %v5764, %v5801
    %v5808 = vadd.f32 %v5765, %v5802
    %v5809 = vadd.f32 %v5766, %v5803
    %s5810 = scalar_lea.vmem [#allocation16], 456
    %v5811 = vld [vmem:[%s5810] sm:$0x3f]
    %v5812 = vlaneseq
    %v5813 = vshrl.u32 %v5812, 7
    %v5814 = vsub.s32 1, %v5813
    %v5815 = vrot.slane %v3344, %v5814
    %v5816 = vlaneseq
    %v5817 = vshrl.u32 %v5816, 7
    %v5818 = vsub.s32 1, %v5817
    %v5819 = vrot.slane %v3342, %v5818
    %v5820 = vlaneseq
    %v5821 = vshrl.u32 %v5820, 7
    %v5822 = vsub.s32 1, %v5821
    %v5823 = vrot.slane %v3346, %v5822
    %v5824 = vlaneseq
    %v5825 = vshrl.u32 %v5824, 7
    %v5826 = vsub.s32 1, %v5825
    %v5827 = vrot.slane %v3345, %v5826
    %v5828 = vlaneseq
    %v5829 = vshrl.u32 %v5828, 7
    %v5830 = vsub.s32 1, %v5829
    %v5831 = vrot.slane %v3343, %v5830
    %v5832 = vlaneseq
    %v5833 = vshrl.u32 %v5832, 7
    %v5834 = vsub.s32 1, %v5833
    %v5835 = vrot.slane %v3347, %v5834
    %5837 = vset.pattern.permute.xlu0 0
    %5838 = vperm.xlu0 %5837, %v5811
    %v5839 = vpop.permute.xlu0 %5838
    %v5841 = vmul.f32 %v5815, %v5839
    %v5842 = vmul.f32 %v5819, %v5839
    %v5843 = vmul.f32 %v5823, %v5839
    %v5844 = vmul.f32 %v5827, %v5839
    %v5845 = vmul.f32 %v5831, %v5839
    %v5846 = vmul.f32 %v5835, %v5839
    %v5847 = vadd.f32 %v5804, %v5841
    %v5848 = vadd.f32 %v5805, %v5842
    %v5849 = vadd.f32 %v5806, %v5843
    %v5850 = vadd.f32 %v5807, %v5844
    %v5851 = vadd.f32 %v5808, %v5845
    %v5852 = vadd.f32 %v5809, %v5846
    %s5853 = scalar_lea.vmem [#allocation16], 464
    %v5854 = vld [vmem:[%s5853] sm:$0x3f]
    %v5855 = vlaneseq
    %v5856 = vshrl.u32 %v5855, 7
    %v5857 = vsub.s32 2, %v5856
    %v5858 = vrot.slane %v3344, %v5857
    %v5859 = vlaneseq
    %v5860 = vshrl.u32 %v5859, 7
    %v5861 = vsub.s32 2, %v5860
    %v5862 = vrot.slane %v3342, %v5861
    %v5863 = vlaneseq
    %v5864 = vshrl.u32 %v5863, 7
    %v5865 = vsub.s32 2, %v5864
    %v5866 = vrot.slane %v3346, %v5865
    %v5867 = vlaneseq
    %v5868 = vshrl.u32 %v5867, 7
    %v5869 = vsub.s32 2, %v5868
    %v5870 = vrot.slane %v3345, %v5869
    %v5871 = vlaneseq
    %v5872 = vshrl.u32 %v5871, 7
    %v5873 = vsub.s32 2, %v5872
    %v5874 = vrot.slane %v3343, %v5873
    %v5875 = vlaneseq
    %v5876 = vshrl.u32 %v5875, 7
    %v5877 = vsub.s32 2, %v5876
    %v5878 = vrot.slane %v3347, %v5877
    %5880 = vset.pattern.permute.xlu0 0
    %5881 = vperm.xlu0 %5880, %v5854
    %v5882 = vpop.permute.xlu0 %5881
    %v5884 = vmul.f32 %v5858, %v5882
    %v5885 = vmul.f32 %v5862, %v5882
    %v5886 = vmul.f32 %v5866, %v5882
    %v5887 = vmul.f32 %v5870, %v5882
    %v5888 = vmul.f32 %v5874, %v5882
    %v5889 = vmul.f32 %v5878, %v5882
    %v5890 = vadd.f32 %v5847, %v5884
    %v5891 = vadd.f32 %v5848, %v5885
    %v5892 = vadd.f32 %v5849, %v5886
    %v5893 = vadd.f32 %v5850, %v5887
    %v5894 = vadd.f32 %v5851, %v5888
    %v5895 = vadd.f32 %v5852, %v5889
    %s5896 = scalar_lea.vmem [#allocation16], 472
    %v5897 = vld [vmem:[%s5896] sm:$0x3f]
    %v5898 = vlaneseq
    %v5899 = vshrl.u32 %v5898, 7
    %v5900 = vsub.s32 3, %v5899
    %v5901 = vrot.slane %v3344, %v5900
    %v5902 = vlaneseq
    %v5903 = vshrl.u32 %v5902, 7
    %v5904 = vsub.s32 3, %v5903
    %v5905 = vrot.slane %v3342, %v5904
    %v5906 = vlaneseq
    %v5907 = vshrl.u32 %v5906, 7
    %v5908 = vsub.s32 3, %v5907
    %v5909 = vrot.slane %v3346, %v5908
    %v5910 = vlaneseq
    %v5911 = vshrl.u32 %v5910, 7
    %v5912 = vsub.s32 3, %v5911
    %v5913 = vrot.slane %v3345, %v5912
    %v5914 = vlaneseq
    %v5915 = vshrl.u32 %v5914, 7
    %v5916 = vsub.s32 3, %v5915
    %v5917 = vrot.slane %v3343, %v5916
    %v5918 = vlaneseq
    %v5919 = vshrl.u32 %v5918, 7
    %v5920 = vsub.s32 3, %v5919
    %v5921 = vrot.slane %v3347, %v5920
    %5923 = vset.pattern.permute.xlu0 0
    %5924 = vperm.xlu0 %5923, %v5897
    %v5925 = vpop.permute.xlu0 %5924
    %v5927 = vmul.f32 %v5901, %v5925
    %v5928 = vmul.f32 %v5905, %v5925
    %v5929 = vmul.f32 %v5909, %v5925
    %v5930 = vmul.f32 %v5913, %v5925
    %v5931 = vmul.f32 %v5917, %v5925
    %v5932 = vmul.f32 %v5921, %v5925
    %v5933 = vadd.f32 %v5890, %v5927
    %v5934 = vadd.f32 %v5891, %v5928
    %v5935 = vadd.f32 %v5892, %v5929
    %v5936 = vadd.f32 %v5893, %v5930
    %v5937 = vadd.f32 %v5894, %v5931
    %v5938 = vadd.f32 %v5895, %v5932
    %s5939 = scalar_lea.vmem [#allocation16], 480
    %v5940 = vld [vmem:[%s5939] sm:$0x3f]
    %v5941 = vlaneseq
    %v5942 = vshrl.u32 %v5941, 7
    %v5943 = vsub.s32 4, %v5942
    %v5944 = vrot.slane %v3344, %v5943
    %v5945 = vlaneseq
    %v5946 = vshrl.u32 %v5945, 7
    %v5947 = vsub.s32 4, %v5946
    %v5948 = vrot.slane %v3342, %v5947
    %v5949 = vlaneseq
    %v5950 = vshrl.u32 %v5949, 7
    %v5951 = vsub.s32 4, %v5950
    %v5952 = vrot.slane %v3346, %v5951
    %v5953 = vlaneseq
    %v5954 = vshrl.u32 %v5953, 7
    %v5955 = vsub.s32 4, %v5954
    %v5956 = vrot.slane %v3345, %v5955
    %v5957 = vlaneseq
    %v5958 = vshrl.u32 %v5957, 7
    %v5959 = vsub.s32 4, %v5958
    %v5960 = vrot.slane %v3343, %v5959
    %v5961 = vlaneseq
    %v5962 = vshrl.u32 %v5961, 7
    %v5963 = vsub.s32 4, %v5962
    %v5964 = vrot.slane %v3347, %v5963
    %5966 = vset.pattern.permute.xlu0 0
    %5967 = vperm.xlu0 %5966, %v5940
    %v5968 = vpop.permute.xlu0 %5967
    %v5970 = vmul.f32 %v5944, %v5968
    %v5971 = vmul.f32 %v5948, %v5968
    %v5972 = vmul.f32 %v5952, %v5968
    %v5973 = vmul.f32 %v5956, %v5968
    %v5974 = vmul.f32 %v5960, %v5968
    %v5975 = vmul.f32 %v5964, %v5968
    %v5976 = vadd.f32 %v5933, %v5970
    %v5977 = vadd.f32 %v5934, %v5971
    %v5978 = vadd.f32 %v5935, %v5972
    %v5979 = vadd.f32 %v5936, %v5973
    %v5980 = vadd.f32 %v5937, %v5974
    %v5981 = vadd.f32 %v5938, %v5975
    %s5982 = scalar_lea.vmem [#allocation16], 488
    %v5983 = vld [vmem:[%s5982] sm:$0x3f]
    %v5984 = vlaneseq
    %v5985 = vshrl.u32 %v5984, 7
    %v5986 = vsub.s32 5, %v5985
    %v5987 = vrot.slane %v3344, %v5986
    %v5988 = vlaneseq
    %v5989 = vshrl.u32 %v5988, 7
    %v5990 = vsub.s32 5, %v5989
    %v5991 = vrot.slane %v3342, %v5990
    %v5992 = vlaneseq
    %v5993 = vshrl.u32 %v5992, 7
    %v5994 = vsub.s32 5, %v5993
    %v5995 = vrot.slane %v3346, %v5994
    %v5996 = vlaneseq
    %v5997 = vshrl.u32 %v5996, 7
    %v5998 = vsub.s32 5, %v5997
    %v5999 = vrot.slane %v3345, %v5998
    %v6000 = vlaneseq
    %v6001 = vshrl.u32 %v6000, 7
    %v6002 = vsub.s32 5, %v6001
    %v6003 = vrot.slane %v3343, %v6002
    %v6004 = vlaneseq
    %v6005 = vshrl.u32 %v6004, 7
    %v6006 = vsub.s32 5, %v6005
    %v6007 = vrot.slane %v3347, %v6006
    %6009 = vset.pattern.permute.xlu0 0
    %6010 = vperm.xlu0 %6009, %v5983
    %v6011 = vpop.permute.xlu0 %6010
    %v6013 = vmul.f32 %v5987, %v6011
    %v6014 = vmul.f32 %v5991, %v6011
    %v6015 = vmul.f32 %v5995, %v6011
    %v6016 = vmul.f32 %v5999, %v6011
    %v6017 = vmul.f32 %v6003, %v6011
    %v6018 = vmul.f32 %v6007, %v6011
    %v6019 = vadd.f32 %v5976, %v6013
    %v6020 = vadd.f32 %v5977, %v6014
    %v6021 = vadd.f32 %v5978, %v6015
    %v6022 = vadd.f32 %v5979, %v6016
    %v6023 = vadd.f32 %v5980, %v6017
    %v6024 = vadd.f32 %v5981, %v6018
    %s6025 = scalar_lea.vmem [#allocation16], 496
    %v6026 = vld [vmem:[%s6025] sm:$0x3f]
    %v6027 = vlaneseq
    %v6028 = vshrl.u32 %v6027, 7
    %v6029 = vsub.s32 6, %v6028
    %v6030 = vrot.slane %v3344, %v6029
    %v6031 = vlaneseq
    %v6032 = vshrl.u32 %v6031, 7
    %v6033 = vsub.s32 6, %v6032
    %v6034 = vrot.slane %v3342, %v6033
    %v6035 = vlaneseq
    %v6036 = vshrl.u32 %v6035, 7
    %v6037 = vsub.s32 6, %v6036
    %v6038 = vrot.slane %v3346, %v6037
    %v6039 = vlaneseq
    %v6040 = vshrl.u32 %v6039, 7
    %v6041 = vsub.s32 6, %v6040
    %v6042 = vrot.slane %v3345, %v6041
    %v6043 = vlaneseq
    %v6044 = vshrl.u32 %v6043, 7
    %v6045 = vsub.s32 6, %v6044
    %v6046 = vrot.slane %v3343, %v6045
    %v6047 = vlaneseq
    %v6048 = vshrl.u32 %v6047, 7
    %v6049 = vsub.s32 6, %v6048
    %v6050 = vrot.slane %v3347, %v6049
    %6052 = vset.pattern.permute.xlu0 0
    %6053 = vperm.xlu0 %6052, %v6026
    %v6054 = vpop.permute.xlu0 %6053
    %v6056 = vmul.f32 %v6030, %v6054
    %v6057 = vmul.f32 %v6034, %v6054
    %v6058 = vmul.f32 %v6038, %v6054
    %v6059 = vmul.f32 %v6042, %v6054
    %v6060 = vmul.f32 %v6046, %v6054
    %v6061 = vmul.f32 %v6050, %v6054
    %v6062 = vadd.f32 %v6019, %v6056
    %v6063 = vadd.f32 %v6020, %v6057
    %v6064 = vadd.f32 %v6021, %v6058
    %v6065 = vadd.f32 %v6022, %v6059
    %v6066 = vadd.f32 %v6023, %v6060
    %v6067 = vadd.f32 %v6024, %v6061
    %s6068 = scalar_lea.vmem [#allocation16], 504
    %v6069 = vld [vmem:[%s6068] sm:$0x3f]
    %v6070 = vlaneseq
    %v6071 = vshrl.u32 %v6070, 7
    %v6072 = vsub.s32 7, %v6071
    %v6073 = vrot.slane %v3344, %v6072
    %v6074 = vlaneseq
    %v6075 = vshrl.u32 %v6074, 7
    %v6076 = vsub.s32 7, %v6075
    %v6077 = vrot.slane %v3342, %v6076
    %v6078 = vlaneseq
    %v6079 = vshrl.u32 %v6078, 7
    %v6080 = vsub.s32 7, %v6079
    %v6081 = vrot.slane %v3346, %v6080
    %v6082 = vlaneseq
    %v6083 = vshrl.u32 %v6082, 7
    %v6084 = vsub.s32 7, %v6083
    %v6085 = vrot.slane %v3345, %v6084
    %v6086 = vlaneseq
    %v6087 = vshrl.u32 %v6086, 7
    %v6088 = vsub.s32 7, %v6087
    %v6089 = vrot.slane %v3343, %v6088
    %v6090 = vlaneseq
    %v6091 = vshrl.u32 %v6090, 7
    %v6092 = vsub.s32 7, %v6091
    %v6093 = vrot.slane %v3347, %v6092
    %6095 = vset.pattern.permute.xlu0 0
    %6096 = vperm.xlu0 %6095, %v6069
    %v6097 = vpop.permute.xlu0 %6096
    %v6099 = vmul.f32 %v6073, %v6097
    %v6100 = vmul.f32 %v6077, %v6097
    %v6101 = vmul.f32 %v6081, %v6097
    %v6102 = vmul.f32 %v6085, %v6097
    %v6103 = vmul.f32 %v6089, %v6097
    %v6104 = vmul.f32 %v6093, %v6097
    %v6105 = vadd.f32 %v6062, %v6099
    %v6106 = vadd.f32 %v6063, %v6100
    %v6107 = vadd.f32 %v6064, %v6101
    %v6108 = vadd.f32 %v6065, %v6102
    %v6109 = vadd.f32 %v6066, %v6103
    %v6110 = vadd.f32 %v6067, %v6104
    %s6111 = scalar_lea.vmem [#allocation16], 512
    %v6112 = vld [vmem:[%s6111] sm:$0x3f]
    %v6113 = vlaneseq
    %v6114 = vshrl.u32 %v6113, 7
    %v6115 = vsub.s32 0, %v6114
    %v6116 = vrot.slane %v3362, %v6115
    %v6117 = vlaneseq
    %v6118 = vshrl.u32 %v6117, 7
    %v6119 = vsub.s32 0, %v6118
    %v6120 = vrot.slane %v3360, %v6119
    %v6121 = vlaneseq
    %v6122 = vshrl.u32 %v6121, 7
    %v6123 = vsub.s32 0, %v6122
    %v6124 = vrot.slane %v3364, %v6123
    %v6125 = vlaneseq
    %v6126 = vshrl.u32 %v6125, 7
    %v6127 = vsub.s32 0, %v6126
    %v6128 = vrot.slane %v3363, %v6127
    %v6129 = vlaneseq
    %v6130 = vshrl.u32 %v6129, 7
    %v6131 = vsub.s32 0, %v6130
    %v6132 = vrot.slane %v3361, %v6131
    %v6133 = vlaneseq
    %v6134 = vshrl.u32 %v6133, 7
    %v6135 = vsub.s32 0, %v6134
    %v6136 = vrot.slane %v3365, %v6135
    %6138 = vset.pattern.permute.xlu0 0
    %6139 = vperm.xlu0 %6138, %v6112
    %v6140 = vpop.permute.xlu0 %6139
    %v6142 = vmul.f32 %v6116, %v6140
    %v6143 = vmul.f32 %v6120, %v6140
    %v6144 = vmul.f32 %v6124, %v6140
    %v6145 = vmul.f32 %v6128, %v6140
    %v6146 = vmul.f32 %v6132, %v6140
    %v6147 = vmul.f32 %v6136, %v6140
    %v6148 = vadd.f32 %v6105, %v6142
    %v6149 = vadd.f32 %v6106, %v6143
    %v6150 = vadd.f32 %v6107, %v6144
    %v6151 = vadd.f32 %v6108, %v6145
    %v6152 = vadd.f32 %v6109, %v6146
    %v6153 = vadd.f32 %v6110, %v6147
    %s6154 = scalar_lea.vmem [#allocation16], 520
    %v6155 = vld [vmem:[%s6154] sm:$0x3f]
    %v6156 = vlaneseq
    %v6157 = vshrl.u32 %v6156, 7
    %v6158 = vsub.s32 1, %v6157
    %v6159 = vrot.slane %v3362, %v6158
    %v6160 = vlaneseq
    %v6161 = vshrl.u32 %v6160, 7
    %v6162 = vsub.s32 1, %v6161
    %v6163 = vrot.slane %v3360, %v6162
    %v6164 = vlaneseq
    %v6165 = vshrl.u32 %v6164, 7
    %v6166 = vsub.s32 1, %v6165
    %v6167 = vrot.slane %v3364, %v6166
    %v6168 = vlaneseq
    %v6169 = vshrl.u32 %v6168, 7
    %v6170 = vsub.s32 1, %v6169
    %v6171 = vrot.slane %v3363, %v6170
    %v6172 = vlaneseq
    %v6173 = vshrl.u32 %v6172, 7
    %v6174 = vsub.s32 1, %v6173
    %v6175 = vrot.slane %v3361, %v6174
    %v6176 = vlaneseq
    %v6177 = vshrl.u32 %v6176, 7
    %v6178 = vsub.s32 1, %v6177
    %v6179 = vrot.slane %v3365, %v6178
    %6181 = vset.pattern.permute.xlu0 0
    %6182 = vperm.xlu0 %6181, %v6155
    %v6183 = vpop.permute.xlu0 %6182
    %v6185 = vmul.f32 %v6159, %v6183
    %v6186 = vmul.f32 %v6163, %v6183
    %v6187 = vmul.f32 %v6167, %v6183
    %v6188 = vmul.f32 %v6171, %v6183
    %v6189 = vmul.f32 %v6175, %v6183
    %v6190 = vmul.f32 %v6179, %v6183
    %v6191 = vadd.f32 %v6148, %v6185
    %v6192 = vadd.f32 %v6149, %v6186
    %v6193 = vadd.f32 %v6150, %v6187
    %v6194 = vadd.f32 %v6151, %v6188
    %v6195 = vadd.f32 %v6152, %v6189
    %v6196 = vadd.f32 %v6153, %v6190
    %s6197 = scalar_lea.vmem [#allocation16], 528
    %v6198 = vld [vmem:[%s6197] sm:$0x3f]
    %v6199 = vlaneseq
    %v6200 = vshrl.u32 %v6199, 7
    %v6201 = vsub.s32 2, %v6200
    %v6202 = vrot.slane %v3362, %v6201
    %v6203 = vlaneseq
    %v6204 = vshrl.u32 %v6203, 7
    %v6205 = vsub.s32 2, %v6204
    %v6206 = vrot.slane %v3360, %v6205
    %v6207 = vlaneseq
    %v6208 = vshrl.u32 %v6207, 7
    %v6209 = vsub.s32 2, %v6208
    %v6210 = vrot.slane %v3364, %v6209
    %v6211 = vlaneseq
    %v6212 = vshrl.u32 %v6211, 7
    %v6213 = vsub.s32 2, %v6212
    %v6214 = vrot.slane %v3363, %v6213
    %v6215 = vlaneseq
    %v6216 = vshrl.u32 %v6215, 7
    %v6217 = vsub.s32 2, %v6216
    %v6218 = vrot.slane %v3361, %v6217
    %v6219 = vlaneseq
    %v6220 = vshrl.u32 %v6219, 7
    %v6221 = vsub.s32 2, %v6220
    %v6222 = vrot.slane %v3365, %v6221
    %6224 = vset.pattern.permute.xlu0 0
    %6225 = vperm.xlu0 %6224, %v6198
    %v6226 = vpop.permute.xlu0 %6225
    %v6228 = vmul.f32 %v6202, %v6226
    %v6229 = vmul.f32 %v6206, %v6226
    %v6230 = vmul.f32 %v6210, %v6226
    %v6231 = vmul.f32 %v6214, %v6226
    %v6232 = vmul.f32 %v6218, %v6226
    %v6233 = vmul.f32 %v6222, %v6226
    %v6234 = vadd.f32 %v6191, %v6228
    %v6235 = vadd.f32 %v6192, %v6229
    %v6236 = vadd.f32 %v6193, %v6230
    %v6237 = vadd.f32 %v6194, %v6231
    %v6238 = vadd.f32 %v6195, %v6232
    %v6239 = vadd.f32 %v6196, %v6233
    %s6240 = scalar_lea.vmem [#allocation16], 536
    %v6241 = vld [vmem:[%s6240] sm:$0x3f]
    %v6242 = vlaneseq
    %v6243 = vshrl.u32 %v6242, 7
    %v6244 = vsub.s32 3, %v6243
    %v6245 = vrot.slane %v3362, %v6244
    %v6246 = vlaneseq
    %v6247 = vshrl.u32 %v6246, 7
    %v6248 = vsub.s32 3, %v6247
    %v6249 = vrot.slane %v3360, %v6248
    %v6250 = vlaneseq
    %v6251 = vshrl.u32 %v6250, 7
    %v6252 = vsub.s32 3, %v6251
    %v6253 = vrot.slane %v3364, %v6252
    %v6254 = vlaneseq
    %v6255 = vshrl.u32 %v6254, 7
    %v6256 = vsub.s32 3, %v6255
    %v6257 = vrot.slane %v3363, %v6256
    %v6258 = vlaneseq
    %v6259 = vshrl.u32 %v6258, 7
    %v6260 = vsub.s32 3, %v6259
    %v6261 = vrot.slane %v3361, %v6260
    %v6262 = vlaneseq
    %v6263 = vshrl.u32 %v6262, 7
    %v6264 = vsub.s32 3, %v6263
    %v6265 = vrot.slane %v3365, %v6264
    %6267 = vset.pattern.permute.xlu0 0
    %6268 = vperm.xlu0 %6267, %v6241
    %v6269 = vpop.permute.xlu0 %6268
    %v6271 = vmul.f32 %v6245, %v6269
    %v6272 = vmul.f32 %v6249, %v6269
    %v6273 = vmul.f32 %v6253, %v6269
    %v6274 = vmul.f32 %v6257, %v6269
    %v6275 = vmul.f32 %v6261, %v6269
    %v6276 = vmul.f32 %v6265, %v6269
    %v6277 = vadd.f32 %v6234, %v6271
    %v6278 = vadd.f32 %v6235, %v6272
    %v6279 = vadd.f32 %v6236, %v6273
    %v6280 = vadd.f32 %v6237, %v6274
    %v6281 = vadd.f32 %v6238, %v6275
    %v6282 = vadd.f32 %v6239, %v6276
    %s6283 = scalar_lea.vmem [#allocation16], 544
    %v6284 = vld [vmem:[%s6283] sm:$0x3f]
    %v6285 = vlaneseq
    %v6286 = vshrl.u32 %v6285, 7
    %v6287 = vsub.s32 4, %v6286
    %v6288 = vrot.slane %v3362, %v6287
    %v6289 = vlaneseq
    %v6290 = vshrl.u32 %v6289, 7
    %v6291 = vsub.s32 4, %v6290
    %v6292 = vrot.slane %v3360, %v6291
    %v6293 = vlaneseq
    %v6294 = vshrl.u32 %v6293, 7
    %v6295 = vsub.s32 4, %v6294
    %v6296 = vrot.slane %v3364, %v6295
    %v6297 = vlaneseq
    %v6298 = vshrl.u32 %v6297, 7
    %v6299 = vsub.s32 4, %v6298
    %v6300 = vrot.slane %v3363, %v6299
    %v6301 = vlaneseq
    %v6302 = vshrl.u32 %v6301, 7
    %v6303 = vsub.s32 4, %v6302
    %v6304 = vrot.slane %v3361, %v6303
    %v6305 = vlaneseq
    %v6306 = vshrl.u32 %v6305, 7
    %v6307 = vsub.s32 4, %v6306
    %v6308 = vrot.slane %v3365, %v6307
    %6310 = vset.pattern.permute.xlu0 0
    %6311 = vperm.xlu0 %6310, %v6284
    %v6312 = vpop.permute.xlu0 %6311
    %v6314 = vmul.f32 %v6288, %v6312
    %v6315 = vmul.f32 %v6292, %v6312
    %v6316 = vmul.f32 %v6296, %v6312
    %v6317 = vmul.f32 %v6300, %v6312
    %v6318 = vmul.f32 %v6304, %v6312
    %v6319 = vmul.f32 %v6308, %v6312
    %v6320 = vadd.f32 %v6277, %v6314
    %v6321 = vadd.f32 %v6278, %v6315
    %v6322 = vadd.f32 %v6279, %v6316
    %v6323 = vadd.f32 %v6280, %v6317
    %v6324 = vadd.f32 %v6281, %v6318
    %v6325 = vadd.f32 %v6282, %v6319
    %s6326 = scalar_lea.vmem [#allocation16], 552
    %v6327 = vld [vmem:[%s6326] sm:$0x3f]
    %v6328 = vlaneseq
    %v6329 = vshrl.u32 %v6328, 7
    %v6330 = vsub.s32 5, %v6329
    %v6331 = vrot.slane %v3362, %v6330
    %v6332 = vlaneseq
    %v6333 = vshrl.u32 %v6332, 7
    %v6334 = vsub.s32 5, %v6333
    %v6335 = vrot.slane %v3360, %v6334
    %v6336 = vlaneseq
    %v6337 = vshrl.u32 %v6336, 7
    %v6338 = vsub.s32 5, %v6337
    %v6339 = vrot.slane %v3364, %v6338
    %v6340 = vlaneseq
    %v6341 = vshrl.u32 %v6340, 7
    %v6342 = vsub.s32 5, %v6341
    %v6343 = vrot.slane %v3363, %v6342
    %v6344 = vlaneseq
    %v6345 = vshrl.u32 %v6344, 7
    %v6346 = vsub.s32 5, %v6345
    %v6347 = vrot.slane %v3361, %v6346
    %v6348 = vlaneseq
    %v6349 = vshrl.u32 %v6348, 7
    %v6350 = vsub.s32 5, %v6349
    %v6351 = vrot.slane %v3365, %v6350
    %6353 = vset.pattern.permute.xlu0 0
    %6354 = vperm.xlu0 %6353, %v6327
    %v6355 = vpop.permute.xlu0 %6354
    %v6357 = vmul.f32 %v6331, %v6355
    %v6358 = vmul.f32 %v6335, %v6355
    %v6359 = vmul.f32 %v6339, %v6355
    %v6360 = vmul.f32 %v6343, %v6355
    %v6361 = vmul.f32 %v6347, %v6355
    %v6362 = vmul.f32 %v6351, %v6355
    %v6363 = vadd.f32 %v6320, %v6357
    %v6364 = vadd.f32 %v6321, %v6358
    %v6365 = vadd.f32 %v6322, %v6359
    %v6366 = vadd.f32 %v6323, %v6360
    %v6367 = vadd.f32 %v6324, %v6361
    %v6368 = vadd.f32 %v6325, %v6362
    %s6369 = scalar_lea.vmem [#allocation16], 560
    %v6370 = vld [vmem:[%s6369] sm:$0x3f]
    %v6371 = vlaneseq
    %v6372 = vshrl.u32 %v6371, 7
    %v6373 = vsub.s32 6, %v6372
    %v6374 = vrot.slane %v3362, %v6373
    %v6375 = vlaneseq
    %v6376 = vshrl.u32 %v6375, 7
    %v6377 = vsub.s32 6, %v6376
    %v6378 = vrot.slane %v3360, %v6377
    %v6379 = vlaneseq
    %v6380 = vshrl.u32 %v6379, 7
    %v6381 = vsub.s32 6, %v6380
    %v6382 = vrot.slane %v3364, %v6381
    %v6383 = vlaneseq
    %v6384 = vshrl.u32 %v6383, 7
    %v6385 = vsub.s32 6, %v6384
    %v6386 = vrot.slane %v3363, %v6385
    %v6387 = vlaneseq
    %v6388 = vshrl.u32 %v6387, 7
    %v6389 = vsub.s32 6, %v6388
    %v6390 = vrot.slane %v3361, %v6389
    %v6391 = vlaneseq
    %v6392 = vshrl.u32 %v6391, 7
    %v6393 = vsub.s32 6, %v6392
    %v6394 = vrot.slane %v3365, %v6393
    %6396 = vset.pattern.permute.xlu0 0
    %6397 = vperm.xlu0 %6396, %v6370
    %v6398 = vpop.permute.xlu0 %6397
    %v6400 = vmul.f32 %v6374, %v6398
    %v6401 = vmul.f32 %v6378, %v6398
    %v6402 = vmul.f32 %v6382, %v6398
    %v6403 = vmul.f32 %v6386, %v6398
    %v6404 = vmul.f32 %v6390, %v6398
    %v6405 = vmul.f32 %v6394, %v6398
    %v6406 = vadd.f32 %v6363, %v6400
    %v6407 = vadd.f32 %v6364, %v6401
    %v6408 = vadd.f32 %v6365, %v6402
    %v6409 = vadd.f32 %v6366, %v6403
    %v6410 = vadd.f32 %v6367, %v6404
    %v6411 = vadd.f32 %v6368, %v6405
    %s6412 = scalar_lea.vmem [#allocation16], 568
    %v6413 = vld [vmem:[%s6412] sm:$0x3f]
    %v6414 = vlaneseq
    %v6415 = vshrl.u32 %v6414, 7
    %v6416 = vsub.s32 7, %v6415
    %v6417 = vrot.slane %v3362, %v6416
    %v6418 = vlaneseq
    %v6419 = vshrl.u32 %v6418, 7
    %v6420 = vsub.s32 7, %v6419
    %v6421 = vrot.slane %v3360, %v6420
    %v6422 = vlaneseq
    %v6423 = vshrl.u32 %v6422, 7
    %v6424 = vsub.s32 7, %v6423
    %v6425 = vrot.slane %v3364, %v6424
    %v6426 = vlaneseq
    %v6427 = vshrl.u32 %v6426, 7
    %v6428 = vsub.s32 7, %v6427
    %v6429 = vrot.slane %v3363, %v6428
    %v6430 = vlaneseq
    %v6431 = vshrl.u32 %v6430, 7
    %v6432 = vsub.s32 7, %v6431
    %v6433 = vrot.slane %v3361, %v6432
    %v6434 = vlaneseq
    %v6435 = vshrl.u32 %v6434, 7
    %v6436 = vsub.s32 7, %v6435
    %v6437 = vrot.slane %v3365, %v6436
    %6439 = vset.pattern.permute.xlu0 0
    %6440 = vperm.xlu0 %6439, %v6413
    %v6441 = vpop.permute.xlu0 %6440
    %v6443 = vmul.f32 %v6417, %v6441
    %v6444 = vmul.f32 %v6421, %v6441
    %v6445 = vmul.f32 %v6425, %v6441
    %v6446 = vmul.f32 %v6429, %v6441
    %v6447 = vmul.f32 %v6433, %v6441
    %v6448 = vmul.f32 %v6437, %v6441
    %v6449 = vadd.f32 %v6406, %v6443
    %v6450 = vadd.f32 %v6407, %v6444
    %v6451 = vadd.f32 %v6408, %v6445
    %v6452 = vadd.f32 %v6409, %v6446
    %v6453 = vadd.f32 %v6410, %v6447
    %v6454 = vadd.f32 %v6411, %v6448
    %v6455 = vld [vmem:[#allocation17] sm:$0x3f]
    %6457 = vset.pattern.permute.xlu0 0
    %6458 = vperm.xlu0 %6457, %v6455
    %v6459 = vpop.permute.xlu0 %6458
    %v6461 = vadd.f32 %v6449, %v6459
    %v6462 = vadd.f32 %v6450, %v6459
    %v6463 = vadd.f32 %v6451, %v6459
    %v6464 = vadd.f32 %v6452, %v6459
    %v6465 = vadd.f32 %v6453, %v6459
    %v6466 = vadd.f32 %v6454, %v6459
    %v6467 = vmax.f32 %v6461, 0.0
    %v6468 = vmax.f32 %v6462, 0.0
    %v6469 = vmax.f32 %v6463, 0.0
    %v6470 = vmax.f32 %v6464, 0.0
    %v6471 = vmax.f32 %v6465, 0.0
    %v6472 = vmax.f32 %v6466, 0.0
    %v6473 = vadd.f32 %v3238, %v3256
    %v6474 = vadd.f32 %v3236, %v3254
    %v6475 = vadd.f32 %v3234, %v3252
    %v6476 = vadd.f32 %v3239, %v3257
    %v6477 = vadd.f32 %v3237, %v3255
    %v6478 = vadd.f32 %v3235, %v3253
    %v6479 = vadd.f32 %v6473, %v3274
    %v6480 = vadd.f32 %v6474, %v3272
    %v6481 = vadd.f32 %v6475, %v3270
    %v6482 = vadd.f32 %v6476, %v3275
    %v6483 = vadd.f32 %v6477, %v3273
    %v6484 = vadd.f32 %v6478, %v3271
    %v6485 = vadd.f32 %v6479, %v3292
    %v6486 = vadd.f32 %v6480, %v3290
    %v6487 = vadd.f32 %v6481, %v3288
    %v6488 = vadd.f32 %v6482, %v3293
    %v6489 = vadd.f32 %v6483, %v3291
    %v6490 = vadd.f32 %v6484, %v3289
    %v6491 = vadd.f32 %v6485, %v3216
    %v6492 = vadd.f32 %v6486, %v3217
    %v6493 = vadd.f32 %v6487, %v3218
    %v6494 = vadd.f32 %v6488, %v3219
    %v6495 = vadd.f32 %v6489, %v3220
    %v6496 = vadd.f32 %v6490, %v3221
    %v6497 = vadd.f32 %v6491, %v3308
    %v6498 = vadd.f32 %v6492, %v3306
    %v6499 = vadd.f32 %v6493, %v3310
    %v6500 = vadd.f32 %v6494, %v3309
    %v6501 = vadd.f32 %v6495, %v3307
    %v6502 = vadd.f32 %v6496, %v3311
    %v6503 = vadd.f32 %v6497, %v3326
    %v6504 = vadd.f32 %v6498, %v3324
    %v6505 = vadd.f32 %v6499, %v3328
    %v6506 = vadd.f32 %v6500, %v3327
    %v6507 = vadd.f32 %v6501, %v3325
    %v6508 = vadd.f32 %v6502, %v3329
    %v6509 = vadd.f32 %v6503, %v3344
    %v6510 = vadd.f32 %v6504, %v3342
    %v6511 = vadd.f32 %v6505, %v3346
    %v6512 = vadd.f32 %v6506, %v3345
    %v6513 = vadd.f32 %v6507, %v3343
    %v6514 = vadd.f32 %v6508, %v3347
    %v6515 = vadd.f32 %v6509, %v3362
    %v6516 = vadd.f32 %v6510, %v3360
    %v6517 = vadd.f32 %v6511, %v3364
    %v6518 = vadd.f32 %v6512, %v3363
    %v6519 = vadd.f32 %v6513, %v3361
    %v6520 = vadd.f32 %v6514, %v3365
    %v6521 = vmul.f32 %v6515, 0.11111111
    %v6522 = vmul.f32 %v6516, 0.11111111
    %v6523 = vmul.f32 %v6517, 0.11111111
    %v6524 = vmul.f32 %v6518, 0.11111111
    %v6525 = vmul.f32 %v6519, 0.11111111
    %v6526 = vmul.f32 %v6520, 0.11111111
    %v6527 = vld [vmem:[%s11] sm:$0xff]
    %v6528 = vlaneseq
    %v6529 = vshrl.u32 %v6528, 7
    %v6530 = vsub.s32 0, %v6529
    %v6531 = vrot.slane %v6467, %v6530
    %v6532 = vlaneseq
    %v6533 = vshrl.u32 %v6532, 7
    %v6534 = vsub.s32 0, %v6533
    %v6535 = vrot.slane %v6468, %v6534
    %v6536 = vlaneseq
    %v6537 = vshrl.u32 %v6536, 7
    %v6538 = vsub.s32 0, %v6537
    %v6539 = vrot.slane %v6469, %v6538
    %v6540 = vlaneseq
    %v6541 = vshrl.u32 %v6540, 7
    %v6542 = vsub.s32 0, %v6541
    %v6543 = vrot.slane %v6470, %v6542
    %v6544 = vlaneseq
    %v6545 = vshrl.u32 %v6544, 7
    %v6546 = vsub.s32 0, %v6545
    %v6547 = vrot.slane %v6471, %v6546
    %v6548 = vlaneseq
    %v6549 = vshrl.u32 %v6548, 7
    %v6550 = vsub.s32 0, %v6549
    %v6551 = vrot.slane %v6472, %v6550
    %6553 = vset.pattern.permute.xlu0 0
    %6554 = vperm.xlu0 %6553, %v6527
    %v6555 = vpop.permute.xlu0 %6554
    %v6557 = vmul.f32 %v6531, %v6555
    %v6558 = vmul.f32 %v6535, %v6555
    %v6559 = vmul.f32 %v6539, %v6555
    %v6560 = vmul.f32 %v6543, %v6555
    %v6561 = vmul.f32 %v6547, %v6555
    %v6562 = vmul.f32 %v6551, %v6555
    %s6563 = scalar_lea.vmem %s11, 8
    %v6564 = vld [vmem:[%s6563] sm:$0xff]
    %v6565 = vlaneseq
    %v6566 = vshrl.u32 %v6565, 7
    %v6567 = vsub.s32 1, %v6566
    %v6568 = vrot.slane %v6467, %v6567
    %v6569 = vlaneseq
    %v6570 = vshrl.u32 %v6569, 7
    %v6571 = vsub.s32 1, %v6570
    %v6572 = vrot.slane %v6468, %v6571
    %v6573 = vlaneseq
    %v6574 = vshrl.u32 %v6573, 7
    %v6575 = vsub.s32 1, %v6574
    %v6576 = vrot.slane %v6469, %v6575
    %v6577 = vlaneseq
    %v6578 = vshrl.u32 %v6577, 7
    %v6579 = vsub.s32 1, %v6578
    %v6580 = vrot.slane %v6470, %v6579
    %v6581 = vlaneseq
    %v6582 = vshrl.u32 %v6581, 7
    %v6583 = vsub.s32 1, %v6582
    %v6584 = vrot.slane %v6471, %v6583
    %v6585 = vlaneseq
    %v6586 = vshrl.u32 %v6585, 7
    %v6587 = vsub.s32 1, %v6586
    %v6588 = vrot.slane %v6472, %v6587
    %6590 = vset.pattern.permute.xlu0 0
    %6591 = vperm.xlu0 %6590, %v6564
    %v6592 = vpop.permute.xlu0 %6591
    %v6594 = vmul.f32 %v6568, %v6592
    %v6595 = vmul.f32 %v6572, %v6592
    %v6596 = vmul.f32 %v6576, %v6592
    %v6597 = vmul.f32 %v6580, %v6592
    %v6598 = vmul.f32 %v6584, %v6592
    %v6599 = vmul.f32 %v6588, %v6592
    %v6600 = vadd.f32 %v6557, %v6594
    %v6601 = vadd.f32 %v6558, %v6595
    %v6602 = vadd.f32 %v6559, %v6596
    %v6603 = vadd.f32 %v6560, %v6597
    %v6604 = vadd.f32 %v6561, %v6598
    %v6605 = vadd.f32 %v6562, %v6599
    %s6606 = scalar_lea.vmem %s11, 16
    %v6607 = vld [vmem:[%s6606] sm:$0xff]
    %v6608 = vlaneseq
    %v6609 = vshrl.u32 %v6608, 7
    %v6610 = vsub.s32 2, %v6609
    %v6611 = vrot.slane %v6467, %v6610
    %v6612 = vlaneseq
    %v6613 = vshrl.u32 %v6612, 7
    %v6614 = vsub.s32 2, %v6613
    %v6615 = vrot.slane %v6468, %v6614
    %v6616 = vlaneseq
    %v6617 = vshrl.u32 %v6616, 7
    %v6618 = vsub.s32 2, %v6617
    %v6619 = vrot.slane %v6469, %v6618
    %v6620 = vlaneseq
    %v6621 = vshrl.u32 %v6620, 7
    %v6622 = vsub.s32 2, %v6621
    %v6623 = vrot.slane %v6470, %v6622
    %v6624 = vlaneseq
    %v6625 = vshrl.u32 %v6624, 7
    %v6626 = vsub.s32 2, %v6625
    %v6627 = vrot.slane %v6471, %v6626
    %v6628 = vlaneseq
    %v6629 = vshrl.u32 %v6628, 7
    %v6630 = vsub.s32 2, %v6629
    %v6631 = vrot.slane %v6472, %v6630
    %6633 = vset.pattern.permute.xlu0 0
    %6634 = vperm.xlu0 %6633, %v6607
    %v6635 = vpop.permute.xlu0 %6634
    %v6637 = vmul.f32 %v6611, %v6635
    %v6638 = vmul.f32 %v6615, %v6635
    %v6639 = vmul.f32 %v6619, %v6635
    %v6640 = vmul.f32 %v6623, %v6635
    %v6641 = vmul.f32 %v6627, %v6635
    %v6642 = vmul.f32 %v6631, %v6635
    %v6643 = vadd.f32 %v6600, %v6637
    %v6644 = vadd.f32 %v6601, %v6638
    %v6645 = vadd.f32 %v6602, %v6639
    %v6646 = vadd.f32 %v6603, %v6640
    %v6647 = vadd.f32 %v6604, %v6641
    %v6648 = vadd.f32 %v6605, %v6642
    %s6649 = scalar_lea.vmem %s11, 24
    %v6650 = vld [vmem:[%s6649] sm:$0xff]
    %v6651 = vlaneseq
    %v6652 = vshrl.u32 %v6651, 7
    %v6653 = vsub.s32 3, %v6652
    %v6654 = vrot.slane %v6467, %v6653
    %v6655 = vlaneseq
    %v6656 = vshrl.u32 %v6655, 7
    %v6657 = vsub.s32 3, %v6656
    %v6658 = vrot.slane %v6468, %v6657
    %v6659 = vlaneseq
    %v6660 = vshrl.u32 %v6659, 7
    %v6661 = vsub.s32 3, %v6660
    %v6662 = vrot.slane %v6469, %v6661
    %v6663 = vlaneseq
    %v6664 = vshrl.u32 %v6663, 7
    %v6665 = vsub.s32 3, %v6664
    %v6666 = vrot.slane %v6470, %v6665
    %v6667 = vlaneseq
    %v6668 = vshrl.u32 %v6667, 7
    %v6669 = vsub.s32 3, %v6668
    %v6670 = vrot.slane %v6471, %v6669
    %v6671 = vlaneseq
    %v6672 = vshrl.u32 %v6671, 7
    %v6673 = vsub.s32 3, %v6672
    %v6674 = vrot.slane %v6472, %v6673
    %6676 = vset.pattern.permute.xlu0 0
    %6677 = vperm.xlu0 %6676, %v6650
    %v6678 = vpop.permute.xlu0 %6677
    %v6680 = vmul.f32 %v6654, %v6678
    %v6681 = vmul.f32 %v6658, %v6678
    %v6682 = vmul.f32 %v6662, %v6678
    %v6683 = vmul.f32 %v6666, %v6678
    %v6684 = vmul.f32 %v6670, %v6678
    %v6685 = vmul.f32 %v6674, %v6678
    %v6686 = vadd.f32 %v6643, %v6680
    %v6687 = vadd.f32 %v6644, %v6681
    %v6688 = vadd.f32 %v6645, %v6682
    %v6689 = vadd.f32 %v6646, %v6683
    %v6690 = vadd.f32 %v6647, %v6684
    %v6691 = vadd.f32 %v6648, %v6685
    %s6692 = scalar_lea.vmem %s11, 32
    %v6693 = vld [vmem:[%s6692] sm:$0xff]
    %v6694 = vlaneseq
    %v6695 = vshrl.u32 %v6694, 7
    %v6696 = vsub.s32 4, %v6695
    %v6697 = vrot.slane %v6467, %v6696
    %v6698 = vlaneseq
    %v6699 = vshrl.u32 %v6698, 7
    %v6700 = vsub.s32 4, %v6699
    %v6701 = vrot.slane %v6468, %v6700
    %v6702 = vlaneseq
    %v6703 = vshrl.u32 %v6702, 7
    %v6704 = vsub.s32 4, %v6703
    %v6705 = vrot.slane %v6469, %v6704
    %v6706 = vlaneseq
    %v6707 = vshrl.u32 %v6706, 7
    %v6708 = vsub.s32 4, %v6707
    %v6709 = vrot.slane %v6470, %v6708
    %v6710 = vlaneseq
    %v6711 = vshrl.u32 %v6710, 7
    %v6712 = vsub.s32 4, %v6711
    %v6713 = vrot.slane %v6471, %v6712
    %v6714 = vlaneseq
    %v6715 = vshrl.u32 %v6714, 7
    %v6716 = vsub.s32 4, %v6715
    %v6717 = vrot.slane %v6472, %v6716
    %6719 = vset.pattern.permute.xlu0 0
    %6720 = vperm.xlu0 %6719, %v6693
    %v6721 = vpop.permute.xlu0 %6720
    %v6723 = vmul.f32 %v6697, %v6721
    %v6724 = vmul.f32 %v6701, %v6721
    %v6725 = vmul.f32 %v6705, %v6721
    %v6726 = vmul.f32 %v6709, %v6721
    %v6727 = vmul.f32 %v6713, %v6721
    %v6728 = vmul.f32 %v6717, %v6721
    %v6729 = vadd.f32 %v6686, %v6723
    %v6730 = vadd.f32 %v6687, %v6724
    %v6731 = vadd.f32 %v6688, %v6725
    %v6732 = vadd.f32 %v6689, %v6726
    %v6733 = vadd.f32 %v6690, %v6727
    %v6734 = vadd.f32 %v6691, %v6728
    %s6735 = scalar_lea.vmem %s11, 40
    %v6736 = vld [vmem:[%s6735] sm:$0xff]
    %v6737 = vlaneseq
    %v6738 = vshrl.u32 %v6737, 7
    %v6739 = vsub.s32 5, %v6738
    %v6740 = vrot.slane %v6467, %v6739
    %v6741 = vlaneseq
    %v6742 = vshrl.u32 %v6741, 7
    %v6743 = vsub.s32 5, %v6742
    %v6744 = vrot.slane %v6468, %v6743
    %v6745 = vlaneseq
    %v6746 = vshrl.u32 %v6745, 7
    %v6747 = vsub.s32 5, %v6746
    %v6748 = vrot.slane %v6469, %v6747
    %v6749 = vlaneseq
    %v6750 = vshrl.u32 %v6749, 7
    %v6751 = vsub.s32 5, %v6750
    %v6752 = vrot.slane %v6470, %v6751
    %v6753 = vlaneseq
    %v6754 = vshrl.u32 %v6753, 7
    %v6755 = vsub.s32 5, %v6754
    %v6756 = vrot.slane %v6471, %v6755
    %v6757 = vlaneseq
    %v6758 = vshrl.u32 %v6757, 7
    %v6759 = vsub.s32 5, %v6758
    %v6760 = vrot.slane %v6472, %v6759
    %6762 = vset.pattern.permute.xlu0 0
    %6763 = vperm.xlu0 %6762, %v6736
    %v6764 = vpop.permute.xlu0 %6763
    %v6766 = vmul.f32 %v6740, %v6764
    %v6767 = vmul.f32 %v6744, %v6764
    %v6768 = vmul.f32 %v6748, %v6764
    %v6769 = vmul.f32 %v6752, %v6764
    %v6770 = vmul.f32 %v6756, %v6764
    %v6771 = vmul.f32 %v6760, %v6764
    %v6772 = vadd.f32 %v6729, %v6766
    %v6773 = vadd.f32 %v6730, %v6767
    %v6774 = vadd.f32 %v6731, %v6768
    %v6775 = vadd.f32 %v6732, %v6769
    %v6776 = vadd.f32 %v6733, %v6770
    %v6777 = vadd.f32 %v6734, %v6771
    %v6778 = vld [vmem:[%s12] sm:$0xff]
    %v6779 = vlaneseq
    %v6780 = vshrl.u32 %v6779, 7
    %v6781 = vsub.s32 0, %v6780
    %v6782 = vrot.slane %v6521, %v6781
    %v6783 = vlaneseq
    %v6784 = vshrl.u32 %v6783, 7
    %v6785 = vsub.s32 0, %v6784
    %v6786 = vrot.slane %v6522, %v6785
    %v6787 = vlaneseq
    %v6788 = vshrl.u32 %v6787, 7
    %v6789 = vsub.s32 0, %v6788
    %v6790 = vrot.slane %v6523, %v6789
    %v6791 = vlaneseq
    %v6792 = vshrl.u32 %v6791, 7
    %v6793 = vsub.s32 0, %v6792
    %v6794 = vrot.slane %v6524, %v6793
    %v6795 = vlaneseq
    %v6796 = vshrl.u32 %v6795, 7
    %v6797 = vsub.s32 0, %v6796
    %v6798 = vrot.slane %v6525, %v6797
    %v6799 = vlaneseq
    %v6800 = vshrl.u32 %v6799, 7
    %v6801 = vsub.s32 0, %v6800
    %v6802 = vrot.slane %v6526, %v6801
    %6804 = vset.pattern.permute.xlu0 0
    %6805 = vperm.xlu0 %6804, %v6778
    %v6806 = vpop.permute.xlu0 %6805
    %v6808 = vmul.f32 %v6782, %v6806
    %v6809 = vmul.f32 %v6786, %v6806
    %v6810 = vmul.f32 %v6790, %v6806
    %v6811 = vmul.f32 %v6794, %v6806
    %v6812 = vmul.f32 %v6798, %v6806
    %v6813 = vmul.f32 %v6802, %v6806
    %v6814 = vadd.f32 %v6772, %v6808
    %v6815 = vadd.f32 %v6773, %v6809
    %v6816 = vadd.f32 %v6774, %v6810
    %v6817 = vadd.f32 %v6775, %v6811
    %v6818 = vadd.f32 %v6776, %v6812
    %v6819 = vadd.f32 %v6777, %v6813
    %s6820 = scalar_lea.vmem %s12, 8
    %v6821 = vld [vmem:[%s6820] sm:$0xff]
    %v6822 = vlaneseq
    %v6823 = vshrl.u32 %v6822, 7
    %v6824 = vsub.s32 1, %v6823
    %v6825 = vrot.slane %v6521, %v6824
    %v6826 = vlaneseq
    %v6827 = vshrl.u32 %v6826, 7
    %v6828 = vsub.s32 1, %v6827
    %v6829 = vrot.slane %v6522, %v6828
    %v6830 = vlaneseq
    %v6831 = vshrl.u32 %v6830, 7
    %v6832 = vsub.s32 1, %v6831
    %v6833 = vrot.slane %v6523, %v6832
    %v6834 = vlaneseq
    %v6835 = vshrl.u32 %v6834, 7
    %v6836 = vsub.s32 1, %v6835
    %v6837 = vrot.slane %v6524, %v6836
    %v6838 = vlaneseq
    %v6839 = vshrl.u32 %v6838, 7
    %v6840 = vsub.s32 1, %v6839
    %v6841 = vrot.slane %v6525, %v6840
    %v6842 = vlaneseq
    %v6843 = vshrl.u32 %v6842, 7
    %v6844 = vsub.s32 1, %v6843
    %v6845 = vrot.slane %v6526, %v6844
    %6847 = vset.pattern.permute.xlu0 0
    %6848 = vperm.xlu0 %6847, %v6821
    %v6849 = vpop.permute.xlu0 %6848
    %v6851 = vmul.f32 %v6825, %v6849
    %v6852 = vmul.f32 %v6829, %v6849
    %v6853 = vmul.f32 %v6833, %v6849
    %v6854 = vmul.f32 %v6837, %v6849
    %v6855 = vmul.f32 %v6841, %v6849
    %v6856 = vmul.f32 %v6845, %v6849
    %v6857 = vadd.f32 %v6814, %v6851
    %v6858 = vadd.f32 %v6815, %v6852
    %v6859 = vadd.f32 %v6816, %v6853
    %v6860 = vadd.f32 %v6817, %v6854
    %v6861 = vadd.f32 %v6818, %v6855
    %v6862 = vadd.f32 %v6819, %v6856
    %s6863 = scalar_lea.vmem %s12, 16
    %v6864 = vld [vmem:[%s6863] sm:$0xff]
    %v6865 = vlaneseq
    %v6866 = vshrl.u32 %v6865, 7
    %v6867 = vsub.s32 2, %v6866
    %v6868 = vrot.slane %v6521, %v6867
    %v6869 = vlaneseq
    %v6870 = vshrl.u32 %v6869, 7
    %v6871 = vsub.s32 2, %v6870
    %v6872 = vrot.slane %v6522, %v6871
    %v6873 = vlaneseq
    %v6874 = vshrl.u32 %v6873, 7
    %v6875 = vsub.s32 2, %v6874
    %v6876 = vrot.slane %v6523, %v6875
    %v6877 = vlaneseq
    %v6878 = vshrl.u32 %v6877, 7
    %v6879 = vsub.s32 2, %v6878
    %v6880 = vrot.slane %v6524, %v6879
    %v6881 = vlaneseq
    %v6882 = vshrl.u32 %v6881, 7
    %v6883 = vsub.s32 2, %v6882
    %v6884 = vrot.slane %v6525, %v6883
    %v6885 = vlaneseq
    %v6886 = vshrl.u32 %v6885, 7
    %v6887 = vsub.s32 2, %v6886
    %v6888 = vrot.slane %v6526, %v6887
    %6890 = vset.pattern.permute.xlu0 0
    %6891 = vperm.xlu0 %6890, %v6864
    %v6892 = vpop.permute.xlu0 %6891
    %v6894 = vmul.f32 %v6868, %v6892
    %v6895 = vmul.f32 %v6872, %v6892
    %v6896 = vmul.f32 %v6876, %v6892
    %v6897 = vmul.f32 %v6880, %v6892
    %v6898 = vmul.f32 %v6884, %v6892
    %v6899 = vmul.f32 %v6888, %v6892
    %v6900 = vadd.f32 %v6857, %v6894
    %v6901 = vadd.f32 %v6858, %v6895
    %v6902 = vadd.f32 %v6859, %v6896
    %v6903 = vadd.f32 %v6860, %v6897
    %v6904 = vadd.f32 %v6861, %v6898
    %v6905 = vadd.f32 %v6862, %v6899
    %s6906 = scalar_lea.vmem %s12, 24
    %v6907 = vld [vmem:[%s6906] sm:$0xff]
    %v6908 = vlaneseq
    %v6909 = vshrl.u32 %v6908, 7
    %v6910 = vsub.s32 3, %v6909
    %v6911 = vrot.slane %v6521, %v6910
    %v6912 = vlaneseq
    %v6913 = vshrl.u32 %v6912, 7
    %v6914 = vsub.s32 3, %v6913
    %v6915 = vrot.slane %v6522, %v6914
    %v6916 = vlaneseq
    %v6917 = vshrl.u32 %v6916, 7
    %v6918 = vsub.s32 3, %v6917
    %v6919 = vrot.slane %v6523, %v6918
    %v6920 = vlaneseq
    %v6921 = vshrl.u32 %v6920, 7
    %v6922 = vsub.s32 3, %v6921
    %v6923 = vrot.slane %v6524, %v6922
    %v6924 = vlaneseq
    %v6925 = vshrl.u32 %v6924, 7
    %v6926 = vsub.s32 3, %v6925
    %v6927 = vrot.slane %v6525, %v6926
    %v6928 = vlaneseq
    %v6929 = vshrl.u32 %v6928, 7
    %v6930 = vsub.s32 3, %v6929
    %v6931 = vrot.slane %v6526, %v6930
    %6933 = vset.pattern.permute.xlu0 0
    %6934 = vperm.xlu0 %6933, %v6907
    %v6935 = vpop.permute.xlu0 %6934
    %v6937 = vmul.f32 %v6911, %v6935
    %v6938 = vmul.f32 %v6915, %v6935
    %v6939 = vmul.f32 %v6919, %v6935
    %v6940 = vmul.f32 %v6923, %v6935
    %v6941 = vmul.f32 %v6927, %v6935
    %v6942 = vmul.f32 %v6931, %v6935
    %v6943 = vadd.f32 %v6900, %v6937
    %v6944 = vadd.f32 %v6901, %v6938
    %v6945 = vadd.f32 %v6902, %v6939
    %v6946 = vadd.f32 %v6903, %v6940
    %v6947 = vadd.f32 %v6904, %v6941
    %v6948 = vadd.f32 %v6905, %v6942
    %s6949 = scalar_lea.vmem %s12, 32
    %v6950 = vld [vmem:[%s6949] sm:$0xff]
    %v6951 = vlaneseq
    %v6952 = vshrl.u32 %v6951, 7
    %v6953 = vsub.s32 4, %v6952
    %v6954 = vrot.slane %v6521, %v6953
    %v6955 = vlaneseq
    %v6956 = vshrl.u32 %v6955, 7
    %v6957 = vsub.s32 4, %v6956
    %v6958 = vrot.slane %v6522, %v6957
    %v6959 = vlaneseq
    %v6960 = vshrl.u32 %v6959, 7
    %v6961 = vsub.s32 4, %v6960
    %v6962 = vrot.slane %v6523, %v6961
    %v6963 = vlaneseq
    %v6964 = vshrl.u32 %v6963, 7
    %v6965 = vsub.s32 4, %v6964
    %v6966 = vrot.slane %v6524, %v6965
    %v6967 = vlaneseq
    %v6968 = vshrl.u32 %v6967, 7
    %v6969 = vsub.s32 4, %v6968
    %v6970 = vrot.slane %v6525, %v6969
    %v6971 = vlaneseq
    %v6972 = vshrl.u32 %v6971, 7
    %v6973 = vsub.s32 4, %v6972
    %v6974 = vrot.slane %v6526, %v6973
    %6976 = vset.pattern.permute.xlu0 0
    %6977 = vperm.xlu0 %6976, %v6950
    %v6978 = vpop.permute.xlu0 %6977
    %v6980 = vmul.f32 %v6954, %v6978
    %v6981 = vmul.f32 %v6958, %v6978
    %v6982 = vmul.f32 %v6962, %v6978
    %v6983 = vmul.f32 %v6966, %v6978
    %v6984 = vmul.f32 %v6970, %v6978
    %v6985 = vmul.f32 %v6974, %v6978
    %v6986 = vadd.f32 %v6943, %v6980
    %v6987 = vadd.f32 %v6944, %v6981
    %v6988 = vadd.f32 %v6945, %v6982
    %v6989 = vadd.f32 %v6946, %v6983
    %v6990 = vadd.f32 %v6947, %v6984
    %v6991 = vadd.f32 %v6948, %v6985
    %s6992 = scalar_lea.vmem %s12, 40
    %v6993 = vld [vmem:[%s6992] sm:$0xff]
    %v6994 = vlaneseq
    %v6995 = vshrl.u32 %v6994, 7
    %v6996 = vsub.s32 5, %v6995
    %v6997 = vrot.slane %v6521, %v6996
    %v6998 = vlaneseq
    %v6999 = vshrl.u32 %v6998, 7
    %v7000 = vsub.s32 5, %v6999
    %v7001 = vrot.slane %v6522, %v7000
    %v7002 = vlaneseq
    %v7003 = vshrl.u32 %v7002, 7
    %v7004 = vsub.s32 5, %v7003
    %v7005 = vrot.slane %v6523, %v7004
    %v7006 = vlaneseq
    %v7007 = vshrl.u32 %v7006, 7
    %v7008 = vsub.s32 5, %v7007
    %v7009 = vrot.slane %v6524, %v7008
    %v7010 = vlaneseq
    %v7011 = vshrl.u32 %v7010, 7
    %v7012 = vsub.s32 5, %v7011
    %v7013 = vrot.slane %v6525, %v7012
    %v7014 = vlaneseq
    %v7015 = vshrl.u32 %v7014, 7
    %v7016 = vsub.s32 5, %v7015
    %v7017 = vrot.slane %v6526, %v7016
    %7019 = vset.pattern.permute.xlu0 0
    %7020 = vperm.xlu0 %7019, %v6993
    %v7021 = vpop.permute.xlu0 %7020
    %v7023 = vmul.f32 %v6997, %v7021
    %v7024 = vmul.f32 %v7001, %v7021
    %v7025 = vmul.f32 %v7005, %v7021
    %v7026 = vmul.f32 %v7009, %v7021
    %v7027 = vmul.f32 %v7013, %v7021
    %v7028 = vmul.f32 %v7017, %v7021
    %v7029 = vadd.f32 %v6986, %v7023
    %v7030 = vadd.f32 %v6987, %v7024
    %v7031 = vadd.f32 %v6988, %v7025
    %v7032 = vadd.f32 %v6989, %v7026
    %v7033 = vadd.f32 %v6990, %v7027
    %v7034 = vadd.f32 %v6991, %v7028
    %s7035 = scalar_lea.vmem %s12, 48
    %v7036 = vld [vmem:[%s7035] sm:$0xff]
    %v7037 = vlaneseq
    %v7038 = vshrl.u32 %v7037, 7
    %v7039 = vsub.s32 6, %v7038
    %v7040 = vrot.slane %v6521, %v7039
    %v7041 = vlaneseq
    %v7042 = vshrl.u32 %v7041, 7
    %v7043 = vsub.s32 6, %v7042
    %v7044 = vrot.slane %v6522, %v7043
    %v7045 = vlaneseq
    %v7046 = vshrl.u32 %v7045, 7
    %v7047 = vsub.s32 6, %v7046
    %v7048 = vrot.slane %v6523, %v7047
    %v7049 = vlaneseq
    %v7050 = vshrl.u32 %v7049, 7
    %v7051 = vsub.s32 6, %v7050
    %v7052 = vrot.slane %v6524, %v7051
    %v7053 = vlaneseq
    %v7054 = vshrl.u32 %v7053, 7
    %v7055 = vsub.s32 6, %v7054
    %v7056 = vrot.slane %v6525, %v7055
    %v7057 = vlaneseq
    %v7058 = vshrl.u32 %v7057, 7
    %v7059 = vsub.s32 6, %v7058
    %v7060 = vrot.slane %v6526, %v7059
    %7062 = vset.pattern.permute.xlu0 0
    %7063 = vperm.xlu0 %7062, %v7036
    %v7064 = vpop.permute.xlu0 %7063
    %v7066 = vmul.f32 %v7040, %v7064
    %v7067 = vmul.f32 %v7044, %v7064
    %v7068 = vmul.f32 %v7048, %v7064
    %v7069 = vmul.f32 %v7052, %v7064
    %v7070 = vmul.f32 %v7056, %v7064
    %v7071 = vmul.f32 %v7060, %v7064
    %v7072 = vadd.f32 %v7029, %v7066
    %v7073 = vadd.f32 %v7030, %v7067
    %v7074 = vadd.f32 %v7031, %v7068
    %v7075 = vadd.f32 %v7032, %v7069
    %v7076 = vadd.f32 %v7033, %v7070
    %v7077 = vadd.f32 %v7034, %v7071
    %s7078 = scalar_lea.vmem %s12, 56
    %v7079 = vld [vmem:[%s7078] sm:$0xff]
    %v7080 = vlaneseq
    %v7081 = vshrl.u32 %v7080, 7
    %v7082 = vsub.s32 7, %v7081
    %v7083 = vrot.slane %v6521, %v7082
    %v7084 = vlaneseq
    %v7085 = vshrl.u32 %v7084, 7
    %v7086 = vsub.s32 7, %v7085
    %v7087 = vrot.slane %v6522, %v7086
    %v7088 = vlaneseq
    %v7089 = vshrl.u32 %v7088, 7
    %v7090 = vsub.s32 7, %v7089
    %v7091 = vrot.slane %v6523, %v7090
    %v7092 = vlaneseq
    %v7093 = vshrl.u32 %v7092, 7
    %v7094 = vsub.s32 7, %v7093
    %v7095 = vrot.slane %v6524, %v7094
    %v7096 = vlaneseq
    %v7097 = vshrl.u32 %v7096, 7
    %v7098 = vsub.s32 7, %v7097
    %v7099 = vrot.slane %v6525, %v7098
    %v7100 = vlaneseq
    %v7101 = vshrl.u32 %v7100, 7
    %v7102 = vsub.s32 7, %v7101
    %v7103 = vrot.slane %v6526, %v7102
    %7105 = vset.pattern.permute.xlu0 0
    %7106 = vperm.xlu0 %7105, %v7079
    %v7107 = vpop.permute.xlu0 %7106
    %v7109 = vmul.f32 %v7083, %v7107
    %v7110 = vmul.f32 %v7087, %v7107
    %v7111 = vmul.f32 %v7091, %v7107
    %v7112 = vmul.f32 %v7095, %v7107
    %v7113 = vmul.f32 %v7099, %v7107
    %v7114 = vmul.f32 %v7103, %v7107
    %v7115 = vadd.f32 %v7072, %v7109
    %v7116 = vadd.f32 %v7073, %v7110
    %v7117 = vadd.f32 %v7074, %v7111
    %v7118 = vadd.f32 %v7075, %v7112
    %v7119 = vadd.f32 %v7076, %v7113
    %v7120 = vadd.f32 %v7077, %v7114
    %v7121 = vld [vmem:[%s13] sm:$0xff]
    %7123 = vset.pattern.permute.xlu0 0
    %7124 = vperm.xlu0 %7123, %v7121
    %v7125 = vpop.permute.xlu0 %7124
    %v7127 = vmul.f32 %v4740, %v7125
    %v7128 = vmul.f32 %v4744, %v7125
    %v7129 = vmul.f32 %v4748, %v7125
    %v7130 = vmul.f32 %v4752, %v7125
    %v7131 = vmul.f32 %v4756, %v7125
    %v7132 = vmul.f32 %v4760, %v7125
    %v7133 = vadd.f32 %v7115, %v7127
    %v7134 = vadd.f32 %v7116, %v7128
    %v7135 = vadd.f32 %v7117, %v7129
    %v7136 = vadd.f32 %v7118, %v7130
    %v7137 = vadd.f32 %v7119, %v7131
    %v7138 = vadd.f32 %v7120, %v7132
    %s7139 = scalar_lea.vmem %s13, 8
    %v7140 = vld [vmem:[%s7139] sm:$0xff]
    %7142 = vset.pattern.permute.xlu0 0
    %7143 = vperm.xlu0 %7142, %v7140
    %v7144 = vpop.permute.xlu0 %7143
    %v7146 = vmul.f32 %v4783, %v7144
    %v7147 = vmul.f32 %v4787, %v7144
    %v7148 = vmul.f32 %v4791, %v7144
    %v7149 = vmul.f32 %v4795, %v7144
    %v7150 = vmul.f32 %v4799, %v7144
    %v7151 = vmul.f32 %v4803, %v7144
    %v7152 = vadd.f32 %v7133, %v7146
    %v7153 = vadd.f32 %v7134, %v7147
    %v7154 = vadd.f32 %v7135, %v7148
    %v7155 = vadd.f32 %v7136, %v7149
    %v7156 = vadd.f32 %v7137, %v7150
    %v7157 = vadd.f32 %v7138, %v7151
    %s7158 = scalar_lea.vmem %s13, 16
    %v7159 = vld [vmem:[%s7158] sm:$0xff]
    %7161 = vset.pattern.permute.xlu0 0
    %7162 = vperm.xlu0 %7161, %v7159
    %v7163 = vpop.permute.xlu0 %7162
    %v7165 = vmul.f32 %v4826, %v7163
    %v7166 = vmul.f32 %v4830, %v7163
    %v7167 = vmul.f32 %v4834, %v7163
    %v7168 = vmul.f32 %v4838, %v7163
    %v7169 = vmul.f32 %v4842, %v7163
    %v7170 = vmul.f32 %v4846, %v7163
    %v7171 = vadd.f32 %v7152, %v7165
    %v7172 = vadd.f32 %v7153, %v7166
    %v7173 = vadd.f32 %v7154, %v7167
    %v7174 = vadd.f32 %v7155, %v7168
    %v7175 = vadd.f32 %v7156, %v7169
    %v7176 = vadd.f32 %v7157, %v7170
    %s7177 = scalar_lea.vmem %s13, 24
    %v7178 = vld [vmem:[%s7177] sm:$0xff]
    %7180 = vset.pattern.permute.xlu0 0
    %7181 = vperm.xlu0 %7180, %v7178
    %v7182 = vpop.permute.xlu0 %7181
    %v7184 = vmul.f32 %v4869, %v7182
    %v7185 = vmul.f32 %v4873, %v7182
    %v7186 = vmul.f32 %v4877, %v7182
    %v7187 = vmul.f32 %v4881, %v7182
    %v7188 = vmul.f32 %v4885, %v7182
    %v7189 = vmul.f32 %v4889, %v7182
    %v7190 = vadd.f32 %v7171, %v7184
    %v7191 = vadd.f32 %v7172, %v7185
    %v7192 = vadd.f32 %v7173, %v7186
    %v7193 = vadd.f32 %v7174, %v7187
    %v7194 = vadd.f32 %v7175, %v7188
    %v7195 = vadd.f32 %v7176, %v7189
    %s7196 = scalar_lea.vmem %s13, 32
    %v7197 = vld [vmem:[%s7196] sm:$0xff]
    %7199 = vset.pattern.permute.xlu0 0
    %7200 = vperm.xlu0 %7199, %v7197
    %v7201 = vpop.permute.xlu0 %7200
    %v7203 = vmul.f32 %v4912, %v7201
    %v7204 = vmul.f32 %v4916, %v7201
    %v7205 = vmul.f32 %v4920, %v7201
    %v7206 = vmul.f32 %v4924, %v7201
    %v7207 = vmul.f32 %v4928, %v7201
    %v7208 = vmul.f32 %v4932, %v7201
    %v7209 = vadd.f32 %v7190, %v7203
    %v7210 = vadd.f32 %v7191, %v7204
    %v7211 = vadd.f32 %v7192, %v7205
    %v7212 = vadd.f32 %v7193, %v7206
    %v7213 = vadd.f32 %v7194, %v7207
    %v7214 = vadd.f32 %v7195, %v7208
    %s7215 = scalar_lea.vmem %s13, 40
    %v7216 = vld [vmem:[%s7215] sm:$0xff]
    %7218 = vset.pattern.permute.xlu0 0
    %7219 = vperm.xlu0 %7218, %v7216
    %v7220 = vpop.permute.xlu0 %7219
    %v7222 = vmul.f32 %v4955, %v7220
    %v7223 = vmul.f32 %v4959, %v7220
    %v7224 = vmul.f32 %v4963, %v7220
    %v7225 = vmul.f32 %v4967, %v7220
    %v7226 = vmul.f32 %v4971, %v7220
    %v7227 = vmul.f32 %v4975, %v7220
    %v7228 = vadd.f32 %v7209, %v7222
    %v7229 = vadd.f32 %v7210, %v7223
    %v7230 = vadd.f32 %v7211, %v7224
    %v7231 = vadd.f32 %v7212, %v7225
    %v7232 = vadd.f32 %v7213, %v7226
    %v7233 = vadd.f32 %v7214, %v7227
    %s7234 = scalar_lea.vmem %s13, 48
    %v7235 = vld [vmem:[%s7234] sm:$0xff]
    %7237 = vset.pattern.permute.xlu0 0
    %7238 = vperm.xlu0 %7237, %v7235
    %v7239 = vpop.permute.xlu0 %7238
    %v7241 = vmul.f32 %v4998, %v7239
    %v7242 = vmul.f32 %v5002, %v7239
    %v7243 = vmul.f32 %v5006, %v7239
    %v7244 = vmul.f32 %v5010, %v7239
    %v7245 = vmul.f32 %v5014, %v7239
    %v7246 = vmul.f32 %v5018, %v7239
    %v7247 = vadd.f32 %v7228, %v7241
    %v7248 = vadd.f32 %v7229, %v7242
    %v7249 = vadd.f32 %v7230, %v7243
    %v7250 = vadd.f32 %v7231, %v7244
    %v7251 = vadd.f32 %v7232, %v7245
    %v7252 = vadd.f32 %v7233, %v7246
    %s7253 = scalar_lea.vmem %s13, 56
    %v7254 = vld [vmem:[%s7253] sm:$0xff]
    %7256 = vset.pattern.permute.xlu0 0
    %7257 = vperm.xlu0 %7256, %v7254
    %v7258 = vpop.permute.xlu0 %7257
    %v7260 = vmul.f32 %v5041, %v7258
    %v7261 = vmul.f32 %v5045, %v7258
    %v7262 = vmul.f32 %v5049, %v7258
    %v7263 = vmul.f32 %v5053, %v7258
    %v7264 = vmul.f32 %v5057, %v7258
    %v7265 = vmul.f32 %v5061, %v7258
    %v7266 = vadd.f32 %v7247, %v7260
    %v7267 = vadd.f32 %v7248, %v7261
    %v7268 = vadd.f32 %v7249, %v7262
    %v7269 = vadd.f32 %v7250, %v7263
    %v7270 = vadd.f32 %v7251, %v7264
    %v7271 = vadd.f32 %v7252, %v7265
    %v7272 = vld [vmem:[%s14] sm:$0xff]
    %7274 = vset.pattern.permute.xlu0 0
    %7275 = vperm.xlu0 %7274, %v7272
    %v7276 = vpop.permute.xlu0 %7275
    %v7278 = vadd.f32 %v7266, %v7276
    %v7279 = vadd.f32 %v7267, %v7276
    %v7280 = vadd.f32 %v7268, %v7276
    %v7281 = vadd.f32 %v7269, %v7276
    %v7282 = vadd.f32 %v7270, %v7276
    %v7283 = vadd.f32 %v7271, %v7276
    %v7284 = vmax.f32 %v7278, 0.0
    %v7285 = vmax.f32 %v7279, 0.0
    %v7286 = vmax.f32 %v7280, 0.0
    %v7287 = vmax.f32 %v7281, 0.0
    %v7288 = vmax.f32 %v7282, 0.0
    %v7289 = vmax.f32 %v7283, 0.0
    %v7290 = vmul.f32 %v7284, %v381
    %v7291 = vmul.f32 %v7285, %v382
    %v7292 = vmul.f32 %v7286, %v383
    %v7293 = vmul.f32 %v7287, %v381
    %v7294 = vmul.f32 %v7288, %v382
    %v7295 = vmul.f32 %v7289, %v383
    %v7296 = vadd.f32 %v7290, %v7291
    %v7297 = vadd.f32 %v7296, %v7292
    %7298 = vadd.xlane.f32.xlu0 %v7297
    %v7299 = vpop.xlane.xlu0 %7298
    %v7300 = vadd.f32 %v7293, %v7294
    %v7301 = vadd.f32 %v7300, %v7295
    %7302 = vadd.xlane.f32.xlu0 %v7301
    %v7303 = vpop.xlane.xlu0 %7302
    %v7304 = vmul.f32 %v7299, 0.00390625
    %v7305 = vmul.f32 %v7303, 0.00390625
    %v7306 = vld [vmem:[%s15] sm:$0x1]
    %v7307 = vlaneseq
    %v7308 = vshrl.u32 %v7307, 7
    %v7309 = vsub.s32 0, %v7308
    %v7310 = vrot.slane %v7304, %v7309
    %v7311 = vlaneseq
    %v7312 = vshrl.u32 %v7311, 7
    %v7313 = vsub.s32 0, %v7312
    %v7314 = vrot.slane %v7305, %v7313
    %v7316 = vlaneseq
    %v7317 = vshrl.u32 %v7316, 7
    %v7318 = vsub.s32 0, %v7317
    %v7319 = vrot.slane %v7306, %v7318
    %7321 = vbcast.lane.b32.xlu0 %v7319, 256
    %v7322 = vpop.permute.xlu0 %7321
    %s7324 = sor.u32 256, 8
    %7325 = vbcast.lane.b32.xlu0 %v7319, %s7324
    %v7326 = vpop.permute.xlu0 %7325
    %v7329 = vmul.f32 %v7310, %v7322
    %v7330 = vmul.f32 %v7310, %v7326
    %v7331 = vmul.f32 %v7314, %v7322
    %v7332 = vmul.f32 %v7314, %v7326
    %s7333 = scalar_lea.vmem %s15, 1
    %v7334 = vld [vmem:[%s7333] sm:$0x1]
    %v7335 = vlaneseq
    %v7336 = vshrl.u32 %v7335, 7
    %v7337 = vsub.s32 1, %v7336
    %v7338 = vrot.slane %v7304, %v7337
    %v7339 = vlaneseq
    %v7340 = vshrl.u32 %v7339, 7
    %v7341 = vsub.s32 1, %v7340
    %v7342 = vrot.slane %v7305, %v7341
    %v7344 = vlaneseq
    %v7345 = vshrl.u32 %v7344, 7
    %v7346 = vsub.s32 0, %v7345
    %v7347 = vrot.slane %v7334, %v7346
    %7349 = vbcast.lane.b32.xlu0 %v7347, 256
    %v7350 = vpop.permute.xlu0 %7349
    %s7352 = sor.u32 256, 8
    %7353 = vbcast.lane.b32.xlu0 %v7347, %s7352
    %v7354 = vpop.permute.xlu0 %7353
    %v7357 = vmul.f32 %v7338, %v7350
    %v7358 = vmul.f32 %v7338, %v7354
    %v7359 = vmul.f32 %v7342, %v7350
    %v7360 = vmul.f32 %v7342, %v7354
    %v7361 = vadd.f32 %v7329, %v7357
    %v7362 = vadd.f32 %v7330, %v7358
    %v7363 = vadd.f32 %v7331, %v7359
    %v7364 = vadd.f32 %v7332, %v7360
    %s7365 = scalar_lea.vmem %s15, 2
    %v7366 = vld [vmem:[%s7365] sm:$0x1]
    %v7367 = vlaneseq
    %v7368 = vshrl.u32 %v7367, 7
    %v7369 = vsub.s32 2, %v7368
    %v7370 = vrot.slane %v7304, %v7369
    %v7371 = vlaneseq
    %v7372 = vshrl.u32 %v7371, 7
    %v7373 = vsub.s32 2, %v7372
    %v7374 = vrot.slane %v7305, %v7373
    %v7376 = vlaneseq
    %v7377 = vshrl.u32 %v7376, 7
    %v7378 = vsub.s32 0, %v7377
    %v7379 = vrot.slane %v7366, %v7378
    %7381 = vbcast.lane.b32.xlu0 %v7379, 256
    %v7382 = vpop.permute.xlu0 %7381
    %s7384 = sor.u32 256, 8
    %7385 = vbcast.lane.b32.xlu0 %v7379, %s7384
    %v7386 = vpop.permute.xlu0 %7385
    %v7389 = vmul.f32 %v7370, %v7382
    %v7390 = vmul.f32 %v7370, %v7386
    %v7391 = vmul.f32 %v7374, %v7382
    %v7392 = vmul.f32 %v7374, %v7386
    %v7393 = vadd.f32 %v7361, %v7389
    %v7394 = vadd.f32 %v7362, %v7390
    %v7395 = vadd.f32 %v7363, %v7391
    %v7396 = vadd.f32 %v7364, %v7392
    %s7397 = scalar_lea.vmem %s15, 3
    %v7398 = vld [vmem:[%s7397] sm:$0x1]
    %v7399 = vlaneseq
    %v7400 = vshrl.u32 %v7399, 7
    %v7401 = vsub.s32 3, %v7400
    %v7402 = vrot.slane %v7304, %v7401
    %v7403 = vlaneseq
    %v7404 = vshrl.u32 %v7403, 7
    %v7405 = vsub.s32 3, %v7404
    %v7406 = vrot.slane %v7305, %v7405
    %v7408 = vlaneseq
    %v7409 = vshrl.u32 %v7408, 7
    %v7410 = vsub.s32 0, %v7409
    %v7411 = vrot.slane %v7398, %v7410
    %7413 = vbcast.lane.b32.xlu0 %v7411, 256
    %v7414 = vpop.permute.xlu0 %7413
    %s7416 = sor.u32 256, 8
    %7417 = vbcast.lane.b32.xlu0 %v7411, %s7416
    %v7418 = vpop.permute.xlu0 %7417
    %v7421 = vmul.f32 %v7402, %v7414
    %v7422 = vmul.f32 %v7402, %v7418
    %v7423 = vmul.f32 %v7406, %v7414
    %v7424 = vmul.f32 %v7406, %v7418
    %v7425 = vadd.f32 %v7393, %v7421
    %v7426 = vadd.f32 %v7394, %v7422
    %v7427 = vadd.f32 %v7395, %v7423
    %v7428 = vadd.f32 %v7396, %v7424
    %s7429 = scalar_lea.vmem %s15, 4
    %v7430 = vld [vmem:[%s7429] sm:$0x1]
    %v7431 = vlaneseq
    %v7432 = vshrl.u32 %v7431, 7
    %v7433 = vsub.s32 4, %v7432
    %v7434 = vrot.slane %v7304, %v7433
    %v7435 = vlaneseq
    %v7436 = vshrl.u32 %v7435, 7
    %v7437 = vsub.s32 4, %v7436
    %v7438 = vrot.slane %v7305, %v7437
    %v7440 = vlaneseq
    %v7441 = vshrl.u32 %v7440, 7
    %v7442 = vsub.s32 0, %v7441
    %v7443 = vrot.slane %v7430, %v7442
    %7445 = vbcast.lane.b32.xlu0 %v7443, 256
    %v7446 = vpop.permute.xlu0 %7445
    %s7448 = sor.u32 256, 8
    %7449 = vbcast.lane.b32.xlu0 %v7443, %s7448
    %v7450 = vpop.permute.xlu0 %7449
    %v7453 = vmul.f32 %v7434, %v7446
    %v7454 = vmul.f32 %v7434, %v7450
    %v7455 = vmul.f32 %v7438, %v7446
    %v7456 = vmul.f32 %v7438, %v7450
    %v7457 = vadd.f32 %v7425, %v7453
    %v7458 = vadd.f32 %v7426, %v7454
    %v7459 = vadd.f32 %v7427, %v7455
    %v7460 = vadd.f32 %v7428, %v7456
    %s7461 = scalar_lea.vmem %s15, 5
    %v7462 = vld [vmem:[%s7461] sm:$0x1]
    %v7463 = vlaneseq
    %v7464 = vshrl.u32 %v7463, 7
    %v7465 = vsub.s32 5, %v7464
    %v7466 = vrot.slane %v7304, %v7465
    %v7467 = vlaneseq
    %v7468 = vshrl.u32 %v7467, 7
    %v7469 = vsub.s32 5, %v7468
    %v7470 = vrot.slane %v7305, %v7469
    %v7472 = vlaneseq
    %v7473 = vshrl.u32 %v7472, 7
    %v7474 = vsub.s32 0, %v7473
    %v7475 = vrot.slane %v7462, %v7474
    %7477 = vbcast.lane.b32.xlu0 %v7475, 256
    %v7478 = vpop.permute.xlu0 %7477
    %s7480 = sor.u32 256, 8
    %7481 = vbcast.lane.b32.xlu0 %v7475, %s7480
    %v7482 = vpop.permute.xlu0 %7481
    %v7485 = vmul.f32 %v7466, %v7478
    %v7486 = vmul.f32 %v7466, %v7482
    %v7487 = vmul.f32 %v7470, %v7478
    %v7488 = vmul.f32 %v7470, %v7482
    %v7489 = vadd.f32 %v7457, %v7485
    %v7490 = vadd.f32 %v7458, %v7486
    %v7491 = vadd.f32 %v7459, %v7487
    %v7492 = vadd.f32 %v7460, %v7488
    %s7493 = scalar_lea.vmem %s15, 6
    %v7494 = vld [vmem:[%s7493] sm:$0x1]
    %v7495 = vlaneseq
    %v7496 = vshrl.u32 %v7495, 7
    %v7497 = vsub.s32 6, %v7496
    %v7498 = vrot.slane %v7304, %v7497
    %v7499 = vlaneseq
    %v7500 = vshrl.u32 %v7499, 7
    %v7501 = vsub.s32 6, %v7500
    %v7502 = vrot.slane %v7305, %v7501
    %v7504 = vlaneseq
    %v7505 = vshrl.u32 %v7504, 7
    %v7506 = vsub.s32 0, %v7505
    %v7507 = vrot.slane %v7494, %v7506
    %7509 = vbcast.lane.b32.xlu0 %v7507, 256
    %v7510 = vpop.permute.xlu0 %7509
    %s7512 = sor.u32 256, 8
    %7513 = vbcast.lane.b32.xlu0 %v7507, %s7512
    %v7514 = vpop.permute.xlu0 %7513
    %v7517 = vmul.f32 %v7498, %v7510
    %v7518 = vmul.f32 %v7498, %v7514
    %v7519 = vmul.f32 %v7502, %v7510
    %v7520 = vmul.f32 %v7502, %v7514
    %v7521 = vadd.f32 %v7489, %v7517
    %v7522 = vadd.f32 %v7490, %v7518
    %v7523 = vadd.f32 %v7491, %v7519
    %v7524 = vadd.f32 %v7492, %v7520
    %s7525 = scalar_lea.vmem %s15, 7
    %v7526 = vld [vmem:[%s7525] sm:$0x1]
    %v7527 = vlaneseq
    %v7528 = vshrl.u32 %v7527, 7
    %v7529 = vsub.s32 7, %v7528
    %v7530 = vrot.slane %v7304, %v7529
    %v7531 = vlaneseq
    %v7532 = vshrl.u32 %v7531, 7
    %v7533 = vsub.s32 7, %v7532
    %v7534 = vrot.slane %v7305, %v7533
    %v7536 = vlaneseq
    %v7537 = vshrl.u32 %v7536, 7
    %v7538 = vsub.s32 0, %v7537
    %v7539 = vrot.slane %v7526, %v7538
    %7541 = vbcast.lane.b32.xlu0 %v7539, 256
    %v7542 = vpop.permute.xlu0 %7541
    %s7544 = sor.u32 256, 8
    %7545 = vbcast.lane.b32.xlu0 %v7539, %s7544
    %v7546 = vpop.permute.xlu0 %7545
    %v7549 = vmul.f32 %v7530, %v7542
    %v7550 = vmul.f32 %v7530, %v7546
    %v7551 = vmul.f32 %v7534, %v7542
    %v7552 = vmul.f32 %v7534, %v7546
    %v7553 = vadd.f32 %v7521, %v7549
    %v7554 = vadd.f32 %v7522, %v7550
    %v7555 = vadd.f32 %v7523, %v7551
    %v7556 = vadd.f32 %v7524, %v7552
    %v7557 = vld [vmem:[%s16] sm:$0x1]
    %v7559 = vlaneseq
    %v7560 = vshrl.u32 %v7559, 7
    %v7561 = vsub.s32 0, %v7560
    %v7562 = vrot.slane %v7557, %v7561
    %7564 = vbcast.lane.b32.xlu0 %v7562, 256
    %v7565 = vpop.permute.xlu0 %7564
    %s7567 = sor.u32 256, 8
    %7568 = vbcast.lane.b32.xlu0 %v7562, %s7567
    %v7569 = vpop.permute.xlu0 %7568
    %v7572 = vadd.f32 %v7553, %v7565
    %v7573 = vadd.f32 %v7554, %v7569
    %v7574 = vadd.f32 %v7555, %v7565
    %v7575 = vadd.f32 %v7556, %v7569
    %7580 = vset.pattern.permute.xlu0 0
    %7581 = vperm.xlu0 %7580, %v7572
    %v7582 = vpop.permute.xlu0 %7581
    %7583 = vset.pattern.permute.xlu0 0
    %7584 = vperm.xlu0 %7583, %v7573
    %v7585 = vpop.permute.xlu0 %7584
    %7586 = vset.pattern.permute.xlu0 0
    %7587 = vperm.xlu0 %7586, %v7574
    %v7588 = vpop.permute.xlu0 %7587
    %7589 = vset.pattern.permute.xlu0 0
    %7590 = vperm.xlu0 %7589, %v7575
    %v7591 = vpop.permute.xlu0 %7590
    %v7592 = vlaneseq
    %v7593 = vshrl.u32 %v7592, 7
    %v7594 = vsub.s32 %v186, %v7593
    %v7595 = vrot.slane %v7582, %v7594
    %v7596 = vadd.s32 %v186, 4294967288
    %v7597 = vlaneseq
    %v7598 = vshrl.u32 %v7597, 7
    %v7599 = vsub.s32 %v7596, %v7598
    %v7600 = vrot.slane %v7585, %v7599
    %vm7601 = vcmask 130112
    %v7602 = vsel %vm7601, %v7600, %v7595
    %v7603 = vlaneseq
    %v7604 = vshrl.u32 %v7603, 7
    %v7605 = vsub.s32 %v186, %v7604
    %v7606 = vrot.slane %v7588, %v7605
    %v7607 = vlaneseq
    %v7608 = vshrl.u32 %v7607, 7
    %v7609 = vsub.s32 %v7596, %v7608
    %v7610 = vrot.slane %v7591, %v7609
    %v7611 = vsel %vm7601, %v7610, %v7606
    %vm7612 = vcmask 1041409
    %v7613 = vsel %vm7612, %v7611, %v7602
    %vm7615 = vcmask 74752
    %7616 = vst.msk [vmem:[#allocation19] sm:$0x3] %vm7615, %v7613
    // Predicated region
    $region110: #{forward.1} parent=1 // pred_check
      _
    $region111: #{forward.1} parent=1 // pred_check_branch
      %7618 = sbr.rel (0) target = $region113
    $region112: #{forward.1} parent=1 // pred_region
      %s7620 = ssub.s32 32, 32
      %7621 = vsyncadd [#allocation4], %s7620
      %s7623 = sshll.u32 [#allocation19], 4
      %s7624 = int_to_ptr.vmem [resolvable:$true] %s7623
      %7626 = dma.vmem_to_hbm [thread:$0]  %s7624, 32, %s17, [#allocation4]
    $region113: #{forward.1} parent=1 // pred_fallthru
      _
    // Predicated region
    $region114: #{forward.1} parent=1 // pred_check
      _
    $region115: #{forward.1} parent=1 // pred_check_branch
      %7628 = sbr.rel (0) target = $region117
    $region116: #{forward.1} parent=1 // pred_region
      %7629 = dma.done [#allocation4], 32
    $region117: #{forward.1} parent=1 // pred_fallthru
      _
    %7630 = vsyncpa [#allocation3], 1
    %7631 = vsyncpa [#allocation6], 1
    %7632 = vsyncpa [#allocation9], 1
    %7633 = vsyncpa [#allocation12], 1
    %7634 = vsyncpa [#allocation15], 1
    %7635 = vsyncpa [#allocation18], 1
    %7636 = vsyncpa [#allocation4], 1

</llo_original>
